<compile_context>
chip_gen: v5e
topology: v5e:2x2
jax: 0.10.0
libtpu: 0.0.40
codegen_flags: <defaults>
</compile_context>

<pallas_src>
import functools

import jax
import jax.numpy as jnp
import numpy as np
from jax.experimental import pallas as pl
from jax.experimental.pallas import tpu as pltpu

# ---------------- configuration (scaled-down, structure-preserving) -----------
CH = 64            # original: 1024
LATENT = 32        # original: opt.latent_dim (100)
N_CLASSES = 8      # original: opt.n_classes (10)
HIDDEN = 4 * 4 * CH
LEAKY_SLOPE = 0.01       # nn.LeakyReLU() default negative_slope
BN_EPS = 1e-5
VMEM_LIMIT = 48 * 1024 * 1024   # fits v5e/v6e (128 MiB) and v7x (64 MiB) VMEM


def _round_up(v, m):
    return ((v + m - 1) // m) * m


def _pick_tile(dim, prefs, align):
    """Largest preferred tile whose padding overhead is <=10%; else one block."""
    dim_a = _round_up(dim, align)
    for t in prefs:                            # descending preference
        padded = _round_up(dim_a, t)
        if padded * 10 <= dim_a * 11:
            return t, padded
    return dim_a, dim_a


# ---------------------------- matmul + bias + act ------------------------------
def _matmul_bias_act_kernel(x_ref, w_ref, b_ref, o_ref, acc_ref, *, act):
    """One (TM, TN) output tile; grid axis 2 (innermost) is the K reduction."""
    @pl.when(pl.program_id(2) == 0)
    def _():
        acc_ref[...] = jnp.zeros_like(acc_ref)

    acc_ref[...] += jnp.dot(x_ref[...], w_ref[...],
                            preferred_element_type=jnp.float32)

    @pl.when(pl.program_id(2) == pl.num_programs(2) - 1)
    def _():
        y = acc_ref[...] + b_ref[...]
        if act == "leaky":
            y = jnp.where(y > 0, y, LEAKY_SLOPE * y)
        elif act == "tanh":
            y = jnp.tanh(y)
        o_ref[...] = y.astype(o_ref.dtype)


def matmul_bias_act(x, w, b, act="none", compute_dtype=jnp.bfloat16,
                    out_dtype=None):
    """act(x @ w + b) on the MXU (bf16 operands, f32 accumulation by default)."""
    M, K = x.shape
    Kw, N = w.shape
    assert K == Kw
    if out_dtype is None:
        out_dtype = compute_dtype
    TM, Mp = _pick_tile(M, (512, 256, 128), 8)
    TN, Np = _pick_tile(N, (512, 256, 128), 128)
    TK, Kp = _pick_tile(K, (512, 256, 128), 128)

    xp = jnp.pad(x.astype(compute_dtype), ((0, Mp - M), (0, Kp - K)))
    wp = jnp.pad(w.astype(compute_dtype), ((0, Kp - K), (0, Np - N)))
    bp = jnp.pad(b.astype(jnp.float32), (0, Np - N)).reshape(1, Np)

    out = pl.pallas_call(
        functools.partial(_matmul_bias_act_kernel, act=act),
        out_shape=jax.ShapeDtypeStruct((Mp, Np), out_dtype),
        grid=(Mp // TM, Np // TN, Kp // TK),
        in_specs=[
            pl.BlockSpec((TM, TK), lambda i, j, k: (i, k)),
            pl.BlockSpec((TK, TN), lambda i, j, k: (k, j)),
            # bias block index is constant across k -> not re-DMA'd per k step
            pl.BlockSpec((1, TN), lambda i, j, k: (0, j)),
        ],
        out_specs=pl.BlockSpec((TM, TN), lambda i, j, k: (i, j)),
        scratch_shapes=[pltpu.VMEM((TM, TN), jnp.float32)],
        compiler_params=pltpu.CompilerParams(
            dimension_semantics=("parallel", "parallel", "arbitrary"),
            vmem_limit_bytes=VMEM_LIMIT),
    )(xp, wp, bp)
    return out[:M, :N]


# ------------------------------ batch norm --------------------------------------
def _bn_stats_kernel(x_ref, sum_ref, sq_ref):
    """Row-tiled per-channel sum / sum-of-squares (reduction over grid axis 1)."""
    @pl.when(pl.program_id(1) == 0)
    def _():
        sum_ref[...] = jnp.zeros_like(sum_ref)
        sq_ref[...] = jnp.zeros_like(sq_ref)
    x = x_ref[...].astype(jnp.float32)
    sum_ref[...] += jnp.sum(x, axis=0, keepdims=True)
    sq_ref[...] += jnp.sum(x * x, axis=0, keepdims=True)


def _bn_apply_kernel(x_ref, scale_ref, shift_ref, o_ref):
    o_ref[...] = (x_ref[...].astype(jnp.float32) * scale_ref[...]
                  + shift_ref[...]).astype(o_ref.dtype)


def batch_norm_rows(x2d, gamma, beta, eps=BN_EPS, out_dtype=None):
    """Training-mode BatchNorm over the rows of (R, C); covers BatchNorm1d/2d.

    Two Pallas passes: (1) row-tiled sum / sum-of-squares reduction with the row
    axis as an "arbitrary" grid axis, (2) streaming per-channel affine.  VMEM
    use stays bounded for arbitrarily large R (R = B*H*W at reference scale).
    """
    R, C = x2d.shape
    if out_dtype is None:
        out_dtype = x2d.dtype
    TC, Cp = _pick_tile(C, (512, 256, 128), 128)
    TR, Rp = _pick_tile(R, (512, 256, 128), 8)
    xp = jnp.pad(x2d, ((0, Rp - R), (0, Cp - C)))   # zero rows don't bias the sums

    s, q = pl.pallas_call(
        _bn_stats_kernel,
        out_shape=(jax.ShapeDtypeStruct((1, Cp), jnp.float32),
                   jax.ShapeDtypeStruct((1, Cp), jnp.float32)),
        grid=(Cp // TC, Rp // TR),
        in_specs=[pl.BlockSpec((TR, TC), lambda c, r: (r, c))],
        out_specs=(pl.BlockSpec((1, TC), lambda c, r: (0, c)),
                   pl.BlockSpec((1, TC), lambda c, r: (0, c))),
        compiler_params=pltpu.CompilerParams(
            dimension_semantics=("parallel", "arbitrary"),
            vmem_limit_bytes=VMEM_LIMIT),
    )(xp)

    mean = s[0, :C] / R                                  # biased (training) stats
    var = jnp.maximum(q[0, :C] / R - mean * mean, 0.0)
    scale = gamma * jax.lax.rsqrt(var + eps)
    shift = beta - mean * scale
    scale_p = jnp.pad(scale, (0, Cp - C)).reshape(1, Cp)
    shift_p = jnp.pad(shift, (0, Cp - C)).reshape(1, Cp)

    out = pl.pallas_call(
        _bn_apply_kernel,
        out_shape=jax.ShapeDtypeStruct((Rp, Cp), out_dtype),
        grid=(Rp // TR, Cp // TC),
        in_specs=[pl.BlockSpec((TR, TC), lambda r, c: (r, c)),
                  pl.BlockSpec((1, TC), lambda r, c: (0, c)),
                  pl.BlockSpec((1, TC), lambda r, c: (0, c))],
        out_specs=pl.BlockSpec((TR, TC), lambda r, c: (r, c)),
        compiler_params=pltpu.CompilerParams(
            dimension_semantics=("parallel", "parallel"),
            vmem_limit_bytes=VMEM_LIMIT),
    )(xp, scale_p, shift_p)
    return out[:R, :C]


# ------------------------ ConvTranspose2d(k=4,s=2,p=1) --------------------------
def conv_transpose2d_4s2p1(x_nhwc, w, b, act, compute_dtype, out_dtype):
    """4-phase (output-parity) ConvTranspose2d(4, 2, 1) as one MXU GEMM.

    For PyTorch semantics  oy = 2*iy - 1 + ky,  each output parity (dy, dx) is a
    stride-1 conv over the ORIGINAL input with the 2x2 sub-kernel
    w[..., 3-dy-2*wy, 3-dx-2*wx], wy,wx in {0,1}.  All four phases share one
    patch matrix (2x2 windows over the 1-padded NHWC input) and are the
    N = 4*Cout column blocks of a single GEMM with K = 4*Cin.
    x: (B, H, W, Cin) NHWC; w: (Cin, Cout, 4, 4) (PyTorch ConvTranspose2d layout).
    Returns (B, 2H, 2W, Cout) NHWC.
    """
    B, H, W, Cin = x_nhwc.shape
    Cout = w.shape[1]
    xp = jnp.pad(x_nhwc, ((0, 0), (1, 1), (1, 1), (0, 0)))
    # patch matrix: (B*(H+1)*(W+1), 4*Cin); tap (wy,wx) major, cin minor
    # TODO(synk): stream this 2x2-tap gather from the activation inside the
    # Pallas call (manual DMA) instead of materializing the patch matrix in HBM.
    cols = [xp[:, wy:wy + H + 1, wx:wx + W + 1, :]
            for wy in (0, 1) for wx in (0, 1)]
    patches = jnp.concatenate(cols, axis=-1).reshape(
        B * (H + 1) * (W + 1), 4 * Cin)
    # combined weight: (4*Cin, 4*Cout); column block (dy,dx), row block (wy,wx)
    wrows = []
    for wy in (0, 1):
        for wx in (0, 1):
            wrows.append(jnp.concatenate(
                [w[:, :, 3 - dy - 2 * wy, 3 - dx - 2 * wx]
                 for dy in (0, 1) for dx in (0, 1)], axis=1))
    wmat = jnp.concatenate(wrows, axis=0)
    bias4 = jnp.tile(b, 4)

    y = matmul_bias_act(patches, wmat, bias4, act=act,
                        compute_dtype=compute_dtype, out_dtype=out_dtype)
    y = y.reshape(B, H + 1, W + 1, 4, Cout)
    # phase (dy,dx): output pixel (2m+dy, 2n+dx) lives at y[:, m+dy, n+dx, 2*dy+dx]
    ph = jnp.stack([y[:, 0:H,     0:W,     0],
                    y[:, 0:H,     1:W + 1, 1],
                    y[:, 1:H + 1, 0:W,     2],
                    y[:, 1:H + 1, 1:W + 1, 3]], axis=0)
    ph = ph.reshape(2, 2, B, H, W, Cout)
    return ph.transpose(2, 3, 0, 4, 1, 5).reshape(B, 2 * H, 2 * W, Cout)


def convT_block(x_nhwc, w, b, gamma, beta, act="leaky", bn=True,
                compute_dtype=jnp.bfloat16, out_dtype=None):
    """ConvTranspose2d -> LeakyReLU (fused in GEMM epilogue) -> BatchNorm2d."""
    y = conv_transpose2d_4s2p1(
        x_nhwc, w, b, act, compute_dtype,
        compute_dtype if bn else out_dtype)
    if bn:
        B, OH, OW, Cout = y.shape
        y = batch_norm_rows(y.reshape(B * OH * OW, Cout), gamma, beta,
                            out_dtype=out_dtype or compute_dtype)
        y = y.reshape(B, OH, OW, Cout)
    return y


# ------------------------------ parameters --------------------------------------
def init_params(key):
    keys = iter(jax.random.split(key, 16))

    def lin(fin, fout):
        kw, kb = jax.random.split(next(keys))
        s = 1.0 / np.sqrt(fin)
        return (jax.random.uniform(kw, (fin, fout), jnp.float32, -s, s),
                jax.random.uniform(kb, (fout,), jnp.float32, -s, s))

    def convT(cin, cout):
        kw, kb = jax.random.split(next(keys))
        s = 1.0 / np.sqrt(cin * 16)
        return (jax.random.uniform(kw, (cin, cout, 4, 4), jnp.float32, -s, s),
                jax.random.uniform(kb, (cout,), jnp.float32, -s, s))

    def bn(c):
        return jnp.ones((c,), jnp.float32), jnp.zeros((c,), jnp.float32)

    P = {}
    # model_noise: Linear(LATENT, HIDDEN) LReLU BN, Linear(HIDDEN, HIDDEN) LReLU BN
    P["n_w1"], P["n_b1"] = lin(LATENT, HIDDEN);  P["n_g1"], P["n_be1"] = bn(HIDDEN)
    P["n_w2"], P["n_b2"] = lin(HIDDEN, HIDDEN);  P["n_g2"], P["n_be2"] = bn(HIDDEN)
    # model_label: Linear(N_CLASSES, HIDDEN) LReLU BN, Linear(HIDDEN, 16) LReLU BN
    P["l_w1"], P["l_b1"] = lin(N_CLASSES, HIDDEN); P["l_g1"], P["l_be1"] = bn(HIDDEN)
    P["l_w2"], P["l_b2"] = lin(HIDDEN, 16);        P["l_g2"], P["l_be2"] = bn(16)
    # model_img: 4 x ConvTranspose2d(4,2,1)
    c0, c1, c2, c3 = CH + 1, CH // 2, CH // 4, CH // 8
    P["c_w1"], P["c_b1"] = convT(c0, c1); P["c_g1"], P["c_be1"] = bn(c1)
    P["c_w2"], P["c_b2"] = convT(c1, c2); P["c_g2"], P["c_be2"] = bn(c2)
    P["c_w3"], P["c_b3"] = convT(c2, c3); P["c_g3"], P["c_be3"] = bn(c3)
    P["c_w4"], P["c_b4"] = convT(c3, 3)
    return P


# ------------------------------ forward pass ------------------------------------
def generator_forward(noise, labels, P, compute_dtype=jnp.bfloat16):
    B = noise.shape[0]
    cd = compute_dtype
    # --- model_noise: Linear -> LReLU -> BN1d -> Linear -> LReLU -> BN1d ---
    # NOTE(synk): noise/label first linears kept separate (could be fused into
    # one GEMM); labels handled as a general Linear, not an embedding lookup,
    # to preserve the module's semantics for non-one-hot inputs.
    h = matmul_bias_act(noise, P["n_w1"], P["n_b1"], act="leaky", compute_dtype=cd)
    h = batch_norm_rows(h, P["n_g1"], P["n_be1"])
    h = matmul_bias_act(h, P["n_w2"], P["n_b2"], act="leaky", compute_dtype=cd)
    h = batch_norm_rows(h, P["n_g2"], P["n_be2"])
    model_n = h.reshape(B, CH, 4, 4).transpose(0, 2, 3, 1)       # NHWC (B,4,4,CH)
    # --- model_label ---
    l = matmul_bias_act(labels, P["l_w1"], P["l_b1"], act="leaky", compute_dtype=cd)
    l = batch_norm_rows(l, P["l_g1"], P["l_be1"])
    l = matmul_bias_act(l, P["l_w2"], P["l_b2"], act="leaky", compute_dtype=cd)
    l = batch_norm_rows(l, P["l_g2"], P["l_be2"])
    model_l = l.reshape(B, 1, 4, 4).transpose(0, 2, 3, 1)        # NHWC (B,4,4,1)
    # --- concat channels (noise then label) and run the NHWC conv stack ---
    x = jnp.concatenate([model_n, model_l], axis=-1)             # (B,4,4,CH+1)
    x = convT_block(x, P["c_w1"], P["c_b1"], P["c_g1"], P["c_be1"], compute_dtype=cd)
    x = convT_block(x, P["c_w2"], P["c_b2"], P["c_g2"], P["c_be2"], compute_dtype=cd)
    x = convT_block(x, P["c_w3"], P["c_b3"], P["c_g3"], P["c_be3"], compute_dtype=cd)
    x = convT_block(x, P["c_w4"], P["c_b4"], None, None, act="tanh", bn=False,
                    compute_dtype=cd, out_dtype=jnp.float32)     # (B,64,64,3)
    return x.transpose(0, 3, 1, 2)                               # NCHW once, at the end


# ------------------------- pure-XLA reference (for checking) --------------------
def reference_forward(noise, labels, P):
    B = noise.shape[0]
    hi = jax.lax.Precision.HIGHEST

    def lrelu(v):
        return jnp.where(v > 0, v, LEAKY_SLOPE * v)

    def lin(v, w, b):
        return jnp.dot(v, w, precision=hi) + b

    def bn_rows(v, g, be):
        mean = v.mean(axis=0)
        var = ((v - mean) ** 2).mean(axis=0)
        return (v - mean) * jax.lax.rsqrt(var + BN_EPS) * g + be

    def bn_nchw(v, g, be):
        mean = v.mean(axis=(0, 2, 3), keepdims=True)
        var = ((v - mean) ** 2).mean(axis=(0, 2, 3), keepdims=True)
        return ((v - mean) * jax.lax.rsqrt(var + BN_EPS)
                * g[None, :, None, None] + be[None, :, None, None])

    def convT(v, w, b):
        wf = jnp.transpose(w, (1, 0, 2, 3))[:, :, ::-1, ::-1]    # (Cout,Cin,4,4) flipped
        y = jax.lax.conv_general_dilated(
            v, wf, window_strides=(1, 1), padding=((2, 2), (2, 2)),
            lhs_dilation=(2, 2),
            dimension_numbers=("NCHW", "OIHW", "NCHW"), precision=hi)
        return y + b[None, :, None, None]

    h = bn_rows(lrelu(lin(noise, P["n_w1"], P["n_b1"])), P["n_g1"], P["n_be1"])
    h = bn_rows(lrelu(lin(h, P["n_w2"], P["n_b2"])), P["n_g2"], P["n_be2"])
    mn = h.reshape(B, CH, 4, 4)
    l = bn_rows(lrelu(lin(labels, P["l_w1"], P["l_b1"])), P["l_g1"], P["l_be1"])
    l = bn_rows(lrelu(lin(l, P["l_w2"], P["l_b2"])), P["l_g2"], P["l_be2"])
    ml = l.reshape(B, 1, 4, 4)
    x = jnp.concatenate([mn, ml], axis=1)
    x = bn_nchw(lrelu(convT(x, P["c_w1"], P["c_b1"])), P["c_g1"], P["c_be1"])
    x = bn_nchw(lrelu(convT(x, P["c_w2"], P["c_b2"])), P["c_g2"], P["c_be2"])
    x = bn_nchw(lrelu(convT(x, P["c_w3"], P["c_b3"])), P["c_g3"], P["c_be3"])
    return jnp.tanh(convT(x, P["c_w4"], P["c_b4"]))


# ---------------------------------- main -----------------------------------------
if __name__ == "__main__":
    key = jax.random.PRNGKey(0)
    kp, kn, kl = jax.random.split(key, 3)
    params = init_params(kp)

    B = 2
    noise = jax.random.normal(kn, (B, LATENT), dtype=jnp.float32)
    labels = jax.nn.one_hot(
        jax.random.randint(kl, (B,), 0, N_CLASSES), N_CLASSES, dtype=jnp.float32)

    # 1) correctness: f32-compute Pallas path vs. pure-XLA reference
    f32_fwd = jax.jit(functools.partial(generator_forward,
                                        compute_dtype=jnp.float32))
    img_f32 = jax.block_until_ready(f32_fwd(noise, labels, params))
    ref = jax.block_until_ready(jax.jit(reference_forward)(noise, labels, params))
    assert img_f32.shape == (B, 3, 64, 64), img_f32.shape
    max_err = float(jnp.max(jnp.abs(img_f32 - ref)))
    assert np.isfinite(max_err) and max_err < 2e-2, max_err

    # 2) fast path (default): bf16 GEMM operands / bf16 activations
    img = jax.block_until_ready(jax.jit(generator_forward)(noise, labels, params))
    assert img.shape == (B, 3, 64, 64), img.shape
    assert img.dtype == jnp.float32
    assert bool(jnp.all(jnp.isfinite(img)))
    assert bool(jnp.all(jnp.abs(img) <= 1.0))     # tanh output range
    print("KERNEL_OK")
</pallas_src>

<mosaic_0001>
module attributes {stable_mosaic.version = 11 : i64} {
  func.func @_matmul_bias_act_kernel(%arg0: i32, %arg1: i32, %arg2: i32, %arg3: memref<8x128xf32, #tpu.memory_space<vmem>>, %arg4: memref<128x512xf32, #tpu.memory_space<vmem>>, %arg5: memref<1x512xf32, #tpu.memory_space<vmem>>, %arg6: memref<8x512xf32, #tpu.memory_space<vmem>>, %arg7: memref<8x512xf32, #tpu.memory_space<vmem>>) attributes {dimension_semantics = [#tpu.dimension_semantics<parallel>, #tpu.dimension_semantics<parallel>, #tpu.dimension_semantics<arbitrary>], iteration_bounds = array<i64: 1, 2, 1>, scalar_prefetch = 0 : i64, scratch_operands = 1 : i64, tpu.core_type = #tpu.core_type<tc>, window_params = [{transform_indices = @transform_0, window_bounds = array<i64: 8, 128>}, {transform_indices = @transform_1, window_bounds = array<i64: 128, 512>}, {transform_indices = @transform_2, window_bounds = array<i64: 1, 512>}, {transform_indices = @transform_3, window_bounds = array<i64: 8, 512>}]} {
    %c0_i32 = arith.constant 0 : i32
    %0 = arith.cmpi eq, %arg2, %c0_i32 : i32
    %1 = arith.extui %0 : i1 to i32
    %c0_i32_0 = arith.constant 0 : i32
    %2 = arith.cmpi ne, %1, %c0_i32_0 : i32
    scf.if %2 {
      %cst_10 = arith.constant 0.000000e+00 : f32
      %12 = vector.broadcast %cst_10 : f32 to vector<8x512xf32>
      %c0_11 = arith.constant 0 : index
      %c0_12 = arith.constant 0 : index
      %13 = vector.load %arg7[%c0_11, %c0_12] : memref<8x512xf32, #tpu.memory_space<vmem>>, vector<8x512xf32>
      tpu.vector_store %arg7[%c0_11, %c0_12], %12 {strides = array<i32>} : memref<8x512xf32, #tpu.memory_space<vmem>>, vector<8x512xf32>,
    } else {
    }
    %c0 = arith.constant 0 : index
    %c0_1 = arith.constant 0 : index
    %3 = vector.load %arg7[%c0, %c0_1] : memref<8x512xf32, #tpu.memory_space<vmem>>, vector<8x512xf32>
    %c0_2 = arith.constant 0 : index
    %c0_3 = arith.constant 0 : index
    %4 = vector.load %arg3[%c0_2, %c0_3] : memref<8x128xf32, #tpu.memory_space<vmem>>, vector<8x128xf32>
    %c0_4 = arith.constant 0 : index
    %c0_5 = arith.constant 0 : index
    %5 = vector.load %arg4[%c0_4, %c0_5] : memref<128x512xf32, #tpu.memory_space<vmem>>, vector<128x512xf32>
    %cst = arith.constant dense<0.000000e+00> : vector<8x512xf32>
    %6 = tpu.matmul %4, %5, %cst {dimension_numbers = #tpu.dot_dimension_numbers<[1], [0], [0], [1], [0, 0, 1, 1], [], []>} : vector<8x128xf32>, vector<128x512xf32>, vector<8x512xf32> -> vector<8x512xf32>
    %7 = arith.addf %3, %6 : vector<8x512xf32>
    %c0_6 = arith.constant 0 : index
    %c0_7 = arith.constant 0 : index
    %8 = vector.load %arg7[%c0_6, %c0_7] : memref<8x512xf32, #tpu.memory_space<vmem>>, vector<8x512xf32>
    tpu.vector_store %arg7[%c0_6, %c0_7], %7 {strides = array<i32>} : memref<8x512xf32, #tpu.memory_space<vmem>>, vector<8x512xf32>,
    %c0_i32_8 = arith.constant 0 : i32
    %9 = arith.cmpi eq, %arg2, %c0_i32_8 : i32
    %10 = arith.extui %9 : i1 to i32
    %c0_i32_9 = arith.constant 0 : i32
    %11 = arith.cmpi ne, %10, %c0_i32_9 : i32
    scf.if %11 {
      %c0_10 = arith.constant 0 : index
      %c0_11 = arith.constant 0 : index
      %12 = vector.load %arg7[%c0_10, %c0_11] : memref<8x512xf32, #tpu.memory_space<vmem>>, vector<8x512xf32>
      %c0_12 = arith.constant 0 : index
      %c0_13 = arith.constant 0 : index
      %13 = vector.load %arg5[%c0_12, %c0_13] : memref<1x512xf32, #tpu.memory_space<vmem>>, vector<1x512xf32>
      %14 = vector.broadcast %13 : vector<1x512xf32> to vector<8x512xf32>
      %15 = arith.addf %12, %14 : vector<8x512xf32>
      %cst_14 = arith.constant 0.000000e+00 : f32
      %16 = vector.broadcast %cst_14 : f32 to vector<8x512xf32>
      %17 = arith.cmpf ogt, %15, %16 : vector<8x512xf32>
      %cst_15 = arith.constant 0.00999999977 : f32
      %18 = vector.broadcast %cst_15 : f32 to vector<8x512xf32>
      %19 = arith.mulf %18, %15 : vector<8x512xf32>
      %20 = arith.select %17, %15, %19 : vector<8x512xi1>, vector<8x512xf32>
      %c0_16 = arith.constant 0 : index
      %c0_17 = arith.constant 0 : index
      %21 = vector.load %arg6[%c0_16, %c0_17] : memref<8x512xf32, #tpu.memory_space<vmem>>, vector<8x512xf32>
      tpu.vector_store %arg6[%c0_16, %c0_17], %20 {strides = array<i32>} : memref<8x512xf32, #tpu.memory_space<vmem>>, vector<8x512xf32>,
    } else {
    }
    return
  }
  func.func @transform_0(%arg0: i32, %arg1: i32, %arg2: i32) -> (i32, i32) {
    %c0_i32 = arith.constant 0 : i32
    return %arg0, %arg2 : i32, i32
  }
  func.func @transform_1(%arg0: i32, %arg1: i32, %arg2: i32) -> (i32, i32) {
    %c0_i32 = arith.constant 0 : i32
    return %arg2, %arg1 : i32, i32
  }
  func.func @transform_2(%arg0: i32, %arg1: i32, %arg2: i32) -> (i32, i32) {
    %c0_i32 = arith.constant 0 : i32
    %c0_i32_0 = arith.constant 0 : i32
    return %c0_i32, %arg1 : i32, i32
  }
  func.func @transform_3(%arg0: i32, %arg1: i32, %arg2: i32) -> (i32, i32) {
    %c0_i32 = arith.constant 0 : i32
    return %arg0, %arg1 : i32, i32
  }
}

module attributes {stable_mosaic.version = 11 : i64} {
  func.func @_bn_stats_kernel(%arg0: i32, %arg1: i32, %arg2: memref<8x512xf32, #tpu.memory_space<vmem>>, %arg3: memref<1x512xf32, #tpu.memory_space<vmem>>, %arg4: memref<1x512xf32, #tpu.memory_space<vmem>>) attributes {dimension_semantics = [#tpu.dimension_semantics<parallel>, #tpu.dimension_semantics<arbitrary>], iteration_bounds = array<i64: 2, 1>, scalar_prefetch = 0 : i64, scratch_operands = 0 : i64, tpu.core_type = #tpu.core_type<tc>, window_params = [{transform_indices = @transform_0, window_bounds = array<i64: 8, 512>}, {transform_indices = @transform_1, window_bounds = array<i64: 1, 512>}, {transform_indices = @transform_2, window_bounds = array<i64: 1, 512>}]} {
    %c0_i32 = arith.constant 0 : i32
    %0 = arith.cmpi eq, %arg1, %c0_i32 : i32
    %1 = arith.extui %0 : i1 to i32
    %c0_i32_0 = arith.constant 0 : i32
    %2 = arith.cmpi ne, %1, %c0_i32_0 : i32
    scf.if %2 {
      %cst_11 = arith.constant 0.000000e+00 : f32
      %15 = vector.broadcast %cst_11 : f32 to vector<1x512xf32>
      %c0_12 = arith.constant 0 : index
      %c0_13 = arith.constant 0 : index
      %16 = vector.load %arg3[%c0_12, %c0_13] : memref<1x512xf32, #tpu.memory_space<vmem>>, vector<1x512xf32>
      tpu.vector_store %arg3[%c0_12, %c0_13], %15 {strides = array<i32>} : memref<1x512xf32, #tpu.memory_space<vmem>>, vector<1x512xf32>,
      %cst_14 = arith.constant 0.000000e+00 : f32
      %17 = vector.broadcast %cst_14 : f32 to vector<1x512xf32>
      %c0_15 = arith.constant 0 : index
      %c0_16 = arith.constant 0 : index
      %18 = vector.load %arg4[%c0_15, %c0_16] : memref<1x512xf32, #tpu.memory_space<vmem>>, vector<1x512xf32>
      tpu.vector_store %arg4[%c0_15, %c0_16], %17 {strides = array<i32>} : memref<1x512xf32, #tpu.memory_space<vmem>>, vector<1x512xf32>,
    } else {
    }
    %c0 = arith.constant 0 : index
    %c0_1 = arith.constant 0 : index
    %3 = vector.load %arg2[%c0, %c0_1] : memref<8x512xf32, #tpu.memory_space<vmem>>, vector<8x512xf32>
    %c0_2 = arith.constant 0 : index
    %c0_3 = arith.constant 0 : index
    %4 = vector.load %arg3[%c0_2, %c0_3] : memref<1x512xf32, #tpu.memory_space<vmem>>, vector<1x512xf32>
    %cst = arith.constant dense<0.000000e+00> : vector<512xf32>
    %5 = vector.multi_reduction <add>, %3, %cst [0] : vector<8x512xf32> to vector<512xf32>
    %6 = vector.shape_cast %5 : vector<512xf32> to vector<1x512xf32>
    %7 = arith.addf %4, %6 : vector<1x512xf32>
    %c0_4 = arith.constant 0 : index
    %c0_5 = arith.constant 0 : index
    %8 = vector.load %arg3[%c0_4, %c0_5] : memref<1x512xf32, #tpu.memory_space<vmem>>, vector<1x512xf32>
    tpu.vector_store %arg3[%c0_4, %c0_5], %7 {strides = array<i32>} : memref<1x512xf32, #tpu.memory_space<vmem>>, vector<1x512xf32>,
    %c0_6 = arith.constant 0 : index
    %c0_7 = arith.constant 0 : index
    %9 = vector.load %arg4[%c0_6, %c0_7] : memref<1x512xf32, #tpu.memory_space<vmem>>, vector<1x512xf32>
    %10 = arith.mulf %3, %3 : vector<8x512xf32>
    %cst_8 = arith.constant dense<0.000000e+00> : vector<512xf32>
    %11 = vector.multi_reduction <add>, %10, %cst_8 [0] : vector<8x512xf32> to vector<512xf32>
    %12 = vector.shape_cast %11 : vector<512xf32> to vector<1x512xf32>
    %13 = arith.addf %9, %12 : vector<1x512xf32>
    %c0_9 = arith.constant 0 : index
    %c0_10 = arith.constant 0 : index
    %14 = vector.load %arg4[%c0_9, %c0_10] : memref<1x512xf32, #tpu.memory_space<vmem>>, vector<1x512xf32>
    tpu.vector_store %arg4[%c0_9, %c0_10], %13 {strides = array<i32>} : memref<1x512xf32, #tpu.memory_space<vmem>>, vector<1x512xf32>,
    return
  }
  func.func @transform_0(%arg0: i32, %arg1: i32) -> (i32, i32) {
    %c0_i32 = arith.constant 0 : i32
    return %arg1, %arg0 : i32, i32
  }
  func.func @transform_1(%arg0: i32, %arg1: i32) -> (i32, i32) {
    %c0_i32 = arith.constant 0 : i32
    %c0_i32_0 = arith.constant 0 : i32
    return %c0_i32, %arg0 : i32, i32
  }
  func.func @transform_2(%arg0: i32, %arg1: i32) -> (i32, i32) {
    %c0_i32 = arith.constant 0 : i32
    %c0_i32_0 = arith.constant 0 : i32
    return %c0_i32, %arg0 : i32, i32
  }
}

module attributes {stable_mosaic.version = 11 : i64} {
  func.func @_bn_apply_kernel(%arg0: i32, %arg1: i32, %arg2: memref<8x512xf32, #tpu.memory_space<vmem>>, %arg3: memref<1x512xf32, #tpu.memory_space<vmem>>, %arg4: memref<1x512xf32, #tpu.memory_space<vmem>>, %arg5: memref<8x512xf32, #tpu.memory_space<vmem>>) attributes {dimension_semantics = [#tpu.dimension_semantics<parallel>, #tpu.dimension_semantics<parallel>], iteration_bounds = array<i64: 1, 2>, scalar_prefetch = 0 : i64, scratch_operands = 0 : i64, tpu.core_type = #tpu.core_type<tc>, window_params = [{transform_indices = @transform_0, window_bounds = array<i64: 8, 512>}, {transform_indices = @transform_1, window_bounds = array<i64: 1, 512>}, {transform_indices = @transform_2, window_bounds = array<i64: 1, 512>}, {transform_indices = @transform_3, window_bounds = array<i64: 8, 512>}]} {
    %c0 = arith.constant 0 : index
    %c0_0 = arith.constant 0 : index
    %0 = vector.load %arg2[%c0, %c0_0] : memref<8x512xf32, #tpu.memory_space<vmem>>, vector<8x512xf32>
    %c0_1 = arith.constant 0 : index
    %c0_2 = arith.constant 0 : index
    %1 = vector.load %arg3[%c0_1, %c0_2] : memref<1x512xf32, #tpu.memory_space<vmem>>, vector<1x512xf32>
    %2 = vector.broadcast %1 : vector<1x512xf32> to vector<8x512xf32>
    %3 = arith.mulf %0, %2 : vector<8x512xf32>
    %c0_3 = arith.constant 0 : index
    %c0_4 = arith.constant 0 : index
    %4 = vector.load %arg4[%c0_3, %c0_4] : memref<1x512xf32, #tpu.memory_space<vmem>>, vector<1x512xf32>
    %5 = vector.broadcast %4 : vector<1x512xf32> to vector<8x512xf32>
    %6 = arith.addf %3, %5 : vector<8x512xf32>
    %c0_5 = arith.constant 0 : index
    %c0_6 = arith.constant 0 : index
    %7 = vector.load %arg5[%c0_5, %c0_6] : memref<8x512xf32, #tpu.memory_space<vmem>>, vector<8x512xf32>
    tpu.vector_store %arg5[%c0_5, %c0_6], %6 {strides = array<i32>} : memref<8x512xf32, #tpu.memory_space<vmem>>, vector<8x512xf32>,
    return
  }
  func.func @transform_0(%arg0: i32, %arg1: i32) -> (i32, i32) {
    %c0_i32 = arith.constant 0 : i32
    return %arg0, %arg1 : i32, i32
  }
  func.func @transform_1(%arg0: i32, %arg1: i32) -> (i32, i32) {
    %c0_i32 = arith.constant 0 : i32
    %c0_i32_0 = arith.constant 0 : i32
    return %c0_i32, %arg1 : i32, i32
  }
  func.func @transform_2(%arg0: i32, %arg1: i32) -> (i32, i32) {
    %c0_i32 = arith.constant 0 : i32
    %c0_i32_0 = arith.constant 0 : i32
    return %c0_i32, %arg1 : i32, i32
  }
  func.func @transform_3(%arg0: i32, %arg1: i32) -> (i32, i32) {
    %c0_i32 = arith.constant 0 : i32
    return %arg0, %arg1 : i32, i32
  }
}

module attributes {stable_mosaic.version = 11 : i64} {
  func.func @_matmul_bias_act_kernel(%arg0: i32, %arg1: i32, %arg2: i32, %arg3: memref<8x512xf32, #tpu.memory_space<vmem>>, %arg4: memref<512x512xf32, #tpu.memory_space<vmem>>, %arg5: memref<1x512xf32, #tpu.memory_space<vmem>>, %arg6: memref<8x512xf32, #tpu.memory_space<vmem>>, %arg7: memref<8x512xf32, #tpu.memory_space<vmem>>) attributes {dimension_semantics = [#tpu.dimension_semantics<parallel>, #tpu.dimension_semantics<parallel>, #tpu.dimension_semantics<arbitrary>], iteration_bounds = array<i64: 1, 2, 2>, scalar_prefetch = 0 : i64, scratch_operands = 1 : i64, tpu.core_type = #tpu.core_type<tc>, window_params = [{transform_indices = @transform_0, window_bounds = array<i64: 8, 512>}, {transform_indices = @transform_1, window_bounds = array<i64: 512, 512>}, {transform_indices = @transform_2, window_bounds = array<i64: 1, 512>}, {transform_indices = @transform_3, window_bounds = array<i64: 8, 512>}]} {
    %c0_i32 = arith.constant 0 : i32
    %0 = arith.cmpi eq, %arg2, %c0_i32 : i32
    %1 = arith.extui %0 : i1 to i32
    %c0_i32_0 = arith.constant 0 : i32
    %2 = arith.cmpi ne, %1, %c0_i32_0 : i32
    scf.if %2 {
      %cst_9 = arith.constant 0.000000e+00 : f32
      %12 = vector.broadcast %cst_9 : f32 to vector<8x512xf32>
      %c0_10 = arith.constant 0 : index
      %c0_11 = arith.constant 0 : index
      %13 = vector.load %arg7[%c0_10, %c0_11] : memref<8x512xf32, #tpu.memory_space<vmem>>, vector<8x512xf32>
      tpu.vector_store %arg7[%c0_10, %c0_11], %12 {strides = array<i32>} : memref<8x512xf32, #tpu.memory_space<vmem>>, vector<8x512xf32>,
    } else {
    }
    %c0 = arith.constant 0 : index
    %c0_1 = arith.constant 0 : index
    %3 = vector.load %arg7[%c0, %c0_1] : memref<8x512xf32, #tpu.memory_space<vmem>>, vector<8x512xf32>
    %c0_2 = arith.constant 0 : index
    %c0_3 = arith.constant 0 : index
    %4 = vector.load %arg3[%c0_2, %c0_3] : memref<8x512xf32, #tpu.memory_space<vmem>>, vector<8x512xf32>
    %c0_4 = arith.constant 0 : index
    %c0_5 = arith.constant 0 : index
    %5 = vector.load %arg4[%c0_4, %c0_5] : memref<512x512xf32, #tpu.memory_space<vmem>>, vector<512x512xf32>
    %cst = arith.constant dense<0.000000e+00> : vector<8x512xf32>
    %6 = tpu.matmul %4, %5, %cst {dimension_numbers = #tpu.dot_dimension_numbers<[1], [0], [0], [1], [0, 0, 1, 1], [], []>} : vector<8x512xf32>, vector<512x512xf32>, vector<8x512xf32> -> vector<8x512xf32>
    %7 = arith.addf %3, %6 : vector<8x512xf32>
    %c0_6 = arith.constant 0 : index
    %c0_7 = arith.constant 0 : index
    %8 = vector.load %arg7[%c0_6, %c0_7] : memref<8x512xf32, #tpu.memory_space<vmem>>, vector<8x512xf32>
    tpu.vector_store %arg7[%c0_6, %c0_7], %7 {strides = array<i32>} : memref<8x512xf32, #tpu.memory_space<vmem>>, vector<8x512xf32>,
    %c1_i32 = arith.constant 1 : i32
    %9 = arith.cmpi eq, %arg2, %c1_i32 : i32
    %10 = arith.extui %9 : i1 to i32
    %c0_i32_8 = arith.constant 0 : i32
    %11 = arith.cmpi ne, %10, %c0_i32_8 : i32
    scf.if %11 {
      %c0_9 = arith.constant 0 : index
      %c0_10 = arith.constant 0 : index
      %12 = vector.load %arg7[%c0_9, %c0_10] : memref<8x512xf32, #tpu.memory_space<vmem>>, vector<8x512xf32>
      %c0_11 = arith.constant 0 : index
      %c0_12 = arith.constant 0 : index
      %13 = vector.load %arg5[%c0_11, %c0_12] : memref<1x512xf32, #tpu.memory_space<vmem>>, vector<1x512xf32>
      %14 = vector.broadcast %13 : vector<1x512xf32> to vector<8x512xf32>
      %15 = arith.addf %12, %14 : vector<8x512xf32>
      %cst_13 = arith.constant 0.000000e+00 : f32
      %16 = vector.broadcast %cst_13 : f32 to vector<8x512xf32>
      %17 = arith.cmpf ogt, %15, %16 : vector<8x512xf32>
      %cst_14 = arith.constant 0.00999999977 : f32
      %18 = vector.broadcast %cst_14 : f32 to vector<8x512xf32>
      %19 = arith.mulf %18, %15 : vector<8x512xf32>
      %20 = arith.select %17, %15, %19 : vector<8x512xi1>, vector<8x512xf32>
      %c0_15 = arith.constant 0 : index
      %c0_16 = arith.constant 0 : index
      %21 = vector.load %arg6[%c0_15, %c0_16] : memref<8x512xf32, #tpu.memory_space<vmem>>, vector<8x512xf32>
      tpu.vector_store %arg6[%c0_15, %c0_16], %20 {strides = array<i32>} : memref<8x512xf32, #tpu.memory_space<vmem>>, vector<8x512xf32>,
    } else {
    }
    return
  }
  func.func @transform_0(%arg0: i32, %arg1: i32, %arg2: i32) -> (i32, i32) {
    %c0_i32 = arith.constant 0 : i32
    return %arg0, %arg2 : i32, i32
  }
  func.func @transform_1(%arg0: i32, %arg1: i32, %arg2: i32) -> (i32, i32) {
    %c0_i32 = arith.constant 0 : i32
    return %arg2, %arg1 : i32, i32
  }
  func.func @transform_2(%arg0: i32, %arg1: i32, %arg2: i32) -> (i32, i32) {
    %c0_i32 = arith.constant 0 : i32
    %c0_i32_0 = arith.constant 0 : i32
    return %c0_i32, %arg1 : i32, i32
  }
  func.func @transform_3(%arg0: i32, %arg1: i32, %arg2: i32) -> (i32, i32) {
    %c0_i32 = arith.constant 0 : i32
    return %arg0, %arg1 : i32, i32
  }
}

module attributes {stable_mosaic.version = 11 : i64} {
  func.func @_matmul_bias_act_kernel(%arg0: i32, %arg1: i32, %arg2: i32, %arg3: memref<8x512xf32, #tpu.memory_space<vmem>>, %arg4: memref<512x128xf32, #tpu.memory_space<vmem>>, %arg5: memref<1x128xf32, #tpu.memory_space<vmem>>, %arg6: memref<8x128xf32, #tpu.memory_space<vmem>>, %arg7: memref<8x128xf32, #tpu.memory_space<vmem>>) attributes {dimension_semantics = [#tpu.dimension_semantics<parallel>, #tpu.dimension_semantics<parallel>, #tpu.dimension_semantics<arbitrary>], iteration_bounds = array<i64: 1, 1, 2>, scalar_prefetch = 0 : i64, scratch_operands = 1 : i64, tpu.core_type = #tpu.core_type<tc>, window_params = [{transform_indices = @transform_0, window_bounds = array<i64: 8, 512>}, {transform_indices = @transform_1, window_bounds = array<i64: 512, 128>}, {transform_indices = @transform_2, window_bounds = array<i64: 1, 128>}, {transform_indices = @transform_3, window_bounds = array<i64: 8, 128>}]} {
    %c0_i32 = arith.constant 0 : i32
    %0 = arith.cmpi eq, %arg2, %c0_i32 : i32
    %1 = arith.extui %0 : i1 to i32
    %c0_i32_0 = arith.constant 0 : i32
    %2 = arith.cmpi ne, %1, %c0_i32_0 : i32
    scf.if %2 {
      %cst_9 = arith.constant 0.000000e+00 : f32
      %12 = vector.broadcast %cst_9 : f32 to vector<8x128xf32>
      %c0_10 = arith.constant 0 : index
      %c0_11 = arith.constant 0 : index
      %13 = vector.load %arg7[%c0_10, %c0_11] : memref<8x128xf32, #tpu.memory_space<vmem>>, vector<8x128xf32>
      tpu.vector_store %arg7[%c0_10, %c0_11], %12 {strides = array<i32>} : memref<8x128xf32, #tpu.memory_space<vmem>>, vector<8x128xf32>,
    } else {
    }
    %c0 = arith.constant 0 : index
    %c0_1 = arith.constant 0 : index
    %3 = vector.load %arg7[%c0, %c0_1] : memref<8x128xf32, #tpu.memory_space<vmem>>, vector<8x128xf32>
    %c0_2 = arith.constant 0 : index
    %c0_3 = arith.constant 0 : index
    %4 = vector.load %arg3[%c0_2, %c0_3] : memref<8x512xf32, #tpu.memory_space<vmem>>, vector<8x512xf32>
    %c0_4 = arith.constant 0 : index
    %c0_5 = arith.constant 0 : index
    %5 = vector.load %arg4[%c0_4, %c0_5] : memref<512x128xf32, #tpu.memory_space<vmem>>, vector<512x128xf32>
    %cst = arith.constant dense<0.000000e+00> : vector<8x128xf32>
    %6 = tpu.matmul %4, %5, %cst {dimension_numbers = #tpu.dot_dimension_numbers<[1], [0], [0], [1], [0, 0, 1, 1], [], []>} : vector<8x512xf32>, vector<512x128xf32>, vector<8x128xf32> -> vector<8x128xf32>
    %7 = arith.addf %3, %6 : vector<8x128xf32>
    %c0_6 = arith.constant 0 : index
    %c0_7 = arith.constant 0 : index
    %8 = vector.load %arg7[%c0_6, %c0_7] : memref<8x128xf32, #tpu.memory_space<vmem>>, vector<8x128xf32>
    tpu.vector_store %arg7[%c0_6, %c0_7], %7 {strides = array<i32>} : memref<8x128xf32, #tpu.memory_space<vmem>>, vector<8x128xf32>,
    %c1_i32 = arith.constant 1 : i32
    %9 = arith.cmpi eq, %arg2, %c1_i32 : i32
    %10 = arith.extui %9 : i1 to i32
    %c0_i32_8 = arith.constant 0 : i32
    %11 = arith.cmpi ne, %10, %c0_i32_8 : i32
    scf.if %11 {
      %c0_9 = arith.constant 0 : index
      %c0_10 = arith.constant 0 : index
      %12 = vector.load %arg7[%c0_9, %c0_10] : memref<8x128xf32, #tpu.memory_space<vmem>>, vector<8x128xf32>
      %c0_11 = arith.constant 0 : index
      %c0_12 = arith.constant 0 : index
      %13 = vector.load %arg5[%c0_11, %c0_12] : memref<1x128xf32, #tpu.memory_space<vmem>>, vector<1x128xf32>
      %14 = vector.broadcast %13 : vector<1x128xf32> to vector<8x128xf32>
      %15 = arith.addf %12, %14 : vector<8x128xf32>
      %cst_13 = arith.constant 0.000000e+00 : f32
      %16 = vector.broadcast %cst_13 : f32 to vector<8x128xf32>
      %17 = arith.cmpf ogt, %15, %16 : vector<8x128xf32>
      %cst_14 = arith.constant 0.00999999977 : f32
      %18 = vector.broadcast %cst_14 : f32 to vector<8x128xf32>
      %19 = arith.mulf %18, %15 : vector<8x128xf32>
      %20 = arith.select %17, %15, %19 : vector<8x128xi1>, vector<8x128xf32>
      %c0_15 = arith.constant 0 : index
      %c0_16 = arith.constant 0 : index
      %21 = vector.load %arg6[%c0_15, %c0_16] : memref<8x128xf32, #tpu.memory_space<vmem>>, vector<8x128xf32>
      tpu.vector_store %arg6[%c0_15, %c0_16], %20 {strides = array<i32>} : memref<8x128xf32, #tpu.memory_space<vmem>>, vector<8x128xf32>,
    } else {
    }
    return
  }
  func.func @transform_0(%arg0: i32, %arg1: i32, %arg2: i32) -> (i32, i32) {
    %c0_i32 = arith.constant 0 : i32
    return %arg0, %arg2 : i32, i32
  }
  func.func @transform_1(%arg0: i32, %arg1: i32, %arg2: i32) -> (i32, i32) {
    %c0_i32 = arith.constant 0 : i32
    return %arg2, %arg1 : i32, i32
  }
  func.func @transform_2(%arg0: i32, %arg1: i32, %arg2: i32) -> (i32, i32) {
    %c0_i32 = arith.constant 0 : i32
    %c0_i32_0 = arith.constant 0 : i32
    return %c0_i32, %arg1 : i32, i32
  }
  func.func @transform_3(%arg0: i32, %arg1: i32, %arg2: i32) -> (i32, i32) {
    %c0_i32 = arith.constant 0 : i32
    return %arg0, %arg1 : i32, i32
  }
}

module attributes {stable_mosaic.version = 11 : i64} {
  func.func @_bn_apply_kernel(%arg0: i32, %arg1: i32, %arg2: memref<8x128xf32, #tpu.memory_space<vmem>>, %arg3: memref<1x128xf32, #tpu.memory_space<vmem>>, %arg4: memref<1x128xf32, #tpu.memory_space<vmem>>, %arg5: memref<8x128xf32, #tpu.memory_space<vmem>>) attributes {dimension_semantics = [#tpu.dimension_semantics<parallel>, #tpu.dimension_semantics<parallel>], iteration_bounds = array<i64: 1, 1>, scalar_prefetch = 0 : i64, scratch_operands = 0 : i64, tpu.core_type = #tpu.core_type<tc>, window_params = [{transform_indices = @transform_0, window_bounds = array<i64: 8, 128>}, {transform_indices = @transform_1, window_bounds = array<i64: 1, 128>}, {transform_indices = @transform_2, window_bounds = array<i64: 1, 128>}, {transform_indices = @transform_3, window_bounds = array<i64: 8, 128>}]} {
    %c0 = arith.constant 0 : index
    %c0_0 = arith.constant 0 : index
    %0 = vector.load %arg2[%c0, %c0_0] : memref<8x128xf32, #tpu.memory_space<vmem>>, vector<8x128xf32>
    %c0_1 = arith.constant 0 : index
    %c0_2 = arith.constant 0 : index
    %1 = vector.load %arg3[%c0_1, %c0_2] : memref<1x128xf32, #tpu.memory_space<vmem>>, vector<1x128xf32>
    %2 = vector.broadcast %1 : vector<1x128xf32> to vector<8x128xf32>
    %3 = arith.mulf %0, %2 : vector<8x128xf32>
    %c0_3 = arith.constant 0 : index
    %c0_4 = arith.constant 0 : index
    %4 = vector.load %arg4[%c0_3, %c0_4] : memref<1x128xf32, #tpu.memory_space<vmem>>, vector<1x128xf32>
    %5 = vector.broadcast %4 : vector<1x128xf32> to vector<8x128xf32>
    %6 = arith.addf %3, %5 : vector<8x128xf32>
    %c0_5 = arith.constant 0 : index
    %c0_6 = arith.constant 0 : index
    %7 = vector.load %arg5[%c0_5, %c0_6] : memref<8x128xf32, #tpu.memory_space<vmem>>, vector<8x128xf32>
    tpu.vector_store %arg5[%c0_5, %c0_6], %6 {strides = array<i32>} : memref<8x128xf32, #tpu.memory_space<vmem>>, vector<8x128xf32>,
    return
  }
  func.func @transform_0(%arg0: i32, %arg1: i32) -> (i32, i32) {
    %c0_i32 = arith.constant 0 : i32
    return %arg0, %arg1 : i32, i32
  }
  func.func @transform_1(%arg0: i32, %arg1: i32) -> (i32, i32) {
    %c0_i32 = arith.constant 0 : i32
    %c0_i32_0 = arith.constant 0 : i32
    return %c0_i32, %arg1 : i32, i32
  }
  func.func @transform_2(%arg0: i32, %arg1: i32) -> (i32, i32) {
    %c0_i32 = arith.constant 0 : i32
    %c0_i32_0 = arith.constant 0 : i32
    return %c0_i32, %arg1 : i32, i32
  }
  func.func @transform_3(%arg0: i32, %arg1: i32) -> (i32, i32) {
    %c0_i32 = arith.constant 0 : i32
    return %arg0, %arg1 : i32, i32
  }
}

module attributes {stable_mosaic.version = 11 : i64} {
  func.func @_bn_stats_kernel(%arg0: i32, %arg1: i32, %arg2: memref<8x128xf32, #tpu.memory_space<vmem>>, %arg3: memref<1x128xf32, #tpu.memory_space<vmem>>, %arg4: memref<1x128xf32, #tpu.memory_space<vmem>>) attributes {dimension_semantics = [#tpu.dimension_semantics<parallel>, #tpu.dimension_semantics<arbitrary>], iteration_bounds = array<i64: 1, 1>, scalar_prefetch = 0 : i64, scratch_operands = 0 : i64, tpu.core_type = #tpu.core_type<tc>, window_params = [{transform_indices = @transform_0, window_bounds = array<i64: 8, 128>}, {transform_indices = @transform_1, window_bounds = array<i64: 1, 128>}, {transform_indices = @transform_2, window_bounds = array<i64: 1, 128>}]} {
    %c0_i32 = arith.constant 0 : i32
    %0 = arith.cmpi eq, %arg1, %c0_i32 : i32
    %1 = arith.extui %0 : i1 to i32
    %c0_i32_0 = arith.constant 0 : i32
    %2 = arith.cmpi ne, %1, %c0_i32_0 : i32
    scf.if %2 {
      %cst_11 = arith.constant 0.000000e+00 : f32
      %15 = vector.broadcast %cst_11 : f32 to vector<1x128xf32>
      %c0_12 = arith.constant 0 : index
      %c0_13 = arith.constant 0 : index
      %16 = vector.load %arg3[%c0_12, %c0_13] : memref<1x128xf32, #tpu.memory_space<vmem>>, vector<1x128xf32>
      tpu.vector_store %arg3[%c0_12, %c0_13], %15 {strides = array<i32>} : memref<1x128xf32, #tpu.memory_space<vmem>>, vector<1x128xf32>,
      %cst_14 = arith.constant 0.000000e+00 : f32
      %17 = vector.broadcast %cst_14 : f32 to vector<1x128xf32>
      %c0_15 = arith.constant 0 : index
      %c0_16 = arith.constant 0 : index
      %18 = vector.load %arg4[%c0_15, %c0_16] : memref<1x128xf32, #tpu.memory_space<vmem>>, vector<1x128xf32>
      tpu.vector_store %arg4[%c0_15, %c0_16], %17 {strides = array<i32>} : memref<1x128xf32, #tpu.memory_space<vmem>>, vector<1x128xf32>,
    } else {
    }
    %c0 = arith.constant 0 : index
    %c0_1 = arith.constant 0 : index
    %3 = vector.load %arg2[%c0, %c0_1] : memref<8x128xf32, #tpu.memory_space<vmem>>, vector<8x128xf32>
    %c0_2 = arith.constant 0 : index
    %c0_3 = arith.constant 0 : index
    %4 = vector.load %arg3[%c0_2, %c0_3] : memref<1x128xf32, #tpu.memory_space<vmem>>, vector<1x128xf32>
    %cst = arith.constant dense<0.000000e+00> : vector<128xf32>
    %5 = vector.multi_reduction <add>, %3, %cst [0] : vector<8x128xf32> to vector<128xf32>
    %6 = vector.shape_cast %5 : vector<128xf32> to vector<1x128xf32>
    %7 = arith.addf %4, %6 : vector<1x128xf32>
    %c0_4 = arith.constant 0 : index
    %c0_5 = arith.constant 0 : index
    %8 = vector.load %arg3[%c0_4, %c0_5] : memref<1x128xf32, #tpu.memory_space<vmem>>, vector<1x128xf32>
    tpu.vector_store %arg3[%c0_4, %c0_5], %7 {strides = array<i32>} : memref<1x128xf32, #tpu.memory_space<vmem>>, vector<1x128xf32>,
    %c0_6 = arith.constant 0 : index
    %c0_7 = arith.constant 0 : index
    %9 = vector.load %arg4[%c0_6, %c0_7] : memref<1x128xf32, #tpu.memory_space<vmem>>, vector<1x128xf32>
    %10 = arith.mulf %3, %3 : vector<8x128xf32>
    %cst_8 = arith.constant dense<0.000000e+00> : vector<128xf32>
    %11 = vector.multi_reduction <add>, %10, %cst_8 [0] : vector<8x128xf32> to vector<128xf32>
    %12 = vector.shape_cast %11 : vector<128xf32> to vector<1x128xf32>
    %13 = arith.addf %9, %12 : vector<1x128xf32>
    %c0_9 = arith.constant 0 : index
    %c0_10 = arith.constant 0 : index
    %14 = vector.load %arg4[%c0_9, %c0_10] : memref<1x128xf32, #tpu.memory_space<vmem>>, vector<1x128xf32>
    tpu.vector_store %arg4[%c0_9, %c0_10], %13 {strides = array<i32>} : memref<1x128xf32, #tpu.memory_space<vmem>>, vector<1x128xf32>,
    return
  }
  func.func @transform_0(%arg0: i32, %arg1: i32) -> (i32, i32) {
    %c0_i32 = arith.constant 0 : i32
    return %arg1, %arg0 : i32, i32
  }
  func.func @transform_1(%arg0: i32, %arg1: i32) -> (i32, i32) {
    %c0_i32 = arith.constant 0 : i32
    %c0_i32_0 = arith.constant 0 : i32
    return %c0_i32, %arg0 : i32, i32
  }
  func.func @transform_2(%arg0: i32, %arg1: i32) -> (i32, i32) {
    %c0_i32 = arith.constant 0 : i32
    %c0_i32_0 = arith.constant 0 : i32
    return %c0_i32, %arg0 : i32, i32
  }
}

module attributes {stable_mosaic.version = 11 : i64} {
  func.func @_matmul_bias_act_kernel(%arg0: i32, %arg1: i32, %arg2: i32, %arg3: memref<56x128xf32, #tpu.memory_space<vmem>>, %arg4: memref<128x128xf32, #tpu.memory_space<vmem>>, %arg5: memref<1x128xf32, #tpu.memory_space<vmem>>, %arg6: memref<56x128xf32, #tpu.memory_space<vmem>>, %arg7: memref<56x128xf32, #tpu.memory_space<vmem>>) attributes {dimension_semantics = [#tpu.dimension_semantics<parallel>, #tpu.dimension_semantics<parallel>, #tpu.dimension_semantics<arbitrary>], iteration_bounds = array<i64: 1, 1, 3>, scalar_prefetch = 0 : i64, scratch_operands = 1 : i64, tpu.core_type = #tpu.core_type<tc>, window_params = [{transform_indices = @transform_0, window_bounds = array<i64: 56, 128>}, {transform_indices = @transform_1, window_bounds = array<i64: 128, 128>}, {transform_indices = @transform_2, window_bounds = array<i64: 1, 128>}, {transform_indices = @transform_3, window_bounds = array<i64: 56, 128>}]} {
    %c0_i32 = arith.constant 0 : i32
    %0 = arith.cmpi eq, %arg2, %c0_i32 : i32
    %1 = arith.extui %0 : i1 to i32
    %c0_i32_0 = arith.constant 0 : i32
    %2 = arith.cmpi ne, %1, %c0_i32_0 : i32
    scf.if %2 {
      %cst_9 = arith.constant 0.000000e+00 : f32
      %12 = vector.broadcast %cst_9 : f32 to vector<56x128xf32>
      %c0_10 = arith.constant 0 : index
      %c0_11 = arith.constant 0 : index
      %13 = vector.load %arg7[%c0_10, %c0_11] : memref<56x128xf32, #tpu.memory_space<vmem>>, vector<56x128xf32>
      tpu.vector_store %arg7[%c0_10, %c0_11], %12 {strides = array<i32>} : memref<56x128xf32, #tpu.memory_space<vmem>>, vector<56x128xf32>,
    } else {
    }
    %c0 = arith.constant 0 : index
    %c0_1 = arith.constant 0 : index
    %3 = vector.load %arg7[%c0, %c0_1] : memref<56x128xf32, #tpu.memory_space<vmem>>, vector<56x128xf32>
    %c0_2 = arith.constant 0 : index
    %c0_3 = arith.constant 0 : index
    %4 = vector.load %arg3[%c0_2, %c0_3] : memref<56x128xf32, #tpu.memory_space<vmem>>, vector<56x128xf32>
    %c0_4 = arith.constant 0 : index
    %c0_5 = arith.constant 0 : index
    %5 = vector.load %arg4[%c0_4, %c0_5] : memref<128x128xf32, #tpu.memory_space<vmem>>, vector<128x128xf32>
    %cst = arith.constant dense<0.000000e+00> : vector<56x128xf32>
    %6 = tpu.matmul %4, %5, %cst {dimension_numbers = #tpu.dot_dimension_numbers<[1], [0], [0], [1], [0, 0, 1, 1], [], []>} : vector<56x128xf32>, vector<128x128xf32>, vector<56x128xf32> -> vector<56x128xf32>
    %7 = arith.addf %3, %6 : vector<56x128xf32>
    %c0_6 = arith.constant 0 : index
    %c0_7 = arith.constant 0 : index
    %8 = vector.load %arg7[%c0_6, %c0_7] : memref<56x128xf32, #tpu.memory_space<vmem>>, vector<56x128xf32>
    tpu.vector_store %arg7[%c0_6, %c0_7], %7 {strides = array<i32>} : memref<56x128xf32, #tpu.memory_space<vmem>>, vector<56x128xf32>,
    %c2_i32 = arith.constant 2 : i32
    %9 = arith.cmpi eq, %arg2, %c2_i32 : i32
    %10 = arith.extui %9 : i1 to i32
    %c0_i32_8 = arith.constant 0 : i32
    %11 = arith.cmpi ne, %10, %c0_i32_8 : i32
    scf.if %11 {
      %c0_9 = arith.constant 0 : index
      %c0_10 = arith.constant 0 : index
      %12 = vector.load %arg7[%c0_9, %c0_10] : memref<56x128xf32, #tpu.memory_space<vmem>>, vector<56x128xf32>
      %c0_11 = arith.constant 0 : index
      %c0_12 = arith.constant 0 : index
      %13 = vector.load %arg5[%c0_11, %c0_12] : memref<1x128xf32, #tpu.memory_space<vmem>>, vector<1x128xf32>
      %14 = vector.broadcast %13 : vector<1x128xf32> to vector<56x128xf32>
      %15 = arith.addf %12, %14 : vector<56x128xf32>
      %cst_13 = arith.constant 0.000000e+00 : f32
      %16 = vector.broadcast %cst_13 : f32 to vector<56x128xf32>
      %17 = arith.cmpf ogt, %15, %16 : vector<56x128xf32>
      %cst_14 = arith.constant 0.00999999977 : f32
      %18 = vector.broadcast %cst_14 : f32 to vector<56x128xf32>
      %19 = arith.mulf %18, %15 : vector<56x128xf32>
      %20 = arith.select %17, %15, %19 : vector<56x128xi1>, vector<56x128xf32>
      %c0_15 = arith.constant 0 : index
      %c0_16 = arith.constant 0 : index
      %21 = vector.load %arg6[%c0_15, %c0_16] : memref<56x128xf32, #tpu.memory_space<vmem>>, vector<56x128xf32>
      tpu.vector_store %arg6[%c0_15, %c0_16], %20 {strides = array<i32>} : memref<56x128xf32, #tpu.memory_space<vmem>>, vector<56x128xf32>,
    } else {
    }
    return
  }
  func.func @transform_0(%arg0: i32, %arg1: i32, %arg2: i32) -> (i32, i32) {
    %c0_i32 = arith.constant 0 : i32
    return %arg0, %arg2 : i32, i32
  }
  func.func @transform_1(%arg0: i32, %arg1: i32, %arg2: i32) -> (i32, i32) {
    %c0_i32 = arith.constant 0 : i32
    return %arg2, %arg1 : i32, i32
  }
  func.func @transform_2(%arg0: i32, %arg1: i32, %arg2: i32) -> (i32, i32) {
    %c0_i32 = arith.constant 0 : i32
    %c0_i32_0 = arith.constant 0 : i32
    return %c0_i32, %arg1 : i32, i32
  }
  func.func @transform_3(%arg0: i32, %arg1: i32, %arg2: i32) -> (i32, i32) {
    %c0_i32 = arith.constant 0 : i32
    return %arg0, %arg1 : i32, i32
  }
}

module attributes {stable_mosaic.version = 11 : i64} {
  func.func @_bn_apply_kernel(%arg0: i32, %arg1: i32, %arg2: memref<128x128xf32, #tpu.memory_space<vmem>>, %arg3: memref<1x128xf32, #tpu.memory_space<vmem>>, %arg4: memref<1x128xf32, #tpu.memory_space<vmem>>, %arg5: memref<128x128xf32, #tpu.memory_space<vmem>>) attributes {dimension_semantics = [#tpu.dimension_semantics<parallel>, #tpu.dimension_semantics<parallel>], iteration_bounds = array<i64: 1, 1>, scalar_prefetch = 0 : i64, scratch_operands = 0 : i64, tpu.core_type = #tpu.core_type<tc>, window_params = [{transform_indices = @transform_0, window_bounds = array<i64: 128, 128>}, {transform_indices = @transform_1, window_bounds = array<i64: 1, 128>}, {transform_indices = @transform_2, window_bounds = array<i64: 1, 128>}, {transform_indices = @transform_3, window_bounds = array<i64: 128, 128>}]} {
    %c0 = arith.constant 0 : index
    %c0_0 = arith.constant 0 : index
    %0 = vector.load %arg2[%c0, %c0_0] : memref<128x128xf32, #tpu.memory_space<vmem>>, vector<128x128xf32>
    %c0_1 = arith.constant 0 : index
    %c0_2 = arith.constant 0 : index
    %1 = vector.load %arg3[%c0_1, %c0_2] : memref<1x128xf32, #tpu.memory_space<vmem>>, vector<1x128xf32>
    %2 = vector.broadcast %1 : vector<1x128xf32> to vector<128x128xf32>
    %3 = arith.mulf %0, %2 : vector<128x128xf32>
    %c0_3 = arith.constant 0 : index
    %c0_4 = arith.constant 0 : index
    %4 = vector.load %arg4[%c0_3, %c0_4] : memref<1x128xf32, #tpu.memory_space<vmem>>, vector<1x128xf32>
    %5 = vector.broadcast %4 : vector<1x128xf32> to vector<128x128xf32>
    %6 = arith.addf %3, %5 : vector<128x128xf32>
    %c0_5 = arith.constant 0 : index
    %c0_6 = arith.constant 0 : index
    %7 = vector.load %arg5[%c0_5, %c0_6] : memref<128x128xf32, #tpu.memory_space<vmem>>, vector<128x128xf32>
    tpu.vector_store %arg5[%c0_5, %c0_6], %6 {strides = array<i32>} : memref<128x128xf32, #tpu.memory_space<vmem>>, vector<128x128xf32>,
    return
  }
  func.func @transform_0(%arg0: i32, %arg1: i32) -> (i32, i32) {
    %c0_i32 = arith.constant 0 : i32
    return %arg0, %arg1 : i32, i32
  }
  func.func @transform_1(%arg0: i32, %arg1: i32) -> (i32, i32) {
    %c0_i32 = arith.constant 0 : i32
    %c0_i32_0 = arith.constant 0 : i32
    return %c0_i32, %arg1 : i32, i32
  }
  func.func @transform_2(%arg0: i32, %arg1: i32) -> (i32, i32) {
    %c0_i32 = arith.constant 0 : i32
    %c0_i32_0 = arith.constant 0 : i32
    return %c0_i32, %arg1 : i32, i32
  }
  func.func @transform_3(%arg0: i32, %arg1: i32) -> (i32, i32) {
    %c0_i32 = arith.constant 0 : i32
    return %arg0, %arg1 : i32, i32
  }
}

module attributes {stable_mosaic.version = 11 : i64} {
  func.func @_bn_stats_kernel(%arg0: i32, %arg1: i32, %arg2: memref<128x128xf32, #tpu.memory_space<vmem>>, %arg3: memref<1x128xf32, #tpu.memory_space<vmem>>, %arg4: memref<1x128xf32, #tpu.memory_space<vmem>>) attributes {dimension_semantics = [#tpu.dimension_semantics<parallel>, #tpu.dimension_semantics<arbitrary>], iteration_bounds = array<i64: 1, 1>, scalar_prefetch = 0 : i64, scratch_operands = 0 : i64, tpu.core_type = #tpu.core_type<tc>, window_params = [{transform_indices = @transform_0, window_bounds = array<i64: 128, 128>}, {transform_indices = @transform_1, window_bounds = array<i64: 1, 128>}, {transform_indices = @transform_2, window_bounds = array<i64: 1, 128>}]} {
    %c0_i32 = arith.constant 0 : i32
    %0 = arith.cmpi eq, %arg1, %c0_i32 : i32
    %1 = arith.extui %0 : i1 to i32
    %c0_i32_0 = arith.constant 0 : i32
    %2 = arith.cmpi ne, %1, %c0_i32_0 : i32
    scf.if %2 {
      %cst_11 = arith.constant 0.000000e+00 : f32
      %15 = vector.broadcast %cst_11 : f32 to vector<1x128xf32>
      %c0_12 = arith.constant 0 : index
      %c0_13 = arith.constant 0 : index
      %16 = vector.load %arg3[%c0_12, %c0_13] : memref<1x128xf32, #tpu.memory_space<vmem>>, vector<1x128xf32>
      tpu.vector_store %arg3[%c0_12, %c0_13], %15 {strides = array<i32>} : memref<1x128xf32, #tpu.memory_space<vmem>>, vector<1x128xf32>,
      %cst_14 = arith.constant 0.000000e+00 : f32
      %17 = vector.broadcast %cst_14 : f32 to vector<1x128xf32>
      %c0_15 = arith.constant 0 : index
      %c0_16 = arith.constant 0 : index
      %18 = vector.load %arg4[%c0_15, %c0_16] : memref<1x128xf32, #tpu.memory_space<vmem>>, vector<1x128xf32>
      tpu.vector_store %arg4[%c0_15, %c0_16], %17 {strides = array<i32>} : memref<1x128xf32, #tpu.memory_space<vmem>>, vector<1x128xf32>,
    } else {
    }
    %c0 = arith.constant 0 : index
    %c0_1 = arith.constant 0 : index
    %3 = vector.load %arg2[%c0, %c0_1] : memref<128x128xf32, #tpu.memory_space<vmem>>, vector<128x128xf32>
    %c0_2 = arith.constant 0 : index
    %c0_3 = arith.constant 0 : index
    %4 = vector.load %arg3[%c0_2, %c0_3] : memref<1x128xf32, #tpu.memory_space<vmem>>, vector<1x128xf32>
    %cst = arith.constant dense<0.000000e+00> : vector<128xf32>
    %5 = vector.multi_reduction <add>, %3, %cst [0] : vector<128x128xf32> to vector<128xf32>
    %6 = vector.shape_cast %5 : vector<128xf32> to vector<1x128xf32>
    %7 = arith.addf %4, %6 : vector<1x128xf32>
    %c0_4 = arith.constant 0 : index
    %c0_5 = arith.constant 0 : index
    %8 = vector.load %arg3[%c0_4, %c0_5] : memref<1x128xf32, #tpu.memory_space<vmem>>, vector<1x128xf32>
    tpu.vector_store %arg3[%c0_4, %c0_5], %7 {strides = array<i32>} : memref<1x128xf32, #tpu.memory_space<vmem>>, vector<1x128xf32>,
    %c0_6 = arith.constant 0 : index
    %c0_7 = arith.constant 0 : index
    %9 = vector.load %arg4[%c0_6, %c0_7] : memref<1x128xf32, #tpu.memory_space<vmem>>, vector<1x128xf32>
    %10 = arith.mulf %3, %3 : vector<128x128xf32>
    %cst_8 = arith.constant dense<0.000000e+00> : vector<128xf32>
    %11 = vector.multi_reduction <add>, %10, %cst_8 [0] : vector<128x128xf32> to vector<128xf32>
    %12 = vector.shape_cast %11 : vector<128xf32> to vector<1x128xf32>
    %13 = arith.addf %9, %12 : vector<1x128xf32>
    %c0_9 = arith.constant 0 : index
    %c0_10 = arith.constant 0 : index
    %14 = vector.load %arg4[%c0_9, %c0_10] : memref<1x128xf32, #tpu.memory_space<vmem>>, vector<1x128xf32>
    tpu.vector_store %arg4[%c0_9, %c0_10], %13 {strides = array<i32>} : memref<1x128xf32, #tpu.memory_space<vmem>>, vector<1x128xf32>,
    return
  }
  func.func @transform_0(%arg0: i32, %arg1: i32) -> (i32, i32) {
    %c0_i32 = arith.constant 0 : i32
    return %arg1, %arg0 : i32, i32
  }
  func.func @transform_1(%arg0: i32, %arg1: i32) -> (i32, i32) {
    %c0_i32 = arith.constant 0 : i32
    %c0_i32_0 = arith.constant 0 : i32
    return %c0_i32, %arg0 : i32, i32
  }
  func.func @transform_2(%arg0: i32, %arg1: i32) -> (i32, i32) {
    %c0_i32 = arith.constant 0 : i32
    %c0_i32_0 = arith.constant 0 : i32
    return %c0_i32, %arg0 : i32, i32
  }
}

module attributes {stable_mosaic.version = 11 : i64} {
  func.func @_matmul_bias_act_kernel(%arg0: i32, %arg1: i32, %arg2: i32, %arg3: memref<168x128xf32, #tpu.memory_space<vmem>>, %arg4: memref<128x128xf32, #tpu.memory_space<vmem>>, %arg5: memref<1x128xf32, #tpu.memory_space<vmem>>, %arg6: memref<168x128xf32, #tpu.memory_space<vmem>>, %arg7: memref<168x128xf32, #tpu.memory_space<vmem>>) attributes {dimension_semantics = [#tpu.dimension_semantics<parallel>, #tpu.dimension_semantics<parallel>, #tpu.dimension_semantics<arbitrary>], iteration_bounds = array<i64: 1, 1, 1>, scalar_prefetch = 0 : i64, scratch_operands = 1 : i64, tpu.core_type = #tpu.core_type<tc>, window_params = [{transform_indices = @transform_0, window_bounds = array<i64: 168, 128>}, {transform_indices = @transform_1, window_bounds = array<i64: 128, 128>}, {transform_indices = @transform_2, window_bounds = array<i64: 1, 128>}, {transform_indices = @transform_3, window_bounds = array<i64: 168, 128>}]} {
    %c0_i32 = arith.constant 0 : i32
    %0 = arith.cmpi eq, %arg2, %c0_i32 : i32
    %1 = arith.extui %0 : i1 to i32
    %c0_i32_0 = arith.constant 0 : i32
    %2 = arith.cmpi ne, %1, %c0_i32_0 : i32
    scf.if %2 {
      %cst_10 = arith.constant 0.000000e+00 : f32
      %12 = vector.broadcast %cst_10 : f32 to vector<168x128xf32>
      %c0_11 = arith.constant 0 : index
      %c0_12 = arith.constant 0 : index
      %13 = vector.load %arg7[%c0_11, %c0_12] : memref<168x128xf32, #tpu.memory_space<vmem>>, vector<168x128xf32>
      tpu.vector_store %arg7[%c0_11, %c0_12], %12 {strides = array<i32>} : memref<168x128xf32, #tpu.memory_space<vmem>>, vector<168x128xf32>,
    } else {
    }
    %c0 = arith.constant 0 : index
    %c0_1 = arith.constant 0 : index
    %3 = vector.load %arg7[%c0, %c0_1] : memref<168x128xf32, #tpu.memory_space<vmem>>, vector<168x128xf32>
    %c0_2 = arith.constant 0 : index
    %c0_3 = arith.constant 0 : index
    %4 = vector.load %arg3[%c0_2, %c0_3] : memref<168x128xf32, #tpu.memory_space<vmem>>, vector<168x128xf32>
    %c0_4 = arith.constant 0 : index
    %c0_5 = arith.constant 0 : index
    %5 = vector.load %arg4[%c0_4, %c0_5] : memref<128x128xf32, #tpu.memory_space<vmem>>, vector<128x128xf32>
    %cst = arith.constant dense<0.000000e+00> : vector<168x128xf32>
    %6 = tpu.matmul %4, %5, %cst {dimension_numbers = #tpu.dot_dimension_numbers<[1], [0], [0], [1], [0, 0, 1, 1], [], []>} : vector<168x128xf32>, vector<128x128xf32>, vector<168x128xf32> -> vector<168x128xf32>
    %7 = arith.addf %3, %6 : vector<168x128xf32>
    %c0_6 = arith.constant 0 : index
    %c0_7 = arith.constant 0 : index
    %8 = vector.load %arg7[%c0_6, %c0_7] : memref<168x128xf32, #tpu.memory_space<vmem>>, vector<168x128xf32>
    tpu.vector_store %arg7[%c0_6, %c0_7], %7 {strides = array<i32>} : memref<168x128xf32, #tpu.memory_space<vmem>>, vector<168x128xf32>,
    %c0_i32_8 = arith.constant 0 : i32
    %9 = arith.cmpi eq, %arg2, %c0_i32_8 : i32
    %10 = arith.extui %9 : i1 to i32
    %c0_i32_9 = arith.constant 0 : i32
    %11 = arith.cmpi ne, %10, %c0_i32_9 : i32
    scf.if %11 {
      %c0_10 = arith.constant 0 : index
      %c0_11 = arith.constant 0 : index
      %12 = vector.load %arg7[%c0_10, %c0_11] : memref<168x128xf32, #tpu.memory_space<vmem>>, vector<168x128xf32>
      %c0_12 = arith.constant 0 : index
      %c0_13 = arith.constant 0 : index
      %13 = vector.load %arg5[%c0_12, %c0_13] : memref<1x128xf32, #tpu.memory_space<vmem>>, vector<1x128xf32>
      %14 = vector.broadcast %13 : vector<1x128xf32> to vector<168x128xf32>
      %15 = arith.addf %12, %14 : vector<168x128xf32>
      %cst_14 = arith.constant 0.000000e+00 : f32
      %16 = vector.broadcast %cst_14 : f32 to vector<168x128xf32>
      %17 = arith.cmpf ogt, %15, %16 : vector<168x128xf32>
      %cst_15 = arith.constant 0.00999999977 : f32
      %18 = vector.broadcast %cst_15 : f32 to vector<168x128xf32>
      %19 = arith.mulf %18, %15 : vector<168x128xf32>
      %20 = arith.select %17, %15, %19 : vector<168x128xi1>, vector<168x128xf32>
      %c0_16 = arith.constant 0 : index
      %c0_17 = arith.constant 0 : index
      %21 = vector.load %arg6[%c0_16, %c0_17] : memref<168x128xf32, #tpu.memory_space<vmem>>, vector<168x128xf32>
      tpu.vector_store %arg6[%c0_16, %c0_17], %20 {strides = array<i32>} : memref<168x128xf32, #tpu.memory_space<vmem>>, vector<168x128xf32>,
    } else {
    }
    return
  }
  func.func @transform_0(%arg0: i32, %arg1: i32, %arg2: i32) -> (i32, i32) {
    %c0_i32 = arith.constant 0 : i32
    return %arg0, %arg2 : i32, i32
  }
  func.func @transform_1(%arg0: i32, %arg1: i32, %arg2: i32) -> (i32, i32) {
    %c0_i32 = arith.constant 0 : i32
    return %arg2, %arg1 : i32, i32
  }
  func.func @transform_2(%arg0: i32, %arg1: i32, %arg2: i32) -> (i32, i32) {
    %c0_i32 = arith.constant 0 : i32
    %c0_i32_0 = arith.constant 0 : i32
    return %c0_i32, %arg1 : i32, i32
  }
  func.func @transform_3(%arg0: i32, %arg1: i32, %arg2: i32) -> (i32, i32) {
    %c0_i32 = arith.constant 0 : i32
    return %arg0, %arg1 : i32, i32
  }
}

module attributes {stable_mosaic.version = 11 : i64} {
  func.func @_bn_apply_kernel(%arg0: i32, %arg1: i32, %arg2: memref<512x128xf32, #tpu.memory_space<vmem>>, %arg3: memref<1x128xf32, #tpu.memory_space<vmem>>, %arg4: memref<1x128xf32, #tpu.memory_space<vmem>>, %arg5: memref<512x128xf32, #tpu.memory_space<vmem>>) attributes {dimension_semantics = [#tpu.dimension_semantics<parallel>, #tpu.dimension_semantics<parallel>], iteration_bounds = array<i64: 1, 1>, scalar_prefetch = 0 : i64, scratch_operands = 0 : i64, tpu.core_type = #tpu.core_type<tc>, window_params = [{transform_indices = @transform_0, window_bounds = array<i64: 512, 128>}, {transform_indices = @transform_1, window_bounds = array<i64: 1, 128>}, {transform_indices = @transform_2, window_bounds = array<i64: 1, 128>}, {transform_indices = @transform_3, window_bounds = array<i64: 512, 128>}]} {
    %c0 = arith.constant 0 : index
    %c0_0 = arith.constant 0 : index
    %0 = vector.load %arg2[%c0, %c0_0] : memref<512x128xf32, #tpu.memory_space<vmem>>, vector<512x128xf32>
    %c0_1 = arith.constant 0 : index
    %c0_2 = arith.constant 0 : index
    %1 = vector.load %arg3[%c0_1, %c0_2] : memref<1x128xf32, #tpu.memory_space<vmem>>, vector<1x128xf32>
    %2 = vector.broadcast %1 : vector<1x128xf32> to vector<512x128xf32>
    %3 = arith.mulf %0, %2 : vector<512x128xf32>
    %c0_3 = arith.constant 0 : index
    %c0_4 = arith.constant 0 : index
    %4 = vector.load %arg4[%c0_3, %c0_4] : memref<1x128xf32, #tpu.memory_space<vmem>>, vector<1x128xf32>
    %5 = vector.broadcast %4 : vector<1x128xf32> to vector<512x128xf32>
    %6 = arith.addf %3, %5 : vector<512x128xf32>
    %c0_5 = arith.constant 0 : index
    %c0_6 = arith.constant 0 : index
    %7 = vector.load %arg5[%c0_5, %c0_6] : memref<512x128xf32, #tpu.memory_space<vmem>>, vector<512x128xf32>
    tpu.vector_store %arg5[%c0_5, %c0_6], %6 {strides = array<i32>} : memref<512x128xf32, #tpu.memory_space<vmem>>, vector<512x128xf32>,
    return
  }
  func.func @transform_0(%arg0: i32, %arg1: i32) -> (i32, i32) {
    %c0_i32 = arith.constant 0 : i32
    return %arg0, %arg1 : i32, i32
  }
  func.func @transform_1(%arg0: i32, %arg1: i32) -> (i32, i32) {
    %c0_i32 = arith.constant 0 : i32
    %c0_i32_0 = arith.constant 0 : i32
    return %c0_i32, %arg1 : i32, i32
  }
  func.func @transform_2(%arg0: i32, %arg1: i32) -> (i32, i32) {
    %c0_i32 = arith.constant 0 : i32
    %c0_i32_0 = arith.constant 0 : i32
    return %c0_i32, %arg1 : i32, i32
  }
  func.func @transform_3(%arg0: i32, %arg1: i32) -> (i32, i32) {
    %c0_i32 = arith.constant 0 : i32
    return %arg0, %arg1 : i32, i32
  }
}

module attributes {stable_mosaic.version = 11 : i64} {
  func.func @_bn_stats_kernel(%arg0: i32, %arg1: i32, %arg2: memref<512x128xf32, #tpu.memory_space<vmem>>, %arg3: memref<1x128xf32, #tpu.memory_space<vmem>>, %arg4: memref<1x128xf32, #tpu.memory_space<vmem>>) attributes {dimension_semantics = [#tpu.dimension_semantics<parallel>, #tpu.dimension_semantics<arbitrary>], iteration_bounds = array<i64: 1, 1>, scalar_prefetch = 0 : i64, scratch_operands = 0 : i64, tpu.core_type = #tpu.core_type<tc>, window_params = [{transform_indices = @transform_0, window_bounds = array<i64: 512, 128>}, {transform_indices = @transform_1, window_bounds = array<i64: 1, 128>}, {transform_indices = @transform_2, window_bounds = array<i64: 1, 128>}]} {
    %c0_i32 = arith.constant 0 : i32
    %0 = arith.cmpi eq, %arg1, %c0_i32 : i32
    %1 = arith.extui %0 : i1 to i32
    %c0_i32_0 = arith.constant 0 : i32
    %2 = arith.cmpi ne, %1, %c0_i32_0 : i32
    scf.if %2 {
      %cst_11 = arith.constant 0.000000e+00 : f32
      %15 = vector.broadcast %cst_11 : f32 to vector<1x128xf32>
      %c0_12 = arith.constant 0 : index
      %c0_13 = arith.constant 0 : index
      %16 = vector.load %arg3[%c0_12, %c0_13] : memref<1x128xf32, #tpu.memory_space<vmem>>, vector<1x128xf32>
      tpu.vector_store %arg3[%c0_12, %c0_13], %15 {strides = array<i32>} : memref<1x128xf32, #tpu.memory_space<vmem>>, vector<1x128xf32>,
      %cst_14 = arith.constant 0.000000e+00 : f32
      %17 = vector.broadcast %cst_14 : f32 to vector<1x128xf32>
      %c0_15 = arith.constant 0 : index
      %c0_16 = arith.constant 0 : index
      %18 = vector.load %arg4[%c0_15, %c0_16] : memref<1x128xf32, #tpu.memory_space<vmem>>, vector<1x128xf32>
      tpu.vector_store %arg4[%c0_15, %c0_16], %17 {strides = array<i32>} : memref<1x128xf32, #tpu.memory_space<vmem>>, vector<1x128xf32>,
    } else {
    }
    %c0 = arith.constant 0 : index
    %c0_1 = arith.constant 0 : index
    %3 = vector.load %arg2[%c0, %c0_1] : memref<512x128xf32, #tpu.memory_space<vmem>>, vector<512x128xf32>
    %c0_2 = arith.constant 0 : index
    %c0_3 = arith.constant 0 : index
    %4 = vector.load %arg3[%c0_2, %c0_3] : memref<1x128xf32, #tpu.memory_space<vmem>>, vector<1x128xf32>
    %cst = arith.constant dense<0.000000e+00> : vector<128xf32>
    %5 = vector.multi_reduction <add>, %3, %cst [0] : vector<512x128xf32> to vector<128xf32>
    %6 = vector.shape_cast %5 : vector<128xf32> to vector<1x128xf32>
    %7 = arith.addf %4, %6 : vector<1x128xf32>
    %c0_4 = arith.constant 0 : index
    %c0_5 = arith.constant 0 : index
    %8 = vector.load %arg3[%c0_4, %c0_5] : memref<1x128xf32, #tpu.memory_space<vmem>>, vector<1x128xf32>
    tpu.vector_store %arg3[%c0_4, %c0_5], %7 {strides = array<i32>} : memref<1x128xf32, #tpu.memory_space<vmem>>, vector<1x128xf32>,
    %c0_6 = arith.constant 0 : index
    %c0_7 = arith.constant 0 : index
    %9 = vector.load %arg4[%c0_6, %c0_7] : memref<1x128xf32, #tpu.memory_space<vmem>>, vector<1x128xf32>
    %10 = arith.mulf %3, %3 : vector<512x128xf32>
    %cst_8 = arith.constant dense<0.000000e+00> : vector<128xf32>
    %11 = vector.multi_reduction <add>, %10, %cst_8 [0] : vector<512x128xf32> to vector<128xf32>
    %12 = vector.shape_cast %11 : vector<128xf32> to vector<1x128xf32>
    %13 = arith.addf %9, %12 : vector<1x128xf32>
    %c0_9 = arith.constant 0 : index
    %c0_10 = arith.constant 0 : index
    %14 = vector.load %arg4[%c0_9, %c0_10] : memref<1x128xf32, #tpu.memory_space<vmem>>, vector<1x128xf32>
    tpu.vector_store %arg4[%c0_9, %c0_10], %13 {strides = array<i32>} : memref<1x128xf32, #tpu.memory_space<vmem>>, vector<1x128xf32>,
    return
  }
  func.func @transform_0(%arg0: i32, %arg1: i32) -> (i32, i32) {
    %c0_i32 = arith.constant 0 : i32
    return %arg1, %arg0 : i32, i32
  }
  func.func @transform_1(%arg0: i32, %arg1: i32) -> (i32, i32) {
    %c0_i32 = arith.constant 0 : i32
    %c0_i32_0 = arith.constant 0 : i32
    return %c0_i32, %arg0 : i32, i32
  }
  func.func @transform_2(%arg0: i32, %arg1: i32) -> (i32, i32) {
    %c0_i32 = arith.constant 0 : i32
    %c0_i32_0 = arith.constant 0 : i32
    return %c0_i32, %arg0 : i32, i32
  }
}

module attributes {stable_mosaic.version = 11 : i64} {
  func.func @_matmul_bias_act_kernel(%arg0: i32, %arg1: i32, %arg2: i32, %arg3: memref<128x128xf32, #tpu.memory_space<vmem>>, %arg4: memref<128x128xf32, #tpu.memory_space<vmem>>, %arg5: memref<1x128xf32, #tpu.memory_space<vmem>>, %arg6: memref<128x128xf32, #tpu.memory_space<vmem>>, %arg7: memref<128x128xf32, #tpu.memory_space<vmem>>) attributes {dimension_semantics = [#tpu.dimension_semantics<parallel>, #tpu.dimension_semantics<parallel>, #tpu.dimension_semantics<arbitrary>], iteration_bounds = array<i64: 5, 1, 1>, scalar_prefetch = 0 : i64, scratch_operands = 1 : i64, tpu.core_type = #tpu.core_type<tc>, window_params = [{transform_indices = @transform_0, window_bounds = array<i64: 128, 128>}, {transform_indices = @transform_1, window_bounds = array<i64: 128, 128>}, {transform_indices = @transform_2, window_bounds = array<i64: 1, 128>}, {transform_indices = @transform_3, window_bounds = array<i64: 128, 128>}]} {
    %c0_i32 = arith.constant 0 : i32
    %0 = arith.cmpi eq, %arg2, %c0_i32 : i32
    %1 = arith.extui %0 : i1 to i32
    %c0_i32_0 = arith.constant 0 : i32
    %2 = arith.cmpi ne, %1, %c0_i32_0 : i32
    scf.if %2 {
      %cst_10 = arith.constant 0.000000e+00 : f32
      %12 = vector.broadcast %cst_10 : f32 to vector<128x128xf32>
      %c0_11 = arith.constant 0 : index
      %c0_12 = arith.constant 0 : index
      %13 = vector.load %arg7[%c0_11, %c0_12] : memref<128x128xf32, #tpu.memory_space<vmem>>, vector<128x128xf32>
      tpu.vector_store %arg7[%c0_11, %c0_12], %12 {strides = array<i32>} : memref<128x128xf32, #tpu.memory_space<vmem>>, vector<128x128xf32>,
    } else {
    }
    %c0 = arith.constant 0 : index
    %c0_1 = arith.constant 0 : index
    %3 = vector.load %arg7[%c0, %c0_1] : memref<128x128xf32, #tpu.memory_space<vmem>>, vector<128x128xf32>
    %c0_2 = arith.constant 0 : index
    %c0_3 = arith.constant 0 : index
    %4 = vector.load %arg3[%c0_2, %c0_3] : memref<128x128xf32, #tpu.memory_space<vmem>>, vector<128x128xf32>
    %c0_4 = arith.constant 0 : index
    %c0_5 = arith.constant 0 : index
    %5 = vector.load %arg4[%c0_4, %c0_5] : memref<128x128xf32, #tpu.memory_space<vmem>>, vector<128x128xf32>
    %cst = arith.constant dense<0.000000e+00> : vector<128x128xf32>
    %6 = tpu.matmul %4, %5, %cst {dimension_numbers = #tpu.dot_dimension_numbers<[1], [0], [0], [1], [0, 0, 1, 1], [], []>} : vector<128x128xf32>, vector<128x128xf32>, vector<128x128xf32> -> vector<128x128xf32>
    %7 = arith.addf %3, %6 : vector<128x128xf32>
    %c0_6 = arith.constant 0 : index
    %c0_7 = arith.constant 0 : index
    %8 = vector.load %arg7[%c0_6, %c0_7] : memref<128x128xf32, #tpu.memory_space<vmem>>, vector<128x128xf32>
    tpu.vector_store %arg7[%c0_6, %c0_7], %7 {strides = array<i32>} : memref<128x128xf32, #tpu.memory_space<vmem>>, vector<128x128xf32>,
    %c0_i32_8 = arith.constant 0 : i32
    %9 = arith.cmpi eq, %arg2, %c0_i32_8 : i32
    %10 = arith.extui %9 : i1 to i32
    %c0_i32_9 = arith.constant 0 : i32
    %11 = arith.cmpi ne, %10, %c0_i32_9 : i32
    scf.if %11 {
      %c0_10 = arith.constant 0 : index
      %c0_11 = arith.constant 0 : index
      %12 = vector.load %arg7[%c0_10, %c0_11] : memref<128x128xf32, #tpu.memory_space<vmem>>, vector<128x128xf32>
      %c0_12 = arith.constant 0 : index
      %c0_13 = arith.constant 0 : index
      %13 = vector.load %arg5[%c0_12, %c0_13] : memref<1x128xf32, #tpu.memory_space<vmem>>, vector<1x128xf32>
      %14 = vector.broadcast %13 : vector<1x128xf32> to vector<128x128xf32>
      %15 = arith.addf %12, %14 : vector<128x128xf32>
      %cst_14 = arith.constant 0.000000e+00 : f32
      %16 = vector.broadcast %cst_14 : f32 to vector<128x128xf32>
      %17 = arith.cmpf ogt, %15, %16 : vector<128x128xf32>
      %cst_15 = arith.constant 0.00999999977 : f32
      %18 = vector.broadcast %cst_15 : f32 to vector<128x128xf32>
      %19 = arith.mulf %18, %15 : vector<128x128xf32>
      %20 = arith.select %17, %15, %19 : vector<128x128xi1>, vector<128x128xf32>
      %c0_16 = arith.constant 0 : index
      %c0_17 = arith.constant 0 : index
      %21 = vector.load %arg6[%c0_16, %c0_17] : memref<128x128xf32, #tpu.memory_space<vmem>>, vector<128x128xf32>
      tpu.vector_store %arg6[%c0_16, %c0_17], %20 {strides = array<i32>} : memref<128x128xf32, #tpu.memory_space<vmem>>, vector<128x128xf32>,
    } else {
    }
    return
  }
  func.func @transform_0(%arg0: i32, %arg1: i32, %arg2: i32) -> (i32, i32) {
    %c0_i32 = arith.constant 0 : i32
    return %arg0, %arg2 : i32, i32
  }
  func.func @transform_1(%arg0: i32, %arg1: i32, %arg2: i32) -> (i32, i32) {
    %c0_i32 = arith.constant 0 : i32
    return %arg2, %arg1 : i32, i32
  }
  func.func @transform_2(%arg0: i32, %arg1: i32, %arg2: i32) -> (i32, i32) {
    %c0_i32 = arith.constant 0 : i32
    %c0_i32_0 = arith.constant 0 : i32
    return %c0_i32, %arg1 : i32, i32
  }
  func.func @transform_3(%arg0: i32, %arg1: i32, %arg2: i32) -> (i32, i32) {
    %c0_i32 = arith.constant 0 : i32
    return %arg0, %arg1 : i32, i32
  }
}

module attributes {stable_mosaic.version = 11 : i64} {
  func.func @_bn_stats_kernel(%arg0: i32, %arg1: i32, %arg2: memref<512x128xf32, #tpu.memory_space<vmem>>, %arg3: memref<1x128xf32, #tpu.memory_space<vmem>>, %arg4: memref<1x128xf32, #tpu.memory_space<vmem>>) attributes {dimension_semantics = [#tpu.dimension_semantics<parallel>, #tpu.dimension_semantics<arbitrary>], iteration_bounds = array<i64: 1, 4>, scalar_prefetch = 0 : i64, scratch_operands = 0 : i64, tpu.core_type = #tpu.core_type<tc>, window_params = [{transform_indices = @transform_0, window_bounds = array<i64: 512, 128>}, {transform_indices = @transform_1, window_bounds = array<i64: 1, 128>}, {transform_indices = @transform_2, window_bounds = array<i64: 1, 128>}]} {
    %c0_i32 = arith.constant 0 : i32
    %0 = arith.cmpi eq, %arg1, %c0_i32 : i32
    %1 = arith.extui %0 : i1 to i32
    %c0_i32_0 = arith.constant 0 : i32
    %2 = arith.cmpi ne, %1, %c0_i32_0 : i32
    scf.if %2 {
      %cst_11 = arith.constant 0.000000e+00 : f32
      %15 = vector.broadcast %cst_11 : f32 to vector<1x128xf32>
      %c0_12 = arith.constant 0 : index
      %c0_13 = arith.constant 0 : index
      %16 = vector.load %arg3[%c0_12, %c0_13] : memref<1x128xf32, #tpu.memory_space<vmem>>, vector<1x128xf32>
      tpu.vector_store %arg3[%c0_12, %c0_13], %15 {strides = array<i32>} : memref<1x128xf32, #tpu.memory_space<vmem>>, vector<1x128xf32>,
      %cst_14 = arith.constant 0.000000e+00 : f32
      %17 = vector.broadcast %cst_14 : f32 to vector<1x128xf32>
      %c0_15 = arith.constant 0 : index
      %c0_16 = arith.constant 0 : index
      %18 = vector.load %arg4[%c0_15, %c0_16] : memref<1x128xf32, #tpu.memory_space<vmem>>, vector<1x128xf32>
      tpu.vector_store %arg4[%c0_15, %c0_16], %17 {strides = array<i32>} : memref<1x128xf32, #tpu.memory_space<vmem>>, vector<1x128xf32>,
    } else {
    }
    %c0 = arith.constant 0 : index
    %c0_1 = arith.constant 0 : index
    %3 = vector.load %arg2[%c0, %c0_1] : memref<512x128xf32, #tpu.memory_space<vmem>>, vector<512x128xf32>
    %c0_2 = arith.constant 0 : index
    %c0_3 = arith.constant 0 : index
    %4 = vector.load %arg3[%c0_2, %c0_3] : memref<1x128xf32, #tpu.memory_space<vmem>>, vector<1x128xf32>
    %cst = arith.constant dense<0.000000e+00> : vector<128xf32>
    %5 = vector.multi_reduction <add>, %3, %cst [0] : vector<512x128xf32> to vector<128xf32>
    %6 = vector.shape_cast %5 : vector<128xf32> to vector<1x128xf32>
    %7 = arith.addf %4, %6 : vector<1x128xf32>
    %c0_4 = arith.constant 0 : index
    %c0_5 = arith.constant 0 : index
    %8 = vector.load %arg3[%c0_4, %c0_5] : memref<1x128xf32, #tpu.memory_space<vmem>>, vector<1x128xf32>
    tpu.vector_store %arg3[%c0_4, %c0_5], %7 {strides = array<i32>} : memref<1x128xf32, #tpu.memory_space<vmem>>, vector<1x128xf32>,
    %c0_6 = arith.constant 0 : index
    %c0_7 = arith.constant 0 : index
    %9 = vector.load %arg4[%c0_6, %c0_7] : memref<1x128xf32, #tpu.memory_space<vmem>>, vector<1x128xf32>
    %10 = arith.mulf %3, %3 : vector<512x128xf32>
    %cst_8 = arith.constant dense<0.000000e+00> : vector<128xf32>
    %11 = vector.multi_reduction <add>, %10, %cst_8 [0] : vector<512x128xf32> to vector<128xf32>
    %12 = vector.shape_cast %11 : vector<128xf32> to vector<1x128xf32>
    %13 = arith.addf %9, %12 : vector<1x128xf32>
    %c0_9 = arith.constant 0 : index
    %c0_10 = arith.constant 0 : index
    %14 = vector.load %arg4[%c0_9, %c0_10] : memref<1x128xf32, #tpu.memory_space<vmem>>, vector<1x128xf32>
    tpu.vector_store %arg4[%c0_9, %c0_10], %13 {strides = array<i32>} : memref<1x128xf32, #tpu.memory_space<vmem>>, vector<1x128xf32>,
    return
  }
  func.func @transform_0(%arg0: i32, %arg1: i32) -> (i32, i32) {
    %c0_i32 = arith.constant 0 : i32
    return %arg1, %arg0 : i32, i32
  }
  func.func @transform_1(%arg0: i32, %arg1: i32) -> (i32, i32) {
    %c0_i32 = arith.constant 0 : i32
    %c0_i32_0 = arith.constant 0 : i32
    return %c0_i32, %arg0 : i32, i32
  }
  func.func @transform_2(%arg0: i32, %arg1: i32) -> (i32, i32) {
    %c0_i32 = arith.constant 0 : i32
    %c0_i32_0 = arith.constant 0 : i32
    return %c0_i32, %arg0 : i32, i32
  }
}

module attributes {stable_mosaic.version = 11 : i64} {
  func.func @_bn_apply_kernel(%arg0: i32, %arg1: i32, %arg2: memref<512x128xf32, #tpu.memory_space<vmem>>, %arg3: memref<1x128xf32, #tpu.memory_space<vmem>>, %arg4: memref<1x128xf32, #tpu.memory_space<vmem>>, %arg5: memref<512x128xf32, #tpu.memory_space<vmem>>) attributes {dimension_semantics = [#tpu.dimension_semantics<parallel>, #tpu.dimension_semantics<parallel>], iteration_bounds = array<i64: 4, 1>, scalar_prefetch = 0 : i64, scratch_operands = 0 : i64, tpu.core_type = #tpu.core_type<tc>, window_params = [{transform_indices = @transform_0, window_bounds = array<i64: 512, 128>}, {transform_indices = @transform_1, window_bounds = array<i64: 1, 128>}, {transform_indices = @transform_2, window_bounds = array<i64: 1, 128>}, {transform_indices = @transform_3, window_bounds = array<i64: 512, 128>}]} {
    %c0 = arith.constant 0 : index
    %c0_0 = arith.constant 0 : index
    %0 = vector.load %arg2[%c0, %c0_0] : memref<512x128xf32, #tpu.memory_space<vmem>>, vector<512x128xf32>
    %c0_1 = arith.constant 0 : index
    %c0_2 = arith.constant 0 : index
    %1 = vector.load %arg3[%c0_1, %c0_2] : memref<1x128xf32, #tpu.memory_space<vmem>>, vector<1x128xf32>
    %2 = vector.broadcast %1 : vector<1x128xf32> to vector<512x128xf32>
    %3 = arith.mulf %0, %2 : vector<512x128xf32>
    %c0_3 = arith.constant 0 : index
    %c0_4 = arith.constant 0 : index
    %4 = vector.load %arg4[%c0_3, %c0_4] : memref<1x128xf32, #tpu.memory_space<vmem>>, vector<1x128xf32>
    %5 = vector.broadcast %4 : vector<1x128xf32> to vector<512x128xf32>
    %6 = arith.addf %3, %5 : vector<512x128xf32>
    %c0_5 = arith.constant 0 : index
    %c0_6 = arith.constant 0 : index
    %7 = vector.load %arg5[%c0_5, %c0_6] : memref<512x128xf32, #tpu.memory_space<vmem>>, vector<512x128xf32>
    tpu.vector_store %arg5[%c0_5, %c0_6], %6 {strides = array<i32>} : memref<512x128xf32, #tpu.memory_space<vmem>>, vector<512x128xf32>,
    return
  }
  func.func @transform_0(%arg0: i32, %arg1: i32) -> (i32, i32) {
    %c0_i32 = arith.constant 0 : i32
    return %arg0, %arg1 : i32, i32
  }
  func.func @transform_1(%arg0: i32, %arg1: i32) -> (i32, i32) {
    %c0_i32 = arith.constant 0 : i32
    %c0_i32_0 = arith.constant 0 : i32
    return %c0_i32, %arg1 : i32, i32
  }
  func.func @transform_2(%arg0: i32, %arg1: i32) -> (i32, i32) {
    %c0_i32 = arith.constant 0 : i32
    %c0_i32_0 = arith.constant 0 : i32
    return %c0_i32, %arg1 : i32, i32
  }
  func.func @transform_3(%arg0: i32, %arg1: i32) -> (i32, i32) {
    %c0_i32 = arith.constant 0 : i32
    return %arg0, %arg1 : i32, i32
  }
}

module attributes {stable_mosaic.version = 11 : i64} {
  func.func @_matmul_bias_act_kernel(%arg0: i32, %arg1: i32, %arg2: i32, %arg3: memref<256x128xf32, #tpu.memory_space<vmem>>, %arg4: memref<128x128xf32, #tpu.memory_space<vmem>>, %arg5: memref<1x128xf32, #tpu.memory_space<vmem>>, %arg6: memref<256x128xf32, #tpu.memory_space<vmem>>, %arg7: memref<256x128xf32, #tpu.memory_space<vmem>>) attributes {dimension_semantics = [#tpu.dimension_semantics<parallel>, #tpu.dimension_semantics<parallel>, #tpu.dimension_semantics<arbitrary>], iteration_bounds = array<i64: 9, 1, 1>, scalar_prefetch = 0 : i64, scratch_operands = 1 : i64, tpu.core_type = #tpu.core_type<tc>, window_params = [{transform_indices = @transform_0, window_bounds = array<i64: 256, 128>}, {transform_indices = @transform_1, window_bounds = array<i64: 128, 128>}, {transform_indices = @transform_2, window_bounds = array<i64: 1, 128>}, {transform_indices = @transform_3, window_bounds = array<i64: 256, 128>}]} {
    %c0_i32 = arith.constant 0 : i32
    %0 = arith.cmpi eq, %arg2, %c0_i32 : i32
    %1 = arith.extui %0 : i1 to i32
    %c0_i32_0 = arith.constant 0 : i32
    %2 = arith.cmpi ne, %1, %c0_i32_0 : i32
    scf.if %2 {
      %cst_10 = arith.constant 0.000000e+00 : f32
      %12 = vector.broadcast %cst_10 : f32 to vector<256x128xf32>
      %c0_11 = arith.constant 0 : index
      %c0_12 = arith.constant 0 : index
      %13 = vector.load %arg7[%c0_11, %c0_12] : memref<256x128xf32, #tpu.memory_space<vmem>>, vector<256x128xf32>
      tpu.vector_store %arg7[%c0_11, %c0_12], %12 {strides = array<i32>} : memref<256x128xf32, #tpu.memory_space<vmem>>, vector<256x128xf32>,
    } else {
    }
    %c0 = arith.constant 0 : index
    %c0_1 = arith.constant 0 : index
    %3 = vector.load %arg7[%c0, %c0_1] : memref<256x128xf32, #tpu.memory_space<vmem>>, vector<256x128xf32>
    %c0_2 = arith.constant 0 : index
    %c0_3 = arith.constant 0 : index
    %4 = vector.load %arg3[%c0_2, %c0_3] : memref<256x128xf32, #tpu.memory_space<vmem>>, vector<256x128xf32>
    %c0_4 = arith.constant 0 : index
    %c0_5 = arith.constant 0 : index
    %5 = vector.load %arg4[%c0_4, %c0_5] : memref<128x128xf32, #tpu.memory_space<vmem>>, vector<128x128xf32>
    %cst = arith.constant dense<0.000000e+00> : vector<256x128xf32>
    %6 = tpu.matmul %4, %5, %cst {dimension_numbers = #tpu.dot_dimension_numbers<[1], [0], [0], [1], [0, 0, 1, 1], [], []>} : vector<256x128xf32>, vector<128x128xf32>, vector<256x128xf32> -> vector<256x128xf32>
    %7 = arith.addf %3, %6 : vector<256x128xf32>
    %c0_6 = arith.constant 0 : index
    %c0_7 = arith.constant 0 : index
    %8 = vector.load %arg7[%c0_6, %c0_7] : memref<256x128xf32, #tpu.memory_space<vmem>>, vector<256x128xf32>
    tpu.vector_store %arg7[%c0_6, %c0_7], %7 {strides = array<i32>} : memref<256x128xf32, #tpu.memory_space<vmem>>, vector<256x128xf32>,
    %c0_i32_8 = arith.constant 0 : i32
    %9 = arith.cmpi eq, %arg2, %c0_i32_8 : i32
    %10 = arith.extui %9 : i1 to i32
    %c0_i32_9 = arith.constant 0 : i32
    %11 = arith.cmpi ne, %10, %c0_i32_9 : i32
    scf.if %11 {
      %c0_10 = arith.constant 0 : index
      %c0_11 = arith.constant 0 : index
      %12 = vector.load %arg7[%c0_10, %c0_11] : memref<256x128xf32, #tpu.memory_space<vmem>>, vector<256x128xf32>
      %c0_12 = arith.constant 0 : index
      %c0_13 = arith.constant 0 : index
      %13 = vector.load %arg5[%c0_12, %c0_13] : memref<1x128xf32, #tpu.memory_space<vmem>>, vector<1x128xf32>
      %14 = vector.broadcast %13 : vector<1x128xf32> to vector<256x128xf32>
      %15 = arith.addf %12, %14 : vector<256x128xf32>
      %16 = math.tanh %15 : vector<256x128xf32>
      %c0_14 = arith.constant 0 : index
      %c0_15 = arith.constant 0 : index
      %17 = vector.load %arg6[%c0_14, %c0_15] : memref<256x128xf32, #tpu.memory_space<vmem>>, vector<256x128xf32>
      tpu.vector_store %arg6[%c0_14, %c0_15], %16 {strides = array<i32>} : memref<256x128xf32, #tpu.memory_space<vmem>>, vector<256x128xf32>,
    } else {
    }
    return
  }
  func.func @transform_0(%arg0: i32, %arg1: i32, %arg2: i32) -> (i32, i32) {
    %c0_i32 = arith.constant 0 : i32
    return %arg0, %arg2 : i32, i32
  }
  func.func @transform_1(%arg0: i32, %arg1: i32, %arg2: i32) -> (i32, i32) {
    %c0_i32 = arith.constant 0 : i32
    return %arg2, %arg1 : i32, i32
  }
  func.func @transform_2(%arg0: i32, %arg1: i32, %arg2: i32) -> (i32, i32) {
    %c0_i32 = arith.constant 0 : i32
    %c0_i32_0 = arith.constant 0 : i32
    return %c0_i32, %arg1 : i32, i32
  }
  func.func @transform_3(%arg0: i32, %arg1: i32, %arg2: i32) -> (i32, i32) {
    %c0_i32 = arith.constant 0 : i32
    return %arg0, %arg1 : i32, i32
  }
}

</mosaic_0001>

<llo_original>
// kernel: tile.23
$region0: #{tile.23}
  #allocation2 [shape = 's32[1]{0}', space=sflag, size = 0x4, scoped, tag = 'scoped memory for tile.23']
  %s0 = inlined_call_operand.hbm [shape: f32[32], index: 0, kind: input, shape index: {}]
  %s1 = inlined_call_operand.vmem [shape: f32[4,32], index: 1, kind: output, shape index: {}]
  $region1: #{tile.23} parent=0
    #allocation0 [shape = 'u8[512]{0}', space=vmem, size = 0x400, scoped, tag = 'operand span for operand 0']
    #allocation1 [shape = 's32[1]{0}', space=sflag, size = 0x4, scoped, tag = 'scoped memory for tile.23']
    %2 = vsyncpa [#allocation1], 0
    // Predicated region
    $region2: #{tile.23} parent=1 // pred_check
      _
    $region3: #{tile.23} parent=1 // pred_check_branch
      %4 = sbr.rel (0) target = $region5
    $region4: #{tile.23} parent=1 // pred_region
      %6 = vsyncadd [#allocation1], 0
      %s8 = sshll.u32 %s0, 4
      %s9 = int_to_ptr.hbm [resolvable:$true] %s8
      %s10 = sshll.u32 [#allocation0], 4
      %s11 = int_to_ptr.vmem [resolvable:$true] %s10
      %13 = dma.hbm_to_vmem [thread:$0]  %s9, 16, %s11, [#allocation1]
    $region5: #{tile.23} parent=1 // pred_fallthru
      _
    // Predicated region
    $region6: #{tile.23} parent=1 // pred_check
      _
    $region7: #{tile.23} parent=1 // pred_check_branch
      %15 = sbr.rel (0) target = $region9
    $region8: #{tile.23} parent=1 // pred_region
      %17 = dma.done [#allocation1], 16
    $region9: #{tile.23} parent=1 // pred_fallthru
      _
    %v18 = vld [vmem:[#allocation0] ss:$0 sm:$0xff]
    %19 = vst [vmem:[%s1] sm:$0xf] %v18
    %20 = vsyncpa [#allocation1], 1

// kernel: tile.28
$region0: #{tile.28}
  #allocation2 [shape = 's32[1]{0}', space=sflag, size = 0x4, scoped, tag = 'scoped memory for tile.28']
  %s0 = inlined_call_operand.hbm [shape: f32[16], index: 0, kind: input, shape index: {}]
  %s1 = inlined_call_operand.vmem [shape: f32[4,16], index: 1, kind: output, shape index: {}]
  $region1: #{tile.28} parent=0
    #allocation0 [shape = 'u8[512]{0}', space=vmem, size = 0x400, scoped, tag = 'operand span for operand 0']
    #allocation1 [shape = 's32[1]{0}', space=sflag, size = 0x4, scoped, tag = 'scoped memory for tile.28']
    %2 = vsyncpa [#allocation1], 0
    // Predicated region
    $region2: #{tile.28} parent=1 // pred_check
      _
    $region3: #{tile.28} parent=1 // pred_check_branch
      %4 = sbr.rel (0) target = $region5
    $region4: #{tile.28} parent=1 // pred_region
      %6 = vsyncadd [#allocation1], 0
      %s8 = sshll.u32 %s0, 4
      %s9 = int_to_ptr.hbm [resolvable:$true] %s8
      %s10 = sshll.u32 [#allocation0], 4
      %s11 = int_to_ptr.vmem [resolvable:$true] %s10
      %13 = dma.hbm_to_vmem [thread:$0]  %s9, 16, %s11, [#allocation1]
    $region5: #{tile.28} parent=1 // pred_fallthru
      _
    // Predicated region
    $region6: #{tile.28} parent=1 // pred_check
      _
    $region7: #{tile.28} parent=1 // pred_check_branch
      %15 = sbr.rel (0) target = $region9
    $region8: #{tile.28} parent=1 // pred_region
      %17 = dma.done [#allocation1], 16
    $region9: #{tile.28} parent=1 // pred_fallthru
      _
    %v18 = vld [vmem:[#allocation0] ss:$0 sm:$0xff]
    %19 = vst [vmem:[%s1] sm:$0xf] %v18
    %20 = vsyncpa [#allocation1], 1

// kernel: tile.29
$region0: #{tile.29}
  %s0 = inlined_call_operand.vmem [shape: f32[4,16], index: 0, kind: input, shape index: {}]
  %s1 = inlined_call_operand.vmem [shape: f32[64], index: 1, kind: output, shape index: {}]
  $region1: #{tile.29} parent=0
    #allocation0 [shape = 'u8[4096]{0}', space=vmem, size = 0x1000, scoped, tag = 'scoped mem for output reshape']
    #allocation1 [shape = 'u8[4096]{0}', space=vmem, size = 0x1000, scoped, tag = 'scoped mem for input reshape']
    %s3 = ssub.s32 16, 1
    %v4 = vld [vmem:[%s0] sm:%s3]
    %5 = vst [vmem:[#allocation1] sm:%s3] %v4
    %v6 = vld [vmem:[#allocation1] sm:$0x1]
    %vm7 = vcmask 130048
    %8 = vst.msk [vmem:[#allocation0] sm:$0x1] %vm7, %v6
    %s9 = scalar_lea.vmem [#allocation1], 3
    %v10 = vld [vmem:[%s9] sm:$0x1]
    %11 = vrot.lane.b32.xlu0 %v10, 48
    %v12 = vpop.permute.xlu0 %11
    %vm13 = vcmask 523648
    %14 = vst.msk [vmem:[#allocation0] sm:$0x1] %vm13, %v12
    %s15 = scalar_lea.vmem [#allocation1], 2
    %v16 = vld [vmem:[%s15] sm:$0x1]
    %17 = vrot.lane.b32.xlu0 %v16, 32
    %v18 = vpop.permute.xlu0 %17
    %vm19 = vcmask 392448
    %20 = vst.msk [vmem:[#allocation0] sm:$0x1] %vm19, %v18
    %s21 = scalar_lea.vmem [#allocation1], 1
    %v22 = vld [vmem:[%s21] sm:$0x1]
    %23 = vrot.lane.b32.xlu0 %v22, 16
    %v24 = vpop.permute.xlu0 %23
    %vm25 = vcmask 261248
    %26 = vst.msk [vmem:[#allocation0] sm:$0x1] %vm25, %v24
    %s28 = ssub.s32 2, 1
    %v29 = vld [vmem:[#allocation0] sm:%s28]
    %s31 = ssub.s32 2, 1
    %32 = vst [vmem:[%s1] sm:%s31] %v29

// kernel: tile.33
$region0: #{tile.33}
  #allocation2 [shape = 's32[1]{0}', space=sflag, size = 0x4, scoped, tag = 'scoped memory for tile.33']
  %s0 = inlined_call_operand.hbm [shape: f32[8], index: 0, kind: input, shape index: {}]
  %s1 = inlined_call_operand.vmem [shape: f32[4,8], index: 1, kind: output, shape index: {}]
  $region1: #{tile.33} parent=0
    #allocation0 [shape = 'u8[512]{0}', space=vmem, size = 0x400, scoped, tag = 'operand span for operand 0']
    #allocation1 [shape = 's32[1]{0}', space=sflag, size = 0x4, scoped, tag = 'scoped memory for tile.33']
    %2 = vsyncpa [#allocation1], 0
    // Predicated region
    $region2: #{tile.33} parent=1 // pred_check
      _
    $region3: #{tile.33} parent=1 // pred_check_branch
      %4 = sbr.rel (0) target = $region5
    $region4: #{tile.33} parent=1 // pred_region
      %6 = vsyncadd [#allocation1], 0
      %s8 = sshll.u32 %s0, 4
      %s9 = int_to_ptr.hbm [resolvable:$true] %s8
      %s10 = sshll.u32 [#allocation0], 4
      %s11 = int_to_ptr.vmem [resolvable:$true] %s10
      %13 = dma.hbm_to_vmem [thread:$0]  %s9, 16, %s11, [#allocation1]
    $region5: #{tile.33} parent=1 // pred_fallthru
      _
    // Predicated region
    $region6: #{tile.33} parent=1 // pred_check
      _
    $region7: #{tile.33} parent=1 // pred_check_branch
      %15 = sbr.rel (0) target = $region9
    $region8: #{tile.33} parent=1 // pred_region
      %17 = dma.done [#allocation1], 16
    $region9: #{tile.33} parent=1 // pred_fallthru
      _
    %v18 = vld [vmem:[#allocation0] ss:$0 sm:$0xff]
    %19 = vst [vmem:[%s1] sm:$0xf] %v18
    %20 = vsyncpa [#allocation1], 1

// kernel: tile.34
$region0: #{tile.34}
  %s0 = inlined_call_operand.vmem [shape: f32[4,8], index: 0, kind: input, shape index: {}]
  %s1 = inlined_call_operand.vmem [shape: f32[32], index: 1, kind: output, shape index: {}]
  $region1: #{tile.34} parent=0
    #allocation0 [shape = 'u8[4096]{0}', space=vmem, size = 0x1000, scoped, tag = 'scoped mem for output reshape']
    #allocation1 [shape = 'u8[4096]{0}', space=vmem, size = 0x1000, scoped, tag = 'scoped mem for input reshape']
    %s3 = ssub.s32 16, 1
    %v4 = vld [vmem:[%s0] sm:%s3]
    %5 = vst [vmem:[#allocation1] sm:%s3] %v4
    %v6 = vld [vmem:[#allocation1] sm:$0x1]
    %vm7 = vcmask 64512
    %8 = vst.msk [vmem:[#allocation0] sm:$0x1] %vm7, %v6
    %s9 = scalar_lea.vmem [#allocation1], 3
    %v10 = vld [vmem:[%s9] sm:$0x1]
    %11 = vrot.lane.b32.xlu0 %v10, 24
    %v12 = vpop.permute.xlu0 %11
    %vm13 = vcmask 261312
    %14 = vst.msk [vmem:[#allocation0] sm:$0x1] %vm13, %v12
    %s15 = scalar_lea.vmem [#allocation1], 2
    %v16 = vld [vmem:[%s15] sm:$0x1]
    %17 = vrot.lane.b32.xlu0 %v16, 16
    %v18 = vpop.permute.xlu0 %17
    %vm19 = vcmask 195712
    %20 = vst.msk [vmem:[#allocation0] sm:$0x1] %vm19, %v18
    %s21 = scalar_lea.vmem [#allocation1], 1
    %v22 = vld [vmem:[%s21] sm:$0x1]
    %23 = vrot.lane.b32.xlu0 %v22, 8
    %v24 = vpop.permute.xlu0 %23
    %vm25 = vcmask 130112
    %26 = vst.msk [vmem:[#allocation0] sm:$0x1] %vm25, %v24
    %s28 = ssub.s32 2, 1
    %v29 = vld [vmem:[#allocation0] sm:%s28]
    %s31 = ssub.s32 2, 1
    %32 = vst [vmem:[%s1] sm:%s31] %v29

// kernel: tile.38
$region0: #{tile.38}
  #allocation2 [shape = 's32[1]{0}', space=sflag, size = 0x4, scoped, tag = 'scoped memory for tile.38']
  %s0 = inlined_call_operand.hbm [shape: f32[3], index: 0, kind: input, shape index: {}]
  %s1 = inlined_call_operand.vmem [shape: f32[4,3], index: 1, kind: output, shape index: {}]
  $region1: #{tile.38} parent=0
    #allocation0 [shape = 'u8[512]{0}', space=vmem, size = 0x400, scoped, tag = 'operand span for operand 0']
    #allocation1 [shape = 's32[1]{0}', space=sflag, size = 0x4, scoped, tag = 'scoped memory for tile.38']
    %2 = vsyncpa [#allocation1], 0
    // Predicated region
    $region2: #{tile.38} parent=1 // pred_check
      _
    $region3: #{tile.38} parent=1 // pred_check_branch
      %4 = sbr.rel (0) target = $region5
    $region4: #{tile.38} parent=1 // pred_region
      %6 = vsyncadd [#allocation1], 0
      %s8 = sshll.u32 %s0, 4
      %s9 = int_to_ptr.hbm [resolvable:$true] %s8
      %s10 = sshll.u32 [#allocation0], 4
      %s11 = int_to_ptr.vmem [resolvable:$true] %s10
      %13 = dma.hbm_to_vmem [thread:$0]  %s9, 16, %s11, [#allocation1]
    $region5: #{tile.38} parent=1 // pred_fallthru
      _
    // Predicated region
    $region6: #{tile.38} parent=1 // pred_check
      _
    $region7: #{tile.38} parent=1 // pred_check_branch
      %15 = sbr.rel (0) target = $region9
    $region8: #{tile.38} parent=1 // pred_region
      %17 = dma.done [#allocation1], 16
    $region9: #{tile.38} parent=1 // pred_fallthru
      _
    %v18 = vld [vmem:[#allocation0] ss:$0 sm:$0xff]
    %19 = vst [vmem:[%s1] sm:$0xf] %v18
    %20 = vsyncpa [#allocation1], 1

// kernel: tile.39
$region0: #{tile.39}
  %s0 = inlined_call_operand.vmem [shape: f32[4,3], index: 0, kind: input, shape index: {}]
  %s1 = inlined_call_operand.vmem [shape: f32[12], index: 1, kind: output, shape index: {}]
  $region1: #{tile.39} parent=0
    #allocation0 [shape = 'u8[4096]{0}', space=vmem, size = 0x1000, scoped, tag = 'scoped mem for output reshape']
    #allocation1 [shape = 'u8[4096]{0}', space=vmem, size = 0x1000, scoped, tag = 'scoped mem for input reshape']
    %s3 = ssub.s32 16, 1
    %v4 = vld [vmem:[%s0] sm:%s3]
    %5 = vst [vmem:[#allocation1] sm:%s3] %v4
    %v6 = vld [vmem:[#allocation1] sm:$0x1]
    %vm7 = vcmask 23552
    %8 = vst.msk [vmem:[#allocation0] sm:$0x1] %vm7, %v6
    %s9 = scalar_lea.vmem [#allocation1], 3
    %v10 = vld [vmem:[%s9] sm:$0x1]
    %11 = vrot.lane.b32.xlu0 %v10, 9
    %v12 = vpop.permute.xlu0 %11
    %vm13 = vcmask 97352
    %14 = vst.msk [vmem:[#allocation0] sm:$0x1] %vm13, %v12
    %s15 = scalar_lea.vmem [#allocation1], 2
    %v16 = vld [vmem:[%s15] sm:$0x1]
    %17 = vrot.lane.b32.xlu0 %v16, 6
    %v18 = vpop.permute.xlu0 %17
    %vm19 = vcmask 72752
    %20 = vst.msk [vmem:[#allocation0] sm:$0x1] %vm19, %v18
    %s21 = scalar_lea.vmem [#allocation1], 1
    %v22 = vld [vmem:[%s21] sm:$0x1]
    %23 = vrot.lane.b32.xlu0 %v22, 3
    %v24 = vpop.permute.xlu0 %23
    %vm25 = vcmask 48152
    %26 = vst.msk [vmem:[#allocation0] sm:$0x1] %vm25, %v24
    %s28 = ssub.s32 2, 1
    %v29 = vld [vmem:[#allocation0] sm:%s28]
    %s31 = ssub.s32 2, 1
    %32 = vst [vmem:[%s1] sm:%s31] %v29

// kernel: generator_forward.23
$region0: #{generator_forward.23}
  #allocation0 [shape = 'u32[]', space=smem, size = 0x4, offset = 0x4, fixed_abs, tag = 'smem constant byte address 0x4 - core index']
  #allocation1 [shape = 'u32[72,128]{1,0:T(1,128)}', space=vmem, size = 0x9000, scoped, tag = 'internal scratch']
  %s0 = inlined_call_operand.vmem [shape: f32[8,1024], index: 0, kind: input, shape index: {}]
  %s1 = inlined_call_operand.vmem [shape: f32[1,1024], index: 1, kind: output, shape index: {0}]
  %s2 = inlined_call_operand.vmem [shape: f32[1,1024], index: 2, kind: output, shape index: {1}]
  %3 = xla_tuple %s1, %s2
  %s4 = sld [smem:[#allocation0]]
  $region49: #{generator_forward.23} parent=0
    _
  %s6 = ssub.s32 1, %s4
  %s7 = scalar_select 0, %s6, %s4
  loop: start=0, step=1, limit=4
  $region2: #{generator_forward.23} parent=0 // loop_pre_header
    _
  $region3: #{generator_forward.23} parent=0 // loop_header
    %s9 = sphi 0, %s13
    %p10 = scmp.ge.s32.totalorder %s9, 4
    %s16 = sphi 0, %s28
    %s17 = sphi 0, %s24
    %s18 = sphi 0, %s16
    %s19 = sphi 0, %s17
    %s20 = sphi 0, %s18
    %s21 = sphi 0, %s19
    %s33 = sphi 0, %s35
    %s36 = sphi 0, %s33
    %s37 = sphi 0, %s36
    %s53 = sphi 0, %s37
    %s59 = sphi 0, %s61
    %s62 = sphi 0, %s59
    %s63 = sphi 0, %s62
    %s79 = sphi 0, %s63
    %s85 = sphi 0, %s87
    %s88 = sphi 0, %s85
    %s89 = sphi 0, %s88
    %s105 = sphi 0, %s89
  $region4: #{generator_forward.23} parent=0 // loop_header_branch
    %12 = sbr.rel (%p10) target = $region8
  $region5: #{generator_forward.23} parent=0 // loop_body
    %s14 = ssub.s32 %s9, 1
    %s15 = ssub.s32 %s9, 2
    %s22 = sadd.s32 1, %s17
    %p23 = scmp.ge.s32.totalorder %s22, 1
    %s24 = scalar_select %p23, 0, %s22
    %s25 = sadd.s32 1, %s16
    %s26 = scalar_select %p23, %s25, %s16
    %p27 = scmp.ge.s32.totalorder %s26, 2
    %s28 = scalar_select %p27, 0, %s26
    %s29 = ssub.s32 %s17, %s24
    %s30 = ssub.s32 %s16, %s28
    %s31 = sor.u32 %s29, %s30
    %p32 = scmp.eq.s32.totalorder %s31, 0
    %s34 = sadd.s32 %s33, 1
    %s35 = scalar_select %p32, %s33, %s34
    %p38 = pneg %p32
    %p39 = scmp.eq.s32.totalorder %s9, 1
    %p40 = por %p38, %p39
    %p41 = scmp.ne.s32.totalorder %s33, %s36
    %p42 = scmp.eq.s32.totalorder %s9, 0
    %p43 = por %p41, %p42
    %p44 = scmp.ne.s32.totalorder %s33, %s36
    %p45 = scmp.eq.s32.totalorder %s14, 1
    %p46 = por %p44, %p45
    %p47 = scmp.ne.s32.totalorder %s36, %s37
    %p48 = scmp.eq.s32.totalorder %s14, 0
    %p49 = por %p47, %p48
    %p50 = scmp.ne.s32.totalorder %s36, %s37
    %p51 = scmp.eq.s32.totalorder %s15, 1
    %p52 = por %p50, %p51
    %p54 = scmp.ne.s32.totalorder %s37, %s53
    %p55 = scmp.eq.s32.totalorder %s15, 0
    %p56 = por %p54, %p55
    %s57 = ssub.s32 %s16, %s28
    %p58 = scmp.eq.s32.totalorder %s57, 0
    %s60 = sadd.s32 %s59, 1
    %s61 = scalar_select %p58, %s59, %s60
    %p64 = pneg %p58
    %p65 = scmp.eq.s32.totalorder %s9, 1
    %p66 = por %p64, %p65
    %p67 = scmp.ne.s32.totalorder %s59, %s62
    %p68 = scmp.eq.s32.totalorder %s9, 0
    %p69 = por %p67, %p68
    %p70 = scmp.ne.s32.totalorder %s59, %s62
    %p71 = scmp.eq.s32.totalorder %s14, 1
    %p72 = por %p70, %p71
    %p73 = scmp.ne.s32.totalorder %s62, %s63
    %p74 = scmp.eq.s32.totalorder %s14, 0
    %p75 = por %p73, %p74
    %p76 = scmp.ne.s32.totalorder %s62, %s63
    %p77 = scmp.eq.s32.totalorder %s15, 1
    %p78 = por %p76, %p77
    %p80 = scmp.ne.s32.totalorder %s63, %s79
    %p81 = scmp.eq.s32.totalorder %s15, 0
    %p82 = por %p80, %p81
    %s83 = ssub.s32 %s16, %s28
    %p84 = scmp.eq.s32.totalorder %s83, 0
    %s86 = sadd.s32 %s85, 1
    %s87 = scalar_select %p84, %s85, %s86
    %p90 = pneg %p84
    %p91 = scmp.eq.s32.totalorder %s9, 1
    %p92 = por %p90, %p91
    %p93 = scmp.ne.s32.totalorder %s85, %s88
    %p94 = scmp.eq.s32.totalorder %s9, 0
    %p95 = por %p93, %p94
    %p96 = scmp.ne.s32.totalorder %s85, %s88
    %p97 = scmp.eq.s32.totalorder %s14, 1
    %p98 = por %p96, %p97
    %p99 = scmp.ne.s32.totalorder %s88, %s89
    %p100 = scmp.eq.s32.totalorder %s14, 0
    %p101 = por %p99, %p100
    %p102 = scmp.ne.s32.totalorder %s88, %s89
    %p103 = scmp.eq.s32.totalorder %s15, 1
    %p104 = por %p102, %p103
    %p106 = scmp.ne.s32.totalorder %s89, %s105
    %p107 = scmp.eq.s32.totalorder %s15, 0
    %p108 = por %p106, %p107
    %p109 = scmp.le.s32.totalorder 1, %s9
    %p110 = scmp.lt.s32.totalorder %s9, 3
    %p111 = pnand %p109, %p110
    %p112 = pneg %p111
    // Predicated region
    $region9: #{generator_forward.23} parent=5 // pred_check
      _
    $region10: #{generator_forward.23} parent=5 // pred_check_branch
      %114 = sbr.rel (%p111) target = $region12
    $region11: #{generator_forward.23} parent=5 // pred_region
      %s115 = ssub.s32 %s9, 1
    $region12: #{generator_forward.23} parent=5 // pred_fallthru
      _
    %p116 = scmp.lt.s32.totalorder %s9, 2
    // Predicated region
    $region13: #{generator_forward.23} parent=5 // pred_check
      %p117 = pneg %p116
    $region14: #{generator_forward.23} parent=5 // pred_check_branch
      %119 = sbr.rel (%p117) target = $region16
    $region15: #{generator_forward.23} parent=5 // pred_region
      // Predicated region
      $region17: #{generator_forward.23} parent=15 // pred_check
        %p120 = pneg %p43
      $region18: #{generator_forward.23} parent=15 // pred_check_branch
        %122 = sbr.rel (%p120) target = $region20
      $region19: #{generator_forward.23} parent=15 // pred_region
        %s123 = smul.u32 4, %s16
        %p124 = scmp.lt.s32.totalorder %s17, 0
        %s125 = scalar_select %p124, %s17, 0
        %p126 = scmp.lt.s32.totalorder %s123, 7
        %s127 = scalar_select %p126, %s123, 7
        %s128 = smul.addr %s125, 8
        %s129 = sadd.s32 %s127, %s128
        %s130 = smul.addr %s129, 8
        %s131 = scalar_lea.vmem %s0, %s130
        %s132 = smul.u32 4, %s16
      $region20: #{generator_forward.23} parent=15 // pred_fallthru
        _
    $region16: #{generator_forward.23} parent=5 // pred_fallthru
      _
    %p133 = scmp.le.s32.totalorder 1, %s9
    %p134 = scmp.lt.s32.totalorder %s9, 3
    %p135 = pnand %p133, %p134
    %p136 = pneg %p135
    // Predicated region
    $region21: #{generator_forward.23} parent=5 // pred_check
      _
    $region22: #{generator_forward.23} parent=5 // pred_check_branch
      %138 = sbr.rel (%p135) target = $region24
    $region23: #{generator_forward.23} parent=5 // pred_region
      %s139 = ssub.s32 %s9, 1
      %s140 = smul.u32 4, %s18
      %p141 = scmp.lt.s32.totalorder %s19, 0
      %s142 = scalar_select %p141, %s19, 0
      %p143 = scmp.lt.s32.totalorder %s140, 7
      %s144 = scalar_select %p143, %s140, 7
      %s145 = smul.addr %s142, 8
      %s146 = sadd.s32 %s144, %s145
      %s147 = smul.addr %s146, 8
      %s148 = scalar_lea.vmem %s0, %s147
      %p149 = pneg %p49
      %p150 = pneg %p46
      %p151 = pneg %p75
      %p152 = pneg %p72
      %s153 = smul.u32 4, %s18
      %p154 = scmp.lt.s32.totalorder %s153, 7
      %s155 = scalar_select %p154, %s153, 7
      %s156 = scalar_lea.vmem %s1, %s155
      %p157 = pneg %p101
      %p158 = pneg %p98
      %s159 = smul.u32 4, %s18
      %p160 = scmp.lt.s32.totalorder %s159, 7
      %s161 = scalar_select %p160, %s159, 7
      %s162 = scalar_lea.vmem %s2, %s161
      %s163 = smul.u32 4, %s18
      %p164 = scmp.lt.s32.totalorder %s19, 0
      %s165 = scalar_select %p164, %s19, 0
      %p166 = scmp.lt.s32.totalorder %s163, 7
      %s167 = scalar_select %p166, %s163, 7
      %s168 = smul.addr %s165, 8
      %s169 = sadd.s32 %s167, %s168
      %s170 = smul.addr %s169, 8
      %s171 = scalar_lea.vmem %s0, %s170
      %s172 = smul.u32 4, %s18
      %s173 = smul.u32 4, %s18
      %p174 = scmp.lt.s32.totalorder %s173, 7
      %s175 = scalar_select %p174, %s173, 7
      %s176 = scalar_lea.vmem %s1, %s175
      %s177 = smul.u32 4, %s18
      %s178 = smul.u32 4, %s18
      %p179 = scmp.lt.s32.totalorder %s178, 7
      %s180 = scalar_select %p179, %s178, 7
      %s181 = scalar_lea.vmem %s2, %s180
      %s182 = smul.u32 4, %s18
      %p183 = scmp.eq.s32.totalorder %s19, 0
      // Predicated region
      $region25: #{generator_forward.23} parent=23 // pred_check
        %p184 = pneg %p183
      $region26: #{generator_forward.23} parent=23 // pred_check_branch
        %186 = sbr.rel (%p184) target = $region28
      $region27: #{generator_forward.23} parent=23 // pred_region
        %v187 = vlaneseq
        %vm188 = vcmp.ge.s32.totalorder %v187, 0
        %vm189 = vcmp.lt.s32.totalorder %v187, 512
        %vm190 = vmand %vm188, %vm189
        %191 = vst.msk [vmem:[%s176] sm:$0xf] %vm190, 0.0
        %192 = vst.msk [vmem:[%s181] sm:$0xf] %vm190, 0.0
      $region28: #{generator_forward.23} parent=23 // pred_fallthru
        _
      %v193 = vld [vmem:[%s171] sm:$0xff]
      %v194 = vld [vmem:[%s171 + $0x8] sm:$0xff]
      %v195 = vld [vmem:[%s171 + $0x10] sm:$0xff]
      %v196 = vld [vmem:[%s171 + $0x18] sm:$0xff]
      %v197 = vld [vmem:[%s176] sm:$0xf]
      %v198 = vrot.slane %v193, 4
      %v199 = vadd.f32 %v193, %v198
      %v200 = vrot.slane %v199, 2
      %v201 = vadd.f32 %v199, %v200
      %v202 = vrot.slane %v201, 1
      %v203 = vadd.f32 %v201, %v202
      %v204 = vrot.slane %v194, 4
      %v205 = vadd.f32 %v194, %v204
      %v206 = vrot.slane %v205, 2
      %v207 = vadd.f32 %v205, %v206
      %v208 = vrot.slane %v207, 1
      %v209 = vadd.f32 %v207, %v208
      %v210 = vrot.slane %v195, 4
      %v211 = vadd.f32 %v195, %v210
      %v212 = vrot.slane %v211, 2
      %v213 = vadd.f32 %v211, %v212
      %v214 = vrot.slane %v213, 1
      %v215 = vadd.f32 %v213, %v214
      %v216 = vrot.slane %v196, 4
      %v217 = vadd.f32 %v196, %v216
      %v218 = vrot.slane %v217, 2
      %v219 = vadd.f32 %v217, %v218
      %v220 = vrot.slane %v219, 1
      %v221 = vadd.f32 %v219, %v220
      %v226 = vrot.slane %v209, 7
      %v227 = vrot.slane %v215, 6
      %v228 = vrot.slane %v221, 5
      %vm229 = vcmask 1040384
      %v230 = vsel %vm229, %v203, %v226
      %vm231 = vcmask 1042434
      %v232 = vsel %vm231, %v227, %v228
      %vm233 = vcmask 1041408
      %v234 = vsel %vm233, %v230, %v232
      %v236 = vadd.f32 %v197, %v234
      %v237 = vlaneseq
      %vm238 = vcmp.ge.s32.totalorder %v237, 0
      %vm239 = vcmp.lt.s32.totalorder %v237, 512
      %vm240 = vmand %vm238, %vm239
      %241 = vst.msk [vmem:[%s176] sm:$0xf] %vm240, %v236
      %v242 = vld [vmem:[%s181] sm:$0xf]
      %v243 = vmul.f32 %v193, %v193
      %v244 = vmul.f32 %v194, %v194
      %v245 = vmul.f32 %v195, %v195
      %v246 = vmul.f32 %v196, %v196
      %v247 = vrot.slane %v243, 4
      %v248 = vadd.f32 %v243, %v247
      %v249 = vrot.slane %v248, 2
      %v250 = vadd.f32 %v248, %v249
      %v251 = vrot.slane %v250, 1
      %v252 = vadd.f32 %v250, %v251
      %v253 = vrot.slane %v244, 4
      %v254 = vadd.f32 %v244, %v253
      %v255 = vrot.slane %v254, 2
      %v256 = vadd.f32 %v254, %v255
      %v257 = vrot.slane %v256, 1
      %v258 = vadd.f32 %v256, %v257
      %v259 = vrot.slane %v245, 4
      %v260 = vadd.f32 %v245, %v259
      %v261 = vrot.slane %v260, 2
      %v262 = vadd.f32 %v260, %v261
      %v263 = vrot.slane %v262, 1
      %v264 = vadd.f32 %v262, %v263
      %v265 = vrot.slane %v246, 4
      %v266 = vadd.f32 %v246, %v265
      %v267 = vrot.slane %v266, 2
      %v268 = vadd.f32 %v266, %v267
      %v269 = vrot.slane %v268, 1
      %v270 = vadd.f32 %v268, %v269
      %v275 = vrot.slane %v258, 7
      %v276 = vrot.slane %v264, 6
      %v277 = vrot.slane %v270, 5
      %v278 = vsel %vm229, %v252, %v275
      %v279 = vsel %vm231, %v276, %v277
      %v280 = vsel %vm233, %v278, %v279
      %v282 = vadd.f32 %v242, %v280
      %283 = vst.msk [vmem:[%s181] sm:$0xf] %vm240, %v282
      %s284 = smul.u32 4, %s18
      %p285 = scmp.lt.s32.totalorder %s284, 7
      %s286 = scalar_select %p285, %s284, 7
      %s287 = scalar_lea.vmem %s1, %s286
      %s288 = smul.u32 4, %s18
      %p289 = scmp.lt.s32.totalorder %s288, 7
      %s290 = scalar_select %p289, %s288, 7
      %s291 = scalar_lea.vmem %s2, %s290
      // Predicated region
      $region29: #{generator_forward.23} parent=23 // pred_check
        %p292 = pneg %p72
      $region30: #{generator_forward.23} parent=23 // pred_check_branch
        %294 = sbr.rel (%p292) target = $region32
      $region31: #{generator_forward.23} parent=23 // pred_region
        %s295 = smul.u32 4, %s18
      $region32: #{generator_forward.23} parent=23 // pred_fallthru
        _
      // Predicated region
      $region33: #{generator_forward.23} parent=23 // pred_check
        %p296 = pneg %p98
      $region34: #{generator_forward.23} parent=23 // pred_check_branch
        %298 = sbr.rel (%p296) target = $region36
      $region35: #{generator_forward.23} parent=23 // pred_region
        %s299 = smul.u32 4, %s18
      $region36: #{generator_forward.23} parent=23 // pred_fallthru
        _
    $region24: #{generator_forward.23} parent=5 // pred_fallthru
      _
    %p300 = scmp.le.s32.totalorder 2, %s9
    // Predicated region
    $region37: #{generator_forward.23} parent=5 // pred_check
      %p301 = pneg %p300
    $region38: #{generator_forward.23} parent=5 // pred_check_branch
      %303 = sbr.rel (%p301) target = $region40
    $region39: #{generator_forward.23} parent=5 // pred_region
      %s304 = ssub.s32 %s9, 2
      // Predicated region
      $region41: #{generator_forward.23} parent=39 // pred_check
        %p305 = pneg %p78
      $region42: #{generator_forward.23} parent=39 // pred_check_branch
        %307 = sbr.rel (%p305) target = $region44
      $region43: #{generator_forward.23} parent=39 // pred_region
        %s308 = smul.u32 4, %s20
        %p309 = scmp.lt.s32.totalorder %s308, 7
        %s310 = scalar_select %p309, %s308, 7
        %s311 = scalar_lea.vmem %s1, %s310
      $region44: #{generator_forward.23} parent=39 // pred_fallthru
        _
      // Predicated region
      $region45: #{generator_forward.23} parent=39 // pred_check
        %p312 = pneg %p104
      $region46: #{generator_forward.23} parent=39 // pred_check_branch
        %314 = sbr.rel (%p312) target = $region48
      $region47: #{generator_forward.23} parent=39 // pred_region
        %s315 = smul.u32 4, %s20
        %p316 = scmp.lt.s32.totalorder %s315, 7
        %s317 = scalar_select %p316, %s315, 7
        %s318 = scalar_lea.vmem %s2, %s317
      $region48: #{generator_forward.23} parent=39 // pred_fallthru
        _
    $region40: #{generator_forward.23} parent=5 // pred_fallthru
      _
  $region6: #{generator_forward.23} parent=0 // loop_footer
    %s13 = sadd.s32 1, %s9
  $region7: #{generator_forward.23} parent=0 // loop_footer_branch
    %8 = sbr.rel target = $region3
  $region8: #{generator_forward.23} parent=0 // loop_exit
    _

// kernel: generator_forward.28
$region0: #{generator_forward.28}
  #allocation0 [shape = 'u32[]', space=smem, size = 0x4, offset = 0x4, fixed_abs, tag = 'smem constant byte address 0x4 - core index']
  #allocation1 [shape = 'u32[72,128]{1,0:T(1,128)}', space=vmem, size = 0x9000, scoped, tag = 'internal scratch']
  #allocation2 [shape = 'f32[8,512]{1,0:T(8,128)}', space=vmem, size = 0x4000, scoped, tag = 'scratch operand']
  %s0 = inlined_call_operand.vmem [shape: f32[8,128], index: 0, kind: input, shape index: {}]
  %s1 = inlined_call_operand.vmem [shape: f32[128,1024], index: 1, kind: input, shape index: {}]
  %s2 = inlined_call_operand.vmem [shape: f32[1,1024], index: 2, kind: input, shape index: {}]
  %s3 = inlined_call_operand.vmem [shape: f32[8,1024], index: 3, kind: output, shape index: {}]
  %s4 = sld [smem:[#allocation0]]
  $region76: #{generator_forward.28} parent=0
    _
  %s6 = ssub.s32 1, %s4
  %s7 = scalar_select 0, %s6, %s4
  $region1: #{generator_forward.28} parent=0
    #allocation3 [shape = 'u8[524288]{0}', space=vmem, size = 0x80000, scoped, tag = 'input window, operand 1']
    loop: start=0, step=1, limit=4
    $region2: #{generator_forward.28} parent=1 // loop_pre_header
      _
    $region3: #{generator_forward.28} parent=1 // loop_header
      %s9 = sphi 0, %s13
      %p10 = scmp.ge.s32.totalorder %s9, 4
      %s16 = sphi 0, %s35
      %s17 = sphi 0, %s31
      %s18 = sphi 0, %s27
      %s19 = sphi 0, %s16
      %s20 = sphi 0, %s17
      %s21 = sphi 0, %s18
      %s22 = sphi 0, %s19
      %s23 = sphi 0, %s20
      %s24 = sphi 0, %s21
      %s40 = sphi 0, %s42
      %s43 = sphi 0, %s40
      %s44 = sphi 0, %s43
      %s60 = sphi 0, %s44
      %s68 = sphi 0, %s70
      %s71 = sphi 0, %s68
      %s72 = sphi 0, %s71
      %s88 = sphi 0, %s72
      %s94 = sphi 0, %s96
      %s97 = sphi 0, %s94
      %s98 = sphi 0, %s97
      %s114 = sphi 0, %s98
      %s122 = sphi 0, %s124
      %s125 = sphi 0, %s122
      %s126 = sphi 0, %s125
      %s142 = sphi 0, %s126
    $region4: #{generator_forward.28} parent=1 // loop_header_branch
      %12 = sbr.rel (%p10) target = $region8
    $region5: #{generator_forward.28} parent=1 // loop_body
      %s14 = ssub.s32 %s9, 1
      %s15 = ssub.s32 %s9, 2
      %s25 = sadd.s32 1, %s18
      %p26 = scmp.ge.s32.totalorder %s25, 1
      %s27 = scalar_select %p26, 0, %s25
      %s28 = sadd.s32 1, %s17
      %s29 = scalar_select %p26, %s28, %s17
      %p30 = scmp.ge.s32.totalorder %s29, 2
      %s31 = scalar_select %p30, 0, %s29
      %s32 = sadd.s32 1, %s16
      %s33 = scalar_select %p30, %s32, %s16
      %p34 = scmp.ge.s32.totalorder %s33, 1
      %s35 = scalar_select %p34, 0, %s33
      %s36 = ssub.s32 %s16, %s35
      %s37 = ssub.s32 %s18, %s27
      %s38 = sor.u32 %s36, %s37
      %p39 = scmp.eq.s32.totalorder %s38, 0
      %s41 = sadd.s32 %s40, 1
      %s42 = scalar_select %p39, %s40, %s41
      %p45 = pneg %p39
      %p46 = scmp.eq.s32.totalorder %s9, 1
      %p47 = por %p45, %p46
      %p48 = scmp.ne.s32.totalorder %s40, %s43
      %p49 = scmp.eq.s32.totalorder %s9, 0
      %p50 = por %p48, %p49
      %p51 = scmp.ne.s32.totalorder %s40, %s43
      %p52 = scmp.eq.s32.totalorder %s14, 1
      %p53 = por %p51, %p52
      %p54 = scmp.ne.s32.totalorder %s43, %s44
      %p55 = scmp.eq.s32.totalorder %s14, 0
      %p56 = por %p54, %p55
      %p57 = scmp.ne.s32.totalorder %s43, %s44
      %p58 = scmp.eq.s32.totalorder %s15, 1
      %p59 = por %p57, %p58
      %p61 = scmp.ne.s32.totalorder %s44, %s60
      %p62 = scmp.eq.s32.totalorder %s15, 0
      %p63 = por %p61, %p62
      %s64 = ssub.s32 %s18, %s27
      %s65 = ssub.s32 %s17, %s31
      %s66 = sor.u32 %s64, %s65
      %p67 = scmp.eq.s32.totalorder %s66, 0
      %s69 = sadd.s32 %s68, 1
      %s70 = scalar_select %p67, %s68, %s69
      %p73 = pneg %p67
      %p74 = scmp.eq.s32.totalorder %s9, 1
      %p75 = por %p73, %p74
      %p76 = scmp.ne.s32.totalorder %s68, %s71
      %p77 = scmp.eq.s32.totalorder %s9, 0
      %p78 = por %p76, %p77
      %p79 = scmp.ne.s32.totalorder %s68, %s71
      %p80 = scmp.eq.s32.totalorder %s14, 1
      %p81 = por %p79, %p80
      %p82 = scmp.ne.s32.totalorder %s71, %s72
      %p83 = scmp.eq.s32.totalorder %s14, 0
      %p84 = por %p82, %p83
      %p85 = scmp.ne.s32.totalorder %s71, %s72
      %p86 = scmp.eq.s32.totalorder %s15, 1
      %p87 = por %p85, %p86
      %p89 = scmp.ne.s32.totalorder %s72, %s88
      %p90 = scmp.eq.s32.totalorder %s15, 0
      %p91 = por %p89, %p90
      %s92 = ssub.s32 %s17, %s31
      %p93 = scmp.eq.s32.totalorder %s92, 0
      %s95 = sadd.s32 %s94, 1
      %s96 = scalar_select %p93, %s94, %s95
      %p99 = pneg %p93
      %p100 = scmp.eq.s32.totalorder %s9, 1
      %p101 = por %p99, %p100
      %p102 = scmp.ne.s32.totalorder %s94, %s97
      %p103 = scmp.eq.s32.totalorder %s9, 0
      %p104 = por %p102, %p103
      %p105 = scmp.ne.s32.totalorder %s94, %s97
      %p106 = scmp.eq.s32.totalorder %s14, 1
      %p107 = por %p105, %p106
      %p108 = scmp.ne.s32.totalorder %s97, %s98
      %p109 = scmp.eq.s32.totalorder %s14, 0
      %p110 = por %p108, %p109
      %p111 = scmp.ne.s32.totalorder %s97, %s98
      %p112 = scmp.eq.s32.totalorder %s15, 1
      %p113 = por %p111, %p112
      %p115 = scmp.ne.s32.totalorder %s98, %s114
      %p116 = scmp.eq.s32.totalorder %s15, 0
      %p117 = por %p115, %p116
      %s118 = ssub.s32 %s16, %s35
      %s119 = ssub.s32 %s17, %s31
      %s120 = sor.u32 %s118, %s119
      %p121 = scmp.eq.s32.totalorder %s120, 0
      %s123 = sadd.s32 %s122, 1
      %s124 = scalar_select %p121, %s122, %s123
      %p127 = pneg %p121
      %p128 = scmp.eq.s32.totalorder %s9, 1
      %p129 = por %p127, %p128
      %p130 = scmp.ne.s32.totalorder %s122, %s125
      %p131 = scmp.eq.s32.totalorder %s9, 0
      %p132 = por %p130, %p131
      %p133 = scmp.ne.s32.totalorder %s122, %s125
      %p134 = scmp.eq.s32.totalorder %s14, 1
      %p135 = por %p133, %p134
      %p136 = scmp.ne.s32.totalorder %s125, %s126
      %p137 = scmp.eq.s32.totalorder %s14, 0
      %p138 = por %p136, %p137
      %p139 = scmp.ne.s32.totalorder %s125, %s126
      %p140 = scmp.eq.s32.totalorder %s15, 1
      %p141 = por %p139, %p140
      %p143 = scmp.ne.s32.totalorder %s126, %s142
      %p144 = scmp.eq.s32.totalorder %s15, 0
      %p145 = por %p143, %p144
      %p146 = scmp.le.s32.totalorder 1, %s9
      %p147 = scmp.lt.s32.totalorder %s9, 3
      %p148 = pnand %p146, %p147
      %p149 = pneg %p148
      // Predicated region
      $region9: #{generator_forward.28} parent=5 // pred_check
        _
      $region10: #{generator_forward.28} parent=5 // pred_check_branch
        %151 = sbr.rel (%p148) target = $region12
      $region11: #{generator_forward.28} parent=5 // pred_region
        %s152 = ssub.s32 %s9, 1
        // Predicated region
        $region13: #{generator_forward.28} parent=11 // pred_check
          %p153 = pneg %p56
        $region14: #{generator_forward.28} parent=11 // pred_check_branch
          %155 = sbr.rel (%p153) target = $region16
        $region15: #{generator_forward.28} parent=11 // pred_region
          %p156 = scmp.lt.s32.totalorder %s19, 0
          %s157 = scalar_select %p156, %s19, 0
          %p158 = scmp.lt.s32.totalorder %s21, 0
          %s159 = scalar_select %p158, %s21, 0
          %s160 = sadd.s32 %s159, %s157
          %s161 = smul.addr %s160, 8
          %s162 = scalar_lea.vmem %s0, %s161
        $region16: #{generator_forward.28} parent=11 // pred_fallthru
          _
      $region12: #{generator_forward.28} parent=5 // pred_fallthru
        _
      %p163 = scmp.lt.s32.totalorder %s9, 2
      // Predicated region
      $region17: #{generator_forward.28} parent=5 // pred_check
        %p164 = pneg %p163
      $region18: #{generator_forward.28} parent=5 // pred_check_branch
        %166 = sbr.rel (%p164) target = $region20
      $region19: #{generator_forward.28} parent=5 // pred_region
        // Predicated region
        $region21: #{generator_forward.28} parent=19 // pred_check
          %p167 = pneg %p78
        $region22: #{generator_forward.28} parent=19 // pred_check_branch
          %169 = sbr.rel (%p167) target = $region24
        $region23: #{generator_forward.28} parent=19 // pred_region
          %s170 = sand.u32 %s68, 1
          %s171 = sand.u32 %s68, 1
          %s172 = smul.addr %s171, 512
          %s173 = scalar_lea.vmem [#allocation3], %s172
          %s174 = smul.u32 16, %s18
          %s175 = smul.u32 4, %s17
          %s176 = smul.addr %s174, 8
          %s177 = sadd.s32 %s175, %s176
          %s178 = smul.addr %s177, 8
          %s179 = scalar_lea.vmem %s1, %s178
          // Predicated region
          $region25: #{generator_forward.28} parent=23 // pred_check
            _
          $region26: #{generator_forward.28} parent=23 // pred_check_branch
            %181 = sbr.rel (0) target = $region28
          $region27: #{generator_forward.28} parent=23 // pred_region
            // Predicated region
            $region29: #{generator_forward.28} parent=27 // pred_check
              _
            $region30: #{generator_forward.28} parent=27 // pred_check_branch
              %183 = sbr.rel (0) target = $region32
            $region31: #{generator_forward.28} parent=27 // pred_region
              loop: start=0, step=1, limit=1
              $region33: #{generator_forward.28} parent=31 // loop_pre_header
                _
              $region34: #{generator_forward.28} parent=31 // loop_header
                %s185 = sphi 0, %s189
                %p186 = scmp.ge.s32.totalorder %s185, 1
                %s190 = sphi %s179, %s179
                %s191 = sphi %s173, %s173
              $region35: #{generator_forward.28} parent=31 // loop_header_branch
                %188 = sbr.rel (%p186) target = $region39
              $region36: #{generator_forward.28} parent=31 // loop_body
                %v192 = vld [vmem:[%s190] sm:$0xff]
                %193 = vst [vmem:[%s191] sm:$0xff] %v192
                %v194 = vld [vmem:[%s190 + $0x8] sm:$0xff]
                %195 = vst [vmem:[%s191 + $0x8] sm:$0xff] %v194
                %v196 = vld [vmem:[%s190 + $0x10] sm:$0xff]
                %197 = vst [vmem:[%s191 + $0x10] sm:$0xff] %v196
                %v198 = vld [vmem:[%s190 + $0x18] sm:$0xff]
                %199 = vst [vmem:[%s191 + $0x18] sm:$0xff] %v198
                %v200 = vld [vmem:[%s190 + $0x40] sm:$0xff]
                %201 = vst [vmem:[%s191 + $0x20] sm:$0xff] %v200
                %v202 = vld [vmem:[%s190 + $0x48] sm:$0xff]
                %203 = vst [vmem:[%s191 + $0x28] sm:$0xff] %v202
                %v204 = vld [vmem:[%s190 + $0x50] sm:$0xff]
                %205 = vst [vmem:[%s191 + $0x30] sm:$0xff] %v204
                %v206 = vld [vmem:[%s190 + $0x58] sm:$0xff]
                %207 = vst [vmem:[%s191 + $0x38] sm:$0xff] %v206
                %v208 = vld [vmem:[%s190 + $0x80] sm:$0xff]
                %209 = vst [vmem:[%s191 + $0x40] sm:$0xff] %v208
                %v210 = vld [vmem:[%s190 + $0x88] sm:$0xff]
                %211 = vst [vmem:[%s191 + $0x48] sm:$0xff] %v210
                %v212 = vld [vmem:[%s190 + $0x90] sm:$0xff]
                %213 = vst [vmem:[%s191 + $0x50] sm:$0xff] %v212
                %v214 = vld [vmem:[%s190 + $0x98] sm:$0xff]
                %215 = vst [vmem:[%s191 + $0x58] sm:$0xff] %v214
                %v216 = vld [vmem:[%s190 + $0xc0] sm:$0xff]
                %217 = vst [vmem:[%s191 + $0x60] sm:$0xff] %v216
                %v218 = vld [vmem:[%s190 + $0xc8] sm:$0xff]
                %219 = vst [vmem:[%s191 + $0x68] sm:$0xff] %v218
                %v220 = vld [vmem:[%s190 + $0xd0] sm:$0xff]
                %221 = vst [vmem:[%s191 + $0x70] sm:$0xff] %v220
                %v222 = vld [vmem:[%s190 + $0xd8] sm:$0xff]
                %223 = vst [vmem:[%s191 + $0x78] sm:$0xff] %v222
                %v224 = vld [vmem:[%s190 + $0x100] sm:$0xff]
                %225 = vst [vmem:[%s191 + $0x80] sm:$0xff] %v224
                %v226 = vld [vmem:[%s190 + $0x108] sm:$0xff]
                %227 = vst [vmem:[%s191 + $0x88] sm:$0xff] %v226
                %v228 = vld [vmem:[%s190 + $0x110] sm:$0xff]
                %229 = vst [vmem:[%s191 + $0x90] sm:$0xff] %v228
                %v230 = vld [vmem:[%s190 + $0x118] sm:$0xff]
                %231 = vst [vmem:[%s191 + $0x98] sm:$0xff] %v230
                %v232 = vld [vmem:[%s190 + $0x140] sm:$0xff]
                %233 = vst [vmem:[%s191 + $0xa0] sm:$0xff] %v232
                %v234 = vld [vmem:[%s190 + $0x148] sm:$0xff]
                %235 = vst [vmem:[%s191 + $0xa8] sm:$0xff] %v234
                %v236 = vld [vmem:[%s190 + $0x150] sm:$0xff]
                %237 = vst [vmem:[%s191 + $0xb0] sm:$0xff] %v236
                %v238 = vld [vmem:[%s190 + $0x158] sm:$0xff]
                %239 = vst [vmem:[%s191 + $0xb8] sm:$0xff] %v238
                %v240 = vld [vmem:[%s190 + $0x180] sm:$0xff]
                %241 = vst [vmem:[%s191 + $0xc0] sm:$0xff] %v240
                %v242 = vld [vmem:[%s190 + $0x188] sm:$0xff]
                %243 = vst [vmem:[%s191 + $0xc8] sm:$0xff] %v242
                %v244 = vld [vmem:[%s190 + $0x190] sm:$0xff]
                %245 = vst [vmem:[%s191 + $0xd0] sm:$0xff] %v244
                %v246 = vld [vmem:[%s190 + $0x198] sm:$0xff]
                %247 = vst [vmem:[%s191 + $0xd8] sm:$0xff] %v246
                %v248 = vld [vmem:[%s190 + $0x1c0] sm:$0xff]
                %249 = vst [vmem:[%s191 + $0xe0] sm:$0xff] %v248
                %v250 = vld [vmem:[%s190 + $0x1c8] sm:$0xff]
                %251 = vst [vmem:[%s191 + $0xe8] sm:$0xff] %v250
                %v252 = vld [vmem:[%s190 + $0x1d0] sm:$0xff]
                %253 = vst [vmem:[%s191 + $0xf0] sm:$0xff] %v252
                %v254 = vld [vmem:[%s190 + $0x1d8] sm:$0xff]
                %255 = vst [vmem:[%s191 + $0xf8] sm:$0xff] %v254
                %v256 = vld [vmem:[%s190 + $0x200] sm:$0xff]
                %257 = vst [vmem:[%s191 + $0x100] sm:$0xff] %v256
                %v258 = vld [vmem:[%s190 + $0x208] sm:$0xff]
                %259 = vst [vmem:[%s191 + $0x108] sm:$0xff] %v258
                %v260 = vld [vmem:[%s190 + $0x210] sm:$0xff]
                %261 = vst [vmem:[%s191 + $0x110] sm:$0xff] %v260
                %v262 = vld [vmem:[%s190 + $0x218] sm:$0xff]
                %263 = vst [vmem:[%s191 + $0x118] sm:$0xff] %v262
                %v264 = vld [vmem:[%s190 + $0x240] sm:$0xff]
                %265 = vst [vmem:[%s191 + $0x120] sm:$0xff] %v264
                %v266 = vld [vmem:[%s190 + $0x248] sm:$0xff]
                %267 = vst [vmem:[%s191 + $0x128] sm:$0xff] %v266
                %v268 = vld [vmem:[%s190 + $0x250] sm:$0xff]
                %269 = vst [vmem:[%s191 + $0x130] sm:$0xff] %v268
                %v270 = vld [vmem:[%s190 + $0x258] sm:$0xff]
                %271 = vst [vmem:[%s191 + $0x138] sm:$0xff] %v270
                %v272 = vld [vmem:[%s190 + $0x280] sm:$0xff]
                %273 = vst [vmem:[%s191 + $0x140] sm:$0xff] %v272
                %v274 = vld [vmem:[%s190 + $0x288] sm:$0xff]
                %275 = vst [vmem:[%s191 + $0x148] sm:$0xff] %v274
                %v276 = vld [vmem:[%s190 + $0x290] sm:$0xff]
                %277 = vst [vmem:[%s191 + $0x150] sm:$0xff] %v276
                %v278 = vld [vmem:[%s190 + $0x298] sm:$0xff]
                %279 = vst [vmem:[%s191 + $0x158] sm:$0xff] %v278
                %v280 = vld [vmem:[%s190 + $0x2c0] sm:$0xff]
                %281 = vst [vmem:[%s191 + $0x160] sm:$0xff] %v280
                %v282 = vld [vmem:[%s190 + $0x2c8] sm:$0xff]
                %283 = vst [vmem:[%s191 + $0x168] sm:$0xff] %v282
                %v284 = vld [vmem:[%s190 + $0x2d0] sm:$0xff]
                %285 = vst [vmem:[%s191 + $0x170] sm:$0xff] %v284
                %v286 = vld [vmem:[%s190 + $0x2d8] sm:$0xff]
                %287 = vst [vmem:[%s191 + $0x178] sm:$0xff] %v286
                %v288 = vld [vmem:[%s190 + $0x300] sm:$0xff]
                %289 = vst [vmem:[%s191 + $0x180] sm:$0xff] %v288
                %v290 = vld [vmem:[%s190 + $0x308] sm:$0xff]
                %291 = vst [vmem:[%s191 + $0x188] sm:$0xff] %v290
                %v292 = vld [vmem:[%s190 + $0x310] sm:$0xff]
                %293 = vst [vmem:[%s191 + $0x190] sm:$0xff] %v292
                %v294 = vld [vmem:[%s190 + $0x318] sm:$0xff]
                %295 = vst [vmem:[%s191 + $0x198] sm:$0xff] %v294
                %v296 = vld [vmem:[%s190 + $0x340] sm:$0xff]
                %297 = vst [vmem:[%s191 + $0x1a0] sm:$0xff] %v296
                %v298 = vld [vmem:[%s190 + $0x348] sm:$0xff]
                %299 = vst [vmem:[%s191 + $0x1a8] sm:$0xff] %v298
                %v300 = vld [vmem:[%s190 + $0x350] sm:$0xff]
                %301 = vst [vmem:[%s191 + $0x1b0] sm:$0xff] %v300
                %v302 = vld [vmem:[%s190 + $0x358] sm:$0xff]
                %303 = vst [vmem:[%s191 + $0x1b8] sm:$0xff] %v302
                %v304 = vld [vmem:[%s190 + $0x380] sm:$0xff]
                %305 = vst [vmem:[%s191 + $0x1c0] sm:$0xff] %v304
                %v306 = vld [vmem:[%s190 + $0x388] sm:$0xff]
                %307 = vst [vmem:[%s191 + $0x1c8] sm:$0xff] %v306
                %v308 = vld [vmem:[%s190 + $0x390] sm:$0xff]
                %309 = vst [vmem:[%s191 + $0x1d0] sm:$0xff] %v308
                %v310 = vld [vmem:[%s190 + $0x398] sm:$0xff]
                %311 = vst [vmem:[%s191 + $0x1d8] sm:$0xff] %v310
                %v312 = vld [vmem:[%s190 + $0x3c0] sm:$0xff]
                %313 = vst [vmem:[%s191 + $0x1e0] sm:$0xff] %v312
                %v314 = vld [vmem:[%s190 + $0x3c8] sm:$0xff]
                %315 = vst [vmem:[%s191 + $0x1e8] sm:$0xff] %v314
                %v316 = vld [vmem:[%s190 + $0x3d0] sm:$0xff]
                %317 = vst [vmem:[%s191 + $0x1f0] sm:$0xff] %v316
                %v318 = vld [vmem:[%s190 + $0x3d8] sm:$0xff]
                %319 = vst [vmem:[%s191 + $0x1f8] sm:$0xff] %v318
              $region37: #{generator_forward.28} parent=31 // loop_footer
                %s189 = sadd.s32 1, %s185
              $region38: #{generator_forward.28} parent=31 // loop_footer_branch
                %184 = sbr.rel target = $region34
              $region39: #{generator_forward.28} parent=31 // loop_exit
                _
            $region32: #{generator_forward.28} parent=27 // pred_fallthru
              _
            // Predicated region
            $region40: #{generator_forward.28} parent=27 // pred_check
              _
            $region41: #{generator_forward.28} parent=27 // pred_check_branch
              %321 = sbr.rel target = $region43
            $region42: #{generator_forward.28} parent=27 // pred_region
              _
            $region43: #{generator_forward.28} parent=27 // pred_fallthru
              _
          $region28: #{generator_forward.28} parent=23 // pred_fallthru
            _
          %322 = vnop
        $region24: #{generator_forward.28} parent=19 // pred_fallthru
          _
        // Predicated region
        $region44: #{generator_forward.28} parent=19 // pred_check
          %p323 = pneg %p104
        $region45: #{generator_forward.28} parent=19 // pred_check_branch
          %325 = sbr.rel (%p323) target = $region47
        $region46: #{generator_forward.28} parent=19 // pred_region
          %s326 = smul.u32 4, %s17
          %p327 = scmp.lt.s32.totalorder %s326, 7
          %s328 = scalar_select %p327, %s326, 7
          %s329 = scalar_lea.vmem %s2, %s328
          %s330 = smul.u32 4, %s17
        $region47: #{generator_forward.28} parent=19 // pred_fallthru
          _
      $region20: #{generator_forward.28} parent=5 // pred_fallthru
        _
      %p331 = scmp.le.s32.totalorder 1, %s9
      %p332 = scmp.lt.s32.totalorder %s9, 3
      %p333 = pnand %p331, %p332
      %p334 = pneg %p333
      // Predicated region
      $region48: #{generator_forward.28} parent=5 // pred_check
        _
      $region49: #{generator_forward.28} parent=5 // pred_check_branch
        %336 = sbr.rel (%p333) target = $region51
      $region50: #{generator_forward.28} parent=5 // pred_region
        %s337 = ssub.s32 %s9, 1
        %s338 = sand.u32 %s71, 1
        %s339 = sand.u32 %s71, 1
        %s340 = smul.addr %s339, 512
        %s341 = scalar_lea.vmem [#allocation3], %s340
        // Predicated region
        $region52: #{generator_forward.28} parent=50 // pred_check
          %p342 = pneg %p84
        $region53: #{generator_forward.28} parent=50 // pred_check_branch
          %344 = sbr.rel (%p342) target = $region55
        $region54: #{generator_forward.28} parent=50 // pred_region
          _
        $region55: #{generator_forward.28} parent=50 // pred_fallthru
          _
        %p345 = scmp.lt.s32.totalorder %s19, 0
        %s346 = scalar_select %p345, %s19, 0
        %p347 = scmp.lt.s32.totalorder %s21, 0
        %s348 = scalar_select %p347, %s21, 0
        %s349 = sadd.s32 %s348, %s346
        %s350 = smul.addr %s349, 8
        %s351 = scalar_lea.vmem %s0, %s350
        %p352 = pneg %p56
        %p353 = pneg %p53
        %s354 = sand.u32 %s71, 1
        %s355 = sand.u32 %s71, 1
        %s356 = smul.addr %s355, 512
        %s357 = scalar_lea.vmem [#allocation3], %s356
        %p358 = pneg %p84
        %p359 = pneg %p81
        %s360 = smul.u32 4, %s20
        %p361 = scmp.lt.s32.totalorder %s360, 7
        %s362 = scalar_select %p361, %s360, 7
        %s363 = scalar_lea.vmem %s2, %s362
        %p364 = pneg %p110
        %p365 = pneg %p107
        %p366 = pneg %p138
        %p367 = pneg %p135
        %s368 = smul.u32 4, %s20
        %p369 = scmp.lt.s32.totalorder %s19, 0
        %s370 = scalar_select %p369, %s19, 0
        %p371 = scmp.lt.s32.totalorder %s368, 7
        %s372 = scalar_select %p371, %s368, 7
        %s373 = smul.addr %s370, 8
        %s374 = sadd.s32 %s372, %s373
        %s375 = smul.addr %s374, 8
        %s376 = scalar_lea.vmem %s3, %s375
        %p377 = scmp.lt.s32.totalorder %s19, 0
        %s378 = scalar_select %p377, %s19, 0
        %p379 = scmp.lt.s32.totalorder %s21, 0
        %s380 = scalar_select %p379, %s21, 0
        %s381 = sadd.s32 %s380, %s378
        %s382 = smul.addr %s381, 8
        %s383 = scalar_lea.vmem %s0, %s382
        %s384 = smul.u32 16, %s21
        %s385 = smul.u32 4, %s20
        %s386 = smul.u32 4, %s20
        %p387 = scmp.lt.s32.totalorder %s386, 7
        %s388 = scalar_select %p387, %s386, 7
        %s389 = scalar_lea.vmem %s2, %s388
        %s390 = smul.u32 4, %s20
        %s391 = smul.u32 4, %s20
        %p392 = scmp.lt.s32.totalorder %s19, 0
        %s393 = scalar_select %p392, %s19, 0
        %p394 = scmp.lt.s32.totalorder %s391, 7
        %s395 = scalar_select %p394, %s391, 7
        %s396 = smul.addr %s393, 8
        %s397 = sadd.s32 %s395, %s396
        %s398 = smul.addr %s397, 8
        %s399 = scalar_lea.vmem %s3, %s398
        %s400 = smul.u32 4, %s20
        %p401 = scmp.eq.s32.totalorder %s21, 0
        // Predicated region
        $region56: #{generator_forward.28} parent=50 // pred_check
          %p402 = pneg %p401
        $region57: #{generator_forward.28} parent=50 // pred_check_branch
          %404 = sbr.rel (%p402) target = $region59
        $region58: #{generator_forward.28} parent=50 // pred_region
          %405 = vst [vmem:[#allocation2] sm:$0xff] 0.0
          %406 = vst [vmem:[#allocation2 + $0x8] sm:$0xff] 0.0
          %407 = vst [vmem:[#allocation2 + $0x10] sm:$0xff] 0.0
          %408 = vst [vmem:[#allocation2 + $0x18] sm:$0xff] 0.0
        $region59: #{generator_forward.28} parent=50 // pred_fallthru
          _
        %v409 = vld [vmem:[#allocation2] sm:$0xff]
        %v410 = vld [vmem:[#allocation2 + $0x8] sm:$0xff]
        %v411 = vld [vmem:[#allocation2 + $0x10] sm:$0xff]
        %v412 = vld [vmem:[#allocation2 + $0x18] sm:$0xff]
        %v413 = vld [vmem:[%s383] sm:$0xff]
        %v414 = vld [vmem:[%s341] sm:$0xff]
        %v415 = vld [vmem:[%s341 + $0x8] sm:$0xff]
        %v416 = vld [vmem:[%s341 + $0x10] sm:$0xff]
        %v417 = vld [vmem:[%s341 + $0x18] sm:$0xff]
        %v418 = vld [vmem:[%s341 + $0x20] sm:$0xff]
        %v419 = vld [vmem:[%s341 + $0x28] sm:$0xff]
        %v420 = vld [vmem:[%s341 + $0x30] sm:$0xff]
        %v421 = vld [vmem:[%s341 + $0x38] sm:$0xff]
        %v422 = vld [vmem:[%s341 + $0x40] sm:$0xff]
        %v423 = vld [vmem:[%s341 + $0x48] sm:$0xff]
        %v424 = vld [vmem:[%s341 + $0x50] sm:$0xff]
        %v425 = vld [vmem:[%s341 + $0x58] sm:$0xff]
        %v426 = vld [vmem:[%s341 + $0x60] sm:$0xff]
        %v427 = vld [vmem:[%s341 + $0x68] sm:$0xff]
        %v428 = vld [vmem:[%s341 + $0x70] sm:$0xff]
        %v429 = vld [vmem:[%s341 + $0x78] sm:$0xff]
        %v430 = vld [vmem:[%s341 + $0x80] sm:$0xff]
        %v431 = vld [vmem:[%s341 + $0x88] sm:$0xff]
        %v432 = vld [vmem:[%s341 + $0x90] sm:$0xff]
        %v433 = vld [vmem:[%s341 + $0x98] sm:$0xff]
        %v434 = vld [vmem:[%s341 + $0xa0] sm:$0xff]
        %v435 = vld [vmem:[%s341 + $0xa8] sm:$0xff]
        %v436 = vld [vmem:[%s341 + $0xb0] sm:$0xff]
        %v437 = vld [vmem:[%s341 + $0xb8] sm:$0xff]
        %v438 = vld [vmem:[%s341 + $0xc0] sm:$0xff]
        %v439 = vld [vmem:[%s341 + $0xc8] sm:$0xff]
        %v440 = vld [vmem:[%s341 + $0xd0] sm:$0xff]
        %v441 = vld [vmem:[%s341 + $0xd8] sm:$0xff]
        %v442 = vld [vmem:[%s341 + $0xe0] sm:$0xff]
        %v443 = vld [vmem:[%s341 + $0xe8] sm:$0xff]
        %v444 = vld [vmem:[%s341 + $0xf0] sm:$0xff]
        %v445 = vld [vmem:[%s341 + $0xf8] sm:$0xff]
        %v446 = vld [vmem:[%s341 + $0x100] sm:$0xff]
        %v447 = vld [vmem:[%s341 + $0x108] sm:$0xff]
        %v448 = vld [vmem:[%s341 + $0x110] sm:$0xff]
        %v449 = vld [vmem:[%s341 + $0x118] sm:$0xff]
        %v450 = vld [vmem:[%s341 + $0x120] sm:$0xff]
        %v451 = vld [vmem:[%s341 + $0x128] sm:$0xff]
        %v452 = vld [vmem:[%s341 + $0x130] sm:$0xff]
        %v453 = vld [vmem:[%s341 + $0x138] sm:$0xff]
        %v454 = vld [vmem:[%s341 + $0x140] sm:$0xff]
        %v455 = vld [vmem:[%s341 + $0x148] sm:$0xff]
        %v456 = vld [vmem:[%s341 + $0x150] sm:$0xff]
        %v457 = vld [vmem:[%s341 + $0x158] sm:$0xff]
        %v458 = vld [vmem:[%s341 + $0x160] sm:$0xff]
        %v459 = vld [vmem:[%s341 + $0x168] sm:$0xff]
        %v460 = vld [vmem:[%s341 + $0x170] sm:$0xff]
        %v461 = vld [vmem:[%s341 + $0x178] sm:$0xff]
        %v462 = vld [vmem:[%s341 + $0x180] sm:$0xff]
        %v463 = vld [vmem:[%s341 + $0x188] sm:$0xff]
        %v464 = vld [vmem:[%s341 + $0x190] sm:$0xff]
        %v465 = vld [vmem:[%s341 + $0x198] sm:$0xff]
        %v466 = vld [vmem:[%s341 + $0x1a0] sm:$0xff]
        %v467 = vld [vmem:[%s341 + $0x1a8] sm:$0xff]
        %v468 = vld [vmem:[%s341 + $0x1b0] sm:$0xff]
        %v469 = vld [vmem:[%s341 + $0x1b8] sm:$0xff]
        %v470 = vld [vmem:[%s341 + $0x1c0] sm:$0xff]
        %v471 = vld [vmem:[%s341 + $0x1c8] sm:$0xff]
        %v472 = vld [vmem:[%s341 + $0x1d0] sm:$0xff]
        %v473 = vld [vmem:[%s341 + $0x1d8] sm:$0xff]
        %v474 = vld [vmem:[%s341 + $0x1e0] sm:$0xff]
        %v475 = vld [vmem:[%s341 + $0x1e8] sm:$0xff]
        %v476 = vld [vmem:[%s341 + $0x1f0] sm:$0xff]
        %v477 = vld [vmem:[%s341 + $0x1f8] sm:$0xff]
        %478 = vmatpush.msra.mxu0 %v474
        %479 = vmatpush.msra.mxu0 %v470
        %480 = vmatpush.msra.mxu0 %v466
        %481 = vmatpush.msra.mxu0 %v462
        %482 = vmatpush.msra.mxu0 %v458
        %483 = vmatpush.msra.mxu0 %v454
        %484 = vmatpush.msra.mxu0 %v450
        %485 = vmatpush.msra.mxu0 %v446
        %486 = vmatpush.msra.mxu0 %v442
        %487 = vmatpush.msra.mxu0 %v438
        %488 = vmatpush.msra.mxu0 %v434
        %489 = vmatpush.msra.mxu0 %v430
        %490 = vmatpush.msra.mxu0 %v426
        %491 = vmatpush.msra.mxu0 %v422
        %492 = vmatpush.msra.mxu0 %v418
        %493 = vmatpush.msra.mxu0 %v414
        %494 = vmatmul.f32.gmra.mxu0 %v413
        %v495 = vpop.f32.mrf.mxu0
        %v496 = vadd.f32 0.0, %v495
        %497 = vdwg.mxu0
        %498 = vmatpush.msra.mxu0 %v475
        %499 = vmatpush.msra.mxu0 %v471
        %500 = vmatpush.msra.mxu0 %v467
        %501 = vmatpush.msra.mxu0 %v463
        %502 = vmatpush.msra.mxu0 %v459
        %503 = vmatpush.msra.mxu0 %v455
        %504 = vmatpush.msra.mxu0 %v451
        %505 = vmatpush.msra.mxu0 %v447
        %506 = vmatpush.msra.mxu0 %v443
        %507 = vmatpush.msra.mxu0 %v439
        %508 = vmatpush.msra.mxu0 %v435
        %509 = vmatpush.msra.mxu0 %v431
        %510 = vmatpush.msra.mxu0 %v427
        %511 = vmatpush.msra.mxu0 %v423
        %512 = vmatpush.msra.mxu0 %v419
        %513 = vmatpush.msra.mxu0 %v415
        %514 = vmatmul.f32.gmra.mxu0 %v413
        %v515 = vpop.f32.mrf.mxu0
        %v516 = vadd.f32 0.0, %v515
        %517 = vdwg.mxu0
        %518 = vmatpush.msra.mxu0 %v476
        %519 = vmatpush.msra.mxu0 %v472
        %520 = vmatpush.msra.mxu0 %v468
        %521 = vmatpush.msra.mxu0 %v464
        %522 = vmatpush.msra.mxu0 %v460
        %523 = vmatpush.msra.mxu0 %v456
        %524 = vmatpush.msra.mxu0 %v452
        %525 = vmatpush.msra.mxu0 %v448
        %526 = vmatpush.msra.mxu0 %v444
        %527 = vmatpush.msra.mxu0 %v440
        %528 = vmatpush.msra.mxu0 %v436
        %529 = vmatpush.msra.mxu0 %v432
        %530 = vmatpush.msra.mxu0 %v428
        %531 = vmatpush.msra.mxu0 %v424
        %532 = vmatpush.msra.mxu0 %v420
        %533 = vmatpush.msra.mxu0 %v416
        %534 = vmatmul.f32.gmra.mxu0 %v413
        %v535 = vpop.f32.mrf.mxu0
        %v536 = vadd.f32 0.0, %v535
        %537 = vdwg.mxu0
        %538 = vmatpush.msra.mxu0 %v477
        %539 = vmatpush.msra.mxu0 %v473
        %540 = vmatpush.msra.mxu0 %v469
        %541 = vmatpush.msra.mxu0 %v465
        %542 = vmatpush.msra.mxu0 %v461
        %543 = vmatpush.msra.mxu0 %v457
        %544 = vmatpush.msra.mxu0 %v453
        %545 = vmatpush.msra.mxu0 %v449
        %546 = vmatpush.msra.mxu0 %v445
        %547 = vmatpush.msra.mxu0 %v441
        %548 = vmatpush.msra.mxu0 %v437
        %549 = vmatpush.msra.mxu0 %v433
        %550 = vmatpush.msra.mxu0 %v429
        %551 = vmatpush.msra.mxu0 %v425
        %552 = vmatpush.msra.mxu0 %v421
        %553 = vmatpush.msra.mxu0 %v417
        %554 = vmatmul.f32.gmra.mxu0 %v413
        %v555 = vpop.f32.mrf.mxu0
        %v556 = vadd.f32 0.0, %v555
        %557 = vdwg.mxu0
        %v558 = vadd.f32 %v409, %v496
        %v559 = vadd.f32 %v410, %v516
        %v560 = vadd.f32 %v411, %v536
        %v561 = vadd.f32 %v412, %v556
        %562 = vst [vmem:[#allocation2] sm:$0xff] %v558
        %563 = vst [vmem:[#allocation2 + $0x8] sm:$0xff] %v559
        %564 = vst [vmem:[#allocation2 + $0x10] sm:$0xff] %v560
        %565 = vst [vmem:[#allocation2 + $0x18] sm:$0xff] %v561
        // Predicated region
        $region60: #{generator_forward.28} parent=50 // pred_check
          %p566 = pneg %p401
        $region61: #{generator_forward.28} parent=50 // pred_check_branch
          %568 = sbr.rel (%p566) target = $region63
        $region62: #{generator_forward.28} parent=50 // pred_region
          %v569 = vld [vmem:[#allocation2] sm:$0xff]
          %v570 = vld [vmem:[#allocation2 + $0x8] sm:$0xff]
          %v571 = vld [vmem:[#allocation2 + $0x10] sm:$0xff]
          %v572 = vld [vmem:[#allocation2 + $0x18] sm:$0xff]
          %v573 = vld [vmem:[%s389] sm:$0xf]
          %v575 = vperm.slane %v573, 0
          %v576 = vperm.slane %v573, 1
          %v577 = vperm.slane %v573, 2
          %v578 = vperm.slane %v573, 3
          %v583 = vadd.f32 %v569, %v575
          %v584 = vadd.f32 %v570, %v576
          %v585 = vadd.f32 %v571, %v577
          %v586 = vadd.f32 %v572, %v578
          %vm587 = vcmp.gt.f32.partialorder %v583, 0.0
          %vm588 = vcmp.gt.f32.partialorder %v584, 0.0
          %vm589 = vcmp.gt.f32.partialorder %v585, 0.0
          %vm590 = vcmp.gt.f32.partialorder %v586, 0.0
          %v591 = vmul.f32 %v583, 0.01
          %v592 = vmul.f32 %v584, 0.01
          %v593 = vmul.f32 %v585, 0.01
          %v594 = vmul.f32 %v586, 0.01
          %v595 = vsel %vm587, %v583, %v591
          %v596 = vsel %vm588, %v584, %v592
          %v597 = vsel %vm589, %v585, %v593
          %v598 = vsel %vm590, %v586, %v594
          %599 = vst [vmem:[%s399] sm:$0xff] %v595
          %600 = vst [vmem:[%s399 + $0x8] sm:$0xff] %v596
          %601 = vst [vmem:[%s399 + $0x10] sm:$0xff] %v597
          %602 = vst [vmem:[%s399 + $0x18] sm:$0xff] %v598
        $region63: #{generator_forward.28} parent=50 // pred_fallthru
          _
        %s603 = smul.u32 4, %s20
        %p604 = scmp.lt.s32.totalorder %s19, 0
        %s605 = scalar_select %p604, %s19, 0
        %p606 = scmp.lt.s32.totalorder %s603, 7
        %s607 = scalar_select %p606, %s603, 7
        %s608 = smul.addr %s605, 8
        %s609 = sadd.s32 %s607, %s608
        %s610 = smul.addr %s609, 8
        %s611 = scalar_lea.vmem %s3, %s610
        // Predicated region
        $region64: #{generator_forward.28} parent=50 // pred_check
          %p612 = pneg %p135
        $region65: #{generator_forward.28} parent=50 // pred_check_branch
          %614 = sbr.rel (%p612) target = $region67
        $region66: #{generator_forward.28} parent=50 // pred_region
          %s615 = smul.u32 4, %s20
        $region67: #{generator_forward.28} parent=50 // pred_fallthru
          _
      $region51: #{generator_forward.28} parent=5 // pred_fallthru
        _
      %p616 = scmp.le.s32.totalorder 2, %s9
      // Predicated region
      $region68: #{generator_forward.28} parent=5 // pred_check
        %p617 = pneg %p616
      $region69: #{generator_forward.28} parent=5 // pred_check_branch
        %619 = sbr.rel (%p617) target = $region71
      $region70: #{generator_forward.28} parent=5 // pred_region
        %s620 = ssub.s32 %s9, 2
        // Predicated region
        $region72: #{generator_forward.28} parent=70 // pred_check
          %p621 = pneg %p141
        $region73: #{generator_forward.28} parent=70 // pred_check_branch
          %623 = sbr.rel (%p621) target = $region75
        $region74: #{generator_forward.28} parent=70 // pred_region
          %s624 = smul.u32 4, %s23
          %p625 = scmp.lt.s32.totalorder %s22, 0
          %s626 = scalar_select %p625, %s22, 0
          %p627 = scmp.lt.s32.totalorder %s624, 7
          %s628 = scalar_select %p627, %s624, 7
          %s629 = smul.addr %s626, 8
          %s630 = sadd.s32 %s628, %s629
          %s631 = smul.addr %s630, 8
          %s632 = scalar_lea.vmem %s3, %s631
        $region75: #{generator_forward.28} parent=70 // pred_fallthru
          _
      $region71: #{generator_forward.28} parent=5 // pred_fallthru
        _
    $region6: #{generator_forward.28} parent=1 // loop_footer
      %s13 = sadd.s32 1, %s9
    $region7: #{generator_forward.28} parent=1 // loop_footer_branch
      %8 = sbr.rel target = $region3
    $region8: #{generator_forward.28} parent=1 // loop_exit
      _

// kernel: generator_forward.24
$region0: #{generator_forward.24}
  #allocation0 [shape = 'u32[]', space=smem, size = 0x4, offset = 0x4, fixed_abs, tag = 'smem constant byte address 0x4 - core index']
  #allocation1 [shape = 'u32[72,128]{1,0:T(1,128)}', space=vmem, size = 0x9000, scoped, tag = 'internal scratch']
  %s0 = inlined_call_operand.vmem [shape: f32[8,1024], index: 0, kind: input, shape index: {}]
  %s1 = inlined_call_operand.vmem [shape: f32[1,1024], index: 1, kind: input, shape index: {}]
  %s2 = inlined_call_operand.vmem [shape: f32[1,1024], index: 2, kind: input, shape index: {}]
  %s3 = inlined_call_operand.vmem [shape: f32[8,1024], index: 3, kind: output, shape index: {}]
  %s4 = sld [smem:[#allocation0]]
  $region45: #{generator_forward.24} parent=0
    _
  %s6 = ssub.s32 1, %s4
  %s7 = scalar_select 0, %s6, %s4
  loop: start=0, step=1, limit=4
  $region2: #{generator_forward.24} parent=0 // loop_pre_header
    _
  $region3: #{generator_forward.24} parent=0 // loop_header
    %s9 = sphi 0, %s13
    %p10 = scmp.ge.s32.totalorder %s9, 4
    %s16 = sphi 0, %s28
    %s17 = sphi 0, %s24
    %s18 = sphi 0, %s16
    %s19 = sphi 0, %s17
    %s20 = sphi 0, %s18
    %s21 = sphi 0, %s19
    %s33 = sphi 0, %s35
    %s36 = sphi 0, %s33
    %s37 = sphi 0, %s36
    %s53 = sphi 0, %s37
    %s59 = sphi 0, %s61
    %s62 = sphi 0, %s59
    %s63 = sphi 0, %s62
    %s79 = sphi 0, %s63
    %s85 = sphi 0, %s87
    %s88 = sphi 0, %s85
    %s89 = sphi 0, %s88
    %s105 = sphi 0, %s89
    %s113 = sphi 0, %s115
    %s116 = sphi 0, %s113
    %s117 = sphi 0, %s116
    %s133 = sphi 0, %s117
  $region4: #{generator_forward.24} parent=0 // loop_header_branch
    %12 = sbr.rel (%p10) target = $region8
  $region5: #{generator_forward.24} parent=0 // loop_body
    %s14 = ssub.s32 %s9, 1
    %s15 = ssub.s32 %s9, 2
    %s22 = sadd.s32 1, %s17
    %p23 = scmp.ge.s32.totalorder %s22, 2
    %s24 = scalar_select %p23, 0, %s22
    %s25 = sadd.s32 1, %s16
    %s26 = scalar_select %p23, %s25, %s16
    %p27 = scmp.ge.s32.totalorder %s26, 1
    %s28 = scalar_select %p27, 0, %s26
    %s29 = ssub.s32 %s16, %s28
    %s30 = ssub.s32 %s17, %s24
    %s31 = sor.u32 %s29, %s30
    %p32 = scmp.eq.s32.totalorder %s31, 0
    %s34 = sadd.s32 %s33, 1
    %s35 = scalar_select %p32, %s33, %s34
    %p38 = pneg %p32
    %p39 = scmp.eq.s32.totalorder %s9, 1
    %p40 = por %p38, %p39
    %p41 = scmp.ne.s32.totalorder %s33, %s36
    %p42 = scmp.eq.s32.totalorder %s9, 0
    %p43 = por %p41, %p42
    %p44 = scmp.ne.s32.totalorder %s33, %s36
    %p45 = scmp.eq.s32.totalorder %s14, 1
    %p46 = por %p44, %p45
    %p47 = scmp.ne.s32.totalorder %s36, %s37
    %p48 = scmp.eq.s32.totalorder %s14, 0
    %p49 = por %p47, %p48
    %p50 = scmp.ne.s32.totalorder %s36, %s37
    %p51 = scmp.eq.s32.totalorder %s15, 1
    %p52 = por %p50, %p51
    %p54 = scmp.ne.s32.totalorder %s37, %s53
    %p55 = scmp.eq.s32.totalorder %s15, 0
    %p56 = por %p54, %p55
    %s57 = ssub.s32 %s17, %s24
    %p58 = scmp.eq.s32.totalorder %s57, 0
    %s60 = sadd.s32 %s59, 1
    %s61 = scalar_select %p58, %s59, %s60
    %p64 = pneg %p58
    %p65 = scmp.eq.s32.totalorder %s9, 1
    %p66 = por %p64, %p65
    %p67 = scmp.ne.s32.totalorder %s59, %s62
    %p68 = scmp.eq.s32.totalorder %s9, 0
    %p69 = por %p67, %p68
    %p70 = scmp.ne.s32.totalorder %s59, %s62
    %p71 = scmp.eq.s32.totalorder %s14, 1
    %p72 = por %p70, %p71
    %p73 = scmp.ne.s32.totalorder %s62, %s63
    %p74 = scmp.eq.s32.totalorder %s14, 0
    %p75 = por %p73, %p74
    %p76 = scmp.ne.s32.totalorder %s62, %s63
    %p77 = scmp.eq.s32.totalorder %s15, 1
    %p78 = por %p76, %p77
    %p80 = scmp.ne.s32.totalorder %s63, %s79
    %p81 = scmp.eq.s32.totalorder %s15, 0
    %p82 = por %p80, %p81
    %s83 = ssub.s32 %s17, %s24
    %p84 = scmp.eq.s32.totalorder %s83, 0
    %s86 = sadd.s32 %s85, 1
    %s87 = scalar_select %p84, %s85, %s86
    %p90 = pneg %p84
    %p91 = scmp.eq.s32.totalorder %s9, 1
    %p92 = por %p90, %p91
    %p93 = scmp.ne.s32.totalorder %s85, %s88
    %p94 = scmp.eq.s32.totalorder %s9, 0
    %p95 = por %p93, %p94
    %p96 = scmp.ne.s32.totalorder %s85, %s88
    %p97 = scmp.eq.s32.totalorder %s14, 1
    %p98 = por %p96, %p97
    %p99 = scmp.ne.s32.totalorder %s88, %s89
    %p100 = scmp.eq.s32.totalorder %s14, 0
    %p101 = por %p99, %p100
    %p102 = scmp.ne.s32.totalorder %s88, %s89
    %p103 = scmp.eq.s32.totalorder %s15, 1
    %p104 = por %p102, %p103
    %p106 = scmp.ne.s32.totalorder %s89, %s105
    %p107 = scmp.eq.s32.totalorder %s15, 0
    %p108 = por %p106, %p107
    %s109 = ssub.s32 %s16, %s28
    %s110 = ssub.s32 %s17, %s24
    %s111 = sor.u32 %s109, %s110
    %p112 = scmp.eq.s32.totalorder %s111, 0
    %s114 = sadd.s32 %s113, 1
    %s115 = scalar_select %p112, %s113, %s114
    %p118 = pneg %p112
    %p119 = scmp.eq.s32.totalorder %s9, 1
    %p120 = por %p118, %p119
    %p121 = scmp.ne.s32.totalorder %s113, %s116
    %p122 = scmp.eq.s32.totalorder %s9, 0
    %p123 = por %p121, %p122
    %p124 = scmp.ne.s32.totalorder %s113, %s116
    %p125 = scmp.eq.s32.totalorder %s14, 1
    %p126 = por %p124, %p125
    %p127 = scmp.ne.s32.totalorder %s116, %s117
    %p128 = scmp.eq.s32.totalorder %s14, 0
    %p129 = por %p127, %p128
    %p130 = scmp.ne.s32.totalorder %s116, %s117
    %p131 = scmp.eq.s32.totalorder %s15, 1
    %p132 = por %p130, %p131
    %p134 = scmp.ne.s32.totalorder %s117, %s133
    %p135 = scmp.eq.s32.totalorder %s15, 0
    %p136 = por %p134, %p135
    %p137 = scmp.le.s32.totalorder 1, %s9
    %p138 = scmp.lt.s32.totalorder %s9, 3
    %p139 = pnand %p137, %p138
    %p140 = pneg %p139
    // Predicated region
    $region9: #{generator_forward.24} parent=5 // pred_check
      _
    $region10: #{generator_forward.24} parent=5 // pred_check_branch
      %142 = sbr.rel (%p139) target = $region12
    $region11: #{generator_forward.24} parent=5 // pred_region
      %s143 = ssub.s32 %s9, 1
    $region12: #{generator_forward.24} parent=5 // pred_fallthru
      _
    %p144 = scmp.lt.s32.totalorder %s9, 2
    // Predicated region
    $region13: #{generator_forward.24} parent=5 // pred_check
      %p145 = pneg %p144
    $region14: #{generator_forward.24} parent=5 // pred_check_branch
      %147 = sbr.rel (%p145) target = $region16
    $region15: #{generator_forward.24} parent=5 // pred_region
      // Predicated region
      $region17: #{generator_forward.24} parent=15 // pred_check
        %p148 = pneg %p43
      $region18: #{generator_forward.24} parent=15 // pred_check_branch
        %150 = sbr.rel (%p148) target = $region20
      $region19: #{generator_forward.24} parent=15 // pred_region
        %s151 = smul.u32 4, %s17
        %p152 = scmp.lt.s32.totalorder %s16, 0
        %s153 = scalar_select %p152, %s16, 0
        %p154 = scmp.lt.s32.totalorder %s151, 7
        %s155 = scalar_select %p154, %s151, 7
        %s156 = smul.addr %s153, 8
        %s157 = sadd.s32 %s155, %s156
        %s158 = smul.addr %s157, 8
        %s159 = scalar_lea.vmem %s0, %s158
        %s160 = smul.u32 4, %s17
      $region20: #{generator_forward.24} parent=15 // pred_fallthru
        _
      // Predicated region
      $region21: #{generator_forward.24} parent=15 // pred_check
        %p161 = pneg %p69
      $region22: #{generator_forward.24} parent=15 // pred_check_branch
        %163 = sbr.rel (%p161) target = $region24
      $region23: #{generator_forward.24} parent=15 // pred_region
        %s164 = smul.u32 4, %s17
        %p165 = scmp.lt.s32.totalorder %s164, 7
        %s166 = scalar_select %p165, %s164, 7
        %s167 = scalar_lea.vmem %s1, %s166
        %s168 = smul.u32 4, %s17
      $region24: #{generator_forward.24} parent=15 // pred_fallthru
        _
      // Predicated region
      $region25: #{generator_forward.24} parent=15 // pred_check
        %p169 = pneg %p95
      $region26: #{generator_forward.24} parent=15 // pred_check_branch
        %171 = sbr.rel (%p169) target = $region28
      $region27: #{generator_forward.24} parent=15 // pred_region
        %s172 = smul.u32 4, %s17
        %p173 = scmp.lt.s32.totalorder %s172, 7
        %s174 = scalar_select %p173, %s172, 7
        %s175 = scalar_lea.vmem %s2, %s174
        %s176 = smul.u32 4, %s17
      $region28: #{generator_forward.24} parent=15 // pred_fallthru
        _
    $region16: #{generator_forward.24} parent=5 // pred_fallthru
      _
    %p177 = scmp.le.s32.totalorder 1, %s9
    %p178 = scmp.lt.s32.totalorder %s9, 3
    %p179 = pnand %p177, %p178
    %p180 = pneg %p179
    // Predicated region
    $region29: #{generator_forward.24} parent=5 // pred_check
      _
    $region30: #{generator_forward.24} parent=5 // pred_check_branch
      %182 = sbr.rel (%p179) target = $region32
    $region31: #{generator_forward.24} parent=5 // pred_region
      %s183 = ssub.s32 %s9, 1
      %s184 = smul.u32 4, %s19
      %p185 = scmp.lt.s32.totalorder %s18, 0
      %s186 = scalar_select %p185, %s18, 0
      %p187 = scmp.lt.s32.totalorder %s184, 7
      %s188 = scalar_select %p187, %s184, 7
      %s189 = smul.addr %s186, 8
      %s190 = sadd.s32 %s188, %s189
      %s191 = smul.addr %s190, 8
      %s192 = scalar_lea.vmem %s0, %s191
      %p193 = pneg %p49
      %p194 = pneg %p46
      %s195 = smul.u32 4, %s19
      %p196 = scmp.lt.s32.totalorder %s195, 7
      %s197 = scalar_select %p196, %s195, 7
      %s198 = scalar_lea.vmem %s1, %s197
      %p199 = pneg %p75
      %p200 = pneg %p72
      %s201 = smul.u32 4, %s19
      %p202 = scmp.lt.s32.totalorder %s201, 7
      %s203 = scalar_select %p202, %s201, 7
      %s204 = scalar_lea.vmem %s2, %s203
      %p205 = pneg %p101
      %p206 = pneg %p98
      %p207 = pneg %p129
      %p208 = pneg %p126
      %s209 = smul.u32 4, %s19
      %p210 = scmp.lt.s32.totalorder %s18, 0
      %s211 = scalar_select %p210, %s18, 0
      %p212 = scmp.lt.s32.totalorder %s209, 7
      %s213 = scalar_select %p212, %s209, 7
      %s214 = smul.addr %s211, 8
      %s215 = sadd.s32 %s213, %s214
      %s216 = smul.addr %s215, 8
      %s217 = scalar_lea.vmem %s3, %s216
      %s218 = smul.u32 4, %s19
      %p219 = scmp.lt.s32.totalorder %s18, 0
      %s220 = scalar_select %p219, %s18, 0
      %p221 = scmp.lt.s32.totalorder %s218, 7
      %s222 = scalar_select %p221, %s218, 7
      %s223 = smul.addr %s220, 8
      %s224 = sadd.s32 %s222, %s223
      %s225 = smul.addr %s224, 8
      %s226 = scalar_lea.vmem %s0, %s225
      %s227 = smul.u32 4, %s19
      %s228 = smul.u32 4, %s19
      %p229 = scmp.lt.s32.totalorder %s228, 7
      %s230 = scalar_select %p229, %s228, 7
      %s231 = scalar_lea.vmem %s1, %s230
      %s232 = smul.u32 4, %s19
      %s233 = smul.u32 4, %s19
      %p234 = scmp.lt.s32.totalorder %s233, 7
      %s235 = scalar_select %p234, %s233, 7
      %s236 = scalar_lea.vmem %s2, %s235
      %s237 = smul.u32 4, %s19
      %s238 = smul.u32 4, %s19
      %p239 = scmp.lt.s32.totalorder %s18, 0
      %s240 = scalar_select %p239, %s18, 0
      %p241 = scmp.lt.s32.totalorder %s238, 7
      %s242 = scalar_select %p241, %s238, 7
      %s243 = smul.addr %s240, 8
      %s244 = sadd.s32 %s242, %s243
      %s245 = smul.addr %s244, 8
      %s246 = scalar_lea.vmem %s3, %s245
      %s247 = smul.u32 4, %s19
      %v248 = vld [vmem:[%s226] sm:$0xff]
      %v249 = vld [vmem:[%s226 + $0x8] sm:$0xff]
      %v250 = vld [vmem:[%s226 + $0x10] sm:$0xff]
      %v251 = vld [vmem:[%s226 + $0x18] sm:$0xff]
      %v252 = vld [vmem:[%s231] sm:$0xf]
      %v254 = vperm.slane %v252, 0
      %v255 = vperm.slane %v252, 1
      %v256 = vperm.slane %v252, 2
      %v257 = vperm.slane %v252, 3
      %v262 = vmul.f32 %v248, %v254
      %v263 = vmul.f32 %v249, %v255
      %v264 = vmul.f32 %v250, %v256
      %v265 = vmul.f32 %v251, %v257
      %v266 = vld [vmem:[%s236] sm:$0xf]
      %v268 = vperm.slane %v266, 0
      %v269 = vperm.slane %v266, 1
      %v270 = vperm.slane %v266, 2
      %v271 = vperm.slane %v266, 3
      %v276 = vadd.f32 %v262, %v268
      %v277 = vadd.f32 %v263, %v269
      %v278 = vadd.f32 %v264, %v270
      %v279 = vadd.f32 %v265, %v271
      %280 = vst [vmem:[%s246] sm:$0xff] %v276
      %281 = vst [vmem:[%s246 + $0x8] sm:$0xff] %v277
      %282 = vst [vmem:[%s246 + $0x10] sm:$0xff] %v278
      %283 = vst [vmem:[%s246 + $0x18] sm:$0xff] %v279
      %s284 = smul.u32 4, %s19
      %p285 = scmp.lt.s32.totalorder %s18, 0
      %s286 = scalar_select %p285, %s18, 0
      %p287 = scmp.lt.s32.totalorder %s284, 7
      %s288 = scalar_select %p287, %s284, 7
      %s289 = smul.addr %s286, 8
      %s290 = sadd.s32 %s288, %s289
      %s291 = smul.addr %s290, 8
      %s292 = scalar_lea.vmem %s3, %s291
      // Predicated region
      $region33: #{generator_forward.24} parent=31 // pred_check
        %p293 = pneg %p126
      $region34: #{generator_forward.24} parent=31 // pred_check_branch
        %295 = sbr.rel (%p293) target = $region36
      $region35: #{generator_forward.24} parent=31 // pred_region
        %s296 = smul.u32 4, %s19
      $region36: #{generator_forward.24} parent=31 // pred_fallthru
        _
    $region32: #{generator_forward.24} parent=5 // pred_fallthru
      _
    %p297 = scmp.le.s32.totalorder 2, %s9
    // Predicated region
    $region37: #{generator_forward.24} parent=5 // pred_check
      %p298 = pneg %p297
    $region38: #{generator_forward.24} parent=5 // pred_check_branch
      %300 = sbr.rel (%p298) target = $region40
    $region39: #{generator_forward.24} parent=5 // pred_region
      %s301 = ssub.s32 %s9, 2
      // Predicated region
      $region41: #{generator_forward.24} parent=39 // pred_check
        %p302 = pneg %p132
      $region42: #{generator_forward.24} parent=39 // pred_check_branch
        %304 = sbr.rel (%p302) target = $region44
      $region43: #{generator_forward.24} parent=39 // pred_region
        %s305 = smul.u32 4, %s21
        %p306 = scmp.lt.s32.totalorder %s20, 0
        %s307 = scalar_select %p306, %s20, 0
        %p308 = scmp.lt.s32.totalorder %s305, 7
        %s309 = scalar_select %p308, %s305, 7
        %s310 = smul.addr %s307, 8
        %s311 = sadd.s32 %s309, %s310
        %s312 = smul.addr %s311, 8
        %s313 = scalar_lea.vmem %s3, %s312
      $region44: #{generator_forward.24} parent=39 // pred_fallthru
        _
    $region40: #{generator_forward.24} parent=5 // pred_fallthru
      _
  $region6: #{generator_forward.24} parent=0 // loop_footer
    %s13 = sadd.s32 1, %s9
  $region7: #{generator_forward.24} parent=0 // loop_footer_branch
    %8 = sbr.rel target = $region3
  $region8: #{generator_forward.24} parent=0 // loop_exit
    _

// kernel: generator_forward.25
$region0: #{generator_forward.25}
  #allocation0 [shape = 'u32[]', space=smem, size = 0x4, offset = 0x4, fixed_abs, tag = 'smem constant byte address 0x4 - core index']
  #allocation1 [shape = 'u32[72,128]{1,0:T(1,128)}', space=vmem, size = 0x9000, scoped, tag = 'internal scratch']
  #allocation2 [shape = 'f32[8,512]{1,0:T(8,128)}', space=vmem, size = 0x4000, scoped, tag = 'scratch operand']
  %s0 = inlined_call_operand.vmem [shape: f32[8,1024], index: 0, kind: input, shape index: {}]
  %s1 = inlined_call_operand.hbm [shape: f32[1024,1024], index: 1, kind: input, shape index: {}]
  %s2 = inlined_call_operand.vmem [shape: f32[1,1024], index: 2, kind: input, shape index: {}]
  %s3 = inlined_call_operand.vmem [shape: f32[8,1024], index: 3, kind: output, shape index: {}]
  %s4 = sld [smem:[#allocation0]]
  $region57: #{generator_forward.25} parent=0
    _
  %s6 = ssub.s32 1, %s4
  %s7 = scalar_select 0, %s6, %s4
  $region1: #{generator_forward.25} parent=0
    #allocation3 [shape = 'u8[2097152]{0}', space=vmem, size = 0x200000, scoped, tag = 'input window, operand 1']
    #allocation4 [shape = 's32[2]{0}', space=sflag, size = 0x8, scoped, tag = 'scoped memory for generator_forward.25']
    %8 = vsyncpa [#allocation4], 0
    %s9 = scalar_lea.sflag [#allocation4], 1
    %10 = vsyncpa %s9, 0
    loop: start=0, step=1, limit=6
    $region2: #{generator_forward.25} parent=1 // loop_pre_header
      _
    $region3: #{generator_forward.25} parent=1 // loop_header
      %s12 = sphi 0, %s16
      %p13 = scmp.ge.s32.totalorder %s12, 6
      %s19 = sphi 0, %s38
      %s20 = sphi 0, %s34
      %s21 = sphi 0, %s30
      %s22 = sphi 0, %s19
      %s23 = sphi 0, %s20
      %s24 = sphi 0, %s21
      %s25 = sphi 0, %s22
      %s26 = sphi 0, %s23
      %s27 = sphi 0, %s24
      %s43 = sphi 0, %s45
      %s46 = sphi 0, %s43
      %s47 = sphi 0, %s46
      %s63 = sphi 0, %s47
      %s71 = sphi 0, %s73
      %s74 = sphi 0, %s71
      %s75 = sphi 0, %s74
      %s91 = sphi 0, %s75
      %s97 = sphi 0, %s99
      %s100 = sphi 0, %s97
      %s101 = sphi 0, %s100
      %s117 = sphi 0, %s101
      %s125 = sphi 0, %s127
      %s128 = sphi 0, %s125
      %s129 = sphi 0, %s128
      %s145 = sphi 0, %s129
    $region4: #{generator_forward.25} parent=1 // loop_header_branch
      %15 = sbr.rel (%p13) target = $region8
    $region5: #{generator_forward.25} parent=1 // loop_body
      %s17 = ssub.s32 %s12, 1
      %s18 = ssub.s32 %s12, 2
      %s28 = sadd.s32 1, %s21
      %p29 = scmp.ge.s32.totalorder %s28, 2
      %s30 = scalar_select %p29, 0, %s28
      %s31 = sadd.s32 1, %s20
      %s32 = scalar_select %p29, %s31, %s20
      %p33 = scmp.ge.s32.totalorder %s32, 2
      %s34 = scalar_select %p33, 0, %s32
      %s35 = sadd.s32 1, %s19
      %s36 = scalar_select %p33, %s35, %s19
      %p37 = scmp.ge.s32.totalorder %s36, 1
      %s38 = scalar_select %p37, 0, %s36
      %s39 = ssub.s32 %s19, %s38
      %s40 = ssub.s32 %s21, %s30
      %s41 = sor.u32 %s39, %s40
      %p42 = scmp.eq.s32.totalorder %s41, 0
      %s44 = sadd.s32 %s43, 1
      %s45 = scalar_select %p42, %s43, %s44
      %p48 = pneg %p42
      %p49 = scmp.eq.s32.totalorder %s12, 3
      %p50 = por %p48, %p49
      %p51 = scmp.ne.s32.totalorder %s43, %s46
      %p52 = scmp.eq.s32.totalorder %s12, 0
      %p53 = por %p51, %p52
      %p54 = scmp.ne.s32.totalorder %s43, %s46
      %p55 = scmp.eq.s32.totalorder %s17, 3
      %p56 = por %p54, %p55
      %p57 = scmp.ne.s32.totalorder %s46, %s47
      %p58 = scmp.eq.s32.totalorder %s17, 0
      %p59 = por %p57, %p58
      %p60 = scmp.ne.s32.totalorder %s46, %s47
      %p61 = scmp.eq.s32.totalorder %s18, 3
      %p62 = por %p60, %p61
      %p64 = scmp.ne.s32.totalorder %s47, %s63
      %p65 = scmp.eq.s32.totalorder %s18, 0
      %p66 = por %p64, %p65
      %s67 = ssub.s32 %s21, %s30
      %s68 = ssub.s32 %s20, %s34
      %s69 = sor.u32 %s67, %s68
      %p70 = scmp.eq.s32.totalorder %s69, 0
      %s72 = sadd.s32 %s71, 1
      %s73 = scalar_select %p70, %s71, %s72
      %p76 = pneg %p70
      %p77 = scmp.eq.s32.totalorder %s12, 3
      %p78 = por %p76, %p77
      %p79 = scmp.ne.s32.totalorder %s71, %s74
      %p80 = scmp.eq.s32.totalorder %s12, 0
      %p81 = por %p79, %p80
      %p82 = scmp.ne.s32.totalorder %s71, %s74
      %p83 = scmp.eq.s32.totalorder %s17, 3
      %p84 = por %p82, %p83
      %p85 = scmp.ne.s32.totalorder %s74, %s75
      %p86 = scmp.eq.s32.totalorder %s17, 0
      %p87 = por %p85, %p86
      %p88 = scmp.ne.s32.totalorder %s74, %s75
      %p89 = scmp.eq.s32.totalorder %s18, 3
      %p90 = por %p88, %p89
      %p92 = scmp.ne.s32.totalorder %s75, %s91
      %p93 = scmp.eq.s32.totalorder %s18, 0
      %p94 = por %p92, %p93
      %s95 = ssub.s32 %s20, %s34
      %p96 = scmp.eq.s32.totalorder %s95, 0
      %s98 = sadd.s32 %s97, 1
      %s99 = scalar_select %p96, %s97, %s98
      %p102 = pneg %p96
      %p103 = scmp.eq.s32.totalorder %s12, 3
      %p104 = por %p102, %p103
      %p105 = scmp.ne.s32.totalorder %s97, %s100
      %p106 = scmp.eq.s32.totalorder %s12, 0
      %p107 = por %p105, %p106
      %p108 = scmp.ne.s32.totalorder %s97, %s100
      %p109 = scmp.eq.s32.totalorder %s17, 3
      %p110 = por %p108, %p109
      %p111 = scmp.ne.s32.totalorder %s100, %s101
      %p112 = scmp.eq.s32.totalorder %s17, 0
      %p113 = por %p111, %p112
      %p114 = scmp.ne.s32.totalorder %s100, %s101
      %p115 = scmp.eq.s32.totalorder %s18, 3
      %p116 = por %p114, %p115
      %p118 = scmp.ne.s32.totalorder %s101, %s117
      %p119 = scmp.eq.s32.totalorder %s18, 0
      %p120 = por %p118, %p119
      %s121 = ssub.s32 %s19, %s38
      %s122 = ssub.s32 %s20, %s34
      %s123 = sor.u32 %s121, %s122
      %p124 = scmp.eq.s32.totalorder %s123, 0
      %s126 = sadd.s32 %s125, 1
      %s127 = scalar_select %p124, %s125, %s126
      %p130 = pneg %p124
      %p131 = scmp.eq.s32.totalorder %s12, 3
      %p132 = por %p130, %p131
      %p133 = scmp.ne.s32.totalorder %s125, %s128
      %p134 = scmp.eq.s32.totalorder %s12, 0
      %p135 = por %p133, %p134
      %p136 = scmp.ne.s32.totalorder %s125, %s128
      %p137 = scmp.eq.s32.totalorder %s17, 3
      %p138 = por %p136, %p137
      %p139 = scmp.ne.s32.totalorder %s128, %s129
      %p140 = scmp.eq.s32.totalorder %s17, 0
      %p141 = por %p139, %p140
      %p142 = scmp.ne.s32.totalorder %s128, %s129
      %p143 = scmp.eq.s32.totalorder %s18, 3
      %p144 = por %p142, %p143
      %p146 = scmp.ne.s32.totalorder %s129, %s145
      %p147 = scmp.eq.s32.totalorder %s18, 0
      %p148 = por %p146, %p147
      %p149 = scmp.le.s32.totalorder 1, %s12
      %p150 = scmp.lt.s32.totalorder %s12, 5
      %p151 = pnand %p149, %p150
      %p152 = pneg %p151
      // Predicated region
      $region9: #{generator_forward.25} parent=5 // pred_check
        _
      $region10: #{generator_forward.25} parent=5 // pred_check_branch
        %154 = sbr.rel (%p151) target = $region12
      $region11: #{generator_forward.25} parent=5 // pred_region
        %s155 = ssub.s32 %s12, 1
      $region12: #{generator_forward.25} parent=5 // pred_fallthru
        _
      %p156 = scmp.lt.s32.totalorder %s12, 4
      // Predicated region
      $region13: #{generator_forward.25} parent=5 // pred_check
        %p157 = pneg %p156
      $region14: #{generator_forward.25} parent=5 // pred_check_branch
        %159 = sbr.rel (%p157) target = $region16
      $region15: #{generator_forward.25} parent=5 // pred_region
        // Predicated region
        $region17: #{generator_forward.25} parent=15 // pred_check
          %p160 = pneg %p53
        $region18: #{generator_forward.25} parent=15 // pred_check_branch
          %162 = sbr.rel (%p160) target = $region20
        $region19: #{generator_forward.25} parent=15 // pred_region
          %s163 = smul.u32 4, %s21
          %p164 = scmp.lt.s32.totalorder %s19, 0
          %s165 = scalar_select %p164, %s19, 0
          %p166 = scmp.lt.s32.totalorder %s163, 7
          %s167 = scalar_select %p166, %s163, 7
          %s168 = smul.addr %s165, 8
          %s169 = sadd.s32 %s167, %s168
          %s170 = smul.addr %s169, 8
          %s171 = scalar_lea.vmem %s0, %s170
          %s172 = smul.u32 4, %s21
        $region20: #{generator_forward.25} parent=15 // pred_fallthru
          _
        // Predicated region
        $region21: #{generator_forward.25} parent=15 // pred_check
          %p173 = pneg %p81
        $region22: #{generator_forward.25} parent=15 // pred_check_branch
          %175 = sbr.rel (%p173) target = $region24
        $region23: #{generator_forward.25} parent=15 // pred_region
          %s176 = sand.u32 %s71, 1
          %s177 = scalar_lea.sflag [#allocation4], %s176
          %s178 = sand.u32 %s71, 1
          %s179 = smul.addr %s178, 2048
          %s180 = scalar_lea.vmem [#allocation3], %s179
          %s181 = smul.u32 64, %s21
          %s182 = smul.u32 4, %s20
          %184 = vsyncadd %s177, 0
          %s185 = smul.addr %s181, 8
          %s186 = sadd.s32 %s182, %s185
          %s187 = smul.addr %s186, 8
          %s188 = scalar_lea.hbm %s1, %s187
          %s189 = sshll.u32 %s188, 4
          %s190 = int_to_ptr.hbm [resolvable:$true] %s189
          %s191 = sshll.u32 %s180, 4
          %s192 = int_to_ptr.vmem [resolvable:$true] %s191
          %197 = dma.hbm_to_vmem [thread:$0]  %s190, 32768, %s192, %s177, 1024, 512, 32
        $region24: #{generator_forward.25} parent=15 // pred_fallthru
          _
        // Predicated region
        $region25: #{generator_forward.25} parent=15 // pred_check
          %p198 = pneg %p107
        $region26: #{generator_forward.25} parent=15 // pred_check_branch
          %200 = sbr.rel (%p198) target = $region28
        $region27: #{generator_forward.25} parent=15 // pred_region
          %s201 = smul.u32 4, %s20
          %p202 = scmp.lt.s32.totalorder %s201, 7
          %s203 = scalar_select %p202, %s201, 7
          %s204 = scalar_lea.vmem %s2, %s203
          %s205 = smul.u32 4, %s20
        $region28: #{generator_forward.25} parent=15 // pred_fallthru
          _
      $region16: #{generator_forward.25} parent=5 // pred_fallthru
        _
      %p206 = scmp.le.s32.totalorder 1, %s12
      %p207 = scmp.lt.s32.totalorder %s12, 5
      %p208 = pnand %p206, %p207
      %p209 = pneg %p208
      // Predicated region
      $region29: #{generator_forward.25} parent=5 // pred_check
        _
      $region30: #{generator_forward.25} parent=5 // pred_check_branch
        %211 = sbr.rel (%p208) target = $region32
      $region31: #{generator_forward.25} parent=5 // pred_region
        %s212 = ssub.s32 %s12, 1
        %s213 = sand.u32 %s74, 1
        %s214 = scalar_lea.sflag [#allocation4], %s213
        %s215 = sand.u32 %s74, 1
        %s216 = smul.addr %s215, 2048
        %s217 = scalar_lea.vmem [#allocation3], %s216
        // Predicated region
        $region33: #{generator_forward.25} parent=31 // pred_check
          %p218 = pneg %p87
        $region34: #{generator_forward.25} parent=31 // pred_check_branch
          %220 = sbr.rel (%p218) target = $region36
        $region35: #{generator_forward.25} parent=31 // pred_region
          %222 = dma.done %s214, 32768
        $region36: #{generator_forward.25} parent=31 // pred_fallthru
          _
        %s223 = smul.u32 4, %s24
        %p224 = scmp.lt.s32.totalorder %s22, 0
        %s225 = scalar_select %p224, %s22, 0
        %p226 = scmp.lt.s32.totalorder %s223, 7
        %s227 = scalar_select %p226, %s223, 7
        %s228 = smul.addr %s225, 8
        %s229 = sadd.s32 %s227, %s228
        %s230 = smul.addr %s229, 8
        %s231 = scalar_lea.vmem %s0, %s230
        %p232 = pneg %p59
        %p233 = pneg %p56
        %s234 = sand.u32 %s74, 1
        %s235 = scalar_lea.sflag [#allocation4], %s234
        %s236 = sand.u32 %s74, 1
        %s237 = smul.addr %s236, 2048
        %s238 = scalar_lea.vmem [#allocation3], %s237
        %p239 = pneg %p87
        %p240 = pneg %p84
        %s241 = smul.u32 4, %s23
        %p242 = scmp.lt.s32.totalorder %s241, 7
        %s243 = scalar_select %p242, %s241, 7
        %s244 = scalar_lea.vmem %s2, %s243
        %p245 = pneg %p113
        %p246 = pneg %p110
        %p247 = pneg %p141
        %p248 = pneg %p138
        %s249 = smul.u32 4, %s23
        %p250 = scmp.lt.s32.totalorder %s22, 0
        %s251 = scalar_select %p250, %s22, 0
        %p252 = scmp.lt.s32.totalorder %s249, 7
        %s253 = scalar_select %p252, %s249, 7
        %s254 = smul.addr %s251, 8
        %s255 = sadd.s32 %s253, %s254
        %s256 = smul.addr %s255, 8
        %s257 = scalar_lea.vmem %s3, %s256
        %s258 = smul.u32 4, %s24
        %p259 = scmp.lt.s32.totalorder %s22, 0
        %s260 = scalar_select %p259, %s22, 0
        %p261 = scmp.lt.s32.totalorder %s258, 7
        %s262 = scalar_select %p261, %s258, 7
        %s263 = smul.addr %s260, 8
        %s264 = sadd.s32 %s262, %s263
        %s265 = smul.addr %s264, 8
        %s266 = scalar_lea.vmem %s0, %s265
        %s267 = smul.u32 4, %s24
        %s268 = smul.u32 64, %s24
        %s269 = smul.u32 4, %s23
        %s270 = smul.u32 4, %s23
        %p271 = scmp.lt.s32.totalorder %s270, 7
        %s272 = scalar_select %p271, %s270, 7
        %s273 = scalar_lea.vmem %s2, %s272
        %s274 = smul.u32 4, %s23
        %s275 = smul.u32 4, %s23
        %p276 = scmp.lt.s32.totalorder %s22, 0
        %s277 = scalar_select %p276, %s22, 0
        %p278 = scmp.lt.s32.totalorder %s275, 7
        %s279 = scalar_select %p278, %s275, 7
        %s280 = smul.addr %s277, 8
        %s281 = sadd.s32 %s279, %s280
        %s282 = smul.addr %s281, 8
        %s283 = scalar_lea.vmem %s3, %s282
        %s284 = smul.u32 4, %s23
        %p285 = scmp.eq.s32.totalorder %s24, 0
        // Predicated region
        $region37: #{generator_forward.25} parent=31 // pred_check
          %p286 = pneg %p285
        $region38: #{generator_forward.25} parent=31 // pred_check_branch
          %288 = sbr.rel (%p286) target = $region40
        $region39: #{generator_forward.25} parent=31 // pred_region
          %289 = vst [vmem:[#allocation2] sm:$0xff] 0.0
          %290 = vst [vmem:[#allocation2 + $0x8] sm:$0xff] 0.0
          %291 = vst [vmem:[#allocation2 + $0x10] sm:$0xff] 0.0
          %292 = vst [vmem:[#allocation2 + $0x18] sm:$0xff] 0.0
        $region40: #{generator_forward.25} parent=31 // pred_fallthru
          _
        %v293 = vld [vmem:[#allocation2] sm:$0xff]
        %v294 = vld [vmem:[#allocation2 + $0x8] sm:$0xff]
        %v295 = vld [vmem:[#allocation2 + $0x10] sm:$0xff]
        %v296 = vld [vmem:[#allocation2 + $0x18] sm:$0xff]
        %v297 = vld [vmem:[%s266] sm:$0xff]
        %v298 = vld [vmem:[%s266 + $0x8] sm:$0xff]
        %v299 = vld [vmem:[%s266 + $0x10] sm:$0xff]
        %v300 = vld [vmem:[%s266 + $0x18] sm:$0xff]
        %v301 = vld [vmem:[%s217] sm:$0xff]
        %v302 = vld [vmem:[%s217 + $0x8] sm:$0xff]
        %v303 = vld [vmem:[%s217 + $0x10] sm:$0xff]
        %v304 = vld [vmem:[%s217 + $0x18] sm:$0xff]
        %v305 = vld [vmem:[%s217 + $0x20] sm:$0xff]
        %v306 = vld [vmem:[%s217 + $0x28] sm:$0xff]
        %v307 = vld [vmem:[%s217 + $0x30] sm:$0xff]
        %v308 = vld [vmem:[%s217 + $0x38] sm:$0xff]
        %v309 = vld [vmem:[%s217 + $0x40] sm:$0xff]
        %v310 = vld [vmem:[%s217 + $0x48] sm:$0xff]
        %v311 = vld [vmem:[%s217 + $0x50] sm:$0xff]
        %v312 = vld [vmem:[%s217 + $0x58] sm:$0xff]
        %v313 = vld [vmem:[%s217 + $0x60] sm:$0xff]
        %v314 = vld [vmem:[%s217 + $0x68] sm:$0xff]
        %v315 = vld [vmem:[%s217 + $0x70] sm:$0xff]
        %v316 = vld [vmem:[%s217 + $0x78] sm:$0xff]
        %v317 = vld [vmem:[%s217 + $0x80] sm:$0xff]
        %v318 = vld [vmem:[%s217 + $0x88] sm:$0xff]
        %v319 = vld [vmem:[%s217 + $0x90] sm:$0xff]
        %v320 = vld [vmem:[%s217 + $0x98] sm:$0xff]
        %v321 = vld [vmem:[%s217 + $0xa0] sm:$0xff]
        %v322 = vld [vmem:[%s217 + $0xa8] sm:$0xff]
        %v323 = vld [vmem:[%s217 + $0xb0] sm:$0xff]
        %v324 = vld [vmem:[%s217 + $0xb8] sm:$0xff]
        %v325 = vld [vmem:[%s217 + $0xc0] sm:$0xff]
        %v326 = vld [vmem:[%s217 + $0xc8] sm:$0xff]
        %v327 = vld [vmem:[%s217 + $0xd0] sm:$0xff]
        %v328 = vld [vmem:[%s217 + $0xd8] sm:$0xff]
        %v329 = vld [vmem:[%s217 + $0xe0] sm:$0xff]
        %v330 = vld [vmem:[%s217 + $0xe8] sm:$0xff]
        %v331 = vld [vmem:[%s217 + $0xf0] sm:$0xff]
        %v332 = vld [vmem:[%s217 + $0xf8] sm:$0xff]
        %v333 = vld [vmem:[%s217 + $0x100] sm:$0xff]
        %v334 = vld [vmem:[%s217 + $0x108] sm:$0xff]
        %v335 = vld [vmem:[%s217 + $0x110] sm:$0xff]
        %v336 = vld [vmem:[%s217 + $0x118] sm:$0xff]
        %v337 = vld [vmem:[%s217 + $0x120] sm:$0xff]
        %v338 = vld [vmem:[%s217 + $0x128] sm:$0xff]
        %v339 = vld [vmem:[%s217 + $0x130] sm:$0xff]
        %v340 = vld [vmem:[%s217 + $0x138] sm:$0xff]
        %v341 = vld [vmem:[%s217 + $0x140] sm:$0xff]
        %v342 = vld [vmem:[%s217 + $0x148] sm:$0xff]
        %v343 = vld [vmem:[%s217 + $0x150] sm:$0xff]
        %v344 = vld [vmem:[%s217 + $0x158] sm:$0xff]
        %v345 = vld [vmem:[%s217 + $0x160] sm:$0xff]
        %v346 = vld [vmem:[%s217 + $0x168] sm:$0xff]
        %v347 = vld [vmem:[%s217 + $0x170] sm:$0xff]
        %v348 = vld [vmem:[%s217 + $0x178] sm:$0xff]
        %v349 = vld [vmem:[%s217 + $0x180] sm:$0xff]
        %v350 = vld [vmem:[%s217 + $0x188] sm:$0xff]
        %v351 = vld [vmem:[%s217 + $0x190] sm:$0xff]
        %v352 = vld [vmem:[%s217 + $0x198] sm:$0xff]
        %v353 = vld [vmem:[%s217 + $0x1a0] sm:$0xff]
        %v354 = vld [vmem:[%s217 + $0x1a8] sm:$0xff]
        %v355 = vld [vmem:[%s217 + $0x1b0] sm:$0xff]
        %v356 = vld [vmem:[%s217 + $0x1b8] sm:$0xff]
        %v357 = vld [vmem:[%s217 + $0x1c0] sm:$0xff]
        %v358 = vld [vmem:[%s217 + $0x1c8] sm:$0xff]
        %v359 = vld [vmem:[%s217 + $0x1d0] sm:$0xff]
        %v360 = vld [vmem:[%s217 + $0x1d8] sm:$0xff]
        %v361 = vld [vmem:[%s217 + $0x1e0] sm:$0xff]
        %v362 = vld [vmem:[%s217 + $0x1e8] sm:$0xff]
        %v363 = vld [vmem:[%s217 + $0x1f0] sm:$0xff]
        %v364 = vld [vmem:[%s217 + $0x1f8] sm:$0xff]
        %v365 = vld [vmem:[%s217 + $0x200] sm:$0xff]
        %v366 = vld [vmem:[%s217 + $0x208] sm:$0xff]
        %v367 = vld [vmem:[%s217 + $0x210] sm:$0xff]
        %v368 = vld [vmem:[%s217 + $0x218] sm:$0xff]
        %v369 = vld [vmem:[%s217 + $0x220] sm:$0xff]
        %v370 = vld [vmem:[%s217 + $0x228] sm:$0xff]
        %v371 = vld [vmem:[%s217 + $0x230] sm:$0xff]
        %v372 = vld [vmem:[%s217 + $0x238] sm:$0xff]
        %v373 = vld [vmem:[%s217 + $0x240] sm:$0xff]
        %v374 = vld [vmem:[%s217 + $0x248] sm:$0xff]
        %v375 = vld [vmem:[%s217 + $0x250] sm:$0xff]
        %v376 = vld [vmem:[%s217 + $0x258] sm:$0xff]
        %v377 = vld [vmem:[%s217 + $0x260] sm:$0xff]
        %v378 = vld [vmem:[%s217 + $0x268] sm:$0xff]
        %v379 = vld [vmem:[%s217 + $0x270] sm:$0xff]
        %v380 = vld [vmem:[%s217 + $0x278] sm:$0xff]
        %v381 = vld [vmem:[%s217 + $0x280] sm:$0xff]
        %v382 = vld [vmem:[%s217 + $0x288] sm:$0xff]
        %v383 = vld [vmem:[%s217 + $0x290] sm:$0xff]
        %v384 = vld [vmem:[%s217 + $0x298] sm:$0xff]
        %v385 = vld [vmem:[%s217 + $0x2a0] sm:$0xff]
        %v386 = vld [vmem:[%s217 + $0x2a8] sm:$0xff]
        %v387 = vld [vmem:[%s217 + $0x2b0] sm:$0xff]
        %v388 = vld [vmem:[%s217 + $0x2b8] sm:$0xff]
        %v389 = vld [vmem:[%s217 + $0x2c0] sm:$0xff]
        %v390 = vld [vmem:[%s217 + $0x2c8] sm:$0xff]
        %v391 = vld [vmem:[%s217 + $0x2d0] sm:$0xff]
        %v392 = vld [vmem:[%s217 + $0x2d8] sm:$0xff]
        %v393 = vld [vmem:[%s217 + $0x2e0] sm:$0xff]
        %v394 = vld [vmem:[%s217 + $0x2e8] sm:$0xff]
        %v395 = vld [vmem:[%s217 + $0x2f0] sm:$0xff]
        %v396 = vld [vmem:[%s217 + $0x2f8] sm:$0xff]
        %v397 = vld [vmem:[%s217 + $0x300] sm:$0xff]
        %v398 = vld [vmem:[%s217 + $0x308] sm:$0xff]
        %v399 = vld [vmem:[%s217 + $0x310] sm:$0xff]
        %v400 = vld [vmem:[%s217 + $0x318] sm:$0xff]
        %v401 = vld [vmem:[%s217 + $0x320] sm:$0xff]
        %v402 = vld [vmem:[%s217 + $0x328] sm:$0xff]
        %v403 = vld [vmem:[%s217 + $0x330] sm:$0xff]
        %v404 = vld [vmem:[%s217 + $0x338] sm:$0xff]
        %v405 = vld [vmem:[%s217 + $0x340] sm:$0xff]
        %v406 = vld [vmem:[%s217 + $0x348] sm:$0xff]
        %v407 = vld [vmem:[%s217 + $0x350] sm:$0xff]
        %v408 = vld [vmem:[%s217 + $0x358] sm:$0xff]
        %v409 = vld [vmem:[%s217 + $0x360] sm:$0xff]
        %v410 = vld [vmem:[%s217 + $0x368] sm:$0xff]
        %v411 = vld [vmem:[%s217 + $0x370] sm:$0xff]
        %v412 = vld [vmem:[%s217 + $0x378] sm:$0xff]
        %v413 = vld [vmem:[%s217 + $0x380] sm:$0xff]
        %v414 = vld [vmem:[%s217 + $0x388] sm:$0xff]
        %v415 = vld [vmem:[%s217 + $0x390] sm:$0xff]
        %v416 = vld [vmem:[%s217 + $0x398] sm:$0xff]
        %v417 = vld [vmem:[%s217 + $0x3a0] sm:$0xff]
        %v418 = vld [vmem:[%s217 + $0x3a8] sm:$0xff]
        %v419 = vld [vmem:[%s217 + $0x3b0] sm:$0xff]
        %v420 = vld [vmem:[%s217 + $0x3b8] sm:$0xff]
        %v421 = vld [vmem:[%s217 + $0x3c0] sm:$0xff]
        %v422 = vld [vmem:[%s217 + $0x3c8] sm:$0xff]
        %v423 = vld [vmem:[%s217 + $0x3d0] sm:$0xff]
        %v424 = vld [vmem:[%s217 + $0x3d8] sm:$0xff]
        %v425 = vld [vmem:[%s217 + $0x3e0] sm:$0xff]
        %v426 = vld [vmem:[%s217 + $0x3e8] sm:$0xff]
        %v427 = vld [vmem:[%s217 + $0x3f0] sm:$0xff]
        %v428 = vld [vmem:[%s217 + $0x3f8] sm:$0xff]
        %v429 = vld [vmem:[%s217 + $0x400] sm:$0xff]
        %v430 = vld [vmem:[%s217 + $0x408] sm:$0xff]
        %v431 = vld [vmem:[%s217 + $0x410] sm:$0xff]
        %v432 = vld [vmem:[%s217 + $0x418] sm:$0xff]
        %v433 = vld [vmem:[%s217 + $0x420] sm:$0xff]
        %v434 = vld [vmem:[%s217 + $0x428] sm:$0xff]
        %v435 = vld [vmem:[%s217 + $0x430] sm:$0xff]
        %v436 = vld [vmem:[%s217 + $0x438] sm:$0xff]
        %v437 = vld [vmem:[%s217 + $0x440] sm:$0xff]
        %v438 = vld [vmem:[%s217 + $0x448] sm:$0xff]
        %v439 = vld [vmem:[%s217 + $0x450] sm:$0xff]
        %v440 = vld [vmem:[%s217 + $0x458] sm:$0xff]
        %v441 = vld [vmem:[%s217 + $0x460] sm:$0xff]
        %v442 = vld [vmem:[%s217 + $0x468] sm:$0xff]
        %v443 = vld [vmem:[%s217 + $0x470] sm:$0xff]
        %v444 = vld [vmem:[%s217 + $0x478] sm:$0xff]
        %v445 = vld [vmem:[%s217 + $0x480] sm:$0xff]
        %v446 = vld [vmem:[%s217 + $0x488] sm:$0xff]
        %v447 = vld [vmem:[%s217 + $0x490] sm:$0xff]
        %v448 = vld [vmem:[%s217 + $0x498] sm:$0xff]
        %v449 = vld [vmem:[%s217 + $0x4a0] sm:$0xff]
        %v450 = vld [vmem:[%s217 + $0x4a8] sm:$0xff]
        %v451 = vld [vmem:[%s217 + $0x4b0] sm:$0xff]
        %v452 = vld [vmem:[%s217 + $0x4b8] sm:$0xff]
        %v453 = vld [vmem:[%s217 + $0x4c0] sm:$0xff]
        %v454 = vld [vmem:[%s217 + $0x4c8] sm:$0xff]
        %v455 = vld [vmem:[%s217 + $0x4d0] sm:$0xff]
        %v456 = vld [vmem:[%s217 + $0x4d8] sm:$0xff]
        %v457 = vld [vmem:[%s217 + $0x4e0] sm:$0xff]
        %v458 = vld [vmem:[%s217 + $0x4e8] sm:$0xff]
        %v459 = vld [vmem:[%s217 + $0x4f0] sm:$0xff]
        %v460 = vld [vmem:[%s217 + $0x4f8] sm:$0xff]
        %v461 = vld [vmem:[%s217 + $0x500] sm:$0xff]
        %v462 = vld [vmem:[%s217 + $0x508] sm:$0xff]
        %v463 = vld [vmem:[%s217 + $0x510] sm:$0xff]
        %v464 = vld [vmem:[%s217 + $0x518] sm:$0xff]
        %v465 = vld [vmem:[%s217 + $0x520] sm:$0xff]
        %v466 = vld [vmem:[%s217 + $0x528] sm:$0xff]
        %v467 = vld [vmem:[%s217 + $0x530] sm:$0xff]
        %v468 = vld [vmem:[%s217 + $0x538] sm:$0xff]
        %v469 = vld [vmem:[%s217 + $0x540] sm:$0xff]
        %v470 = vld [vmem:[%s217 + $0x548] sm:$0xff]
        %v471 = vld [vmem:[%s217 + $0x550] sm:$0xff]
        %v472 = vld [vmem:[%s217 + $0x558] sm:$0xff]
        %v473 = vld [vmem:[%s217 + $0x560] sm:$0xff]
        %v474 = vld [vmem:[%s217 + $0x568] sm:$0xff]
        %v475 = vld [vmem:[%s217 + $0x570] sm:$0xff]
        %v476 = vld [vmem:[%s217 + $0x578] sm:$0xff]
        %v477 = vld [vmem:[%s217 + $0x580] sm:$0xff]
        %v478 = vld [vmem:[%s217 + $0x588] sm:$0xff]
        %v479 = vld [vmem:[%s217 + $0x590] sm:$0xff]
        %v480 = vld [vmem:[%s217 + $0x598] sm:$0xff]
        %v481 = vld [vmem:[%s217 + $0x5a0] sm:$0xff]
        %v482 = vld [vmem:[%s217 + $0x5a8] sm:$0xff]
        %v483 = vld [vmem:[%s217 + $0x5b0] sm:$0xff]
        %v484 = vld [vmem:[%s217 + $0x5b8] sm:$0xff]
        %v485 = vld [vmem:[%s217 + $0x5c0] sm:$0xff]
        %v486 = vld [vmem:[%s217 + $0x5c8] sm:$0xff]
        %v487 = vld [vmem:[%s217 + $0x5d0] sm:$0xff]
        %v488 = vld [vmem:[%s217 + $0x5d8] sm:$0xff]
        %v489 = vld [vmem:[%s217 + $0x5e0] sm:$0xff]
        %v490 = vld [vmem:[%s217 + $0x5e8] sm:$0xff]
        %v491 = vld [vmem:[%s217 + $0x5f0] sm:$0xff]
        %v492 = vld [vmem:[%s217 + $0x5f8] sm:$0xff]
        %v493 = vld [vmem:[%s217 + $0x600] sm:$0xff]
        %v494 = vld [vmem:[%s217 + $0x608] sm:$0xff]
        %v495 = vld [vmem:[%s217 + $0x610] sm:$0xff]
        %v496 = vld [vmem:[%s217 + $0x618] sm:$0xff]
        %v497 = vld [vmem:[%s217 + $0x620] sm:$0xff]
        %v498 = vld [vmem:[%s217 + $0x628] sm:$0xff]
        %v499 = vld [vmem:[%s217 + $0x630] sm:$0xff]
        %v500 = vld [vmem:[%s217 + $0x638] sm:$0xff]
        %v501 = vld [vmem:[%s217 + $0x640] sm:$0xff]
        %v502 = vld [vmem:[%s217 + $0x648] sm:$0xff]
        %v503 = vld [vmem:[%s217 + $0x650] sm:$0xff]
        %v504 = vld [vmem:[%s217 + $0x658] sm:$0xff]
        %v505 = vld [vmem:[%s217 + $0x660] sm:$0xff]
        %v506 = vld [vmem:[%s217 + $0x668] sm:$0xff]
        %v507 = vld [vmem:[%s217 + $0x670] sm:$0xff]
        %v508 = vld [vmem:[%s217 + $0x678] sm:$0xff]
        %v509 = vld [vmem:[%s217 + $0x680] sm:$0xff]
        %v510 = vld [vmem:[%s217 + $0x688] sm:$0xff]
        %v511 = vld [vmem:[%s217 + $0x690] sm:$0xff]
        %v512 = vld [vmem:[%s217 + $0x698] sm:$0xff]
        %v513 = vld [vmem:[%s217 + $0x6a0] sm:$0xff]
        %v514 = vld [vmem:[%s217 + $0x6a8] sm:$0xff]
        %v515 = vld [vmem:[%s217 + $0x6b0] sm:$0xff]
        %v516 = vld [vmem:[%s217 + $0x6b8] sm:$0xff]
        %v517 = vld [vmem:[%s217 + $0x6c0] sm:$0xff]
        %v518 = vld [vmem:[%s217 + $0x6c8] sm:$0xff]
        %v519 = vld [vmem:[%s217 + $0x6d0] sm:$0xff]
        %v520 = vld [vmem:[%s217 + $0x6d8] sm:$0xff]
        %v521 = vld [vmem:[%s217 + $0x6e0] sm:$0xff]
        %v522 = vld [vmem:[%s217 + $0x6e8] sm:$0xff]
        %v523 = vld [vmem:[%s217 + $0x6f0] sm:$0xff]
        %v524 = vld [vmem:[%s217 + $0x6f8] sm:$0xff]
        %v525 = vld [vmem:[%s217 + $0x700] sm:$0xff]
        %v526 = vld [vmem:[%s217 + $0x708] sm:$0xff]
        %v527 = vld [vmem:[%s217 + $0x710] sm:$0xff]
        %v528 = vld [vmem:[%s217 + $0x718] sm:$0xff]
        %v529 = vld [vmem:[%s217 + $0x720] sm:$0xff]
        %v530 = vld [vmem:[%s217 + $0x728] sm:$0xff]
        %v531 = vld [vmem:[%s217 + $0x730] sm:$0xff]
        %v532 = vld [vmem:[%s217 + $0x738] sm:$0xff]
        %v533 = vld [vmem:[%s217 + $0x740] sm:$0xff]
        %v534 = vld [vmem:[%s217 + $0x748] sm:$0xff]
        %v535 = vld [vmem:[%s217 + $0x750] sm:$0xff]
        %v536 = vld [vmem:[%s217 + $0x758] sm:$0xff]
        %v537 = vld [vmem:[%s217 + $0x760] sm:$0xff]
        %v538 = vld [vmem:[%s217 + $0x768] sm:$0xff]
        %v539 = vld [vmem:[%s217 + $0x770] sm:$0xff]
        %v540 = vld [vmem:[%s217 + $0x778] sm:$0xff]
        %v541 = vld [vmem:[%s217 + $0x780] sm:$0xff]
        %v542 = vld [vmem:[%s217 + $0x788] sm:$0xff]
        %v543 = vld [vmem:[%s217 + $0x790] sm:$0xff]
        %v544 = vld [vmem:[%s217 + $0x798] sm:$0xff]
        %v545 = vld [vmem:[%s217 + $0x7a0] sm:$0xff]
        %v546 = vld [vmem:[%s217 + $0x7a8] sm:$0xff]
        %v547 = vld [vmem:[%s217 + $0x7b0] sm:$0xff]
        %v548 = vld [vmem:[%s217 + $0x7b8] sm:$0xff]
        %v549 = vld [vmem:[%s217 + $0x7c0] sm:$0xff]
        %v550 = vld [vmem:[%s217 + $0x7c8] sm:$0xff]
        %v551 = vld [vmem:[%s217 + $0x7d0] sm:$0xff]
        %v552 = vld [vmem:[%s217 + $0x7d8] sm:$0xff]
        %v553 = vld [vmem:[%s217 + $0x7e0] sm:$0xff]
        %v554 = vld [vmem:[%s217 + $0x7e8] sm:$0xff]
        %v555 = vld [vmem:[%s217 + $0x7f0] sm:$0xff]
        %v556 = vld [vmem:[%s217 + $0x7f8] sm:$0xff]
        %557 = vmatpush.msra.mxu0 %v361
        %558 = vmatpush.msra.mxu0 %v357
        %559 = vmatpush.msra.mxu0 %v353
        %560 = vmatpush.msra.mxu0 %v349
        %561 = vmatpush.msra.mxu0 %v345
        %562 = vmatpush.msra.mxu0 %v341
        %563 = vmatpush.msra.mxu0 %v337
        %564 = vmatpush.msra.mxu0 %v333
        %565 = vmatpush.msra.mxu0 %v329
        %566 = vmatpush.msra.mxu0 %v325
        %567 = vmatpush.msra.mxu0 %v321
        %568 = vmatpush.msra.mxu0 %v317
        %569 = vmatpush.msra.mxu0 %v313
        %570 = vmatpush.msra.mxu0 %v309
        %571 = vmatpush.msra.mxu0 %v305
        %572 = vmatpush.msra.mxu0 %v301
        %573 = vmatmul.f32.gmra.mxu0 %v297
        %v574 = vpop.f32.mrf.mxu0
        %v575 = vadd.f32 0.0, %v574
        %576 = vdwg.mxu0
        %577 = vmatpush.msra.mxu0 %v425
        %578 = vmatpush.msra.mxu0 %v421
        %579 = vmatpush.msra.mxu0 %v417
        %580 = vmatpush.msra.mxu0 %v413
        %581 = vmatpush.msra.mxu0 %v409
        %582 = vmatpush.msra.mxu0 %v405
        %583 = vmatpush.msra.mxu0 %v401
        %584 = vmatpush.msra.mxu0 %v397
        %585 = vmatpush.msra.mxu0 %v393
        %586 = vmatpush.msra.mxu0 %v389
        %587 = vmatpush.msra.mxu0 %v385
        %588 = vmatpush.msra.mxu0 %v381
        %589 = vmatpush.msra.mxu0 %v377
        %590 = vmatpush.msra.mxu0 %v373
        %591 = vmatpush.msra.mxu0 %v369
        %592 = vmatpush.msra.mxu0 %v365
        %593 = vmatmul.f32.gmra.mxu0 %v298
        %v594 = vpop.f32.mrf.mxu0
        %v595 = vadd.f32 %v575, %v594
        %596 = vdwg.mxu0
        %597 = vmatpush.msra.mxu0 %v489
        %598 = vmatpush.msra.mxu0 %v485
        %599 = vmatpush.msra.mxu0 %v481
        %600 = vmatpush.msra.mxu0 %v477
        %601 = vmatpush.msra.mxu0 %v473
        %602 = vmatpush.msra.mxu0 %v469
        %603 = vmatpush.msra.mxu0 %v465
        %604 = vmatpush.msra.mxu0 %v461
        %605 = vmatpush.msra.mxu0 %v457
        %606 = vmatpush.msra.mxu0 %v453
        %607 = vmatpush.msra.mxu0 %v449
        %608 = vmatpush.msra.mxu0 %v445
        %609 = vmatpush.msra.mxu0 %v441
        %610 = vmatpush.msra.mxu0 %v437
        %611 = vmatpush.msra.mxu0 %v433
        %612 = vmatpush.msra.mxu0 %v429
        %613 = vmatmul.f32.gmra.mxu0 %v299
        %v614 = vpop.f32.mrf.mxu0
        %v615 = vadd.f32 %v595, %v614
        %616 = vdwg.mxu0
        %617 = vmatpush.msra.mxu0 %v553
        %618 = vmatpush.msra.mxu0 %v549
        %619 = vmatpush.msra.mxu0 %v545
        %620 = vmatpush.msra.mxu0 %v541
        %621 = vmatpush.msra.mxu0 %v537
        %622 = vmatpush.msra.mxu0 %v533
        %623 = vmatpush.msra.mxu0 %v529
        %624 = vmatpush.msra.mxu0 %v525
        %625 = vmatpush.msra.mxu0 %v521
        %626 = vmatpush.msra.mxu0 %v517
        %627 = vmatpush.msra.mxu0 %v513
        %628 = vmatpush.msra.mxu0 %v509
        %629 = vmatpush.msra.mxu0 %v505
        %630 = vmatpush.msra.mxu0 %v501
        %631 = vmatpush.msra.mxu0 %v497
        %632 = vmatpush.msra.mxu0 %v493
        %633 = vmatmul.f32.gmra.mxu0 %v300
        %v634 = vpop.f32.mrf.mxu0
        %v635 = vadd.f32 %v615, %v634
        %636 = vdwg.mxu0
        %637 = vmatpush.msra.mxu0 %v362
        %638 = vmatpush.msra.mxu0 %v358
        %639 = vmatpush.msra.mxu0 %v354
        %640 = vmatpush.msra.mxu0 %v350
        %641 = vmatpush.msra.mxu0 %v346
        %642 = vmatpush.msra.mxu0 %v342
        %643 = vmatpush.msra.mxu0 %v338
        %644 = vmatpush.msra.mxu0 %v334
        %645 = vmatpush.msra.mxu0 %v330
        %646 = vmatpush.msra.mxu0 %v326
        %647 = vmatpush.msra.mxu0 %v322
        %648 = vmatpush.msra.mxu0 %v318
        %649 = vmatpush.msra.mxu0 %v314
        %650 = vmatpush.msra.mxu0 %v310
        %651 = vmatpush.msra.mxu0 %v306
        %652 = vmatpush.msra.mxu0 %v302
        %653 = vmatmul.f32.gmra.mxu0 %v297
        %v654 = vpop.f32.mrf.mxu0
        %v655 = vadd.f32 0.0, %v654
        %656 = vdwg.mxu0
        %657 = vmatpush.msra.mxu0 %v426
        %658 = vmatpush.msra.mxu0 %v422
        %659 = vmatpush.msra.mxu0 %v418
        %660 = vmatpush.msra.mxu0 %v414
        %661 = vmatpush.msra.mxu0 %v410
        %662 = vmatpush.msra.mxu0 %v406
        %663 = vmatpush.msra.mxu0 %v402
        %664 = vmatpush.msra.mxu0 %v398
        %665 = vmatpush.msra.mxu0 %v394
        %666 = vmatpush.msra.mxu0 %v390
        %667 = vmatpush.msra.mxu0 %v386
        %668 = vmatpush.msra.mxu0 %v382
        %669 = vmatpush.msra.mxu0 %v378
        %670 = vmatpush.msra.mxu0 %v374
        %671 = vmatpush.msra.mxu0 %v370
        %672 = vmatpush.msra.mxu0 %v366
        %673 = vmatmul.f32.gmra.mxu0 %v298
        %v674 = vpop.f32.mrf.mxu0
        %v675 = vadd.f32 %v655, %v674
        %676 = vdwg.mxu0
        %677 = vmatpush.msra.mxu0 %v490
        %678 = vmatpush.msra.mxu0 %v486
        %679 = vmatpush.msra.mxu0 %v482
        %680 = vmatpush.msra.mxu0 %v478
        %681 = vmatpush.msra.mxu0 %v474
        %682 = vmatpush.msra.mxu0 %v470
        %683 = vmatpush.msra.mxu0 %v466
        %684 = vmatpush.msra.mxu0 %v462
        %685 = vmatpush.msra.mxu0 %v458
        %686 = vmatpush.msra.mxu0 %v454
        %687 = vmatpush.msra.mxu0 %v450
        %688 = vmatpush.msra.mxu0 %v446
        %689 = vmatpush.msra.mxu0 %v442
        %690 = vmatpush.msra.mxu0 %v438
        %691 = vmatpush.msra.mxu0 %v434
        %692 = vmatpush.msra.mxu0 %v430
        %693 = vmatmul.f32.gmra.mxu0 %v299
        %v694 = vpop.f32.mrf.mxu0
        %v695 = vadd.f32 %v675, %v694
        %696 = vdwg.mxu0
        %697 = vmatpush.msra.mxu0 %v554
        %698 = vmatpush.msra.mxu0 %v550
        %699 = vmatpush.msra.mxu0 %v546
        %700 = vmatpush.msra.mxu0 %v542
        %701 = vmatpush.msra.mxu0 %v538
        %702 = vmatpush.msra.mxu0 %v534
        %703 = vmatpush.msra.mxu0 %v530
        %704 = vmatpush.msra.mxu0 %v526
        %705 = vmatpush.msra.mxu0 %v522
        %706 = vmatpush.msra.mxu0 %v518
        %707 = vmatpush.msra.mxu0 %v514
        %708 = vmatpush.msra.mxu0 %v510
        %709 = vmatpush.msra.mxu0 %v506
        %710 = vmatpush.msra.mxu0 %v502
        %711 = vmatpush.msra.mxu0 %v498
        %712 = vmatpush.msra.mxu0 %v494
        %713 = vmatmul.f32.gmra.mxu0 %v300
        %v714 = vpop.f32.mrf.mxu0
        %v715 = vadd.f32 %v695, %v714
        %716 = vdwg.mxu0
        %717 = vmatpush.msra.mxu0 %v363
        %718 = vmatpush.msra.mxu0 %v359
        %719 = vmatpush.msra.mxu0 %v355
        %720 = vmatpush.msra.mxu0 %v351
        %721 = vmatpush.msra.mxu0 %v347
        %722 = vmatpush.msra.mxu0 %v343
        %723 = vmatpush.msra.mxu0 %v339
        %724 = vmatpush.msra.mxu0 %v335
        %725 = vmatpush.msra.mxu0 %v331
        %726 = vmatpush.msra.mxu0 %v327
        %727 = vmatpush.msra.mxu0 %v323
        %728 = vmatpush.msra.mxu0 %v319
        %729 = vmatpush.msra.mxu0 %v315
        %730 = vmatpush.msra.mxu0 %v311
        %731 = vmatpush.msra.mxu0 %v307
        %732 = vmatpush.msra.mxu0 %v303
        %733 = vmatmul.f32.gmra.mxu0 %v297
        %v734 = vpop.f32.mrf.mxu0
        %v735 = vadd.f32 0.0, %v734
        %736 = vdwg.mxu0
        %737 = vmatpush.msra.mxu0 %v427
        %738 = vmatpush.msra.mxu0 %v423
        %739 = vmatpush.msra.mxu0 %v419
        %740 = vmatpush.msra.mxu0 %v415
        %741 = vmatpush.msra.mxu0 %v411
        %742 = vmatpush.msra.mxu0 %v407
        %743 = vmatpush.msra.mxu0 %v403
        %744 = vmatpush.msra.mxu0 %v399
        %745 = vmatpush.msra.mxu0 %v395
        %746 = vmatpush.msra.mxu0 %v391
        %747 = vmatpush.msra.mxu0 %v387
        %748 = vmatpush.msra.mxu0 %v383
        %749 = vmatpush.msra.mxu0 %v379
        %750 = vmatpush.msra.mxu0 %v375
        %751 = vmatpush.msra.mxu0 %v371
        %752 = vmatpush.msra.mxu0 %v367
        %753 = vmatmul.f32.gmra.mxu0 %v298
        %v754 = vpop.f32.mrf.mxu0
        %v755 = vadd.f32 %v735, %v754
        %756 = vdwg.mxu0
        %757 = vmatpush.msra.mxu0 %v491
        %758 = vmatpush.msra.mxu0 %v487
        %759 = vmatpush.msra.mxu0 %v483
        %760 = vmatpush.msra.mxu0 %v479
        %761 = vmatpush.msra.mxu0 %v475
        %762 = vmatpush.msra.mxu0 %v471
        %763 = vmatpush.msra.mxu0 %v467
        %764 = vmatpush.msra.mxu0 %v463
        %765 = vmatpush.msra.mxu0 %v459
        %766 = vmatpush.msra.mxu0 %v455
        %767 = vmatpush.msra.mxu0 %v451
        %768 = vmatpush.msra.mxu0 %v447
        %769 = vmatpush.msra.mxu0 %v443
        %770 = vmatpush.msra.mxu0 %v439
        %771 = vmatpush.msra.mxu0 %v435
        %772 = vmatpush.msra.mxu0 %v431
        %773 = vmatmul.f32.gmra.mxu0 %v299
        %v774 = vpop.f32.mrf.mxu0
        %v775 = vadd.f32 %v755, %v774
        %776 = vdwg.mxu0
        %777 = vmatpush.msra.mxu0 %v555
        %778 = vmatpush.msra.mxu0 %v551
        %779 = vmatpush.msra.mxu0 %v547
        %780 = vmatpush.msra.mxu0 %v543
        %781 = vmatpush.msra.mxu0 %v539
        %782 = vmatpush.msra.mxu0 %v535
        %783 = vmatpush.msra.mxu0 %v531
        %784 = vmatpush.msra.mxu0 %v527
        %785 = vmatpush.msra.mxu0 %v523
        %786 = vmatpush.msra.mxu0 %v519
        %787 = vmatpush.msra.mxu0 %v515
        %788 = vmatpush.msra.mxu0 %v511
        %789 = vmatpush.msra.mxu0 %v507
        %790 = vmatpush.msra.mxu0 %v503
        %791 = vmatpush.msra.mxu0 %v499
        %792 = vmatpush.msra.mxu0 %v495
        %793 = vmatmul.f32.gmra.mxu0 %v300
        %v794 = vpop.f32.mrf.mxu0
        %v795 = vadd.f32 %v775, %v794
        %796 = vdwg.mxu0
        %797 = vmatpush.msra.mxu0 %v364
        %798 = vmatpush.msra.mxu0 %v360
        %799 = vmatpush.msra.mxu0 %v356
        %800 = vmatpush.msra.mxu0 %v352
        %801 = vmatpush.msra.mxu0 %v348
        %802 = vmatpush.msra.mxu0 %v344
        %803 = vmatpush.msra.mxu0 %v340
        %804 = vmatpush.msra.mxu0 %v336
        %805 = vmatpush.msra.mxu0 %v332
        %806 = vmatpush.msra.mxu0 %v328
        %807 = vmatpush.msra.mxu0 %v324
        %808 = vmatpush.msra.mxu0 %v320
        %809 = vmatpush.msra.mxu0 %v316
        %810 = vmatpush.msra.mxu0 %v312
        %811 = vmatpush.msra.mxu0 %v308
        %812 = vmatpush.msra.mxu0 %v304
        %813 = vmatmul.f32.gmra.mxu0 %v297
        %v814 = vpop.f32.mrf.mxu0
        %v815 = vadd.f32 0.0, %v814
        %816 = vdwg.mxu0
        %817 = vmatpush.msra.mxu0 %v428
        %818 = vmatpush.msra.mxu0 %v424
        %819 = vmatpush.msra.mxu0 %v420
        %820 = vmatpush.msra.mxu0 %v416
        %821 = vmatpush.msra.mxu0 %v412
        %822 = vmatpush.msra.mxu0 %v408
        %823 = vmatpush.msra.mxu0 %v404
        %824 = vmatpush.msra.mxu0 %v400
        %825 = vmatpush.msra.mxu0 %v396
        %826 = vmatpush.msra.mxu0 %v392
        %827 = vmatpush.msra.mxu0 %v388
        %828 = vmatpush.msra.mxu0 %v384
        %829 = vmatpush.msra.mxu0 %v380
        %830 = vmatpush.msra.mxu0 %v376
        %831 = vmatpush.msra.mxu0 %v372
        %832 = vmatpush.msra.mxu0 %v368
        %833 = vmatmul.f32.gmra.mxu0 %v298
        %v834 = vpop.f32.mrf.mxu0
        %v835 = vadd.f32 %v815, %v834
        %836 = vdwg.mxu0
        %837 = vmatpush.msra.mxu0 %v492
        %838 = vmatpush.msra.mxu0 %v488
        %839 = vmatpush.msra.mxu0 %v484
        %840 = vmatpush.msra.mxu0 %v480
        %841 = vmatpush.msra.mxu0 %v476
        %842 = vmatpush.msra.mxu0 %v472
        %843 = vmatpush.msra.mxu0 %v468
        %844 = vmatpush.msra.mxu0 %v464
        %845 = vmatpush.msra.mxu0 %v460
        %846 = vmatpush.msra.mxu0 %v456
        %847 = vmatpush.msra.mxu0 %v452
        %848 = vmatpush.msra.mxu0 %v448
        %849 = vmatpush.msra.mxu0 %v444
        %850 = vmatpush.msra.mxu0 %v440
        %851 = vmatpush.msra.mxu0 %v436
        %852 = vmatpush.msra.mxu0 %v432
        %853 = vmatmul.f32.gmra.mxu0 %v299
        %v854 = vpop.f32.mrf.mxu0
        %v855 = vadd.f32 %v835, %v854
        %856 = vdwg.mxu0
        %857 = vmatpush.msra.mxu0 %v556
        %858 = vmatpush.msra.mxu0 %v552
        %859 = vmatpush.msra.mxu0 %v548
        %860 = vmatpush.msra.mxu0 %v544
        %861 = vmatpush.msra.mxu0 %v540
        %862 = vmatpush.msra.mxu0 %v536
        %863 = vmatpush.msra.mxu0 %v532
        %864 = vmatpush.msra.mxu0 %v528
        %865 = vmatpush.msra.mxu0 %v524
        %866 = vmatpush.msra.mxu0 %v520
        %867 = vmatpush.msra.mxu0 %v516
        %868 = vmatpush.msra.mxu0 %v512
        %869 = vmatpush.msra.mxu0 %v508
        %870 = vmatpush.msra.mxu0 %v504
        %871 = vmatpush.msra.mxu0 %v500
        %872 = vmatpush.msra.mxu0 %v496
        %873 = vmatmul.f32.gmra.mxu0 %v300
        %v874 = vpop.f32.mrf.mxu0
        %v875 = vadd.f32 %v855, %v874
        %876 = vdwg.mxu0
        %v877 = vadd.f32 %v293, %v635
        %v878 = vadd.f32 %v294, %v715
        %v879 = vadd.f32 %v295, %v795
        %v880 = vadd.f32 %v296, %v875
        %881 = vst [vmem:[#allocation2] sm:$0xff] %v877
        %882 = vst [vmem:[#allocation2 + $0x8] sm:$0xff] %v878
        %883 = vst [vmem:[#allocation2 + $0x10] sm:$0xff] %v879
        %884 = vst [vmem:[#allocation2 + $0x18] sm:$0xff] %v880
        %p885 = scmp.eq.s32.totalorder %s24, 1
        // Predicated region
        $region41: #{generator_forward.25} parent=31 // pred_check
          %p886 = pneg %p885
        $region42: #{generator_forward.25} parent=31 // pred_check_branch
          %888 = sbr.rel (%p886) target = $region44
        $region43: #{generator_forward.25} parent=31 // pred_region
          %v889 = vld [vmem:[#allocation2] sm:$0xff]
          %v890 = vld [vmem:[#allocation2 + $0x8] sm:$0xff]
          %v891 = vld [vmem:[#allocation2 + $0x10] sm:$0xff]
          %v892 = vld [vmem:[#allocation2 + $0x18] sm:$0xff]
          %v893 = vld [vmem:[%s273] sm:$0xf]
          %v895 = vperm.slane %v893, 0
          %v896 = vperm.slane %v893, 1
          %v897 = vperm.slane %v893, 2
          %v898 = vperm.slane %v893, 3
          %v903 = vadd.f32 %v889, %v895
          %v904 = vadd.f32 %v890, %v896
          %v905 = vadd.f32 %v891, %v897
          %v906 = vadd.f32 %v892, %v898
          %vm907 = vcmp.gt.f32.partialorder %v903, 0.0
          %vm908 = vcmp.gt.f32.partialorder %v904, 0.0
          %vm909 = vcmp.gt.f32.partialorder %v905, 0.0
          %vm910 = vcmp.gt.f32.partialorder %v906, 0.0
          %v911 = vmul.f32 %v903, 0.01
          %v912 = vmul.f32 %v904, 0.01
          %v913 = vmul.f32 %v905, 0.01
          %v914 = vmul.f32 %v906, 0.01
          %v915 = vsel %vm907, %v903, %v911
          %v916 = vsel %vm908, %v904, %v912
          %v917 = vsel %vm909, %v905, %v913
          %v918 = vsel %vm910, %v906, %v914
          %919 = vst [vmem:[%s283] sm:$0xff] %v915
          %920 = vst [vmem:[%s283 + $0x8] sm:$0xff] %v916
          %921 = vst [vmem:[%s283 + $0x10] sm:$0xff] %v917
          %922 = vst [vmem:[%s283 + $0x18] sm:$0xff] %v918
        $region44: #{generator_forward.25} parent=31 // pred_fallthru
          _
        %s923 = smul.u32 4, %s23
        %p924 = scmp.lt.s32.totalorder %s22, 0
        %s925 = scalar_select %p924, %s22, 0
        %p926 = scmp.lt.s32.totalorder %s923, 7
        %s927 = scalar_select %p926, %s923, 7
        %s928 = smul.addr %s925, 8
        %s929 = sadd.s32 %s927, %s928
        %s930 = smul.addr %s929, 8
        %s931 = scalar_lea.vmem %s3, %s930
        // Predicated region
        $region45: #{generator_forward.25} parent=31 // pred_check
          %p932 = pneg %p138
        $region46: #{generator_forward.25} parent=31 // pred_check_branch
          %934 = sbr.rel (%p932) target = $region48
        $region47: #{generator_forward.25} parent=31 // pred_region
          %s935 = smul.u32 4, %s23
        $region48: #{generator_forward.25} parent=31 // pred_fallthru
          _
      $region32: #{generator_forward.25} parent=5 // pred_fallthru
        _
      %p936 = scmp.le.s32.totalorder 2, %s12
      // Predicated region
      $region49: #{generator_forward.25} parent=5 // pred_check
        %p937 = pneg %p936
      $region50: #{generator_forward.25} parent=5 // pred_check_branch
        %939 = sbr.rel (%p937) target = $region52
      $region51: #{generator_forward.25} parent=5 // pred_region
        %s940 = ssub.s32 %s12, 2
        // Predicated region
        $region53: #{generator_forward.25} parent=51 // pred_check
          %p941 = pneg %p144
        $region54: #{generator_forward.25} parent=51 // pred_check_branch
          %943 = sbr.rel (%p941) target = $region56
        $region55: #{generator_forward.25} parent=51 // pred_region
          %s944 = smul.u32 4, %s26
          %p945 = scmp.lt.s32.totalorder %s25, 0
          %s946 = scalar_select %p945, %s25, 0
          %p947 = scmp.lt.s32.totalorder %s944, 7
          %s948 = scalar_select %p947, %s944, 7
          %s949 = smul.addr %s946, 8
          %s950 = sadd.s32 %s948, %s949
          %s951 = smul.addr %s950, 8
          %s952 = scalar_lea.vmem %s3, %s951
        $region56: #{generator_forward.25} parent=51 // pred_fallthru
          _
      $region52: #{generator_forward.25} parent=5 // pred_fallthru
        _
    $region6: #{generator_forward.25} parent=1 // loop_footer
      %s16 = sadd.s32 1, %s12
    $region7: #{generator_forward.25} parent=1 // loop_footer_branch
      %11 = sbr.rel target = $region3
    $region8: #{generator_forward.25} parent=1 // loop_exit
      _
    %953 = vsyncpa [#allocation4], 1
    %s954 = scalar_lea.sflag [#allocation4], 1
    %955 = vsyncpa %s954, 1

// kernel: generator_forward.33
$region0: #{generator_forward.33}
  #allocation0 [shape = 'u32[]', space=smem, size = 0x4, offset = 0x4, fixed_abs, tag = 'smem constant byte address 0x4 - core index']
  #allocation1 [shape = 'u32[72,128]{1,0:T(1,128)}', space=vmem, size = 0x9000, scoped, tag = 'internal scratch']
  %s0 = inlined_call_operand.vmem [shape: f32[8,128], index: 0, kind: input, shape index: {}]
  %s1 = inlined_call_operand.vmem [shape: f32[1,128], index: 1, kind: input, shape index: {}]
  %s2 = inlined_call_operand.vmem [shape: f32[1,128], index: 2, kind: input, shape index: {}]
  %s3 = inlined_call_operand.vmem [shape: f32[8,128], index: 3, kind: output, shape index: {}]
  %s4 = sld [smem:[#allocation0]]
  $region22: #{generator_forward.33} parent=0
    _
  %s6 = ssub.s32 1, %s4
  %s7 = scalar_select 0, %s6, %s4
  // Predicated region
  $region2: #{generator_forward.33} parent=0 // pred_check
    _
  $region3: #{generator_forward.33} parent=0 // pred_check_branch
    %9 = sbr.rel (0) target = $region5
  $region4: #{generator_forward.33} parent=0 // pred_region
    _
  $region5: #{generator_forward.33} parent=0 // pred_fallthru
    _
  // Predicated region
  $region6: #{generator_forward.33} parent=0 // pred_check
    _
  $region7: #{generator_forward.33} parent=0 // pred_check_branch
    %11 = sbr.rel (0) target = $region9
  $region8: #{generator_forward.33} parent=0 // pred_region
    _
  $region9: #{generator_forward.33} parent=0 // pred_fallthru
    _
  // Predicated region
  $region10: #{generator_forward.33} parent=0 // pred_check
    _
  $region11: #{generator_forward.33} parent=0 // pred_check_branch
    %13 = sbr.rel (0) target = $region13
  $region12: #{generator_forward.33} parent=0 // pred_region
    _
  $region13: #{generator_forward.33} parent=0 // pred_fallthru
    _
  %v14 = vld [vmem:[%s0] sm:$0xff]
  %v15 = vld [vmem:[%s1] sm:$0x1]
  %v17 = vperm.slane %v15, 0
  %v19 = vmul.f32 %v14, %v17
  %v20 = vld [vmem:[%s2] sm:$0x1]
  %v22 = vperm.slane %v20, 0
  %v24 = vadd.f32 %v19, %v22
  %25 = vst [vmem:[%s3] sm:$0xff] %v24
  // Predicated region
  $region14: #{generator_forward.33} parent=0 // pred_check
    _
  $region15: #{generator_forward.33} parent=0 // pred_check_branch
    %27 = sbr.rel (0) target = $region17
  $region16: #{generator_forward.33} parent=0 // pred_region
    _
  $region17: #{generator_forward.33} parent=0 // pred_fallthru
    _
  // Predicated region
  $region18: #{generator_forward.33} parent=0 // pred_check
    _
  $region19: #{generator_forward.33} parent=0 // pred_check_branch
    %29 = sbr.rel (0) target = $region21
  $region20: #{generator_forward.33} parent=0 // pred_region
    _
  $region21: #{generator_forward.33} parent=0 // pred_fallthru
    _

// kernel: generator_forward.31
$region0: #{generator_forward.31}
  #allocation0 [shape = 'u32[]', space=smem, size = 0x4, offset = 0x4, fixed_abs, tag = 'smem constant byte address 0x4 - core index']
  #allocation1 [shape = 'u32[72,128]{1,0:T(1,128)}', space=vmem, size = 0x9000, scoped, tag = 'internal scratch']
  #allocation2 [shape = 'f32[8,128]{1,0:T(8,128)}', space=vmem, size = 0x1000, scoped, tag = 'scratch operand']
  %s0 = inlined_call_operand.vmem [shape: f32[8,1024], index: 0, kind: input, shape index: {}]
  %s1 = inlined_call_operand.vmem [shape: f32[1024,128], index: 1, kind: input, shape index: {}]
  %s2 = inlined_call_operand.vmem [shape: f32[1,128], index: 2, kind: input, shape index: {}]
  %s3 = inlined_call_operand.vmem [shape: f32[8,128], index: 3, kind: output, shape index: {}]
  %s4 = sld [smem:[#allocation0]]
  $region53: #{generator_forward.31} parent=0
    _
  %s6 = ssub.s32 1, %s4
  %s7 = scalar_select 0, %s6, %s4
  loop: start=0, step=1, limit=4
  $region2: #{generator_forward.31} parent=0 // loop_pre_header
    _
  $region3: #{generator_forward.31} parent=0 // loop_header
    %s9 = sphi 0, %s13
    %p10 = scmp.ge.s32.totalorder %s9, 4
    %s16 = sphi 0, %s35
    %s17 = sphi 0, %s31
    %s18 = sphi 0, %s27
    %s19 = sphi 0, %s16
    %s20 = sphi 0, %s17
    %s21 = sphi 0, %s18
    %s22 = sphi 0, %s19
    %s23 = sphi 0, %s20
    %s24 = sphi 0, %s21
    %s40 = sphi 0, %s42
    %s43 = sphi 0, %s40
    %s44 = sphi 0, %s43
    %s60 = sphi 0, %s44
    %s68 = sphi 0, %s70
    %s71 = sphi 0, %s68
    %s72 = sphi 0, %s71
    %s88 = sphi 0, %s72
    %s94 = sphi 0, %s96
    %s97 = sphi 0, %s94
    %s98 = sphi 0, %s97
    %s114 = sphi 0, %s98
    %s122 = sphi 0, %s124
    %s125 = sphi 0, %s122
    %s126 = sphi 0, %s125
    %s142 = sphi 0, %s126
  $region4: #{generator_forward.31} parent=0 // loop_header_branch
    %12 = sbr.rel (%p10) target = $region8
  $region5: #{generator_forward.31} parent=0 // loop_body
    %s14 = ssub.s32 %s9, 1
    %s15 = ssub.s32 %s9, 2
    %s25 = sadd.s32 1, %s18
    %p26 = scmp.ge.s32.totalorder %s25, 2
    %s27 = scalar_select %p26, 0, %s25
    %s28 = sadd.s32 1, %s17
    %s29 = scalar_select %p26, %s28, %s17
    %p30 = scmp.ge.s32.totalorder %s29, 1
    %s31 = scalar_select %p30, 0, %s29
    %s32 = sadd.s32 1, %s16
    %s33 = scalar_select %p30, %s32, %s16
    %p34 = scmp.ge.s32.totalorder %s33, 1
    %s35 = scalar_select %p34, 0, %s33
    %s36 = ssub.s32 %s16, %s35
    %s37 = ssub.s32 %s18, %s27
    %s38 = sor.u32 %s36, %s37
    %p39 = scmp.eq.s32.totalorder %s38, 0
    %s41 = sadd.s32 %s40, 1
    %s42 = scalar_select %p39, %s40, %s41
    %p45 = pneg %p39
    %p46 = scmp.eq.s32.totalorder %s9, 1
    %p47 = por %p45, %p46
    %p48 = scmp.ne.s32.totalorder %s40, %s43
    %p49 = scmp.eq.s32.totalorder %s9, 0
    %p50 = por %p48, %p49
    %p51 = scmp.ne.s32.totalorder %s40, %s43
    %p52 = scmp.eq.s32.totalorder %s14, 1
    %p53 = por %p51, %p52
    %p54 = scmp.ne.s32.totalorder %s43, %s44
    %p55 = scmp.eq.s32.totalorder %s14, 0
    %p56 = por %p54, %p55
    %p57 = scmp.ne.s32.totalorder %s43, %s44
    %p58 = scmp.eq.s32.totalorder %s15, 1
    %p59 = por %p57, %p58
    %p61 = scmp.ne.s32.totalorder %s44, %s60
    %p62 = scmp.eq.s32.totalorder %s15, 0
    %p63 = por %p61, %p62
    %s64 = ssub.s32 %s18, %s27
    %s65 = ssub.s32 %s17, %s31
    %s66 = sor.u32 %s64, %s65
    %p67 = scmp.eq.s32.totalorder %s66, 0
    %s69 = sadd.s32 %s68, 1
    %s70 = scalar_select %p67, %s68, %s69
    %p73 = pneg %p67
    %p74 = scmp.eq.s32.totalorder %s9, 1
    %p75 = por %p73, %p74
    %p76 = scmp.ne.s32.totalorder %s68, %s71
    %p77 = scmp.eq.s32.totalorder %s9, 0
    %p78 = por %p76, %p77
    %p79 = scmp.ne.s32.totalorder %s68, %s71
    %p80 = scmp.eq.s32.totalorder %s14, 1
    %p81 = por %p79, %p80
    %p82 = scmp.ne.s32.totalorder %s71, %s72
    %p83 = scmp.eq.s32.totalorder %s14, 0
    %p84 = por %p82, %p83
    %p85 = scmp.ne.s32.totalorder %s71, %s72
    %p86 = scmp.eq.s32.totalorder %s15, 1
    %p87 = por %p85, %p86
    %p89 = scmp.ne.s32.totalorder %s72, %s88
    %p90 = scmp.eq.s32.totalorder %s15, 0
    %p91 = por %p89, %p90
    %s92 = ssub.s32 %s17, %s31
    %p93 = scmp.eq.s32.totalorder %s92, 0
    %s95 = sadd.s32 %s94, 1
    %s96 = scalar_select %p93, %s94, %s95
    %p99 = pneg %p93
    %p100 = scmp.eq.s32.totalorder %s9, 1
    %p101 = por %p99, %p100
    %p102 = scmp.ne.s32.totalorder %s94, %s97
    %p103 = scmp.eq.s32.totalorder %s9, 0
    %p104 = por %p102, %p103
    %p105 = scmp.ne.s32.totalorder %s94, %s97
    %p106 = scmp.eq.s32.totalorder %s14, 1
    %p107 = por %p105, %p106
    %p108 = scmp.ne.s32.totalorder %s97, %s98
    %p109 = scmp.eq.s32.totalorder %s14, 0
    %p110 = por %p108, %p109
    %p111 = scmp.ne.s32.totalorder %s97, %s98
    %p112 = scmp.eq.s32.totalorder %s15, 1
    %p113 = por %p111, %p112
    %p115 = scmp.ne.s32.totalorder %s98, %s114
    %p116 = scmp.eq.s32.totalorder %s15, 0
    %p117 = por %p115, %p116
    %s118 = ssub.s32 %s16, %s35
    %s119 = ssub.s32 %s17, %s31
    %s120 = sor.u32 %s118, %s119
    %p121 = scmp.eq.s32.totalorder %s120, 0
    %s123 = sadd.s32 %s122, 1
    %s124 = scalar_select %p121, %s122, %s123
    %p127 = pneg %p121
    %p128 = scmp.eq.s32.totalorder %s9, 1
    %p129 = por %p127, %p128
    %p130 = scmp.ne.s32.totalorder %s122, %s125
    %p131 = scmp.eq.s32.totalorder %s9, 0
    %p132 = por %p130, %p131
    %p133 = scmp.ne.s32.totalorder %s122, %s125
    %p134 = scmp.eq.s32.totalorder %s14, 1
    %p135 = por %p133, %p134
    %p136 = scmp.ne.s32.totalorder %s125, %s126
    %p137 = scmp.eq.s32.totalorder %s14, 0
    %p138 = por %p136, %p137
    %p139 = scmp.ne.s32.totalorder %s125, %s126
    %p140 = scmp.eq.s32.totalorder %s15, 1
    %p141 = por %p139, %p140
    %p143 = scmp.ne.s32.totalorder %s126, %s142
    %p144 = scmp.eq.s32.totalorder %s15, 0
    %p145 = por %p143, %p144
    %p146 = scmp.le.s32.totalorder 1, %s9
    %p147 = scmp.lt.s32.totalorder %s9, 3
    %p148 = pnand %p146, %p147
    %p149 = pneg %p148
    // Predicated region
    $region9: #{generator_forward.31} parent=5 // pred_check
      _
    $region10: #{generator_forward.31} parent=5 // pred_check_branch
      %151 = sbr.rel (%p148) target = $region12
    $region11: #{generator_forward.31} parent=5 // pred_region
      %s152 = ssub.s32 %s9, 1
      // Predicated region
      $region13: #{generator_forward.31} parent=11 // pred_check
        %p153 = pneg %p110
      $region14: #{generator_forward.31} parent=11 // pred_check_branch
        %155 = sbr.rel (%p153) target = $region16
      $region15: #{generator_forward.31} parent=11 // pred_region
        %p156 = scmp.lt.s32.totalorder %s20, 0
        %s157 = scalar_select %p156, %s20, 0
        %s158 = scalar_lea.vmem %s2, %s157
      $region16: #{generator_forward.31} parent=11 // pred_fallthru
        _
    $region12: #{generator_forward.31} parent=5 // pred_fallthru
      _
    %p159 = scmp.lt.s32.totalorder %s9, 2
    // Predicated region
    $region17: #{generator_forward.31} parent=5 // pred_check
      %p160 = pneg %p159
    $region18: #{generator_forward.31} parent=5 // pred_check_branch
      %162 = sbr.rel (%p160) target = $region20
    $region19: #{generator_forward.31} parent=5 // pred_region
      // Predicated region
      $region21: #{generator_forward.31} parent=19 // pred_check
        %p163 = pneg %p50
      $region22: #{generator_forward.31} parent=19 // pred_check_branch
        %165 = sbr.rel (%p163) target = $region24
      $region23: #{generator_forward.31} parent=19 // pred_region
        %s166 = smul.u32 4, %s18
        %p167 = scmp.lt.s32.totalorder %s16, 0
        %s168 = scalar_select %p167, %s16, 0
        %p169 = scmp.lt.s32.totalorder %s166, 7
        %s170 = scalar_select %p169, %s166, 7
        %s171 = smul.addr %s168, 8
        %s172 = sadd.s32 %s170, %s171
        %s173 = smul.addr %s172, 8
        %s174 = scalar_lea.vmem %s0, %s173
        %s175 = smul.u32 4, %s18
      $region24: #{generator_forward.31} parent=19 // pred_fallthru
        _
      // Predicated region
      $region25: #{generator_forward.31} parent=19 // pred_check
        %p176 = pneg %p78
      $region26: #{generator_forward.31} parent=19 // pred_check_branch
        %178 = sbr.rel (%p176) target = $region28
      $region27: #{generator_forward.31} parent=19 // pred_region
        %s179 = smul.u32 64, %s18
        %p180 = scmp.lt.s32.totalorder %s179, 127
        %s181 = scalar_select %p180, %s179, 127
        %p182 = scmp.lt.s32.totalorder %s17, 0
        %s183 = scalar_select %p182, %s17, 0
        %s184 = sadd.s32 %s183, %s181
        %s185 = smul.addr %s184, 8
        %s186 = scalar_lea.vmem %s1, %s185
        %s187 = smul.u32 64, %s18
      $region28: #{generator_forward.31} parent=19 // pred_fallthru
        _
    $region20: #{generator_forward.31} parent=5 // pred_fallthru
      _
    %p188 = scmp.le.s32.totalorder 1, %s9
    %p189 = scmp.lt.s32.totalorder %s9, 3
    %p190 = pnand %p188, %p189
    %p191 = pneg %p190
    // Predicated region
    $region29: #{generator_forward.31} parent=5 // pred_check
      _
    $region30: #{generator_forward.31} parent=5 // pred_check_branch
      %193 = sbr.rel (%p190) target = $region32
    $region31: #{generator_forward.31} parent=5 // pred_region
      %s194 = ssub.s32 %s9, 1
      %s195 = smul.u32 4, %s21
      %p196 = scmp.lt.s32.totalorder %s19, 0
      %s197 = scalar_select %p196, %s19, 0
      %p198 = scmp.lt.s32.totalorder %s195, 7
      %s199 = scalar_select %p198, %s195, 7
      %s200 = smul.addr %s197, 8
      %s201 = sadd.s32 %s199, %s200
      %s202 = smul.addr %s201, 8
      %s203 = scalar_lea.vmem %s0, %s202
      %p204 = pneg %p56
      %p205 = pneg %p53
      %s206 = smul.u32 64, %s21
      %p207 = scmp.lt.s32.totalorder %s206, 127
      %s208 = scalar_select %p207, %s206, 127
      %p209 = scmp.lt.s32.totalorder %s20, 0
      %s210 = scalar_select %p209, %s20, 0
      %s211 = sadd.s32 %s210, %s208
      %s212 = smul.addr %s211, 8
      %s213 = scalar_lea.vmem %s1, %s212
      %p214 = pneg %p84
      %p215 = pneg %p81
      %p216 = scmp.lt.s32.totalorder %s20, 0
      %s217 = scalar_select %p216, %s20, 0
      %s218 = scalar_lea.vmem %s2, %s217
      %p219 = pneg %p110
      %p220 = pneg %p107
      %p221 = pneg %p138
      %p222 = pneg %p135
      %p223 = scmp.lt.s32.totalorder %s19, 0
      %s224 = scalar_select %p223, %s19, 0
      %p225 = scmp.lt.s32.totalorder %s20, 0
      %s226 = scalar_select %p225, %s20, 0
      %s227 = sadd.s32 %s226, %s224
      %s228 = smul.addr %s227, 8
      %s229 = scalar_lea.vmem %s3, %s228
      %s230 = smul.u32 4, %s21
      %p231 = scmp.lt.s32.totalorder %s19, 0
      %s232 = scalar_select %p231, %s19, 0
      %p233 = scmp.lt.s32.totalorder %s230, 7
      %s234 = scalar_select %p233, %s230, 7
      %s235 = smul.addr %s232, 8
      %s236 = sadd.s32 %s234, %s235
      %s237 = smul.addr %s236, 8
      %s238 = scalar_lea.vmem %s0, %s237
      %s239 = smul.u32 4, %s21
      %s240 = smul.u32 64, %s21
      %p241 = scmp.lt.s32.totalorder %s240, 127
      %s242 = scalar_select %p241, %s240, 127
      %p243 = scmp.lt.s32.totalorder %s20, 0
      %s244 = scalar_select %p243, %s20, 0
      %s245 = sadd.s32 %s244, %s242
      %s246 = smul.addr %s245, 8
      %s247 = scalar_lea.vmem %s1, %s246
      %s248 = smul.u32 64, %s21
      %p249 = scmp.lt.s32.totalorder %s20, 0
      %s250 = scalar_select %p249, %s20, 0
      %s251 = scalar_lea.vmem %s2, %s250
      %p252 = scmp.lt.s32.totalorder %s19, 0
      %s253 = scalar_select %p252, %s19, 0
      %p254 = scmp.lt.s32.totalorder %s20, 0
      %s255 = scalar_select %p254, %s20, 0
      %s256 = sadd.s32 %s255, %s253
      %s257 = smul.addr %s256, 8
      %s258 = scalar_lea.vmem %s3, %s257
      %p259 = scmp.eq.s32.totalorder %s21, 0
      // Predicated region
      $region33: #{generator_forward.31} parent=31 // pred_check
        %p260 = pneg %p259
      $region34: #{generator_forward.31} parent=31 // pred_check_branch
        %262 = sbr.rel (%p260) target = $region36
      $region35: #{generator_forward.31} parent=31 // pred_region
        %263 = vst [vmem:[#allocation2] sm:$0xff] 0.0
      $region36: #{generator_forward.31} parent=31 // pred_fallthru
        _
      %v264 = vld [vmem:[#allocation2] sm:$0xff]
      %v265 = vld [vmem:[%s238] sm:$0xff]
      %v266 = vld [vmem:[%s238 + $0x8] sm:$0xff]
      %v267 = vld [vmem:[%s238 + $0x10] sm:$0xff]
      %v268 = vld [vmem:[%s238 + $0x18] sm:$0xff]
      %v269 = vld [vmem:[%s247] sm:$0xff]
      %v270 = vld [vmem:[%s247 + $0x8] sm:$0xff]
      %v271 = vld [vmem:[%s247 + $0x10] sm:$0xff]
      %v272 = vld [vmem:[%s247 + $0x18] sm:$0xff]
      %v273 = vld [vmem:[%s247 + $0x20] sm:$0xff]
      %v274 = vld [vmem:[%s247 + $0x28] sm:$0xff]
      %v275 = vld [vmem:[%s247 + $0x30] sm:$0xff]
      %v276 = vld [vmem:[%s247 + $0x38] sm:$0xff]
      %v277 = vld [vmem:[%s247 + $0x40] sm:$0xff]
      %v278 = vld [vmem:[%s247 + $0x48] sm:$0xff]
      %v279 = vld [vmem:[%s247 + $0x50] sm:$0xff]
      %v280 = vld [vmem:[%s247 + $0x58] sm:$0xff]
      %v281 = vld [vmem:[%s247 + $0x60] sm:$0xff]
      %v282 = vld [vmem:[%s247 + $0x68] sm:$0xff]
      %v283 = vld [vmem:[%s247 + $0x70] sm:$0xff]
      %v284 = vld [vmem:[%s247 + $0x78] sm:$0xff]
      %v285 = vld [vmem:[%s247 + $0x80] sm:$0xff]
      %v286 = vld [vmem:[%s247 + $0x88] sm:$0xff]
      %v287 = vld [vmem:[%s247 + $0x90] sm:$0xff]
      %v288 = vld [vmem:[%s247 + $0x98] sm:$0xff]
      %v289 = vld [vmem:[%s247 + $0xa0] sm:$0xff]
      %v290 = vld [vmem:[%s247 + $0xa8] sm:$0xff]
      %v291 = vld [vmem:[%s247 + $0xb0] sm:$0xff]
      %v292 = vld [vmem:[%s247 + $0xb8] sm:$0xff]
      %v293 = vld [vmem:[%s247 + $0xc0] sm:$0xff]
      %v294 = vld [vmem:[%s247 + $0xc8] sm:$0xff]
      %v295 = vld [vmem:[%s247 + $0xd0] sm:$0xff]
      %v296 = vld [vmem:[%s247 + $0xd8] sm:$0xff]
      %v297 = vld [vmem:[%s247 + $0xe0] sm:$0xff]
      %v298 = vld [vmem:[%s247 + $0xe8] sm:$0xff]
      %v299 = vld [vmem:[%s247 + $0xf0] sm:$0xff]
      %v300 = vld [vmem:[%s247 + $0xf8] sm:$0xff]
      %v301 = vld [vmem:[%s247 + $0x100] sm:$0xff]
      %v302 = vld [vmem:[%s247 + $0x108] sm:$0xff]
      %v303 = vld [vmem:[%s247 + $0x110] sm:$0xff]
      %v304 = vld [vmem:[%s247 + $0x118] sm:$0xff]
      %v305 = vld [vmem:[%s247 + $0x120] sm:$0xff]
      %v306 = vld [vmem:[%s247 + $0x128] sm:$0xff]
      %v307 = vld [vmem:[%s247 + $0x130] sm:$0xff]
      %v308 = vld [vmem:[%s247 + $0x138] sm:$0xff]
      %v309 = vld [vmem:[%s247 + $0x140] sm:$0xff]
      %v310 = vld [vmem:[%s247 + $0x148] sm:$0xff]
      %v311 = vld [vmem:[%s247 + $0x150] sm:$0xff]
      %v312 = vld [vmem:[%s247 + $0x158] sm:$0xff]
      %v313 = vld [vmem:[%s247 + $0x160] sm:$0xff]
      %v314 = vld [vmem:[%s247 + $0x168] sm:$0xff]
      %v315 = vld [vmem:[%s247 + $0x170] sm:$0xff]
      %v316 = vld [vmem:[%s247 + $0x178] sm:$0xff]
      %v317 = vld [vmem:[%s247 + $0x180] sm:$0xff]
      %v318 = vld [vmem:[%s247 + $0x188] sm:$0xff]
      %v319 = vld [vmem:[%s247 + $0x190] sm:$0xff]
      %v320 = vld [vmem:[%s247 + $0x198] sm:$0xff]
      %v321 = vld [vmem:[%s247 + $0x1a0] sm:$0xff]
      %v322 = vld [vmem:[%s247 + $0x1a8] sm:$0xff]
      %v323 = vld [vmem:[%s247 + $0x1b0] sm:$0xff]
      %v324 = vld [vmem:[%s247 + $0x1b8] sm:$0xff]
      %v325 = vld [vmem:[%s247 + $0x1c0] sm:$0xff]
      %v326 = vld [vmem:[%s247 + $0x1c8] sm:$0xff]
      %v327 = vld [vmem:[%s247 + $0x1d0] sm:$0xff]
      %v328 = vld [vmem:[%s247 + $0x1d8] sm:$0xff]
      %v329 = vld [vmem:[%s247 + $0x1e0] sm:$0xff]
      %v330 = vld [vmem:[%s247 + $0x1e8] sm:$0xff]
      %v331 = vld [vmem:[%s247 + $0x1f0] sm:$0xff]
      %v332 = vld [vmem:[%s247 + $0x1f8] sm:$0xff]
      %333 = vmatpush.msra.mxu0 %v284
      %334 = vmatpush.msra.mxu0 %v283
      %335 = vmatpush.msra.mxu0 %v282
      %336 = vmatpush.msra.mxu0 %v281
      %337 = vmatpush.msra.mxu0 %v280
      %338 = vmatpush.msra.mxu0 %v279
      %339 = vmatpush.msra.mxu0 %v278
      %340 = vmatpush.msra.mxu0 %v277
      %341 = vmatpush.msra.mxu0 %v276
      %342 = vmatpush.msra.mxu0 %v275
      %343 = vmatpush.msra.mxu0 %v274
      %344 = vmatpush.msra.mxu0 %v273
      %345 = vmatpush.msra.mxu0 %v272
      %346 = vmatpush.msra.mxu0 %v271
      %347 = vmatpush.msra.mxu0 %v270
      %348 = vmatpush.msra.mxu0 %v269
      %349 = vmatmul.f32.gmra.mxu0 %v265
      %v350 = vpop.f32.mrf.mxu0
      %v351 = vadd.f32 0.0, %v350
      %352 = vdwg.mxu0
      %353 = vmatpush.msra.mxu0 %v300
      %354 = vmatpush.msra.mxu0 %v299
      %355 = vmatpush.msra.mxu0 %v298
      %356 = vmatpush.msra.mxu0 %v297
      %357 = vmatpush.msra.mxu0 %v296
      %358 = vmatpush.msra.mxu0 %v295
      %359 = vmatpush.msra.mxu0 %v294
      %360 = vmatpush.msra.mxu0 %v293
      %361 = vmatpush.msra.mxu0 %v292
      %362 = vmatpush.msra.mxu0 %v291
      %363 = vmatpush.msra.mxu0 %v290
      %364 = vmatpush.msra.mxu0 %v289
      %365 = vmatpush.msra.mxu0 %v288
      %366 = vmatpush.msra.mxu0 %v287
      %367 = vmatpush.msra.mxu0 %v286
      %368 = vmatpush.msra.mxu0 %v285
      %369 = vmatmul.f32.gmra.mxu0 %v266
      %v370 = vpop.f32.mrf.mxu0
      %v371 = vadd.f32 %v351, %v370
      %372 = vdwg.mxu0
      %373 = vmatpush.msra.mxu0 %v316
      %374 = vmatpush.msra.mxu0 %v315
      %375 = vmatpush.msra.mxu0 %v314
      %376 = vmatpush.msra.mxu0 %v313
      %377 = vmatpush.msra.mxu0 %v312
      %378 = vmatpush.msra.mxu0 %v311
      %379 = vmatpush.msra.mxu0 %v310
      %380 = vmatpush.msra.mxu0 %v309
      %381 = vmatpush.msra.mxu0 %v308
      %382 = vmatpush.msra.mxu0 %v307
      %383 = vmatpush.msra.mxu0 %v306
      %384 = vmatpush.msra.mxu0 %v305
      %385 = vmatpush.msra.mxu0 %v304
      %386 = vmatpush.msra.mxu0 %v303
      %387 = vmatpush.msra.mxu0 %v302
      %388 = vmatpush.msra.mxu0 %v301
      %389 = vmatmul.f32.gmra.mxu0 %v267
      %v390 = vpop.f32.mrf.mxu0
      %v391 = vadd.f32 %v371, %v390
      %392 = vdwg.mxu0
      %393 = vmatpush.msra.mxu0 %v332
      %394 = vmatpush.msra.mxu0 %v331
      %395 = vmatpush.msra.mxu0 %v330
      %396 = vmatpush.msra.mxu0 %v329
      %397 = vmatpush.msra.mxu0 %v328
      %398 = vmatpush.msra.mxu0 %v327
      %399 = vmatpush.msra.mxu0 %v326
      %400 = vmatpush.msra.mxu0 %v325
      %401 = vmatpush.msra.mxu0 %v324
      %402 = vmatpush.msra.mxu0 %v323
      %403 = vmatpush.msra.mxu0 %v322
      %404 = vmatpush.msra.mxu0 %v321
      %405 = vmatpush.msra.mxu0 %v320
      %406 = vmatpush.msra.mxu0 %v319
      %407 = vmatpush.msra.mxu0 %v318
      %408 = vmatpush.msra.mxu0 %v317
      %409 = vmatmul.f32.gmra.mxu0 %v268
      %v410 = vpop.f32.mrf.mxu0
      %v411 = vadd.f32 %v391, %v410
      %412 = vdwg.mxu0
      %v413 = vadd.f32 %v264, %v411
      %414 = vst [vmem:[#allocation2] sm:$0xff] %v413
      %p415 = scmp.eq.s32.totalorder %s21, 1
      // Predicated region
      $region37: #{generator_forward.31} parent=31 // pred_check
        %p416 = pneg %p415
      $region38: #{generator_forward.31} parent=31 // pred_check_branch
        %418 = sbr.rel (%p416) target = $region40
      $region39: #{generator_forward.31} parent=31 // pred_region
        %v419 = vld [vmem:[#allocation2] sm:$0xff]
        %v420 = vld [vmem:[%s251] sm:$0x1]
        %v422 = vperm.slane %v420, 0
        %v424 = vadd.f32 %v419, %v422
        %vm425 = vcmp.gt.f32.partialorder %v424, 0.0
        %v426 = vmul.f32 %v424, 0.01
        %v427 = vsel %vm425, %v424, %v426
        %428 = vst [vmem:[%s258] sm:$0xff] %v427
      $region40: #{generator_forward.31} parent=31 // pred_fallthru
        _
      %p429 = scmp.lt.s32.totalorder %s19, 0
      %s430 = scalar_select %p429, %s19, 0
      %p431 = scmp.lt.s32.totalorder %s20, 0
      %s432 = scalar_select %p431, %s20, 0
      %s433 = sadd.s32 %s432, %s430
      %s434 = smul.addr %s433, 8
      %s435 = scalar_lea.vmem %s3, %s434
      // Predicated region
      $region41: #{generator_forward.31} parent=31 // pred_check
        %p436 = pneg %p135
      $region42: #{generator_forward.31} parent=31 // pred_check_branch
        %438 = sbr.rel (%p436) target = $region44
      $region43: #{generator_forward.31} parent=31 // pred_region
        _
      $region44: #{generator_forward.31} parent=31 // pred_fallthru
        _
      // Predicated region
      $region45: #{generator_forward.31} parent=31 // pred_check
        %p439 = pneg %p135
      $region46: #{generator_forward.31} parent=31 // pred_check_branch
        %441 = sbr.rel (%p439) target = $region48
      $region47: #{generator_forward.31} parent=31 // pred_region
        %p442 = scmp.lt.s32.totalorder %s19, 0
        %s443 = scalar_select %p442, %s19, 0
        %p444 = scmp.lt.s32.totalorder %s20, 0
        %s445 = scalar_select %p444, %s20, 0
        %s446 = sadd.s32 %s445, %s443
        %s447 = smul.addr %s446, 8
        %s448 = scalar_lea.vmem %s3, %s447
      $region48: #{generator_forward.31} parent=31 // pred_fallthru
        _
    $region32: #{generator_forward.31} parent=5 // pred_fallthru
      _
    %p449 = scmp.le.s32.totalorder 2, %s9
    // Predicated region
    $region49: #{generator_forward.31} parent=5 // pred_check
      %p450 = pneg %p449
    $region50: #{generator_forward.31} parent=5 // pred_check_branch
      %452 = sbr.rel (%p450) target = $region52
    $region51: #{generator_forward.31} parent=5 // pred_region
      %s453 = ssub.s32 %s9, 2
    $region52: #{generator_forward.31} parent=5 // pred_fallthru
      _
  $region6: #{generator_forward.31} parent=0 // loop_footer
    %s13 = sadd.s32 1, %s9
  $region7: #{generator_forward.31} parent=0 // loop_footer_branch
    %8 = sbr.rel target = $region3
  $region8: #{generator_forward.31} parent=0 // loop_exit
    _

// kernel: generator_forward.32
$region0: #{generator_forward.32}
  #allocation0 [shape = 'u32[]', space=smem, size = 0x4, offset = 0x4, fixed_abs, tag = 'smem constant byte address 0x4 - core index']
  #allocation1 [shape = 'u32[72,128]{1,0:T(1,128)}', space=vmem, size = 0x9000, scoped, tag = 'internal scratch']
  %s0 = inlined_call_operand.vmem [shape: f32[8,128], index: 0, kind: input, shape index: {}]
  %s1 = inlined_call_operand.vmem [shape: f32[1,128], index: 1, kind: output, shape index: {0}]
  %s2 = inlined_call_operand.vmem [shape: f32[1,128], index: 2, kind: output, shape index: {1}]
  %3 = xla_tuple %s1, %s2
  %s4 = sld [smem:[#allocation0]]
  $region26: #{generator_forward.32} parent=0
    _
  %s6 = ssub.s32 1, %s4
  %s7 = scalar_select 0, %s6, %s4
  // Predicated region
  $region2: #{generator_forward.32} parent=0 // pred_check
    _
  $region3: #{generator_forward.32} parent=0 // pred_check_branch
    %9 = sbr.rel (0) target = $region5
  $region4: #{generator_forward.32} parent=0 // pred_region
    _
  $region5: #{generator_forward.32} parent=0 // pred_fallthru
    _
  %p10 = scmp.eq.s32.totalorder 0, 0
  // Predicated region
  $region6: #{generator_forward.32} parent=0 // pred_check
    %p11 = pneg %p10
  $region7: #{generator_forward.32} parent=0 // pred_check_branch
    %13 = sbr.rel (%p11) target = $region9
  $region8: #{generator_forward.32} parent=0 // pred_region
    %14 = vst [vmem:[%s1] sm:$0x1] 0.0
    %15 = vst [vmem:[%s2] sm:$0x1] 0.0
  $region9: #{generator_forward.32} parent=0 // pred_fallthru
    _
  %v16 = vld [vmem:[%s0] sm:$0xff]
  %v17 = vld [vmem:[%s1] sm:$0x1]
  %v18 = vrot.slane %v16, 4
  %v19 = vadd.f32 %v16, %v18
  %v20 = vrot.slane %v19, 2
  %v21 = vadd.f32 %v19, %v20
  %v22 = vrot.slane %v21, 1
  %v23 = vadd.f32 %v21, %v22
  %v24 = vadd.f32 %v17, %v23
  %25 = vst [vmem:[%s1] sm:$0x1] %v24
  %v26 = vld [vmem:[%s2] sm:$0x1]
  %v27 = vmul.f32 %v16, %v16
  %v28 = vrot.slane %v27, 4
  %v29 = vadd.f32 %v27, %v28
  %v30 = vrot.slane %v29, 2
  %v31 = vadd.f32 %v29, %v30
  %v32 = vrot.slane %v31, 1
  %v33 = vadd.f32 %v31, %v32
  %v34 = vadd.f32 %v26, %v33
  %35 = vst [vmem:[%s2] sm:$0x1] %v34
  // Predicated region
  $region10: #{generator_forward.32} parent=0 // pred_check
    _
  $region11: #{generator_forward.32} parent=0 // pred_check_branch
    %37 = sbr.rel (0) target = $region13
  $region12: #{generator_forward.32} parent=0 // pred_region
    _
  $region13: #{generator_forward.32} parent=0 // pred_fallthru
    _
  // Predicated region
  $region14: #{generator_forward.32} parent=0 // pred_check
    _
  $region15: #{generator_forward.32} parent=0 // pred_check_branch
    %39 = sbr.rel (0) target = $region17
  $region16: #{generator_forward.32} parent=0 // pred_region
    _
  $region17: #{generator_forward.32} parent=0 // pred_fallthru
    _
  // Predicated region
  $region18: #{generator_forward.32} parent=0 // pred_check
    _
  $region19: #{generator_forward.32} parent=0 // pred_check_branch
    %41 = sbr.rel (0) target = $region21
  $region20: #{generator_forward.32} parent=0 // pred_region
    _
  $region21: #{generator_forward.32} parent=0 // pred_fallthru
    _
  // Predicated region
  $region22: #{generator_forward.32} parent=0 // pred_check
    _
  $region23: #{generator_forward.32} parent=0 // pred_check_branch
    %43 = sbr.rel (0) target = $region25
  $region24: #{generator_forward.32} parent=0 // pred_region
    _
  $region25: #{generator_forward.32} parent=0 // pred_fallthru
    _

// kernel: generator_forward.34
$region0: #{generator_forward.34}
  #allocation0 [shape = 'u32[]', space=smem, size = 0x4, offset = 0x4, fixed_abs, tag = 'smem constant byte address 0x4 - core index']
  #allocation1 [shape = 'u32[72,128]{1,0:T(1,128)}', space=vmem, size = 0x9000, scoped, tag = 'internal scratch']
  #allocation2 [shape = 'f32[56,128]{1,0:T(8,128)}', space=vmem, size = 0x7000, scoped, tag = 'scratch operand']
  %s0 = inlined_call_operand.vmem [shape: f32[56,384], index: 0, kind: input, shape index: {}]
  %s1 = inlined_call_operand.vmem [shape: f32[384,128], index: 1, kind: input, shape index: {}]
  %s2 = inlined_call_operand.vmem [shape: f32[1,128], index: 2, kind: input, shape index: {}]
  %s3 = inlined_call_operand.vmem [shape: f32[56,128], index: 3, kind: output, shape index: {}]
  %s4 = sld [smem:[#allocation0]]
  $region91: #{generator_forward.34} parent=0
    _
  %s6 = ssub.s32 1, %s4
  %s7 = scalar_select 0, %s6, %s4
  $region1: #{generator_forward.34} parent=0
    #allocation3 [shape = 'u8[57344]{0}', space=vmem, size = 0xe000, scoped, tag = 'input window, operand 0']
    loop: start=0, step=1, limit=5
    $region2: #{generator_forward.34} parent=1 // loop_pre_header
      _
    $region3: #{generator_forward.34} parent=1 // loop_header
      %s9 = sphi 0, %s13
      %p10 = scmp.ge.s32.totalorder %s9, 5
      %s16 = sphi 0, %s35
      %s17 = sphi 0, %s31
      %s18 = sphi 0, %s27
      %s19 = sphi 0, %s16
      %s20 = sphi 0, %s17
      %s21 = sphi 0, %s18
      %s22 = sphi 0, %s19
      %s23 = sphi 0, %s20
      %s24 = sphi 0, %s21
      %s40 = sphi 0, %s42
      %s43 = sphi 0, %s40
      %s44 = sphi 0, %s43
      %s60 = sphi 0, %s44
      %s68 = sphi 0, %s70
      %s71 = sphi 0, %s68
      %s72 = sphi 0, %s71
      %s88 = sphi 0, %s72
      %s94 = sphi 0, %s96
      %s97 = sphi 0, %s94
      %s98 = sphi 0, %s97
      %s114 = sphi 0, %s98
      %s122 = sphi 0, %s124
      %s125 = sphi 0, %s122
      %s126 = sphi 0, %s125
      %s142 = sphi 0, %s126
    $region4: #{generator_forward.34} parent=1 // loop_header_branch
      %12 = sbr.rel (%p10) target = $region8
    $region5: #{generator_forward.34} parent=1 // loop_body
      %s14 = ssub.s32 %s9, 1
      %s15 = ssub.s32 %s9, 2
      %s25 = sadd.s32 1, %s18
      %p26 = scmp.ge.s32.totalorder %s25, 3
      %s27 = scalar_select %p26, 0, %s25
      %s28 = sadd.s32 1, %s17
      %s29 = scalar_select %p26, %s28, %s17
      %p30 = scmp.ge.s32.totalorder %s29, 1
      %s31 = scalar_select %p30, 0, %s29
      %s32 = sadd.s32 1, %s16
      %s33 = scalar_select %p30, %s32, %s16
      %p34 = scmp.ge.s32.totalorder %s33, 1
      %s35 = scalar_select %p34, 0, %s33
      %s36 = ssub.s32 %s16, %s35
      %s37 = ssub.s32 %s18, %s27
      %s38 = sor.u32 %s36, %s37
      %p39 = scmp.eq.s32.totalorder %s38, 0
      %s41 = sadd.s32 %s40, 1
      %s42 = scalar_select %p39, %s40, %s41
      %p45 = pneg %p39
      %p46 = scmp.eq.s32.totalorder %s9, 2
      %p47 = por %p45, %p46
      %p48 = scmp.ne.s32.totalorder %s40, %s43
      %p49 = scmp.eq.s32.totalorder %s9, 0
      %p50 = por %p48, %p49
      %p51 = scmp.ne.s32.totalorder %s40, %s43
      %p52 = scmp.eq.s32.totalorder %s14, 2
      %p53 = por %p51, %p52
      %p54 = scmp.ne.s32.totalorder %s43, %s44
      %p55 = scmp.eq.s32.totalorder %s14, 0
      %p56 = por %p54, %p55
      %p57 = scmp.ne.s32.totalorder %s43, %s44
      %p58 = scmp.eq.s32.totalorder %s15, 2
      %p59 = por %p57, %p58
      %p61 = scmp.ne.s32.totalorder %s44, %s60
      %p62 = scmp.eq.s32.totalorder %s15, 0
      %p63 = por %p61, %p62
      %s64 = ssub.s32 %s18, %s27
      %s65 = ssub.s32 %s17, %s31
      %s66 = sor.u32 %s64, %s65
      %p67 = scmp.eq.s32.totalorder %s66, 0
      %s69 = sadd.s32 %s68, 1
      %s70 = scalar_select %p67, %s68, %s69
      %p73 = pneg %p67
      %p74 = scmp.eq.s32.totalorder %s9, 2
      %p75 = por %p73, %p74
      %p76 = scmp.ne.s32.totalorder %s68, %s71
      %p77 = scmp.eq.s32.totalorder %s9, 0
      %p78 = por %p76, %p77
      %p79 = scmp.ne.s32.totalorder %s68, %s71
      %p80 = scmp.eq.s32.totalorder %s14, 2
      %p81 = por %p79, %p80
      %p82 = scmp.ne.s32.totalorder %s71, %s72
      %p83 = scmp.eq.s32.totalorder %s14, 0
      %p84 = por %p82, %p83
      %p85 = scmp.ne.s32.totalorder %s71, %s72
      %p86 = scmp.eq.s32.totalorder %s15, 2
      %p87 = por %p85, %p86
      %p89 = scmp.ne.s32.totalorder %s72, %s88
      %p90 = scmp.eq.s32.totalorder %s15, 0
      %p91 = por %p89, %p90
      %s92 = ssub.s32 %s17, %s31
      %p93 = scmp.eq.s32.totalorder %s92, 0
      %s95 = sadd.s32 %s94, 1
      %s96 = scalar_select %p93, %s94, %s95
      %p99 = pneg %p93
      %p100 = scmp.eq.s32.totalorder %s9, 2
      %p101 = por %p99, %p100
      %p102 = scmp.ne.s32.totalorder %s94, %s97
      %p103 = scmp.eq.s32.totalorder %s9, 0
      %p104 = por %p102, %p103
      %p105 = scmp.ne.s32.totalorder %s94, %s97
      %p106 = scmp.eq.s32.totalorder %s14, 2
      %p107 = por %p105, %p106
      %p108 = scmp.ne.s32.totalorder %s97, %s98
      %p109 = scmp.eq.s32.totalorder %s14, 0
      %p110 = por %p108, %p109
      %p111 = scmp.ne.s32.totalorder %s97, %s98
      %p112 = scmp.eq.s32.totalorder %s15, 2
      %p113 = por %p111, %p112
      %p115 = scmp.ne.s32.totalorder %s98, %s114
      %p116 = scmp.eq.s32.totalorder %s15, 0
      %p117 = por %p115, %p116
      %s118 = ssub.s32 %s16, %s35
      %s119 = ssub.s32 %s17, %s31
      %s120 = sor.u32 %s118, %s119
      %p121 = scmp.eq.s32.totalorder %s120, 0
      %s123 = sadd.s32 %s122, 1
      %s124 = scalar_select %p121, %s122, %s123
      %p127 = pneg %p121
      %p128 = scmp.eq.s32.totalorder %s9, 2
      %p129 = por %p127, %p128
      %p130 = scmp.ne.s32.totalorder %s122, %s125
      %p131 = scmp.eq.s32.totalorder %s9, 0
      %p132 = por %p130, %p131
      %p133 = scmp.ne.s32.totalorder %s122, %s125
      %p134 = scmp.eq.s32.totalorder %s14, 2
      %p135 = por %p133, %p134
      %p136 = scmp.ne.s32.totalorder %s125, %s126
      %p137 = scmp.eq.s32.totalorder %s14, 0
      %p138 = por %p136, %p137
      %p139 = scmp.ne.s32.totalorder %s125, %s126
      %p140 = scmp.eq.s32.totalorder %s15, 2
      %p141 = por %p139, %p140
      %p143 = scmp.ne.s32.totalorder %s126, %s142
      %p144 = scmp.eq.s32.totalorder %s15, 0
      %p145 = por %p143, %p144
      %p146 = scmp.le.s32.totalorder 1, %s9
      %p147 = scmp.lt.s32.totalorder %s9, 4
      %p148 = pnand %p146, %p147
      %p149 = pneg %p148
      // Predicated region
      $region9: #{generator_forward.34} parent=5 // pred_check
        _
      $region10: #{generator_forward.34} parent=5 // pred_check_branch
        %151 = sbr.rel (%p148) target = $region12
      $region11: #{generator_forward.34} parent=5 // pred_region
        %s152 = ssub.s32 %s9, 1
        // Predicated region
        $region13: #{generator_forward.34} parent=11 // pred_check
          %p153 = pneg %p110
        $region14: #{generator_forward.34} parent=11 // pred_check_branch
          %155 = sbr.rel (%p153) target = $region16
        $region15: #{generator_forward.34} parent=11 // pred_region
          %p156 = scmp.lt.s32.totalorder %s20, 0
          %s157 = scalar_select %p156, %s20, 0
          %s158 = scalar_lea.vmem %s2, %s157
        $region16: #{generator_forward.34} parent=11 // pred_fallthru
          _
      $region12: #{generator_forward.34} parent=5 // pred_fallthru
        _
      %p159 = scmp.lt.s32.totalorder %s9, 3
      // Predicated region
      $region17: #{generator_forward.34} parent=5 // pred_check
        %p160 = pneg %p159
      $region18: #{generator_forward.34} parent=5 // pred_check_branch
        %162 = sbr.rel (%p160) target = $region20
      $region19: #{generator_forward.34} parent=5 // pred_region
        // Predicated region
        $region21: #{generator_forward.34} parent=19 // pred_check
          %p163 = pneg %p50
        $region22: #{generator_forward.34} parent=19 // pred_check_branch
          %165 = sbr.rel (%p163) target = $region24
        $region23: #{generator_forward.34} parent=19 // pred_region
          %s166 = sand.u32 %s40, 1
          %s167 = sand.u32 %s40, 1
          %s168 = smul.addr %s167, 56
          %s169 = scalar_lea.vmem [#allocation3], %s168
          %s170 = smul.u32 7, %s16
          %s171 = smul.addr %s170, 3
          %s172 = sadd.s32 %s18, %s171
          %s173 = smul.addr %s172, 8
          %s174 = scalar_lea.vmem %s0, %s173
          // Predicated region
          $region25: #{generator_forward.34} parent=23 // pred_check
            _
          $region26: #{generator_forward.34} parent=23 // pred_check_branch
            %176 = sbr.rel (0) target = $region28
          $region27: #{generator_forward.34} parent=23 // pred_region
            // Predicated region
            $region29: #{generator_forward.34} parent=27 // pred_check
              _
            $region30: #{generator_forward.34} parent=27 // pred_check_branch
              %178 = sbr.rel (0) target = $region32
            $region31: #{generator_forward.34} parent=27 // pred_region
              // Predicated region
              $region44: #{generator_forward.34} parent=31 // pred_check
                _
              $region45: #{generator_forward.34} parent=31 // pred_check_branch
                %206 = sbr.rel (0) target = $region47
              $region46: #{generator_forward.34} parent=31 // pred_region
                loop: start=0, step=1, limit=1
                $region48: #{generator_forward.34} parent=46 // loop_pre_header
                  _
                $region49: #{generator_forward.34} parent=46 // loop_header
                  %s208 = sphi 0, %s212
                  %p209 = scmp.ge.s32.totalorder %s208, 1
                  %s213 = sphi %s174, %s174
                  %s214 = sphi %s169, %s169
                $region50: #{generator_forward.34} parent=46 // loop_header_branch
                  %211 = sbr.rel (%p209) target = $region54
                $region51: #{generator_forward.34} parent=46 // loop_body
                  %v215 = vld [vmem:[%s213] sm:$0xff]
                  %216 = vst [vmem:[%s214] sm:$0xff] %v215
                  %v217 = vld [vmem:[%s213 + $0x18] sm:$0xff]
                  %218 = vst [vmem:[%s214 + $0x8] sm:$0xff] %v217
                  %v219 = vld [vmem:[%s213 + $0x30] sm:$0xff]
                  %220 = vst [vmem:[%s214 + $0x10] sm:$0xff] %v219
                  %v221 = vld [vmem:[%s213 + $0x48] sm:$0xff]
                  %222 = vst [vmem:[%s214 + $0x18] sm:$0xff] %v221
                  %v223 = vld [vmem:[%s213 + $0x60] sm:$0xff]
                  %224 = vst [vmem:[%s214 + $0x20] sm:$0xff] %v223
                  %v225 = vld [vmem:[%s213 + $0x78] sm:$0xff]
                  %226 = vst [vmem:[%s214 + $0x28] sm:$0xff] %v225
                  %v227 = vld [vmem:[%s213 + $0x90] sm:$0xff]
                  %228 = vst [vmem:[%s214 + $0x30] sm:$0xff] %v227
                $region52: #{generator_forward.34} parent=46 // loop_footer
                  %s212 = sadd.s32 1, %s208
                $region53: #{generator_forward.34} parent=46 // loop_footer_branch
                  %207 = sbr.rel target = $region49
                $region54: #{generator_forward.34} parent=46 // loop_exit
                  _
              $region47: #{generator_forward.34} parent=31 // pred_fallthru
                _
              // Predicated region
              $region55: #{generator_forward.34} parent=31 // pred_check
                _
              $region56: #{generator_forward.34} parent=31 // pred_check_branch
                %230 = sbr.rel target = $region58
              $region57: #{generator_forward.34} parent=31 // pred_region
                _
              $region58: #{generator_forward.34} parent=31 // pred_fallthru
                _
            $region32: #{generator_forward.34} parent=27 // pred_fallthru
              _
            // Predicated region
            $region33: #{generator_forward.34} parent=27 // pred_check
              _
            $region34: #{generator_forward.34} parent=27 // pred_check_branch
              %180 = sbr.rel target = $region36
            $region35: #{generator_forward.34} parent=27 // pred_region
              %s182 = ssub.s32 256, 1
              loop: start=0, step=1, limit=1
              $region37: #{generator_forward.34} parent=35 // loop_pre_header
                _
              $region38: #{generator_forward.34} parent=35 // loop_header
                %s184 = sphi 0, %s188
                %p185 = scmp.ge.s32.totalorder %s184, 1
                %s189 = sphi %s174, %s174
                %s190 = sphi %s169, %s169
              $region39: #{generator_forward.34} parent=35 // loop_header_branch
                %187 = sbr.rel (%p185) target = $region43
              $region40: #{generator_forward.34} parent=35 // loop_body
                %v191 = vld [vmem:[%s189] sm:%s182]
                %192 = vst [vmem:[%s190] sm:%s182] %v191
                %v193 = vld [vmem:[%s189 + $0x18] sm:%s182]
                %194 = vst [vmem:[%s190 + $0x8] sm:%s182] %v193
                %v195 = vld [vmem:[%s189 + $0x30] sm:%s182]
                %196 = vst [vmem:[%s190 + $0x10] sm:%s182] %v195
                %v197 = vld [vmem:[%s189 + $0x48] sm:%s182]
                %198 = vst [vmem:[%s190 + $0x18] sm:%s182] %v197
                %v199 = vld [vmem:[%s189 + $0x60] sm:%s182]
                %200 = vst [vmem:[%s190 + $0x20] sm:%s182] %v199
                %v201 = vld [vmem:[%s189 + $0x78] sm:%s182]
                %202 = vst [vmem:[%s190 + $0x28] sm:%s182] %v201
                %v203 = vld [vmem:[%s189 + $0x90] sm:%s182]
                %204 = vst [vmem:[%s190 + $0x30] sm:%s182] %v203
              $region41: #{generator_forward.34} parent=35 // loop_footer
                %s188 = sadd.s32 1, %s184
              $region42: #{generator_forward.34} parent=35 // loop_footer_branch
                %183 = sbr.rel target = $region38
              $region43: #{generator_forward.34} parent=35 // loop_exit
                _
            $region36: #{generator_forward.34} parent=27 // pred_fallthru
              _
          $region28: #{generator_forward.34} parent=23 // pred_fallthru
            _
          %231 = vnop
        $region24: #{generator_forward.34} parent=19 // pred_fallthru
          _
        // Predicated region
        $region59: #{generator_forward.34} parent=19 // pred_check
          %p232 = pneg %p78
        $region60: #{generator_forward.34} parent=19 // pred_check_branch
          %234 = sbr.rel (%p232) target = $region62
        $region61: #{generator_forward.34} parent=19 // pred_region
          %s235 = smul.u32 16, %s18
          %p236 = scmp.lt.s32.totalorder %s235, 47
          %s237 = scalar_select %p236, %s235, 47
          %p238 = scmp.lt.s32.totalorder %s17, 0
          %s239 = scalar_select %p238, %s17, 0
          %s240 = sadd.s32 %s239, %s237
          %s241 = smul.addr %s240, 8
          %s242 = scalar_lea.vmem %s1, %s241
          %s243 = smul.u32 16, %s18
        $region62: #{generator_forward.34} parent=19 // pred_fallthru
          _
      $region20: #{generator_forward.34} parent=5 // pred_fallthru
        _
      %p244 = scmp.le.s32.totalorder 1, %s9
      %p245 = scmp.lt.s32.totalorder %s9, 4
      %p246 = pnand %p244, %p245
      %p247 = pneg %p246
      // Predicated region
      $region63: #{generator_forward.34} parent=5 // pred_check
        _
      $region64: #{generator_forward.34} parent=5 // pred_check_branch
        %249 = sbr.rel (%p246) target = $region66
      $region65: #{generator_forward.34} parent=5 // pred_region
        %s250 = ssub.s32 %s9, 1
        %s251 = sand.u32 %s43, 1
        %s252 = sand.u32 %s43, 1
        %s253 = smul.addr %s252, 56
        %s254 = scalar_lea.vmem [#allocation3], %s253
        // Predicated region
        $region67: #{generator_forward.34} parent=65 // pred_check
          %p255 = pneg %p56
        $region68: #{generator_forward.34} parent=65 // pred_check_branch
          %257 = sbr.rel (%p255) target = $region70
        $region69: #{generator_forward.34} parent=65 // pred_region
          _
        $region70: #{generator_forward.34} parent=65 // pred_fallthru
          _
        %s258 = sand.u32 %s43, 1
        %s259 = sand.u32 %s43, 1
        %s260 = smul.addr %s259, 56
        %s261 = scalar_lea.vmem [#allocation3], %s260
        %p262 = pneg %p56
        %p263 = pneg %p53
        %s264 = smul.u32 16, %s21
        %p265 = scmp.lt.s32.totalorder %s264, 47
        %s266 = scalar_select %p265, %s264, 47
        %p267 = scmp.lt.s32.totalorder %s20, 0
        %s268 = scalar_select %p267, %s20, 0
        %s269 = sadd.s32 %s268, %s266
        %s270 = smul.addr %s269, 8
        %s271 = scalar_lea.vmem %s1, %s270
        %p272 = pneg %p84
        %p273 = pneg %p81
        %p274 = scmp.lt.s32.totalorder %s20, 0
        %s275 = scalar_select %p274, %s20, 0
        %s276 = scalar_lea.vmem %s2, %s275
        %p277 = pneg %p110
        %p278 = pneg %p107
        %p279 = pneg %p138
        %p280 = pneg %p135
        %s281 = smul.u32 7, %s19
        %p282 = scmp.lt.s32.totalorder %s281, 6
        %s283 = scalar_select %p282, %s281, 6
        %p284 = scmp.lt.s32.totalorder %s20, 0
        %s285 = scalar_select %p284, %s20, 0
        %s286 = sadd.s32 %s285, %s283
        %s287 = smul.addr %s286, 8
        %s288 = scalar_lea.vmem %s3, %s287
        %s289 = smul.u32 7, %s19
        %s290 = smul.u32 16, %s21
        %p291 = scmp.lt.s32.totalorder %s290, 47
        %s292 = scalar_select %p291, %s290, 47
        %p293 = scmp.lt.s32.totalorder %s20, 0
        %s294 = scalar_select %p293, %s20, 0
        %s295 = sadd.s32 %s294, %s292
        %s296 = smul.addr %s295, 8
        %s297 = scalar_lea.vmem %s1, %s296
        %s298 = smul.u32 16, %s21
        %p299 = scmp.lt.s32.totalorder %s20, 0
        %s300 = scalar_select %p299, %s20, 0
        %s301 = scalar_lea.vmem %s2, %s300
        %s302 = smul.u32 7, %s19
        %p303 = scmp.lt.s32.totalorder %s302, 6
        %s304 = scalar_select %p303, %s302, 6
        %p305 = scmp.lt.s32.totalorder %s20, 0
        %s306 = scalar_select %p305, %s20, 0
        %s307 = sadd.s32 %s306, %s304
        %s308 = smul.addr %s307, 8
        %s309 = scalar_lea.vmem %s3, %s308
        %s310 = smul.u32 7, %s19
        %p311 = scmp.eq.s32.totalorder %s21, 0
        // Predicated region
        $region71: #{generator_forward.34} parent=65 // pred_check
          %p312 = pneg %p311
        $region72: #{generator_forward.34} parent=65 // pred_check_branch
          %314 = sbr.rel (%p312) target = $region74
        $region73: #{generator_forward.34} parent=65 // pred_region
          %315 = vst [vmem:[#allocation2] sm:$0xff] 0.0
          %316 = vst [vmem:[#allocation2 + $0x8] sm:$0xff] 0.0
          %317 = vst [vmem:[#allocation2 + $0x10] sm:$0xff] 0.0
          %318 = vst [vmem:[#allocation2 + $0x18] sm:$0xff] 0.0
          %319 = vst [vmem:[#allocation2 + $0x20] sm:$0xff] 0.0
          %320 = vst [vmem:[#allocation2 + $0x28] sm:$0xff] 0.0
          %321 = vst [vmem:[#allocation2 + $0x30] sm:$0xff] 0.0
        $region74: #{generator_forward.34} parent=65 // pred_fallthru
          _
        %v322 = vld [vmem:[#allocation2] sm:$0xff]
        %v323 = vld [vmem:[#allocation2 + $0x8] sm:$0xff]
        %v324 = vld [vmem:[#allocation2 + $0x10] sm:$0xff]
        %v325 = vld [vmem:[#allocation2 + $0x18] sm:$0xff]
        %v326 = vld [vmem:[#allocation2 + $0x20] sm:$0xff]
        %v327 = vld [vmem:[#allocation2 + $0x28] sm:$0xff]
        %v328 = vld [vmem:[#allocation2 + $0x30] sm:$0xff]
        %v329 = vld [vmem:[%s254] sm:$0xff]
        %v330 = vld [vmem:[%s254 + $0x8] sm:$0xff]
        %v331 = vld [vmem:[%s254 + $0x10] sm:$0xff]
        %v332 = vld [vmem:[%s254 + $0x18] sm:$0xff]
        %v333 = vld [vmem:[%s254 + $0x20] sm:$0xff]
        %v334 = vld [vmem:[%s254 + $0x28] sm:$0xff]
        %v335 = vld [vmem:[%s254 + $0x30] sm:$0xff]
        %v336 = vld [vmem:[%s297] sm:$0xff]
        %v337 = vld [vmem:[%s297 + $0x8] sm:$0xff]
        %v338 = vld [vmem:[%s297 + $0x10] sm:$0xff]
        %v339 = vld [vmem:[%s297 + $0x18] sm:$0xff]
        %v340 = vld [vmem:[%s297 + $0x20] sm:$0xff]
        %v341 = vld [vmem:[%s297 + $0x28] sm:$0xff]
        %v342 = vld [vmem:[%s297 + $0x30] sm:$0xff]
        %v343 = vld [vmem:[%s297 + $0x38] sm:$0xff]
        %v344 = vld [vmem:[%s297 + $0x40] sm:$0xff]
        %v345 = vld [vmem:[%s297 + $0x48] sm:$0xff]
        %v346 = vld [vmem:[%s297 + $0x50] sm:$0xff]
        %v347 = vld [vmem:[%s297 + $0x58] sm:$0xff]
        %v348 = vld [vmem:[%s297 + $0x60] sm:$0xff]
        %v349 = vld [vmem:[%s297 + $0x68] sm:$0xff]
        %v350 = vld [vmem:[%s297 + $0x70] sm:$0xff]
        %v351 = vld [vmem:[%s297 + $0x78] sm:$0xff]
        %352 = vmatpush.msra.mxu0 %v351
        %353 = vmatpush.msra.mxu0 %v350
        %354 = vmatpush.msra.mxu0 %v349
        %355 = vmatpush.msra.mxu0 %v348
        %356 = vmatpush.msra.mxu0 %v347
        %357 = vmatpush.msra.mxu0 %v346
        %358 = vmatpush.msra.mxu0 %v345
        %359 = vmatpush.msra.mxu0 %v344
        %360 = vmatpush.msra.mxu0 %v343
        %361 = vmatpush.msra.mxu0 %v342
        %362 = vmatpush.msra.mxu0 %v341
        %363 = vmatpush.msra.mxu0 %v340
        %364 = vmatpush.msra.mxu0 %v339
        %365 = vmatpush.msra.mxu0 %v338
        %366 = vmatpush.msra.mxu0 %v337
        %367 = vmatpush.msra.mxu0 %v336
        %368 = vmatmul.f32.gmra.mxu0 %v329
        %v369 = vpop.f32.mrf.mxu0
        %v370 = vadd.f32 0.0, %v369
        %371 = vmatmul.f32.gmra.mxu0 %v330
        %v372 = vpop.f32.mrf.mxu0
        %v373 = vadd.f32 0.0, %v372
        %374 = vmatmul.f32.gmra.mxu0 %v331
        %v375 = vpop.f32.mrf.mxu0
        %v376 = vadd.f32 0.0, %v375
        %377 = vmatmul.f32.gmra.mxu0 %v332
        %v378 = vpop.f32.mrf.mxu0
        %v379 = vadd.f32 0.0, %v378
        %380 = vmatmul.f32.gmra.mxu0 %v333
        %v381 = vpop.f32.mrf.mxu0
        %v382 = vadd.f32 0.0, %v381
        %383 = vmatmul.f32.gmra.mxu0 %v334
        %v384 = vpop.f32.mrf.mxu0
        %v385 = vadd.f32 0.0, %v384
        %386 = vmatmul.f32.gmra.mxu0 %v335
        %v387 = vpop.f32.mrf.mxu0
        %v388 = vadd.f32 0.0, %v387
        %389 = vdwg.mxu0
        %v390 = vadd.f32 %v322, %v370
        %v391 = vadd.f32 %v323, %v373
        %v392 = vadd.f32 %v324, %v376
        %v393 = vadd.f32 %v325, %v379
        %v394 = vadd.f32 %v326, %v382
        %v395 = vadd.f32 %v327, %v385
        %v396 = vadd.f32 %v328, %v388
        %397 = vst [vmem:[#allocation2] sm:$0xff] %v390
        %398 = vst [vmem:[#allocation2 + $0x8] sm:$0xff] %v391
        %399 = vst [vmem:[#allocation2 + $0x10] sm:$0xff] %v392
        %400 = vst [vmem:[#allocation2 + $0x18] sm:$0xff] %v393
        %401 = vst [vmem:[#allocation2 + $0x20] sm:$0xff] %v394
        %402 = vst [vmem:[#allocation2 + $0x28] sm:$0xff] %v395
        %403 = vst [vmem:[#allocation2 + $0x30] sm:$0xff] %v396
        %p404 = scmp.eq.s32.totalorder %s21, 2
        // Predicated region
        $region75: #{generator_forward.34} parent=65 // pred_check
          %p405 = pneg %p404
        $region76: #{generator_forward.34} parent=65 // pred_check_branch
          %407 = sbr.rel (%p405) target = $region78
        $region77: #{generator_forward.34} parent=65 // pred_region
          %v408 = vld [vmem:[#allocation2] sm:$0xff]
          %v409 = vld [vmem:[#allocation2 + $0x8] sm:$0xff]
          %v410 = vld [vmem:[#allocation2 + $0x10] sm:$0xff]
          %v411 = vld [vmem:[#allocation2 + $0x18] sm:$0xff]
          %v412 = vld [vmem:[#allocation2 + $0x20] sm:$0xff]
          %v413 = vld [vmem:[#allocation2 + $0x28] sm:$0xff]
          %v414 = vld [vmem:[#allocation2 + $0x30] sm:$0xff]
          %v415 = vld [vmem:[%s301] sm:$0x1]
          %v417 = vperm.slane %v415, 0
          %v419 = vadd.f32 %v408, %v417
          %v420 = vadd.f32 %v409, %v417
          %v421 = vadd.f32 %v410, %v417
          %v422 = vadd.f32 %v411, %v417
          %v423 = vadd.f32 %v412, %v417
          %v424 = vadd.f32 %v413, %v417
          %v425 = vadd.f32 %v414, %v417
          %vm426 = vcmp.gt.f32.partialorder %v419, 0.0
          %vm427 = vcmp.gt.f32.partialorder %v420, 0.0
          %vm428 = vcmp.gt.f32.partialorder %v421, 0.0
          %vm429 = vcmp.gt.f32.partialorder %v422, 0.0
          %vm430 = vcmp.gt.f32.partialorder %v423, 0.0
          %vm431 = vcmp.gt.f32.partialorder %v424, 0.0
          %vm432 = vcmp.gt.f32.partialorder %v425, 0.0
          %v433 = vmul.f32 %v419, 0.01
          %v434 = vmul.f32 %v420, 0.01
          %v435 = vmul.f32 %v421, 0.01
          %v436 = vmul.f32 %v422, 0.01
          %v437 = vmul.f32 %v423, 0.01
          %v438 = vmul.f32 %v424, 0.01
          %v439 = vmul.f32 %v425, 0.01
          %v440 = vsel %vm426, %v419, %v433
          %v441 = vsel %vm427, %v420, %v434
          %v442 = vsel %vm428, %v421, %v435
          %v443 = vsel %vm429, %v422, %v436
          %v444 = vsel %vm430, %v423, %v437
          %v445 = vsel %vm431, %v424, %v438
          %v446 = vsel %vm432, %v425, %v439
          %447 = vst [vmem:[%s309] sm:$0xff] %v440
          %448 = vst [vmem:[%s309 + $0x8] sm:$0xff] %v441
          %449 = vst [vmem:[%s309 + $0x10] sm:$0xff] %v442
          %450 = vst [vmem:[%s309 + $0x18] sm:$0xff] %v443
          %451 = vst [vmem:[%s309 + $0x20] sm:$0xff] %v444
          %452 = vst [vmem:[%s309 + $0x28] sm:$0xff] %v445
          %453 = vst [vmem:[%s309 + $0x30] sm:$0xff] %v446
        $region78: #{generator_forward.34} parent=65 // pred_fallthru
          _
        %s454 = smul.u32 7, %s19
        %p455 = scmp.lt.s32.totalorder %s454, 6
        %s456 = scalar_select %p455, %s454, 6
        %p457 = scmp.lt.s32.totalorder %s20, 0
        %s458 = scalar_select %p457, %s20, 0
        %s459 = sadd.s32 %s458, %s456
        %s460 = smul.addr %s459, 8
        %s461 = scalar_lea.vmem %s3, %s460
        // Predicated region
        $region79: #{generator_forward.34} parent=65 // pred_check
          %p462 = pneg %p135
        $region80: #{generator_forward.34} parent=65 // pred_check_branch
          %464 = sbr.rel (%p462) target = $region82
        $region81: #{generator_forward.34} parent=65 // pred_region
          %s465 = smul.u32 7, %s19
        $region82: #{generator_forward.34} parent=65 // pred_fallthru
          _
        // Predicated region
        $region83: #{generator_forward.34} parent=65 // pred_check
          %p466 = pneg %p135
        $region84: #{generator_forward.34} parent=65 // pred_check_branch
          %468 = sbr.rel (%p466) target = $region86
        $region85: #{generator_forward.34} parent=65 // pred_region
          %s469 = smul.u32 7, %s19
          %p470 = scmp.lt.s32.totalorder %s469, 6
          %s471 = scalar_select %p470, %s469, 6
          %p472 = scmp.lt.s32.totalorder %s20, 0
          %s473 = scalar_select %p472, %s20, 0
          %s474 = sadd.s32 %s473, %s471
          %s475 = smul.addr %s474, 8
          %s476 = scalar_lea.vmem %s3, %s475
        $region86: #{generator_forward.34} parent=65 // pred_fallthru
          _
      $region66: #{generator_forward.34} parent=5 // pred_fallthru
        _
      %p477 = scmp.le.s32.totalorder 2, %s9
      // Predicated region
      $region87: #{generator_forward.34} parent=5 // pred_check
        %p478 = pneg %p477
      $region88: #{generator_forward.34} parent=5 // pred_check_branch
        %480 = sbr.rel (%p478) target = $region90
      $region89: #{generator_forward.34} parent=5 // pred_region
        %s481 = ssub.s32 %s9, 2
      $region90: #{generator_forward.34} parent=5 // pred_fallthru
        _
    $region6: #{generator_forward.34} parent=1 // loop_footer
      %s13 = sadd.s32 1, %s9
    $region7: #{generator_forward.34} parent=1 // loop_footer_branch
      %8 = sbr.rel target = $region3
    $region8: #{generator_forward.34} parent=1 // loop_exit
      _

// kernel: generator_forward.36
$region0: #{generator_forward.36}
  #allocation0 [shape = 'u32[]', space=smem, size = 0x4, offset = 0x4, fixed_abs, tag = 'smem constant byte address 0x4 - core index']
  #allocation1 [shape = 'u32[72,128]{1,0:T(1,128)}', space=vmem, size = 0x9000, scoped, tag = 'internal scratch']
  %s0 = inlined_call_operand.vmem [shape: f32[128,128], index: 0, kind: input, shape index: {}]
  %s1 = inlined_call_operand.vmem [shape: f32[1,128], index: 1, kind: input, shape index: {}]
  %s2 = inlined_call_operand.vmem [shape: f32[1,128], index: 2, kind: input, shape index: {}]
  %s3 = inlined_call_operand.vmem [shape: f32[128,128], index: 3, kind: output, shape index: {}]
  %s4 = sld [smem:[#allocation0]]
  $region22: #{generator_forward.36} parent=0
    _
  %s6 = ssub.s32 1, %s4
  %s7 = scalar_select 0, %s6, %s4
  // Predicated region
  $region2: #{generator_forward.36} parent=0 // pred_check
    _
  $region3: #{generator_forward.36} parent=0 // pred_check_branch
    %9 = sbr.rel (0) target = $region5
  $region4: #{generator_forward.36} parent=0 // pred_region
    _
  $region5: #{generator_forward.36} parent=0 // pred_fallthru
    _
  // Predicated region
  $region6: #{generator_forward.36} parent=0 // pred_check
    _
  $region7: #{generator_forward.36} parent=0 // pred_check_branch
    %11 = sbr.rel (0) target = $region9
  $region8: #{generator_forward.36} parent=0 // pred_region
    _
  $region9: #{generator_forward.36} parent=0 // pred_fallthru
    _
  // Predicated region
  $region10: #{generator_forward.36} parent=0 // pred_check
    _
  $region11: #{generator_forward.36} parent=0 // pred_check_branch
    %13 = sbr.rel (0) target = $region13
  $region12: #{generator_forward.36} parent=0 // pred_region
    _
  $region13: #{generator_forward.36} parent=0 // pred_fallthru
    _
  %v14 = vld [vmem:[%s0] sm:$0xff]
  %v15 = vld [vmem:[%s0 + $0x8] sm:$0xff]
  %v16 = vld [vmem:[%s0 + $0x10] sm:$0xff]
  %v17 = vld [vmem:[%s0 + $0x18] sm:$0xff]
  %v18 = vld [vmem:[%s0 + $0x20] sm:$0xff]
  %v19 = vld [vmem:[%s0 + $0x28] sm:$0xff]
  %v20 = vld [vmem:[%s0 + $0x30] sm:$0xff]
  %v21 = vld [vmem:[%s0 + $0x38] sm:$0xff]
  %v22 = vld [vmem:[%s0 + $0x40] sm:$0xff]
  %v23 = vld [vmem:[%s0 + $0x48] sm:$0xff]
  %v24 = vld [vmem:[%s0 + $0x50] sm:$0xff]
  %v25 = vld [vmem:[%s0 + $0x58] sm:$0xff]
  %v26 = vld [vmem:[%s0 + $0x60] sm:$0xff]
  %v27 = vld [vmem:[%s0 + $0x68] sm:$0xff]
  %v28 = vld [vmem:[%s0 + $0x70] sm:$0xff]
  %v29 = vld [vmem:[%s0 + $0x78] sm:$0xff]
  %v30 = vld [vmem:[%s1] sm:$0x1]
  %v32 = vperm.slane %v30, 0
  %v34 = vmul.f32 %v14, %v32
  %v35 = vmul.f32 %v15, %v32
  %v36 = vmul.f32 %v16, %v32
  %v37 = vmul.f32 %v17, %v32
  %v38 = vmul.f32 %v18, %v32
  %v39 = vmul.f32 %v19, %v32
  %v40 = vmul.f32 %v20, %v32
  %v41 = vmul.f32 %v21, %v32
  %v42 = vmul.f32 %v22, %v32
  %v43 = vmul.f32 %v23, %v32
  %v44 = vmul.f32 %v24, %v32
  %v45 = vmul.f32 %v25, %v32
  %v46 = vmul.f32 %v26, %v32
  %v47 = vmul.f32 %v27, %v32
  %v48 = vmul.f32 %v28, %v32
  %v49 = vmul.f32 %v29, %v32
  %v50 = vld [vmem:[%s2] sm:$0x1]
  %v52 = vperm.slane %v50, 0
  %v54 = vadd.f32 %v34, %v52
  %v55 = vadd.f32 %v35, %v52
  %v56 = vadd.f32 %v36, %v52
  %v57 = vadd.f32 %v37, %v52
  %v58 = vadd.f32 %v38, %v52
  %v59 = vadd.f32 %v39, %v52
  %v60 = vadd.f32 %v40, %v52
  %v61 = vadd.f32 %v41, %v52
  %v62 = vadd.f32 %v42, %v52
  %v63 = vadd.f32 %v43, %v52
  %v64 = vadd.f32 %v44, %v52
  %v65 = vadd.f32 %v45, %v52
  %v66 = vadd.f32 %v46, %v52
  %v67 = vadd.f32 %v47, %v52
  %v68 = vadd.f32 %v48, %v52
  %v69 = vadd.f32 %v49, %v52
  %70 = vst [vmem:[%s3] sm:$0xff] %v54
  %71 = vst [vmem:[%s3 + $0x8] sm:$0xff] %v55
  %72 = vst [vmem:[%s3 + $0x10] sm:$0xff] %v56
  %73 = vst [vmem:[%s3 + $0x18] sm:$0xff] %v57
  %74 = vst [vmem:[%s3 + $0x20] sm:$0xff] %v58
  %75 = vst [vmem:[%s3 + $0x28] sm:$0xff] %v59
  %76 = vst [vmem:[%s3 + $0x30] sm:$0xff] %v60
  %77 = vst [vmem:[%s3 + $0x38] sm:$0xff] %v61
  %78 = vst [vmem:[%s3 + $0x40] sm:$0xff] %v62
  %79 = vst [vmem:[%s3 + $0x48] sm:$0xff] %v63
  %80 = vst [vmem:[%s3 + $0x50] sm:$0xff] %v64
  %81 = vst [vmem:[%s3 + $0x58] sm:$0xff] %v65
  %82 = vst [vmem:[%s3 + $0x60] sm:$0xff] %v66
  %83 = vst [vmem:[%s3 + $0x68] sm:$0xff] %v67
  %84 = vst [vmem:[%s3 + $0x70] sm:$0xff] %v68
  %85 = vst [vmem:[%s3 + $0x78] sm:$0xff] %v69
  // Predicated region
  $region14: #{generator_forward.36} parent=0 // pred_check
    _
  $region15: #{generator_forward.36} parent=0 // pred_check_branch
    %87 = sbr.rel (0) target = $region17
  $region16: #{generator_forward.36} parent=0 // pred_region
    _
  $region17: #{generator_forward.36} parent=0 // pred_fallthru
    _
  // Predicated region
  $region18: #{generator_forward.36} parent=0 // pred_check
    _
  $region19: #{generator_forward.36} parent=0 // pred_check_branch
    %89 = sbr.rel (0) target = $region21
  $region20: #{generator_forward.36} parent=0 // pred_region
    _
  $region21: #{generator_forward.36} parent=0 // pred_fallthru
    _

// kernel: generator_forward.35
$region0: #{generator_forward.35}
  #allocation0 [shape = 'u32[]', space=smem, size = 0x4, offset = 0x4, fixed_abs, tag = 'smem constant byte address 0x4 - core index']
  #allocation1 [shape = 'u32[72,128]{1,0:T(1,128)}', space=vmem, size = 0x9000, scoped, tag = 'internal scratch']
  %s0 = inlined_call_operand.vmem [shape: f32[128,128], index: 0, kind: input, shape index: {}]
  %s1 = inlined_call_operand.vmem [shape: f32[1,128], index: 1, kind: output, shape index: {0}]
  %s2 = inlined_call_operand.vmem [shape: f32[1,128], index: 2, kind: output, shape index: {1}]
  %3 = xla_tuple %s1, %s2
  %s4 = sld [smem:[#allocation0]]
  $region26: #{generator_forward.35} parent=0
    _
  %s6 = ssub.s32 1, %s4
  %s7 = scalar_select 0, %s6, %s4
  // Predicated region
  $region2: #{generator_forward.35} parent=0 // pred_check
    _
  $region3: #{generator_forward.35} parent=0 // pred_check_branch
    %9 = sbr.rel (0) target = $region5
  $region4: #{generator_forward.35} parent=0 // pred_region
    _
  $region5: #{generator_forward.35} parent=0 // pred_fallthru
    _
  %p10 = scmp.eq.s32.totalorder 0, 0
  // Predicated region
  $region6: #{generator_forward.35} parent=0 // pred_check
    %p11 = pneg %p10
  $region7: #{generator_forward.35} parent=0 // pred_check_branch
    %13 = sbr.rel (%p11) target = $region9
  $region8: #{generator_forward.35} parent=0 // pred_region
    %14 = vst [vmem:[%s1] sm:$0x1] 0.0
    %15 = vst [vmem:[%s2] sm:$0x1] 0.0
  $region9: #{generator_forward.35} parent=0 // pred_fallthru
    _
  %v16 = vld [vmem:[%s0] sm:$0xff]
  %v17 = vld [vmem:[%s0 + $0x8] sm:$0xff]
  %v18 = vld [vmem:[%s0 + $0x10] sm:$0xff]
  %v19 = vld [vmem:[%s0 + $0x18] sm:$0xff]
  %v20 = vld [vmem:[%s0 + $0x20] sm:$0xff]
  %v21 = vld [vmem:[%s0 + $0x28] sm:$0xff]
  %v22 = vld [vmem:[%s0 + $0x30] sm:$0xff]
  %v23 = vld [vmem:[%s0 + $0x38] sm:$0xff]
  %v24 = vld [vmem:[%s0 + $0x40] sm:$0xff]
  %v25 = vld [vmem:[%s0 + $0x48] sm:$0xff]
  %v26 = vld [vmem:[%s0 + $0x50] sm:$0xff]
  %v27 = vld [vmem:[%s0 + $0x58] sm:$0xff]
  %v28 = vld [vmem:[%s0 + $0x60] sm:$0xff]
  %v29 = vld [vmem:[%s0 + $0x68] sm:$0xff]
  %v30 = vld [vmem:[%s0 + $0x70] sm:$0xff]
  %v31 = vld [vmem:[%s0 + $0x78] sm:$0xff]
  %v32 = vld [vmem:[%s1] sm:$0x1]
  %v33 = vadd.f32 %v16, %v17
  %v34 = vadd.f32 %v33, %v18
  %v35 = vadd.f32 %v34, %v19
  %v36 = vadd.f32 %v35, %v20
  %v37 = vadd.f32 %v36, %v21
  %v38 = vadd.f32 %v37, %v22
  %v39 = vadd.f32 %v38, %v23
  %v40 = vadd.f32 %v39, %v24
  %v41 = vadd.f32 %v40, %v25
  %v42 = vadd.f32 %v41, %v26
  %v43 = vadd.f32 %v42, %v27
  %v44 = vadd.f32 %v43, %v28
  %v45 = vadd.f32 %v44, %v29
  %v46 = vadd.f32 %v45, %v30
  %v47 = vadd.f32 %v46, %v31
  %v48 = vrot.slane %v47, 4
  %v49 = vadd.f32 %v47, %v48
  %v50 = vrot.slane %v49, 2
  %v51 = vadd.f32 %v49, %v50
  %v52 = vrot.slane %v51, 1
  %v53 = vadd.f32 %v51, %v52
  %v54 = vadd.f32 %v32, %v53
  %55 = vst [vmem:[%s1] sm:$0x1] %v54
  %v56 = vld [vmem:[%s2] sm:$0x1]
  %v57 = vmul.f32 %v16, %v16
  %v58 = vmul.f32 %v17, %v17
  %v59 = vmul.f32 %v18, %v18
  %v60 = vmul.f32 %v19, %v19
  %v61 = vmul.f32 %v20, %v20
  %v62 = vmul.f32 %v21, %v21
  %v63 = vmul.f32 %v22, %v22
  %v64 = vmul.f32 %v23, %v23
  %v65 = vmul.f32 %v24, %v24
  %v66 = vmul.f32 %v25, %v25
  %v67 = vmul.f32 %v26, %v26
  %v68 = vmul.f32 %v27, %v27
  %v69 = vmul.f32 %v28, %v28
  %v70 = vmul.f32 %v29, %v29
  %v71 = vmul.f32 %v30, %v30
  %v72 = vmul.f32 %v31, %v31
  %v73 = vadd.f32 %v57, %v58
  %v74 = vadd.f32 %v73, %v59
  %v75 = vadd.f32 %v74, %v60
  %v76 = vadd.f32 %v75, %v61
  %v77 = vadd.f32 %v76, %v62
  %v78 = vadd.f32 %v77, %v63
  %v79 = vadd.f32 %v78, %v64
  %v80 = vadd.f32 %v79, %v65
  %v81 = vadd.f32 %v80, %v66
  %v82 = vadd.f32 %v81, %v67
  %v83 = vadd.f32 %v82, %v68
  %v84 = vadd.f32 %v83, %v69
  %v85 = vadd.f32 %v84, %v70
  %v86 = vadd.f32 %v85, %v71
  %v87 = vadd.f32 %v86, %v72
  %v88 = vrot.slane %v87, 4
  %v89 = vadd.f32 %v87, %v88
  %v90 = vrot.slane %v89, 2
  %v91 = vadd.f32 %v89, %v90
  %v92 = vrot.slane %v91, 1
  %v93 = vadd.f32 %v91, %v92
  %v94 = vadd.f32 %v56, %v93
  %95 = vst [vmem:[%s2] sm:$0x1] %v94
  // Predicated region
  $region10: #{generator_forward.35} parent=0 // pred_check
    _
  $region11: #{generator_forward.35} parent=0 // pred_check_branch
    %97 = sbr.rel (0) target = $region13
  $region12: #{generator_forward.35} parent=0 // pred_region
    _
  $region13: #{generator_forward.35} parent=0 // pred_fallthru
    _
  // Predicated region
  $region14: #{generator_forward.35} parent=0 // pred_check
    _
  $region15: #{generator_forward.35} parent=0 // pred_check_branch
    %99 = sbr.rel (0) target = $region17
  $region16: #{generator_forward.35} parent=0 // pred_region
    _
  $region17: #{generator_forward.35} parent=0 // pred_fallthru
    _
  // Predicated region
  $region18: #{generator_forward.35} parent=0 // pred_check
    _
  $region19: #{generator_forward.35} parent=0 // pred_check_branch
    %101 = sbr.rel (0) target = $region21
  $region20: #{generator_forward.35} parent=0 // pred_region
    _
  $region21: #{generator_forward.35} parent=0 // pred_fallthru
    _
  // Predicated region
  $region22: #{generator_forward.35} parent=0 // pred_check
    _
  $region23: #{generator_forward.35} parent=0 // pred_check_branch
    %103 = sbr.rel (0) target = $region25
  $region24: #{generator_forward.35} parent=0 // pred_region
    _
  $region25: #{generator_forward.35} parent=0 // pred_fallthru
    _

// kernel: generator_forward.37
$region0: #{generator_forward.37}
  #allocation0 [shape = 'u32[]', space=smem, size = 0x4, offset = 0x4, fixed_abs, tag = 'smem constant byte address 0x4 - core index']
  #allocation1 [shape = 'u32[72,128]{1,0:T(1,128)}', space=vmem, size = 0x9000, scoped, tag = 'internal scratch']
  #allocation2 [shape = 'f32[168,128]{1,0:T(8,128)}', space=vmem, size = 0x15000, scoped, tag = 'scratch operand']
  %s0 = inlined_call_operand.vmem [shape: f32[168,128], index: 0, kind: input, shape index: {}]
  %s1 = inlined_call_operand.vmem [shape: f32[128,128], index: 1, kind: input, shape index: {}]
  %s2 = inlined_call_operand.vmem [shape: f32[1,128], index: 2, kind: input, shape index: {}]
  %s3 = inlined_call_operand.vmem [shape: f32[168,128], index: 3, kind: output, shape index: {}]
  %s4 = sld [smem:[#allocation0]]
  $region30: #{generator_forward.37} parent=0
    _
  %s6 = ssub.s32 1, %s4
  %s7 = scalar_select 0, %s6, %s4
  // Predicated region
  $region2: #{generator_forward.37} parent=0 // pred_check
    _
  $region3: #{generator_forward.37} parent=0 // pred_check_branch
    %9 = sbr.rel (0) target = $region5
  $region4: #{generator_forward.37} parent=0 // pred_region
    _
  $region5: #{generator_forward.37} parent=0 // pred_fallthru
    _
  // Predicated region
  $region6: #{generator_forward.37} parent=0 // pred_check
    _
  $region7: #{generator_forward.37} parent=0 // pred_check_branch
    %11 = sbr.rel (0) target = $region9
  $region8: #{generator_forward.37} parent=0 // pred_region
    _
  $region9: #{generator_forward.37} parent=0 // pred_fallthru
    _
  // Predicated region
  $region10: #{generator_forward.37} parent=0 // pred_check
    _
  $region11: #{generator_forward.37} parent=0 // pred_check_branch
    %13 = sbr.rel (0) target = $region13
  $region12: #{generator_forward.37} parent=0 // pred_region
    _
  $region13: #{generator_forward.37} parent=0 // pred_fallthru
    _
  %p14 = scmp.eq.s32.totalorder 0, 0
  // Predicated region
  $region14: #{generator_forward.37} parent=0 // pred_check
    %p15 = pneg %p14
  $region15: #{generator_forward.37} parent=0 // pred_check_branch
    %17 = sbr.rel (%p15) target = $region17
  $region16: #{generator_forward.37} parent=0 // pred_region
    %18 = vst [vmem:[#allocation2] sm:$0xff] 0.0
    %19 = vst [vmem:[#allocation2 + $0x8] sm:$0xff] 0.0
    %20 = vst [vmem:[#allocation2 + $0x10] sm:$0xff] 0.0
    %21 = vst [vmem:[#allocation2 + $0x18] sm:$0xff] 0.0
    %22 = vst [vmem:[#allocation2 + $0x20] sm:$0xff] 0.0
    %23 = vst [vmem:[#allocation2 + $0x28] sm:$0xff] 0.0
    %24 = vst [vmem:[#allocation2 + $0x30] sm:$0xff] 0.0
    %25 = vst [vmem:[#allocation2 + $0x38] sm:$0xff] 0.0
    %26 = vst [vmem:[#allocation2 + $0x40] sm:$0xff] 0.0
    %27 = vst [vmem:[#allocation2 + $0x48] sm:$0xff] 0.0
    %28 = vst [vmem:[#allocation2 + $0x50] sm:$0xff] 0.0
    %29 = vst [vmem:[#allocation2 + $0x58] sm:$0xff] 0.0
    %30 = vst [vmem:[#allocation2 + $0x60] sm:$0xff] 0.0
    %31 = vst [vmem:[#allocation2 + $0x68] sm:$0xff] 0.0
    %32 = vst [vmem:[#allocation2 + $0x70] sm:$0xff] 0.0
    %33 = vst [vmem:[#allocation2 + $0x78] sm:$0xff] 0.0
    %34 = vst [vmem:[#allocation2 + $0x80] sm:$0xff] 0.0
    %35 = vst [vmem:[#allocation2 + $0x88] sm:$0xff] 0.0
    %36 = vst [vmem:[#allocation2 + $0x90] sm:$0xff] 0.0
    %37 = vst [vmem:[#allocation2 + $0x98] sm:$0xff] 0.0
    %38 = vst [vmem:[#allocation2 + $0xa0] sm:$0xff] 0.0
  $region17: #{generator_forward.37} parent=0 // pred_fallthru
    _
  %v39 = vld [vmem:[#allocation2] sm:$0xff]
  %v40 = vld [vmem:[#allocation2 + $0x8] sm:$0xff]
  %v41 = vld [vmem:[#allocation2 + $0x10] sm:$0xff]
  %v42 = vld [vmem:[#allocation2 + $0x18] sm:$0xff]
  %v43 = vld [vmem:[#allocation2 + $0x20] sm:$0xff]
  %v44 = vld [vmem:[#allocation2 + $0x28] sm:$0xff]
  %v45 = vld [vmem:[#allocation2 + $0x30] sm:$0xff]
  %v46 = vld [vmem:[#allocation2 + $0x38] sm:$0xff]
  %v47 = vld [vmem:[#allocation2 + $0x40] sm:$0xff]
  %v48 = vld [vmem:[#allocation2 + $0x48] sm:$0xff]
  %v49 = vld [vmem:[#allocation2 + $0x50] sm:$0xff]
  %v50 = vld [vmem:[#allocation2 + $0x58] sm:$0xff]
  %v51 = vld [vmem:[#allocation2 + $0x60] sm:$0xff]
  %v52 = vld [vmem:[#allocation2 + $0x68] sm:$0xff]
  %v53 = vld [vmem:[#allocation2 + $0x70] sm:$0xff]
  %v54 = vld [vmem:[#allocation2 + $0x78] sm:$0xff]
  %v55 = vld [vmem:[#allocation2 + $0x80] sm:$0xff]
  %v56 = vld [vmem:[#allocation2 + $0x88] sm:$0xff]
  %v57 = vld [vmem:[#allocation2 + $0x90] sm:$0xff]
  %v58 = vld [vmem:[#allocation2 + $0x98] sm:$0xff]
  %v59 = vld [vmem:[#allocation2 + $0xa0] sm:$0xff]
  %v60 = vld [vmem:[%s0] sm:$0xff]
  %v61 = vld [vmem:[%s0 + $0x8] sm:$0xff]
  %v62 = vld [vmem:[%s0 + $0x10] sm:$0xff]
  %v63 = vld [vmem:[%s0 + $0x18] sm:$0xff]
  %v64 = vld [vmem:[%s0 + $0x20] sm:$0xff]
  %v65 = vld [vmem:[%s0 + $0x28] sm:$0xff]
  %v66 = vld [vmem:[%s0 + $0x30] sm:$0xff]
  %v67 = vld [vmem:[%s0 + $0x38] sm:$0xff]
  %v68 = vld [vmem:[%s0 + $0x40] sm:$0xff]
  %v69 = vld [vmem:[%s0 + $0x48] sm:$0xff]
  %v70 = vld [vmem:[%s0 + $0x50] sm:$0xff]
  %v71 = vld [vmem:[%s0 + $0x58] sm:$0xff]
  %v72 = vld [vmem:[%s0 + $0x60] sm:$0xff]
  %v73 = vld [vmem:[%s0 + $0x68] sm:$0xff]
  %v74 = vld [vmem:[%s0 + $0x70] sm:$0xff]
  %v75 = vld [vmem:[%s0 + $0x78] sm:$0xff]
  %v76 = vld [vmem:[%s0 + $0x80] sm:$0xff]
  %v77 = vld [vmem:[%s0 + $0x88] sm:$0xff]
  %v78 = vld [vmem:[%s0 + $0x90] sm:$0xff]
  %v79 = vld [vmem:[%s0 + $0x98] sm:$0xff]
  %v80 = vld [vmem:[%s0 + $0xa0] sm:$0xff]
  %v81 = vld [vmem:[%s1] sm:$0xff]
  %v82 = vld [vmem:[%s1 + $0x8] sm:$0xff]
  %v83 = vld [vmem:[%s1 + $0x10] sm:$0xff]
  %v84 = vld [vmem:[%s1 + $0x18] sm:$0xff]
  %v85 = vld [vmem:[%s1 + $0x20] sm:$0xff]
  %v86 = vld [vmem:[%s1 + $0x28] sm:$0xff]
  %v87 = vld [vmem:[%s1 + $0x30] sm:$0xff]
  %v88 = vld [vmem:[%s1 + $0x38] sm:$0xff]
  %v89 = vld [vmem:[%s1 + $0x40] sm:$0xff]
  %v90 = vld [vmem:[%s1 + $0x48] sm:$0xff]
  %v91 = vld [vmem:[%s1 + $0x50] sm:$0xff]
  %v92 = vld [vmem:[%s1 + $0x58] sm:$0xff]
  %v93 = vld [vmem:[%s1 + $0x60] sm:$0xff]
  %v94 = vld [vmem:[%s1 + $0x68] sm:$0xff]
  %v95 = vld [vmem:[%s1 + $0x70] sm:$0xff]
  %v96 = vld [vmem:[%s1 + $0x78] sm:$0xff]
  %97 = vmatpush.msra.mxu0 %v96
  %98 = vmatpush.msra.mxu0 %v95
  %99 = vmatpush.msra.mxu0 %v94
  %100 = vmatpush.msra.mxu0 %v93
  %101 = vmatpush.msra.mxu0 %v92
  %102 = vmatpush.msra.mxu0 %v91
  %103 = vmatpush.msra.mxu0 %v90
  %104 = vmatpush.msra.mxu0 %v89
  %105 = vmatpush.msra.mxu0 %v88
  %106 = vmatpush.msra.mxu0 %v87
  %107 = vmatpush.msra.mxu0 %v86
  %108 = vmatpush.msra.mxu0 %v85
  %109 = vmatpush.msra.mxu0 %v84
  %110 = vmatpush.msra.mxu0 %v83
  %111 = vmatpush.msra.mxu0 %v82
  %112 = vmatpush.msra.mxu0 %v81
  %113 = vmatmul.f32.gmra.mxu0 %v60
  %v114 = vpop.f32.mrf.mxu0
  %v115 = vadd.f32 0.0, %v114
  %116 = vmatmul.f32.gmra.mxu0 %v61
  %v117 = vpop.f32.mrf.mxu0
  %v118 = vadd.f32 0.0, %v117
  %119 = vmatmul.f32.gmra.mxu0 %v62
  %v120 = vpop.f32.mrf.mxu0
  %v121 = vadd.f32 0.0, %v120
  %122 = vmatmul.f32.gmra.mxu0 %v63
  %v123 = vpop.f32.mrf.mxu0
  %v124 = vadd.f32 0.0, %v123
  %125 = vmatmul.f32.gmra.mxu0 %v64
  %v126 = vpop.f32.mrf.mxu0
  %v127 = vadd.f32 0.0, %v126
  %128 = vmatmul.f32.gmra.mxu0 %v65
  %v129 = vpop.f32.mrf.mxu0
  %v130 = vadd.f32 0.0, %v129
  %131 = vmatmul.f32.gmra.mxu0 %v66
  %v132 = vpop.f32.mrf.mxu0
  %v133 = vadd.f32 0.0, %v132
  %134 = vmatmul.f32.gmra.mxu0 %v67
  %v135 = vpop.f32.mrf.mxu0
  %v136 = vadd.f32 0.0, %v135
  %137 = vmatmul.f32.gmra.mxu0 %v68
  %v138 = vpop.f32.mrf.mxu0
  %v139 = vadd.f32 0.0, %v138
  %140 = vmatmul.f32.gmra.mxu0 %v69
  %v141 = vpop.f32.mrf.mxu0
  %v142 = vadd.f32 0.0, %v141
  %143 = vmatmul.f32.gmra.mxu0 %v70
  %v144 = vpop.f32.mrf.mxu0
  %v145 = vadd.f32 0.0, %v144
  %146 = vmatmul.f32.gmra.mxu0 %v71
  %v147 = vpop.f32.mrf.mxu0
  %v148 = vadd.f32 0.0, %v147
  %149 = vmatmul.f32.gmra.mxu0 %v72
  %v150 = vpop.f32.mrf.mxu0
  %v151 = vadd.f32 0.0, %v150
  %152 = vmatmul.f32.gmra.mxu0 %v73
  %v153 = vpop.f32.mrf.mxu0
  %v154 = vadd.f32 0.0, %v153
  %155 = vmatmul.f32.gmra.mxu0 %v74
  %v156 = vpop.f32.mrf.mxu0
  %v157 = vadd.f32 0.0, %v156
  %158 = vmatmul.f32.gmra.mxu0 %v75
  %v159 = vpop.f32.mrf.mxu0
  %v160 = vadd.f32 0.0, %v159
  %161 = vmatmul.f32.gmra.mxu0 %v76
  %v162 = vpop.f32.mrf.mxu0
  %v163 = vadd.f32 0.0, %v162
  %164 = vmatmul.f32.gmra.mxu0 %v77
  %v165 = vpop.f32.mrf.mxu0
  %v166 = vadd.f32 0.0, %v165
  %167 = vmatmul.f32.gmra.mxu0 %v78
  %v168 = vpop.f32.mrf.mxu0
  %v169 = vadd.f32 0.0, %v168
  %170 = vmatmul.f32.gmra.mxu0 %v79
  %v171 = vpop.f32.mrf.mxu0
  %v172 = vadd.f32 0.0, %v171
  %173 = vmatmul.f32.gmra.mxu0 %v80
  %v174 = vpop.f32.mrf.mxu0
  %v175 = vadd.f32 0.0, %v174
  %176 = vdwg.mxu0
  %v177 = vadd.f32 %v39, %v115
  %v178 = vadd.f32 %v40, %v118
  %v179 = vadd.f32 %v41, %v121
  %v180 = vadd.f32 %v42, %v124
  %v181 = vadd.f32 %v43, %v127
  %v182 = vadd.f32 %v44, %v130
  %v183 = vadd.f32 %v45, %v133
  %v184 = vadd.f32 %v46, %v136
  %v185 = vadd.f32 %v47, %v139
  %v186 = vadd.f32 %v48, %v142
  %v187 = vadd.f32 %v49, %v145
  %v188 = vadd.f32 %v50, %v148
  %v189 = vadd.f32 %v51, %v151
  %v190 = vadd.f32 %v52, %v154
  %v191 = vadd.f32 %v53, %v157
  %v192 = vadd.f32 %v54, %v160
  %v193 = vadd.f32 %v55, %v163
  %v194 = vadd.f32 %v56, %v166
  %v195 = vadd.f32 %v57, %v169
  %v196 = vadd.f32 %v58, %v172
  %v197 = vadd.f32 %v59, %v175
  %198 = vst [vmem:[#allocation2] sm:$0xff] %v177
  %199 = vst [vmem:[#allocation2 + $0x8] sm:$0xff] %v178
  %200 = vst [vmem:[#allocation2 + $0x10] sm:$0xff] %v179
  %201 = vst [vmem:[#allocation2 + $0x18] sm:$0xff] %v180
  %202 = vst [vmem:[#allocation2 + $0x20] sm:$0xff] %v181
  %203 = vst [vmem:[#allocation2 + $0x28] sm:$0xff] %v182
  %204 = vst [vmem:[#allocation2 + $0x30] sm:$0xff] %v183
  %205 = vst [vmem:[#allocation2 + $0x38] sm:$0xff] %v184
  %206 = vst [vmem:[#allocation2 + $0x40] sm:$0xff] %v185
  %207 = vst [vmem:[#allocation2 + $0x48] sm:$0xff] %v186
  %208 = vst [vmem:[#allocation2 + $0x50] sm:$0xff] %v187
  %209 = vst [vmem:[#allocation2 + $0x58] sm:$0xff] %v188
  %210 = vst [vmem:[#allocation2 + $0x60] sm:$0xff] %v189
  %211 = vst [vmem:[#allocation2 + $0x68] sm:$0xff] %v190
  %212 = vst [vmem:[#allocation2 + $0x70] sm:$0xff] %v191
  %213 = vst [vmem:[#allocation2 + $0x78] sm:$0xff] %v192
  %214 = vst [vmem:[#allocation2 + $0x80] sm:$0xff] %v193
  %215 = vst [vmem:[#allocation2 + $0x88] sm:$0xff] %v194
  %216 = vst [vmem:[#allocation2 + $0x90] sm:$0xff] %v195
  %217 = vst [vmem:[#allocation2 + $0x98] sm:$0xff] %v196
  %218 = vst [vmem:[#allocation2 + $0xa0] sm:$0xff] %v197
  // Predicated region
  $region18: #{generator_forward.37} parent=0 // pred_check
    %p219 = pneg %p14
  $region19: #{generator_forward.37} parent=0 // pred_check_branch
    %221 = sbr.rel (%p219) target = $region21
  $region20: #{generator_forward.37} parent=0 // pred_region
    %v222 = vld [vmem:[#allocation2] sm:$0xff]
    %v223 = vld [vmem:[#allocation2 + $0x8] sm:$0xff]
    %v224 = vld [vmem:[#allocation2 + $0x10] sm:$0xff]
    %v225 = vld [vmem:[#allocation2 + $0x18] sm:$0xff]
    %v226 = vld [vmem:[#allocation2 + $0x20] sm:$0xff]
    %v227 = vld [vmem:[#allocation2 + $0x28] sm:$0xff]
    %v228 = vld [vmem:[#allocation2 + $0x30] sm:$0xff]
    %v229 = vld [vmem:[#allocation2 + $0x38] sm:$0xff]
    %v230 = vld [vmem:[#allocation2 + $0x40] sm:$0xff]
    %v231 = vld [vmem:[#allocation2 + $0x48] sm:$0xff]
    %v232 = vld [vmem:[#allocation2 + $0x50] sm:$0xff]
    %v233 = vld [vmem:[#allocation2 + $0x58] sm:$0xff]
    %v234 = vld [vmem:[#allocation2 + $0x60] sm:$0xff]
    %v235 = vld [vmem:[#allocation2 + $0x68] sm:$0xff]
    %v236 = vld [vmem:[#allocation2 + $0x70] sm:$0xff]
    %v237 = vld [vmem:[#allocation2 + $0x78] sm:$0xff]
    %v238 = vld [vmem:[#allocation2 + $0x80] sm:$0xff]
    %v239 = vld [vmem:[#allocation2 + $0x88] sm:$0xff]
    %v240 = vld [vmem:[#allocation2 + $0x90] sm:$0xff]
    %v241 = vld [vmem:[#allocation2 + $0x98] sm:$0xff]
    %v242 = vld [vmem:[#allocation2 + $0xa0] sm:$0xff]
    %v243 = vld [vmem:[%s2] sm:$0x1]
    %v245 = vperm.slane %v243, 0
    %v247 = vadd.f32 %v222, %v245
    %v248 = vadd.f32 %v223, %v245
    %v249 = vadd.f32 %v224, %v245
    %v250 = vadd.f32 %v225, %v245
    %v251 = vadd.f32 %v226, %v245
    %v252 = vadd.f32 %v227, %v245
    %v253 = vadd.f32 %v228, %v245
    %v254 = vadd.f32 %v229, %v245
    %v255 = vadd.f32 %v230, %v245
    %v256 = vadd.f32 %v231, %v245
    %v257 = vadd.f32 %v232, %v245
    %v258 = vadd.f32 %v233, %v245
    %v259 = vadd.f32 %v234, %v245
    %v260 = vadd.f32 %v235, %v245
    %v261 = vadd.f32 %v236, %v245
    %v262 = vadd.f32 %v237, %v245
    %v263 = vadd.f32 %v238, %v245
    %v264 = vadd.f32 %v239, %v245
    %v265 = vadd.f32 %v240, %v245
    %v266 = vadd.f32 %v241, %v245
    %v267 = vadd.f32 %v242, %v245
    %vm268 = vcmp.gt.f32.partialorder %v247, 0.0
    %vm269 = vcmp.gt.f32.partialorder %v248, 0.0
    %vm270 = vcmp.gt.f32.partialorder %v249, 0.0
    %vm271 = vcmp.gt.f32.partialorder %v250, 0.0
    %vm272 = vcmp.gt.f32.partialorder %v251, 0.0
    %vm273 = vcmp.gt.f32.partialorder %v252, 0.0
    %vm274 = vcmp.gt.f32.partialorder %v253, 0.0
    %vm275 = vcmp.gt.f32.partialorder %v254, 0.0
    %vm276 = vcmp.gt.f32.partialorder %v255, 0.0
    %vm277 = vcmp.gt.f32.partialorder %v256, 0.0
    %vm278 = vcmp.gt.f32.partialorder %v257, 0.0
    %vm279 = vcmp.gt.f32.partialorder %v258, 0.0
    %vm280 = vcmp.gt.f32.partialorder %v259, 0.0
    %vm281 = vcmp.gt.f32.partialorder %v260, 0.0
    %vm282 = vcmp.gt.f32.partialorder %v261, 0.0
    %vm283 = vcmp.gt.f32.partialorder %v262, 0.0
    %vm284 = vcmp.gt.f32.partialorder %v263, 0.0
    %vm285 = vcmp.gt.f32.partialorder %v264, 0.0
    %vm286 = vcmp.gt.f32.partialorder %v265, 0.0
    %vm287 = vcmp.gt.f32.partialorder %v266, 0.0
    %vm288 = vcmp.gt.f32.partialorder %v267, 0.0
    %v289 = vmul.f32 %v247, 0.01
    %v290 = vmul.f32 %v248, 0.01
    %v291 = vmul.f32 %v249, 0.01
    %v292 = vmul.f32 %v250, 0.01
    %v293 = vmul.f32 %v251, 0.01
    %v294 = vmul.f32 %v252, 0.01
    %v295 = vmul.f32 %v253, 0.01
    %v296 = vmul.f32 %v254, 0.01
    %v297 = vmul.f32 %v255, 0.01
    %v298 = vmul.f32 %v256, 0.01
    %v299 = vmul.f32 %v257, 0.01
    %v300 = vmul.f32 %v258, 0.01
    %v301 = vmul.f32 %v259, 0.01
    %v302 = vmul.f32 %v260, 0.01
    %v303 = vmul.f32 %v261, 0.01
    %v304 = vmul.f32 %v262, 0.01
    %v305 = vmul.f32 %v263, 0.01
    %v306 = vmul.f32 %v264, 0.01
    %v307 = vmul.f32 %v265, 0.01
    %v308 = vmul.f32 %v266, 0.01
    %v309 = vmul.f32 %v267, 0.01
    %v310 = vsel %vm268, %v247, %v289
    %v311 = vsel %vm269, %v248, %v290
    %v312 = vsel %vm270, %v249, %v291
    %v313 = vsel %vm271, %v250, %v292
    %v314 = vsel %vm272, %v251, %v293
    %v315 = vsel %vm273, %v252, %v294
    %v316 = vsel %vm274, %v253, %v295
    %v317 = vsel %vm275, %v254, %v296
    %v318 = vsel %vm276, %v255, %v297
    %v319 = vsel %vm277, %v256, %v298
    %v320 = vsel %vm278, %v257, %v299
    %v321 = vsel %vm279, %v258, %v300
    %v322 = vsel %vm280, %v259, %v301
    %v323 = vsel %vm281, %v260, %v302
    %v324 = vsel %vm282, %v261, %v303
    %v325 = vsel %vm283, %v262, %v304
    %v326 = vsel %vm284, %v263, %v305
    %v327 = vsel %vm285, %v264, %v306
    %v328 = vsel %vm286, %v265, %v307
    %v329 = vsel %vm287, %v266, %v308
    %v330 = vsel %vm288, %v267, %v309
    %331 = vst [vmem:[%s3] sm:$0xff] %v310
    %332 = vst [vmem:[%s3 + $0x8] sm:$0xff] %v311
    %333 = vst [vmem:[%s3 + $0x10] sm:$0xff] %v312
    %334 = vst [vmem:[%s3 + $0x18] sm:$0xff] %v313
    %335 = vst [vmem:[%s3 + $0x20] sm:$0xff] %v314
    %336 = vst [vmem:[%s3 + $0x28] sm:$0xff] %v315
    %337 = vst [vmem:[%s3 + $0x30] sm:$0xff] %v316
    %338 = vst [vmem:[%s3 + $0x38] sm:$0xff] %v317
    %339 = vst [vmem:[%s3 + $0x40] sm:$0xff] %v318
    %340 = vst [vmem:[%s3 + $0x48] sm:$0xff] %v319
    %341 = vst [vmem:[%s3 + $0x50] sm:$0xff] %v320
    %342 = vst [vmem:[%s3 + $0x58] sm:$0xff] %v321
    %343 = vst [vmem:[%s3 + $0x60] sm:$0xff] %v322
    %344 = vst [vmem:[%s3 + $0x68] sm:$0xff] %v323
    %345 = vst [vmem:[%s3 + $0x70] sm:$0xff] %v324
    %346 = vst [vmem:[%s3 + $0x78] sm:$0xff] %v325
    %347 = vst [vmem:[%s3 + $0x80] sm:$0xff] %v326
    %348 = vst [vmem:[%s3 + $0x88] sm:$0xff] %v327
    %349 = vst [vmem:[%s3 + $0x90] sm:$0xff] %v328
    %350 = vst [vmem:[%s3 + $0x98] sm:$0xff] %v329
    %351 = vst [vmem:[%s3 + $0xa0] sm:$0xff] %v330
  $region21: #{generator_forward.37} parent=0 // pred_fallthru
    _
  // Predicated region
  $region22: #{generator_forward.37} parent=0 // pred_check
    _
  $region23: #{generator_forward.37} parent=0 // pred_check_branch
    %353 = sbr.rel (0) target = $region25
  $region24: #{generator_forward.37} parent=0 // pred_region
    _
  $region25: #{generator_forward.37} parent=0 // pred_fallthru
    _
  // Predicated region
  $region26: #{generator_forward.37} parent=0 // pred_check
    _
  $region27: #{generator_forward.37} parent=0 // pred_check_branch
    %355 = sbr.rel (0) target = $region29
  $region28: #{generator_forward.37} parent=0 // pred_region
    _
  $region29: #{generator_forward.37} parent=0 // pred_fallthru
    _

// kernel: generator_forward.39
$region0: #{generator_forward.39}
  #allocation0 [shape = 'u32[]', space=smem, size = 0x4, offset = 0x4, fixed_abs, tag = 'smem constant byte address 0x4 - core index']
  #allocation1 [shape = 'u32[72,128]{1,0:T(1,128)}', space=vmem, size = 0x9000, scoped, tag = 'internal scratch']
  %s0 = inlined_call_operand.vmem [shape: f32[512,128], index: 0, kind: input, shape index: {}]
  %s1 = inlined_call_operand.vmem [shape: f32[1,128], index: 1, kind: input, shape index: {}]
  %s2 = inlined_call_operand.vmem [shape: f32[1,128], index: 2, kind: input, shape index: {}]
  %s3 = inlined_call_operand.vmem [shape: f32[512,128], index: 3, kind: output, shape index: {}]
  %s4 = sld [smem:[#allocation0]]
  $region22: #{generator_forward.39} parent=0
    _
  %s6 = ssub.s32 1, %s4
  %s7 = scalar_select 0, %s6, %s4
  // Predicated region
  $region2: #{generator_forward.39} parent=0 // pred_check
    _
  $region3: #{generator_forward.39} parent=0 // pred_check_branch
    %9 = sbr.rel (0) target = $region5
  $region4: #{generator_forward.39} parent=0 // pred_region
    _
  $region5: #{generator_forward.39} parent=0 // pred_fallthru
    _
  // Predicated region
  $region6: #{generator_forward.39} parent=0 // pred_check
    _
  $region7: #{generator_forward.39} parent=0 // pred_check_branch
    %11 = sbr.rel (0) target = $region9
  $region8: #{generator_forward.39} parent=0 // pred_region
    _
  $region9: #{generator_forward.39} parent=0 // pred_fallthru
    _
  // Predicated region
  $region10: #{generator_forward.39} parent=0 // pred_check
    _
  $region11: #{generator_forward.39} parent=0 // pred_check_branch
    %13 = sbr.rel (0) target = $region13
  $region12: #{generator_forward.39} parent=0 // pred_region
    _
  $region13: #{generator_forward.39} parent=0 // pred_fallthru
    _
  %v14 = vld [vmem:[%s0] sm:$0xff]
  %v15 = vld [vmem:[%s0 + $0x8] sm:$0xff]
  %v16 = vld [vmem:[%s0 + $0x10] sm:$0xff]
  %v17 = vld [vmem:[%s0 + $0x18] sm:$0xff]
  %v18 = vld [vmem:[%s0 + $0x20] sm:$0xff]
  %v19 = vld [vmem:[%s0 + $0x28] sm:$0xff]
  %v20 = vld [vmem:[%s0 + $0x30] sm:$0xff]
  %v21 = vld [vmem:[%s0 + $0x38] sm:$0xff]
  %v22 = vld [vmem:[%s0 + $0x40] sm:$0xff]
  %v23 = vld [vmem:[%s0 + $0x48] sm:$0xff]
  %v24 = vld [vmem:[%s0 + $0x50] sm:$0xff]
  %v25 = vld [vmem:[%s0 + $0x58] sm:$0xff]
  %v26 = vld [vmem:[%s0 + $0x60] sm:$0xff]
  %v27 = vld [vmem:[%s0 + $0x68] sm:$0xff]
  %v28 = vld [vmem:[%s0 + $0x70] sm:$0xff]
  %v29 = vld [vmem:[%s0 + $0x78] sm:$0xff]
  %v30 = vld [vmem:[%s0 + $0x80] sm:$0xff]
  %v31 = vld [vmem:[%s0 + $0x88] sm:$0xff]
  %v32 = vld [vmem:[%s0 + $0x90] sm:$0xff]
  %v33 = vld [vmem:[%s0 + $0x98] sm:$0xff]
  %v34 = vld [vmem:[%s0 + $0xa0] sm:$0xff]
  %v35 = vld [vmem:[%s0 + $0xa8] sm:$0xff]
  %v36 = vld [vmem:[%s0 + $0xb0] sm:$0xff]
  %v37 = vld [vmem:[%s0 + $0xb8] sm:$0xff]
  %v38 = vld [vmem:[%s0 + $0xc0] sm:$0xff]
  %v39 = vld [vmem:[%s0 + $0xc8] sm:$0xff]
  %v40 = vld [vmem:[%s0 + $0xd0] sm:$0xff]
  %v41 = vld [vmem:[%s0 + $0xd8] sm:$0xff]
  %v42 = vld [vmem:[%s0 + $0xe0] sm:$0xff]
  %v43 = vld [vmem:[%s0 + $0xe8] sm:$0xff]
  %v44 = vld [vmem:[%s0 + $0xf0] sm:$0xff]
  %v45 = vld [vmem:[%s0 + $0xf8] sm:$0xff]
  %v46 = vld [vmem:[%s0 + $0x100] sm:$0xff]
  %v47 = vld [vmem:[%s0 + $0x108] sm:$0xff]
  %v48 = vld [vmem:[%s0 + $0x110] sm:$0xff]
  %v49 = vld [vmem:[%s0 + $0x118] sm:$0xff]
  %v50 = vld [vmem:[%s0 + $0x120] sm:$0xff]
  %v51 = vld [vmem:[%s0 + $0x128] sm:$0xff]
  %v52 = vld [vmem:[%s0 + $0x130] sm:$0xff]
  %v53 = vld [vmem:[%s0 + $0x138] sm:$0xff]
  %v54 = vld [vmem:[%s0 + $0x140] sm:$0xff]
  %v55 = vld [vmem:[%s0 + $0x148] sm:$0xff]
  %v56 = vld [vmem:[%s0 + $0x150] sm:$0xff]
  %v57 = vld [vmem:[%s0 + $0x158] sm:$0xff]
  %v58 = vld [vmem:[%s0 + $0x160] sm:$0xff]
  %v59 = vld [vmem:[%s0 + $0x168] sm:$0xff]
  %v60 = vld [vmem:[%s0 + $0x170] sm:$0xff]
  %v61 = vld [vmem:[%s0 + $0x178] sm:$0xff]
  %v62 = vld [vmem:[%s0 + $0x180] sm:$0xff]
  %v63 = vld [vmem:[%s0 + $0x188] sm:$0xff]
  %v64 = vld [vmem:[%s0 + $0x190] sm:$0xff]
  %v65 = vld [vmem:[%s0 + $0x198] sm:$0xff]
  %v66 = vld [vmem:[%s0 + $0x1a0] sm:$0xff]
  %v67 = vld [vmem:[%s0 + $0x1a8] sm:$0xff]
  %v68 = vld [vmem:[%s0 + $0x1b0] sm:$0xff]
  %v69 = vld [vmem:[%s0 + $0x1b8] sm:$0xff]
  %v70 = vld [vmem:[%s0 + $0x1c0] sm:$0xff]
  %v71 = vld [vmem:[%s0 + $0x1c8] sm:$0xff]
  %v72 = vld [vmem:[%s0 + $0x1d0] sm:$0xff]
  %v73 = vld [vmem:[%s0 + $0x1d8] sm:$0xff]
  %v74 = vld [vmem:[%s0 + $0x1e0] sm:$0xff]
  %v75 = vld [vmem:[%s0 + $0x1e8] sm:$0xff]
  %v76 = vld [vmem:[%s0 + $0x1f0] sm:$0xff]
  %v77 = vld [vmem:[%s0 + $0x1f8] sm:$0xff]
  %v78 = vld [vmem:[%s1] sm:$0x1]
  %v80 = vperm.slane %v78, 0
  %v82 = vmul.f32 %v14, %v80
  %v83 = vmul.f32 %v15, %v80
  %v84 = vmul.f32 %v16, %v80
  %v85 = vmul.f32 %v17, %v80
  %v86 = vmul.f32 %v18, %v80
  %v87 = vmul.f32 %v19, %v80
  %v88 = vmul.f32 %v20, %v80
  %v89 = vmul.f32 %v21, %v80
  %v90 = vmul.f32 %v22, %v80
  %v91 = vmul.f32 %v23, %v80
  %v92 = vmul.f32 %v24, %v80
  %v93 = vmul.f32 %v25, %v80
  %v94 = vmul.f32 %v26, %v80
  %v95 = vmul.f32 %v27, %v80
  %v96 = vmul.f32 %v28, %v80
  %v97 = vmul.f32 %v29, %v80
  %v98 = vmul.f32 %v30, %v80
  %v99 = vmul.f32 %v31, %v80
  %v100 = vmul.f32 %v32, %v80
  %v101 = vmul.f32 %v33, %v80
  %v102 = vmul.f32 %v34, %v80
  %v103 = vmul.f32 %v35, %v80
  %v104 = vmul.f32 %v36, %v80
  %v105 = vmul.f32 %v37, %v80
  %v106 = vmul.f32 %v38, %v80
  %v107 = vmul.f32 %v39, %v80
  %v108 = vmul.f32 %v40, %v80
  %v109 = vmul.f32 %v41, %v80
  %v110 = vmul.f32 %v42, %v80
  %v111 = vmul.f32 %v43, %v80
  %v112 = vmul.f32 %v44, %v80
  %v113 = vmul.f32 %v45, %v80
  %v114 = vmul.f32 %v46, %v80
  %v115 = vmul.f32 %v47, %v80
  %v116 = vmul.f32 %v48, %v80
  %v117 = vmul.f32 %v49, %v80
  %v118 = vmul.f32 %v50, %v80
  %v119 = vmul.f32 %v51, %v80
  %v120 = vmul.f32 %v52, %v80
  %v121 = vmul.f32 %v53, %v80
  %v122 = vmul.f32 %v54, %v80
  %v123 = vmul.f32 %v55, %v80
  %v124 = vmul.f32 %v56, %v80
  %v125 = vmul.f32 %v57, %v80
  %v126 = vmul.f32 %v58, %v80
  %v127 = vmul.f32 %v59, %v80
  %v128 = vmul.f32 %v60, %v80
  %v129 = vmul.f32 %v61, %v80
  %v130 = vmul.f32 %v62, %v80
  %v131 = vmul.f32 %v63, %v80
  %v132 = vmul.f32 %v64, %v80
  %v133 = vmul.f32 %v65, %v80
  %v134 = vmul.f32 %v66, %v80
  %v135 = vmul.f32 %v67, %v80
  %v136 = vmul.f32 %v68, %v80
  %v137 = vmul.f32 %v69, %v80
  %v138 = vmul.f32 %v70, %v80
  %v139 = vmul.f32 %v71, %v80
  %v140 = vmul.f32 %v72, %v80
  %v141 = vmul.f32 %v73, %v80
  %v142 = vmul.f32 %v74, %v80
  %v143 = vmul.f32 %v75, %v80
  %v144 = vmul.f32 %v76, %v80
  %v145 = vmul.f32 %v77, %v80
  %v146 = vld [vmem:[%s2] sm:$0x1]
  %v148 = vperm.slane %v146, 0
  %v150 = vadd.f32 %v82, %v148
  %v151 = vadd.f32 %v83, %v148
  %v152 = vadd.f32 %v84, %v148
  %v153 = vadd.f32 %v85, %v148
  %v154 = vadd.f32 %v86, %v148
  %v155 = vadd.f32 %v87, %v148
  %v156 = vadd.f32 %v88, %v148
  %v157 = vadd.f32 %v89, %v148
  %v158 = vadd.f32 %v90, %v148
  %v159 = vadd.f32 %v91, %v148
  %v160 = vadd.f32 %v92, %v148
  %v161 = vadd.f32 %v93, %v148
  %v162 = vadd.f32 %v94, %v148
  %v163 = vadd.f32 %v95, %v148
  %v164 = vadd.f32 %v96, %v148
  %v165 = vadd.f32 %v97, %v148
  %v166 = vadd.f32 %v98, %v148
  %v167 = vadd.f32 %v99, %v148
  %v168 = vadd.f32 %v100, %v148
  %v169 = vadd.f32 %v101, %v148
  %v170 = vadd.f32 %v102, %v148
  %v171 = vadd.f32 %v103, %v148
  %v172 = vadd.f32 %v104, %v148
  %v173 = vadd.f32 %v105, %v148
  %v174 = vadd.f32 %v106, %v148
  %v175 = vadd.f32 %v107, %v148
  %v176 = vadd.f32 %v108, %v148
  %v177 = vadd.f32 %v109, %v148
  %v178 = vadd.f32 %v110, %v148
  %v179 = vadd.f32 %v111, %v148
  %v180 = vadd.f32 %v112, %v148
  %v181 = vadd.f32 %v113, %v148
  %v182 = vadd.f32 %v114, %v148
  %v183 = vadd.f32 %v115, %v148
  %v184 = vadd.f32 %v116, %v148
  %v185 = vadd.f32 %v117, %v148
  %v186 = vadd.f32 %v118, %v148
  %v187 = vadd.f32 %v119, %v148
  %v188 = vadd.f32 %v120, %v148
  %v189 = vadd.f32 %v121, %v148
  %v190 = vadd.f32 %v122, %v148
  %v191 = vadd.f32 %v123, %v148
  %v192 = vadd.f32 %v124, %v148
  %v193 = vadd.f32 %v125, %v148
  %v194 = vadd.f32 %v126, %v148
  %v195 = vadd.f32 %v127, %v148
  %v196 = vadd.f32 %v128, %v148
  %v197 = vadd.f32 %v129, %v148
  %v198 = vadd.f32 %v130, %v148
  %v199 = vadd.f32 %v131, %v148
  %v200 = vadd.f32 %v132, %v148
  %v201 = vadd.f32 %v133, %v148
  %v202 = vadd.f32 %v134, %v148
  %v203 = vadd.f32 %v135, %v148
  %v204 = vadd.f32 %v136, %v148
  %v205 = vadd.f32 %v137, %v148
  %v206 = vadd.f32 %v138, %v148
  %v207 = vadd.f32 %v139, %v148
  %v208 = vadd.f32 %v140, %v148
  %v209 = vadd.f32 %v141, %v148
  %v210 = vadd.f32 %v142, %v148
  %v211 = vadd.f32 %v143, %v148
  %v212 = vadd.f32 %v144, %v148
  %v213 = vadd.f32 %v145, %v148
  %214 = vst [vmem:[%s3] sm:$0xff] %v150
  %215 = vst [vmem:[%s3 + $0x8] sm:$0xff] %v151
  %216 = vst [vmem:[%s3 + $0x10] sm:$0xff] %v152
  %217 = vst [vmem:[%s3 + $0x18] sm:$0xff] %v153
  %218 = vst [vmem:[%s3 + $0x20] sm:$0xff] %v154
  %219 = vst [vmem:[%s3 + $0x28] sm:$0xff] %v155
  %220 = vst [vmem:[%s3 + $0x30] sm:$0xff] %v156
  %221 = vst [vmem:[%s3 + $0x38] sm:$0xff] %v157
  %222 = vst [vmem:[%s3 + $0x40] sm:$0xff] %v158
  %223 = vst [vmem:[%s3 + $0x48] sm:$0xff] %v159
  %224 = vst [vmem:[%s3 + $0x50] sm:$0xff] %v160
  %225 = vst [vmem:[%s3 + $0x58] sm:$0xff] %v161
  %226 = vst [vmem:[%s3 + $0x60] sm:$0xff] %v162
  %227 = vst [vmem:[%s3 + $0x68] sm:$0xff] %v163
  %228 = vst [vmem:[%s3 + $0x70] sm:$0xff] %v164
  %229 = vst [vmem:[%s3 + $0x78] sm:$0xff] %v165
  %230 = vst [vmem:[%s3 + $0x80] sm:$0xff] %v166
  %231 = vst [vmem:[%s3 + $0x88] sm:$0xff] %v167
  %232 = vst [vmem:[%s3 + $0x90] sm:$0xff] %v168
  %233 = vst [vmem:[%s3 + $0x98] sm:$0xff] %v169
  %234 = vst [vmem:[%s3 + $0xa0] sm:$0xff] %v170
  %235 = vst [vmem:[%s3 + $0xa8] sm:$0xff] %v171
  %236 = vst [vmem:[%s3 + $0xb0] sm:$0xff] %v172
  %237 = vst [vmem:[%s3 + $0xb8] sm:$0xff] %v173
  %238 = vst [vmem:[%s3 + $0xc0] sm:$0xff] %v174
  %239 = vst [vmem:[%s3 + $0xc8] sm:$0xff] %v175
  %240 = vst [vmem:[%s3 + $0xd0] sm:$0xff] %v176
  %241 = vst [vmem:[%s3 + $0xd8] sm:$0xff] %v177
  %242 = vst [vmem:[%s3 + $0xe0] sm:$0xff] %v178
  %243 = vst [vmem:[%s3 + $0xe8] sm:$0xff] %v179
  %244 = vst [vmem:[%s3 + $0xf0] sm:$0xff] %v180
  %245 = vst [vmem:[%s3 + $0xf8] sm:$0xff] %v181
  %246 = vst [vmem:[%s3 + $0x100] sm:$0xff] %v182
  %247 = vst [vmem:[%s3 + $0x108] sm:$0xff] %v183
  %248 = vst [vmem:[%s3 + $0x110] sm:$0xff] %v184
  %249 = vst [vmem:[%s3 + $0x118] sm:$0xff] %v185
  %250 = vst [vmem:[%s3 + $0x120] sm:$0xff] %v186
  %251 = vst [vmem:[%s3 + $0x128] sm:$0xff] %v187
  %252 = vst [vmem:[%s3 + $0x130] sm:$0xff] %v188
  %253 = vst [vmem:[%s3 + $0x138] sm:$0xff] %v189
  %254 = vst [vmem:[%s3 + $0x140] sm:$0xff] %v190
  %255 = vst [vmem:[%s3 + $0x148] sm:$0xff] %v191
  %256 = vst [vmem:[%s3 + $0x150] sm:$0xff] %v192
  %257 = vst [vmem:[%s3 + $0x158] sm:$0xff] %v193
  %258 = vst [vmem:[%s3 + $0x160] sm:$0xff] %v194
  %259 = vst [vmem:[%s3 + $0x168] sm:$0xff] %v195
  %260 = vst [vmem:[%s3 + $0x170] sm:$0xff] %v196
  %261 = vst [vmem:[%s3 + $0x178] sm:$0xff] %v197
  %262 = vst [vmem:[%s3 + $0x180] sm:$0xff] %v198
  %263 = vst [vmem:[%s3 + $0x188] sm:$0xff] %v199
  %264 = vst [vmem:[%s3 + $0x190] sm:$0xff] %v200
  %265 = vst [vmem:[%s3 + $0x198] sm:$0xff] %v201
  %266 = vst [vmem:[%s3 + $0x1a0] sm:$0xff] %v202
  %267 = vst [vmem:[%s3 + $0x1a8] sm:$0xff] %v203
  %268 = vst [vmem:[%s3 + $0x1b0] sm:$0xff] %v204
  %269 = vst [vmem:[%s3 + $0x1b8] sm:$0xff] %v205
  %270 = vst [vmem:[%s3 + $0x1c0] sm:$0xff] %v206
  %271 = vst [vmem:[%s3 + $0x1c8] sm:$0xff] %v207
  %272 = vst [vmem:[%s3 + $0x1d0] sm:$0xff] %v208
  %273 = vst [vmem:[%s3 + $0x1d8] sm:$0xff] %v209
  %274 = vst [vmem:[%s3 + $0x1e0] sm:$0xff] %v210
  %275 = vst [vmem:[%s3 + $0x1e8] sm:$0xff] %v211
  %276 = vst [vmem:[%s3 + $0x1f0] sm:$0xff] %v212
  %277 = vst [vmem:[%s3 + $0x1f8] sm:$0xff] %v213
  // Predicated region
  $region14: #{generator_forward.39} parent=0 // pred_check
    _
  $region15: #{generator_forward.39} parent=0 // pred_check_branch
    %279 = sbr.rel (0) target = $region17
  $region16: #{generator_forward.39} parent=0 // pred_region
    _
  $region17: #{generator_forward.39} parent=0 // pred_fallthru
    _
  // Predicated region
  $region18: #{generator_forward.39} parent=0 // pred_check
    _
  $region19: #{generator_forward.39} parent=0 // pred_check_branch
    %281 = sbr.rel (0) target = $region21
  $region20: #{generator_forward.39} parent=0 // pred_region
    _
  $region21: #{generator_forward.39} parent=0 // pred_fallthru
    _

// kernel: generator_forward.38
$region0: #{generator_forward.38}
  #allocation0 [shape = 'u32[]', space=smem, size = 0x4, offset = 0x4, fixed_abs, tag = 'smem constant byte address 0x4 - core index']
  #allocation1 [shape = 'u32[72,128]{1,0:T(1,128)}', space=vmem, size = 0x9000, scoped, tag = 'internal scratch']
  %s0 = inlined_call_operand.vmem [shape: f32[512,128], index: 0, kind: input, shape index: {}]
  %s1 = inlined_call_operand.vmem [shape: f32[1,128], index: 1, kind: output, shape index: {0}]
  %s2 = inlined_call_operand.vmem [shape: f32[1,128], index: 2, kind: output, shape index: {1}]
  %3 = xla_tuple %s1, %s2
  %s4 = sld [smem:[#allocation0]]
  $region26: #{generator_forward.38} parent=0
    _
  %s6 = ssub.s32 1, %s4
  %s7 = scalar_select 0, %s6, %s4
  // Predicated region
  $region2: #{generator_forward.38} parent=0 // pred_check
    _
  $region3: #{generator_forward.38} parent=0 // pred_check_branch
    %9 = sbr.rel (0) target = $region5
  $region4: #{generator_forward.38} parent=0 // pred_region
    _
  $region5: #{generator_forward.38} parent=0 // pred_fallthru
    _
  %p10 = scmp.eq.s32.totalorder 0, 0
  // Predicated region
  $region6: #{generator_forward.38} parent=0 // pred_check
    %p11 = pneg %p10
  $region7: #{generator_forward.38} parent=0 // pred_check_branch
    %13 = sbr.rel (%p11) target = $region9
  $region8: #{generator_forward.38} parent=0 // pred_region
    %14 = vst [vmem:[%s1] sm:$0x1] 0.0
    %15 = vst [vmem:[%s2] sm:$0x1] 0.0
  $region9: #{generator_forward.38} parent=0 // pred_fallthru
    _
  %v16 = vld [vmem:[%s0] sm:$0xff]
  %v17 = vld [vmem:[%s0 + $0x8] sm:$0xff]
  %v18 = vld [vmem:[%s0 + $0x10] sm:$0xff]
  %v19 = vld [vmem:[%s0 + $0x18] sm:$0xff]
  %v20 = vld [vmem:[%s0 + $0x20] sm:$0xff]
  %v21 = vld [vmem:[%s0 + $0x28] sm:$0xff]
  %v22 = vld [vmem:[%s0 + $0x30] sm:$0xff]
  %v23 = vld [vmem:[%s0 + $0x38] sm:$0xff]
  %v24 = vld [vmem:[%s0 + $0x40] sm:$0xff]
  %v25 = vld [vmem:[%s0 + $0x48] sm:$0xff]
  %v26 = vld [vmem:[%s0 + $0x50] sm:$0xff]
  %v27 = vld [vmem:[%s0 + $0x58] sm:$0xff]
  %v28 = vld [vmem:[%s0 + $0x60] sm:$0xff]
  %v29 = vld [vmem:[%s0 + $0x68] sm:$0xff]
  %v30 = vld [vmem:[%s0 + $0x70] sm:$0xff]
  %v31 = vld [vmem:[%s0 + $0x78] sm:$0xff]
  %v32 = vld [vmem:[%s0 + $0x80] sm:$0xff]
  %v33 = vld [vmem:[%s0 + $0x88] sm:$0xff]
  %v34 = vld [vmem:[%s0 + $0x90] sm:$0xff]
  %v35 = vld [vmem:[%s0 + $0x98] sm:$0xff]
  %v36 = vld [vmem:[%s0 + $0xa0] sm:$0xff]
  %v37 = vld [vmem:[%s0 + $0xa8] sm:$0xff]
  %v38 = vld [vmem:[%s0 + $0xb0] sm:$0xff]
  %v39 = vld [vmem:[%s0 + $0xb8] sm:$0xff]
  %v40 = vld [vmem:[%s0 + $0xc0] sm:$0xff]
  %v41 = vld [vmem:[%s0 + $0xc8] sm:$0xff]
  %v42 = vld [vmem:[%s0 + $0xd0] sm:$0xff]
  %v43 = vld [vmem:[%s0 + $0xd8] sm:$0xff]
  %v44 = vld [vmem:[%s0 + $0xe0] sm:$0xff]
  %v45 = vld [vmem:[%s0 + $0xe8] sm:$0xff]
  %v46 = vld [vmem:[%s0 + $0xf0] sm:$0xff]
  %v47 = vld [vmem:[%s0 + $0xf8] sm:$0xff]
  %v48 = vld [vmem:[%s0 + $0x100] sm:$0xff]
  %v49 = vld [vmem:[%s0 + $0x108] sm:$0xff]
  %v50 = vld [vmem:[%s0 + $0x110] sm:$0xff]
  %v51 = vld [vmem:[%s0 + $0x118] sm:$0xff]
  %v52 = vld [vmem:[%s0 + $0x120] sm:$0xff]
  %v53 = vld [vmem:[%s0 + $0x128] sm:$0xff]
  %v54 = vld [vmem:[%s0 + $0x130] sm:$0xff]
  %v55 = vld [vmem:[%s0 + $0x138] sm:$0xff]
  %v56 = vld [vmem:[%s0 + $0x140] sm:$0xff]
  %v57 = vld [vmem:[%s0 + $0x148] sm:$0xff]
  %v58 = vld [vmem:[%s0 + $0x150] sm:$0xff]
  %v59 = vld [vmem:[%s0 + $0x158] sm:$0xff]
  %v60 = vld [vmem:[%s0 + $0x160] sm:$0xff]
  %v61 = vld [vmem:[%s0 + $0x168] sm:$0xff]
  %v62 = vld [vmem:[%s0 + $0x170] sm:$0xff]
  %v63 = vld [vmem:[%s0 + $0x178] sm:$0xff]
  %v64 = vld [vmem:[%s0 + $0x180] sm:$0xff]
  %v65 = vld [vmem:[%s0 + $0x188] sm:$0xff]
  %v66 = vld [vmem:[%s0 + $0x190] sm:$0xff]
  %v67 = vld [vmem:[%s0 + $0x198] sm:$0xff]
  %v68 = vld [vmem:[%s0 + $0x1a0] sm:$0xff]
  %v69 = vld [vmem:[%s0 + $0x1a8] sm:$0xff]
  %v70 = vld [vmem:[%s0 + $0x1b0] sm:$0xff]
  %v71 = vld [vmem:[%s0 + $0x1b8] sm:$0xff]
  %v72 = vld [vmem:[%s0 + $0x1c0] sm:$0xff]
  %v73 = vld [vmem:[%s0 + $0x1c8] sm:$0xff]
  %v74 = vld [vmem:[%s0 + $0x1d0] sm:$0xff]
  %v75 = vld [vmem:[%s0 + $0x1d8] sm:$0xff]
  %v76 = vld [vmem:[%s0 + $0x1e0] sm:$0xff]
  %v77 = vld [vmem:[%s0 + $0x1e8] sm:$0xff]
  %v78 = vld [vmem:[%s0 + $0x1f0] sm:$0xff]
  %v79 = vld [vmem:[%s0 + $0x1f8] sm:$0xff]
  %v80 = vld [vmem:[%s1] sm:$0x1]
  %v81 = vadd.f32 %v16, %v17
  %v82 = vadd.f32 %v81, %v18
  %v83 = vadd.f32 %v82, %v19
  %v84 = vadd.f32 %v83, %v20
  %v85 = vadd.f32 %v84, %v21
  %v86 = vadd.f32 %v85, %v22
  %v87 = vadd.f32 %v86, %v23
  %v88 = vadd.f32 %v87, %v24
  %v89 = vadd.f32 %v88, %v25
  %v90 = vadd.f32 %v89, %v26
  %v91 = vadd.f32 %v90, %v27
  %v92 = vadd.f32 %v91, %v28
  %v93 = vadd.f32 %v92, %v29
  %v94 = vadd.f32 %v93, %v30
  %v95 = vadd.f32 %v94, %v31
  %v96 = vadd.f32 %v95, %v32
  %v97 = vadd.f32 %v96, %v33
  %v98 = vadd.f32 %v97, %v34
  %v99 = vadd.f32 %v98, %v35
  %v100 = vadd.f32 %v99, %v36
  %v101 = vadd.f32 %v100, %v37
  %v102 = vadd.f32 %v101, %v38
  %v103 = vadd.f32 %v102, %v39
  %v104 = vadd.f32 %v103, %v40
  %v105 = vadd.f32 %v104, %v41
  %v106 = vadd.f32 %v105, %v42
  %v107 = vadd.f32 %v106, %v43
  %v108 = vadd.f32 %v107, %v44
  %v109 = vadd.f32 %v108, %v45
  %v110 = vadd.f32 %v109, %v46
  %v111 = vadd.f32 %v110, %v47
  %v112 = vadd.f32 %v111, %v48
  %v113 = vadd.f32 %v112, %v49
  %v114 = vadd.f32 %v113, %v50
  %v115 = vadd.f32 %v114, %v51
  %v116 = vadd.f32 %v115, %v52
  %v117 = vadd.f32 %v116, %v53
  %v118 = vadd.f32 %v117, %v54
  %v119 = vadd.f32 %v118, %v55
  %v120 = vadd.f32 %v119, %v56
  %v121 = vadd.f32 %v120, %v57
  %v122 = vadd.f32 %v121, %v58
  %v123 = vadd.f32 %v122, %v59
  %v124 = vadd.f32 %v123, %v60
  %v125 = vadd.f32 %v124, %v61
  %v126 = vadd.f32 %v125, %v62
  %v127 = vadd.f32 %v126, %v63
  %v128 = vadd.f32 %v127, %v64
  %v129 = vadd.f32 %v128, %v65
  %v130 = vadd.f32 %v129, %v66
  %v131 = vadd.f32 %v130, %v67
  %v132 = vadd.f32 %v131, %v68
  %v133 = vadd.f32 %v132, %v69
  %v134 = vadd.f32 %v133, %v70
  %v135 = vadd.f32 %v134, %v71
  %v136 = vadd.f32 %v135, %v72
  %v137 = vadd.f32 %v136, %v73
  %v138 = vadd.f32 %v137, %v74
  %v139 = vadd.f32 %v138, %v75
  %v140 = vadd.f32 %v139, %v76
  %v141 = vadd.f32 %v140, %v77
  %v142 = vadd.f32 %v141, %v78
  %v143 = vadd.f32 %v142, %v79
  %v144 = vrot.slane %v143, 4
  %v145 = vadd.f32 %v143, %v144
  %v146 = vrot.slane %v145, 2
  %v147 = vadd.f32 %v145, %v146
  %v148 = vrot.slane %v147, 1
  %v149 = vadd.f32 %v147, %v148
  %v150 = vadd.f32 %v80, %v149
  %151 = vst [vmem:[%s1] sm:$0x1] %v150
  %v152 = vld [vmem:[%s2] sm:$0x1]
  %v153 = vmul.f32 %v16, %v16
  %v154 = vmul.f32 %v17, %v17
  %v155 = vmul.f32 %v18, %v18
  %v156 = vmul.f32 %v19, %v19
  %v157 = vmul.f32 %v20, %v20
  %v158 = vmul.f32 %v21, %v21
  %v159 = vmul.f32 %v22, %v22
  %v160 = vmul.f32 %v23, %v23
  %v161 = vmul.f32 %v24, %v24
  %v162 = vmul.f32 %v25, %v25
  %v163 = vmul.f32 %v26, %v26
  %v164 = vmul.f32 %v27, %v27
  %v165 = vmul.f32 %v28, %v28
  %v166 = vmul.f32 %v29, %v29
  %v167 = vmul.f32 %v30, %v30
  %v168 = vmul.f32 %v31, %v31
  %v169 = vmul.f32 %v32, %v32
  %v170 = vmul.f32 %v33, %v33
  %v171 = vmul.f32 %v34, %v34
  %v172 = vmul.f32 %v35, %v35
  %v173 = vmul.f32 %v36, %v36
  %v174 = vmul.f32 %v37, %v37
  %v175 = vmul.f32 %v38, %v38
  %v176 = vmul.f32 %v39, %v39
  %v177 = vmul.f32 %v40, %v40
  %v178 = vmul.f32 %v41, %v41
  %v179 = vmul.f32 %v42, %v42
  %v180 = vmul.f32 %v43, %v43
  %v181 = vmul.f32 %v44, %v44
  %v182 = vmul.f32 %v45, %v45
  %v183 = vmul.f32 %v46, %v46
  %v184 = vmul.f32 %v47, %v47
  %v185 = vmul.f32 %v48, %v48
  %v186 = vmul.f32 %v49, %v49
  %v187 = vmul.f32 %v50, %v50
  %v188 = vmul.f32 %v51, %v51
  %v189 = vmul.f32 %v52, %v52
  %v190 = vmul.f32 %v53, %v53
  %v191 = vmul.f32 %v54, %v54
  %v192 = vmul.f32 %v55, %v55
  %v193 = vmul.f32 %v56, %v56
  %v194 = vmul.f32 %v57, %v57
  %v195 = vmul.f32 %v58, %v58
  %v196 = vmul.f32 %v59, %v59
  %v197 = vmul.f32 %v60, %v60
  %v198 = vmul.f32 %v61, %v61
  %v199 = vmul.f32 %v62, %v62
  %v200 = vmul.f32 %v63, %v63
  %v201 = vmul.f32 %v64, %v64
  %v202 = vmul.f32 %v65, %v65
  %v203 = vmul.f32 %v66, %v66
  %v204 = vmul.f32 %v67, %v67
  %v205 = vmul.f32 %v68, %v68
  %v206 = vmul.f32 %v69, %v69
  %v207 = vmul.f32 %v70, %v70
  %v208 = vmul.f32 %v71, %v71
  %v209 = vmul.f32 %v72, %v72
  %v210 = vmul.f32 %v73, %v73
  %v211 = vmul.f32 %v74, %v74
  %v212 = vmul.f32 %v75, %v75
  %v213 = vmul.f32 %v76, %v76
  %v214 = vmul.f32 %v77, %v77
  %v215 = vmul.f32 %v78, %v78
  %v216 = vmul.f32 %v79, %v79
  %v217 = vadd.f32 %v153, %v154
  %v218 = vadd.f32 %v217, %v155
  %v219 = vadd.f32 %v218, %v156
  %v220 = vadd.f32 %v219, %v157
  %v221 = vadd.f32 %v220, %v158
  %v222 = vadd.f32 %v221, %v159
  %v223 = vadd.f32 %v222, %v160
  %v224 = vadd.f32 %v223, %v161
  %v225 = vadd.f32 %v224, %v162
  %v226 = vadd.f32 %v225, %v163
  %v227 = vadd.f32 %v226, %v164
  %v228 = vadd.f32 %v227, %v165
  %v229 = vadd.f32 %v228, %v166
  %v230 = vadd.f32 %v229, %v167
  %v231 = vadd.f32 %v230, %v168
  %v232 = vadd.f32 %v231, %v169
  %v233 = vadd.f32 %v232, %v170
  %v234 = vadd.f32 %v233, %v171
  %v235 = vadd.f32 %v234, %v172
  %v236 = vadd.f32 %v235, %v173
  %v237 = vadd.f32 %v236, %v174
  %v238 = vadd.f32 %v237, %v175
  %v239 = vadd.f32 %v238, %v176
  %v240 = vadd.f32 %v239, %v177
  %v241 = vadd.f32 %v240, %v178
  %v242 = vadd.f32 %v241, %v179
  %v243 = vadd.f32 %v242, %v180
  %v244 = vadd.f32 %v243, %v181
  %v245 = vadd.f32 %v244, %v182
  %v246 = vadd.f32 %v245, %v183
  %v247 = vadd.f32 %v246, %v184
  %v248 = vadd.f32 %v247, %v185
  %v249 = vadd.f32 %v248, %v186
  %v250 = vadd.f32 %v249, %v187
  %v251 = vadd.f32 %v250, %v188
  %v252 = vadd.f32 %v251, %v189
  %v253 = vadd.f32 %v252, %v190
  %v254 = vadd.f32 %v253, %v191
  %v255 = vadd.f32 %v254, %v192
  %v256 = vadd.f32 %v255, %v193
  %v257 = vadd.f32 %v256, %v194
  %v258 = vadd.f32 %v257, %v195
  %v259 = vadd.f32 %v258, %v196
  %v260 = vadd.f32 %v259, %v197
  %v261 = vadd.f32 %v260, %v198
  %v262 = vadd.f32 %v261, %v199
  %v263 = vadd.f32 %v262, %v200
  %v264 = vadd.f32 %v263, %v201
  %v265 = vadd.f32 %v264, %v202
  %v266 = vadd.f32 %v265, %v203
  %v267 = vadd.f32 %v266, %v204
  %v268 = vadd.f32 %v267, %v205
  %v269 = vadd.f32 %v268, %v206
  %v270 = vadd.f32 %v269, %v207
  %v271 = vadd.f32 %v270, %v208
  %v272 = vadd.f32 %v271, %v209
  %v273 = vadd.f32 %v272, %v210
  %v274 = vadd.f32 %v273, %v211
  %v275 = vadd.f32 %v274, %v212
  %v276 = vadd.f32 %v275, %v213
  %v277 = vadd.f32 %v276, %v214
  %v278 = vadd.f32 %v277, %v215
  %v279 = vadd.f32 %v278, %v216
  %v280 = vrot.slane %v279, 4
  %v281 = vadd.f32 %v279, %v280
  %v282 = vrot.slane %v281, 2
  %v283 = vadd.f32 %v281, %v282
  %v284 = vrot.slane %v283, 1
  %v285 = vadd.f32 %v283, %v284
  %v286 = vadd.f32 %v152, %v285
  %287 = vst [vmem:[%s2] sm:$0x1] %v286
  // Predicated region
  $region10: #{generator_forward.38} parent=0 // pred_check
    _
  $region11: #{generator_forward.38} parent=0 // pred_check_branch
    %289 = sbr.rel (0) target = $region13
  $region12: #{generator_forward.38} parent=0 // pred_region
    _
  $region13: #{generator_forward.38} parent=0 // pred_fallthru
    _
  // Predicated region
  $region14: #{generator_forward.38} parent=0 // pred_check
    _
  $region15: #{generator_forward.38} parent=0 // pred_check_branch
    %291 = sbr.rel (0) target = $region17
  $region16: #{generator_forward.38} parent=0 // pred_region
    _
  $region17: #{generator_forward.38} parent=0 // pred_fallthru
    _
  // Predicated region
  $region18: #{generator_forward.38} parent=0 // pred_check
    _
  $region19: #{generator_forward.38} parent=0 // pred_check_branch
    %293 = sbr.rel (0) target = $region21
  $region20: #{generator_forward.38} parent=0 // pred_region
    _
  $region21: #{generator_forward.38} parent=0 // pred_fallthru
    _
  // Predicated region
  $region22: #{generator_forward.38} parent=0 // pred_check
    _
  $region23: #{generator_forward.38} parent=0 // pred_check_branch
    %295 = sbr.rel (0) target = $region25
  $region24: #{generator_forward.38} parent=0 // pred_region
    _
  $region25: #{generator_forward.38} parent=0 // pred_fallthru
    _

// kernel: generator_forward.40
$region0: #{generator_forward.40}
  #allocation0 [shape = 'u32[]', space=smem, size = 0x4, offset = 0x4, fixed_abs, tag = 'smem constant byte address 0x4 - core index']
  #allocation1 [shape = 'u32[72,128]{1,0:T(1,128)}', space=vmem, size = 0x9000, scoped, tag = 'internal scratch']
  #allocation2 [shape = 'f32[128,128]{1,0:T(8,128)}', space=vmem, size = 0x10000, scoped, tag = 'scratch operand']
  %s0 = inlined_call_operand.vmem [shape: f32[640,128], index: 0, kind: input, shape index: {}]
  %s1 = inlined_call_operand.vmem [shape: f32[128,128], index: 1, kind: input, shape index: {}]
  %s2 = inlined_call_operand.vmem [shape: f32[1,128], index: 2, kind: input, shape index: {}]
  %s3 = inlined_call_operand.vmem [shape: f32[640,128], index: 3, kind: output, shape index: {}]
  %s4 = sld [smem:[#allocation0]]
  $region53: #{generator_forward.40} parent=0
    _
  %s6 = ssub.s32 1, %s4
  %s7 = scalar_select 0, %s6, %s4
  loop: start=0, step=1, limit=7
  $region2: #{generator_forward.40} parent=0 // loop_pre_header
    _
  $region3: #{generator_forward.40} parent=0 // loop_header
    %s9 = sphi 0, %s13
    %p10 = scmp.ge.s32.totalorder %s9, 7
    %s16 = sphi 0, %s35
    %s17 = sphi 0, %s31
    %s18 = sphi 0, %s27
    %s19 = sphi 0, %s16
    %s20 = sphi 0, %s17
    %s21 = sphi 0, %s18
    %s22 = sphi 0, %s19
    %s23 = sphi 0, %s20
    %s24 = sphi 0, %s21
    %s40 = sphi 0, %s42
    %s43 = sphi 0, %s40
    %s44 = sphi 0, %s43
    %s60 = sphi 0, %s44
    %s68 = sphi 0, %s70
    %s71 = sphi 0, %s68
    %s72 = sphi 0, %s71
    %s88 = sphi 0, %s72
    %s94 = sphi 0, %s96
    %s97 = sphi 0, %s94
    %s98 = sphi 0, %s97
    %s114 = sphi 0, %s98
    %s122 = sphi 0, %s124
    %s125 = sphi 0, %s122
    %s126 = sphi 0, %s125
    %s142 = sphi 0, %s126
  $region4: #{generator_forward.40} parent=0 // loop_header_branch
    %12 = sbr.rel (%p10) target = $region8
  $region5: #{generator_forward.40} parent=0 // loop_body
    %s14 = ssub.s32 %s9, 1
    %s15 = ssub.s32 %s9, 2
    %s25 = sadd.s32 1, %s18
    %p26 = scmp.ge.s32.totalorder %s25, 1
    %s27 = scalar_select %p26, 0, %s25
    %s28 = sadd.s32 1, %s17
    %s29 = scalar_select %p26, %s28, %s17
    %p30 = scmp.ge.s32.totalorder %s29, 1
    %s31 = scalar_select %p30, 0, %s29
    %s32 = sadd.s32 1, %s16
    %s33 = scalar_select %p30, %s32, %s16
    %p34 = scmp.ge.s32.totalorder %s33, 5
    %s35 = scalar_select %p34, 0, %s33
    %s36 = ssub.s32 %s16, %s35
    %s37 = ssub.s32 %s18, %s27
    %s38 = sor.u32 %s36, %s37
    %p39 = scmp.eq.s32.totalorder %s38, 0
    %s41 = sadd.s32 %s40, 1
    %s42 = scalar_select %p39, %s40, %s41
    %p45 = pneg %p39
    %p46 = scmp.eq.s32.totalorder %s9, 4
    %p47 = por %p45, %p46
    %p48 = scmp.ne.s32.totalorder %s40, %s43
    %p49 = scmp.eq.s32.totalorder %s9, 0
    %p50 = por %p48, %p49
    %p51 = scmp.ne.s32.totalorder %s40, %s43
    %p52 = scmp.eq.s32.totalorder %s14, 4
    %p53 = por %p51, %p52
    %p54 = scmp.ne.s32.totalorder %s43, %s44
    %p55 = scmp.eq.s32.totalorder %s14, 0
    %p56 = por %p54, %p55
    %p57 = scmp.ne.s32.totalorder %s43, %s44
    %p58 = scmp.eq.s32.totalorder %s15, 4
    %p59 = por %p57, %p58
    %p61 = scmp.ne.s32.totalorder %s44, %s60
    %p62 = scmp.eq.s32.totalorder %s15, 0
    %p63 = por %p61, %p62
    %s64 = ssub.s32 %s18, %s27
    %s65 = ssub.s32 %s17, %s31
    %s66 = sor.u32 %s64, %s65
    %p67 = scmp.eq.s32.totalorder %s66, 0
    %s69 = sadd.s32 %s68, 1
    %s70 = scalar_select %p67, %s68, %s69
    %p73 = pneg %p67
    %p74 = scmp.eq.s32.totalorder %s9, 4
    %p75 = por %p73, %p74
    %p76 = scmp.ne.s32.totalorder %s68, %s71
    %p77 = scmp.eq.s32.totalorder %s9, 0
    %p78 = por %p76, %p77
    %p79 = scmp.ne.s32.totalorder %s68, %s71
    %p80 = scmp.eq.s32.totalorder %s14, 4
    %p81 = por %p79, %p80
    %p82 = scmp.ne.s32.totalorder %s71, %s72
    %p83 = scmp.eq.s32.totalorder %s14, 0
    %p84 = por %p82, %p83
    %p85 = scmp.ne.s32.totalorder %s71, %s72
    %p86 = scmp.eq.s32.totalorder %s15, 4
    %p87 = por %p85, %p86
    %p89 = scmp.ne.s32.totalorder %s72, %s88
    %p90 = scmp.eq.s32.totalorder %s15, 0
    %p91 = por %p89, %p90
    %s92 = ssub.s32 %s17, %s31
    %p93 = scmp.eq.s32.totalorder %s92, 0
    %s95 = sadd.s32 %s94, 1
    %s96 = scalar_select %p93, %s94, %s95
    %p99 = pneg %p93
    %p100 = scmp.eq.s32.totalorder %s9, 4
    %p101 = por %p99, %p100
    %p102 = scmp.ne.s32.totalorder %s94, %s97
    %p103 = scmp.eq.s32.totalorder %s9, 0
    %p104 = por %p102, %p103
    %p105 = scmp.ne.s32.totalorder %s94, %s97
    %p106 = scmp.eq.s32.totalorder %s14, 4
    %p107 = por %p105, %p106
    %p108 = scmp.ne.s32.totalorder %s97, %s98
    %p109 = scmp.eq.s32.totalorder %s14, 0
    %p110 = por %p108, %p109
    %p111 = scmp.ne.s32.totalorder %s97, %s98
    %p112 = scmp.eq.s32.totalorder %s15, 4
    %p113 = por %p111, %p112
    %p115 = scmp.ne.s32.totalorder %s98, %s114
    %p116 = scmp.eq.s32.totalorder %s15, 0
    %p117 = por %p115, %p116
    %s118 = ssub.s32 %s16, %s35
    %s119 = ssub.s32 %s17, %s31
    %s120 = sor.u32 %s118, %s119
    %p121 = scmp.eq.s32.totalorder %s120, 0
    %s123 = sadd.s32 %s122, 1
    %s124 = scalar_select %p121, %s122, %s123
    %p127 = pneg %p121
    %p128 = scmp.eq.s32.totalorder %s9, 4
    %p129 = por %p127, %p128
    %p130 = scmp.ne.s32.totalorder %s122, %s125
    %p131 = scmp.eq.s32.totalorder %s9, 0
    %p132 = por %p130, %p131
    %p133 = scmp.ne.s32.totalorder %s122, %s125
    %p134 = scmp.eq.s32.totalorder %s14, 4
    %p135 = por %p133, %p134
    %p136 = scmp.ne.s32.totalorder %s125, %s126
    %p137 = scmp.eq.s32.totalorder %s14, 0
    %p138 = por %p136, %p137
    %p139 = scmp.ne.s32.totalorder %s125, %s126
    %p140 = scmp.eq.s32.totalorder %s15, 4
    %p141 = por %p139, %p140
    %p143 = scmp.ne.s32.totalorder %s126, %s142
    %p144 = scmp.eq.s32.totalorder %s15, 0
    %p145 = por %p143, %p144
    %p146 = scmp.le.s32.totalorder 1, %s9
    %p147 = scmp.lt.s32.totalorder %s9, 6
    %p148 = pnand %p146, %p147
    %p149 = pneg %p148
    // Predicated region
    $region9: #{generator_forward.40} parent=5 // pred_check
      _
    $region10: #{generator_forward.40} parent=5 // pred_check_branch
      %151 = sbr.rel (%p148) target = $region12
    $region11: #{generator_forward.40} parent=5 // pred_region
      %s152 = ssub.s32 %s9, 1
      // Predicated region
      $region13: #{generator_forward.40} parent=11 // pred_check
        %p153 = pneg %p84
      $region14: #{generator_forward.40} parent=11 // pred_check_branch
        %155 = sbr.rel (%p153) target = $region16
      $region15: #{generator_forward.40} parent=11 // pred_region
        %s156 = smul.u32 16, %s21
        %p157 = scmp.lt.s32.totalorder %s156, 15
        %s158 = scalar_select %p157, %s156, 15
        %p159 = scmp.lt.s32.totalorder %s20, 0
        %s160 = scalar_select %p159, %s20, 0
        %s161 = sadd.s32 %s160, %s158
        %s162 = smul.addr %s161, 8
        %s163 = scalar_lea.vmem %s1, %s162
        %s164 = smul.u32 16, %s21
      $region16: #{generator_forward.40} parent=11 // pred_fallthru
        _
      // Predicated region
      $region17: #{generator_forward.40} parent=11 // pred_check
        %p165 = pneg %p110
      $region18: #{generator_forward.40} parent=11 // pred_check_branch
        %167 = sbr.rel (%p165) target = $region20
      $region19: #{generator_forward.40} parent=11 // pred_region
        %p168 = scmp.lt.s32.totalorder %s20, 0
        %s169 = scalar_select %p168, %s20, 0
        %s170 = scalar_lea.vmem %s2, %s169
      $region20: #{generator_forward.40} parent=11 // pred_fallthru
        _
    $region12: #{generator_forward.40} parent=5 // pred_fallthru
      _
    %p171 = scmp.lt.s32.totalorder %s9, 5
    // Predicated region
    $region21: #{generator_forward.40} parent=5 // pred_check
      %p172 = pneg %p171
    $region22: #{generator_forward.40} parent=5 // pred_check_branch
      %174 = sbr.rel (%p172) target = $region24
    $region23: #{generator_forward.40} parent=5 // pred_region
      // Predicated region
      $region25: #{generator_forward.40} parent=23 // pred_check
        %p175 = pneg %p50
      $region26: #{generator_forward.40} parent=23 // pred_check_branch
        %177 = sbr.rel (%p175) target = $region28
      $region27: #{generator_forward.40} parent=23 // pred_region
        %s178 = smul.u32 16, %s16
        %p179 = scmp.lt.s32.totalorder %s178, 79
        %s180 = scalar_select %p179, %s178, 79
        %p181 = scmp.lt.s32.totalorder %s18, 0
        %s182 = scalar_select %p181, %s18, 0
        %s183 = sadd.s32 %s182, %s180
        %s184 = smul.addr %s183, 8
        %s185 = scalar_lea.vmem %s0, %s184
        %s186 = smul.u32 16, %s16
      $region28: #{generator_forward.40} parent=23 // pred_fallthru
        _
    $region24: #{generator_forward.40} parent=5 // pred_fallthru
      _
    %p187 = scmp.le.s32.totalorder 1, %s9
    %p188 = scmp.lt.s32.totalorder %s9, 6
    %p189 = pnand %p187, %p188
    %p190 = pneg %p189
    // Predicated region
    $region29: #{generator_forward.40} parent=5 // pred_check
      _
    $region30: #{generator_forward.40} parent=5 // pred_check_branch
      %192 = sbr.rel (%p189) target = $region32
    $region31: #{generator_forward.40} parent=5 // pred_region
      %s193 = ssub.s32 %s9, 1
      %s194 = smul.u32 16, %s19
      %p195 = scmp.lt.s32.totalorder %s194, 79
      %s196 = scalar_select %p195, %s194, 79
      %p197 = scmp.lt.s32.totalorder %s21, 0
      %s198 = scalar_select %p197, %s21, 0
      %s199 = sadd.s32 %s198, %s196
      %s200 = smul.addr %s199, 8
      %s201 = scalar_lea.vmem %s0, %s200
      %p202 = pneg %p56
      %p203 = pneg %p53
      %s204 = smul.u32 16, %s21
      %p205 = scmp.lt.s32.totalorder %s204, 15
      %s206 = scalar_select %p205, %s204, 15
      %p207 = scmp.lt.s32.totalorder %s20, 0
      %s208 = scalar_select %p207, %s20, 0
      %s209 = sadd.s32 %s208, %s206
      %s210 = smul.addr %s209, 8
      %s211 = scalar_lea.vmem %s1, %s210
      %p212 = pneg %p84
      %p213 = pneg %p81
      %p214 = scmp.lt.s32.totalorder %s20, 0
      %s215 = scalar_select %p214, %s20, 0
      %s216 = scalar_lea.vmem %s2, %s215
      %p217 = pneg %p110
      %p218 = pneg %p107
      %p219 = pneg %p138
      %p220 = pneg %p135
      %s221 = smul.u32 16, %s19
      %p222 = scmp.lt.s32.totalorder %s221, 79
      %s223 = scalar_select %p222, %s221, 79
      %p224 = scmp.lt.s32.totalorder %s20, 0
      %s225 = scalar_select %p224, %s20, 0
      %s226 = sadd.s32 %s225, %s223
      %s227 = smul.addr %s226, 8
      %s228 = scalar_lea.vmem %s3, %s227
      %s229 = smul.u32 16, %s19
      %p230 = scmp.lt.s32.totalorder %s229, 79
      %s231 = scalar_select %p230, %s229, 79
      %p232 = scmp.lt.s32.totalorder %s21, 0
      %s233 = scalar_select %p232, %s21, 0
      %s234 = sadd.s32 %s233, %s231
      %s235 = smul.addr %s234, 8
      %s236 = scalar_lea.vmem %s0, %s235
      %s237 = smul.u32 16, %s19
      %s238 = smul.u32 16, %s21
      %p239 = scmp.lt.s32.totalorder %s238, 15
      %s240 = scalar_select %p239, %s238, 15
      %p241 = scmp.lt.s32.totalorder %s20, 0
      %s242 = scalar_select %p241, %s20, 0
      %s243 = sadd.s32 %s242, %s240
      %s244 = smul.addr %s243, 8
      %s245 = scalar_lea.vmem %s1, %s244
      %s246 = smul.u32 16, %s21
      %p247 = scmp.lt.s32.totalorder %s20, 0
      %s248 = scalar_select %p247, %s20, 0
      %s249 = scalar_lea.vmem %s2, %s248
      %s250 = smul.u32 16, %s19
      %p251 = scmp.lt.s32.totalorder %s250, 79
      %s252 = scalar_select %p251, %s250, 79
      %p253 = scmp.lt.s32.totalorder %s20, 0
      %s254 = scalar_select %p253, %s20, 0
      %s255 = sadd.s32 %s254, %s252
      %s256 = smul.addr %s255, 8
      %s257 = scalar_lea.vmem %s3, %s256
      %s258 = smul.u32 16, %s19
      %p259 = scmp.eq.s32.totalorder %s21, 0
      // Predicated region
      $region33: #{generator_forward.40} parent=31 // pred_check
        %p260 = pneg %p259
      $region34: #{generator_forward.40} parent=31 // pred_check_branch
        %262 = sbr.rel (%p260) target = $region36
      $region35: #{generator_forward.40} parent=31 // pred_region
        %263 = vst [vmem:[#allocation2] sm:$0xff] 0.0
        %264 = vst [vmem:[#allocation2 + $0x8] sm:$0xff] 0.0
        %265 = vst [vmem:[#allocation2 + $0x10] sm:$0xff] 0.0
        %266 = vst [vmem:[#allocation2 + $0x18] sm:$0xff] 0.0
        %267 = vst [vmem:[#allocation2 + $0x20] sm:$0xff] 0.0
        %268 = vst [vmem:[#allocation2 + $0x28] sm:$0xff] 0.0
        %269 = vst [vmem:[#allocation2 + $0x30] sm:$0xff] 0.0
        %270 = vst [vmem:[#allocation2 + $0x38] sm:$0xff] 0.0
        %271 = vst [vmem:[#allocation2 + $0x40] sm:$0xff] 0.0
        %272 = vst [vmem:[#allocation2 + $0x48] sm:$0xff] 0.0
        %273 = vst [vmem:[#allocation2 + $0x50] sm:$0xff] 0.0
        %274 = vst [vmem:[#allocation2 + $0x58] sm:$0xff] 0.0
        %275 = vst [vmem:[#allocation2 + $0x60] sm:$0xff] 0.0
        %276 = vst [vmem:[#allocation2 + $0x68] sm:$0xff] 0.0
        %277 = vst [vmem:[#allocation2 + $0x70] sm:$0xff] 0.0
        %278 = vst [vmem:[#allocation2 + $0x78] sm:$0xff] 0.0
      $region36: #{generator_forward.40} parent=31 // pred_fallthru
        _
      %v279 = vld [vmem:[#allocation2] sm:$0xff]
      %v280 = vld [vmem:[#allocation2 + $0x8] sm:$0xff]
      %v281 = vld [vmem:[#allocation2 + $0x10] sm:$0xff]
      %v282 = vld [vmem:[#allocation2 + $0x18] sm:$0xff]
      %v283 = vld [vmem:[#allocation2 + $0x20] sm:$0xff]
      %v284 = vld [vmem:[#allocation2 + $0x28] sm:$0xff]
      %v285 = vld [vmem:[#allocation2 + $0x30] sm:$0xff]
      %v286 = vld [vmem:[#allocation2 + $0x38] sm:$0xff]
      %v287 = vld [vmem:[#allocation2 + $0x40] sm:$0xff]
      %v288 = vld [vmem:[#allocation2 + $0x48] sm:$0xff]
      %v289 = vld [vmem:[#allocation2 + $0x50] sm:$0xff]
      %v290 = vld [vmem:[#allocation2 + $0x58] sm:$0xff]
      %v291 = vld [vmem:[#allocation2 + $0x60] sm:$0xff]
      %v292 = vld [vmem:[#allocation2 + $0x68] sm:$0xff]
      %v293 = vld [vmem:[#allocation2 + $0x70] sm:$0xff]
      %v294 = vld [vmem:[#allocation2 + $0x78] sm:$0xff]
      %v295 = vld [vmem:[%s236] sm:$0xff]
      %v296 = vld [vmem:[%s236 + $0x8] sm:$0xff]
      %v297 = vld [vmem:[%s236 + $0x10] sm:$0xff]
      %v298 = vld [vmem:[%s236 + $0x18] sm:$0xff]
      %v299 = vld [vmem:[%s236 + $0x20] sm:$0xff]
      %v300 = vld [vmem:[%s236 + $0x28] sm:$0xff]
      %v301 = vld [vmem:[%s236 + $0x30] sm:$0xff]
      %v302 = vld [vmem:[%s236 + $0x38] sm:$0xff]
      %v303 = vld [vmem:[%s236 + $0x40] sm:$0xff]
      %v304 = vld [vmem:[%s236 + $0x48] sm:$0xff]
      %v305 = vld [vmem:[%s236 + $0x50] sm:$0xff]
      %v306 = vld [vmem:[%s236 + $0x58] sm:$0xff]
      %v307 = vld [vmem:[%s236 + $0x60] sm:$0xff]
      %v308 = vld [vmem:[%s236 + $0x68] sm:$0xff]
      %v309 = vld [vmem:[%s236 + $0x70] sm:$0xff]
      %v310 = vld [vmem:[%s236 + $0x78] sm:$0xff]
      %v311 = vld [vmem:[%s245] sm:$0xff]
      %v312 = vld [vmem:[%s245 + $0x8] sm:$0xff]
      %v313 = vld [vmem:[%s245 + $0x10] sm:$0xff]
      %v314 = vld [vmem:[%s245 + $0x18] sm:$0xff]
      %v315 = vld [vmem:[%s245 + $0x20] sm:$0xff]
      %v316 = vld [vmem:[%s245 + $0x28] sm:$0xff]
      %v317 = vld [vmem:[%s245 + $0x30] sm:$0xff]
      %v318 = vld [vmem:[%s245 + $0x38] sm:$0xff]
      %v319 = vld [vmem:[%s245 + $0x40] sm:$0xff]
      %v320 = vld [vmem:[%s245 + $0x48] sm:$0xff]
      %v321 = vld [vmem:[%s245 + $0x50] sm:$0xff]
      %v322 = vld [vmem:[%s245 + $0x58] sm:$0xff]
      %v323 = vld [vmem:[%s245 + $0x60] sm:$0xff]
      %v324 = vld [vmem:[%s245 + $0x68] sm:$0xff]
      %v325 = vld [vmem:[%s245 + $0x70] sm:$0xff]
      %v326 = vld [vmem:[%s245 + $0x78] sm:$0xff]
      %327 = vmatpush.msra.mxu0 %v326
      %328 = vmatpush.msra.mxu0 %v325
      %329 = vmatpush.msra.mxu0 %v324
      %330 = vmatpush.msra.mxu0 %v323
      %331 = vmatpush.msra.mxu0 %v322
      %332 = vmatpush.msra.mxu0 %v321
      %333 = vmatpush.msra.mxu0 %v320
      %334 = vmatpush.msra.mxu0 %v319
      %335 = vmatpush.msra.mxu0 %v318
      %336 = vmatpush.msra.mxu0 %v317
      %337 = vmatpush.msra.mxu0 %v316
      %338 = vmatpush.msra.mxu0 %v315
      %339 = vmatpush.msra.mxu0 %v314
      %340 = vmatpush.msra.mxu0 %v313
      %341 = vmatpush.msra.mxu0 %v312
      %342 = vmatpush.msra.mxu0 %v311
      %343 = vmatmul.f32.gmra.mxu0 %v295
      %v344 = vpop.f32.mrf.mxu0
      %v345 = vadd.f32 0.0, %v344
      %346 = vmatmul.f32.gmra.mxu0 %v296
      %v347 = vpop.f32.mrf.mxu0
      %v348 = vadd.f32 0.0, %v347
      %349 = vmatmul.f32.gmra.mxu0 %v297
      %v350 = vpop.f32.mrf.mxu0
      %v351 = vadd.f32 0.0, %v350
      %352 = vmatmul.f32.gmra.mxu0 %v298
      %v353 = vpop.f32.mrf.mxu0
      %v354 = vadd.f32 0.0, %v353
      %355 = vmatmul.f32.gmra.mxu0 %v299
      %v356 = vpop.f32.mrf.mxu0
      %v357 = vadd.f32 0.0, %v356
      %358 = vmatmul.f32.gmra.mxu0 %v300
      %v359 = vpop.f32.mrf.mxu0
      %v360 = vadd.f32 0.0, %v359
      %361 = vmatmul.f32.gmra.mxu0 %v301
      %v362 = vpop.f32.mrf.mxu0
      %v363 = vadd.f32 0.0, %v362
      %364 = vmatmul.f32.gmra.mxu0 %v302
      %v365 = vpop.f32.mrf.mxu0
      %v366 = vadd.f32 0.0, %v365
      %367 = vmatmul.f32.gmra.mxu0 %v303
      %v368 = vpop.f32.mrf.mxu0
      %v369 = vadd.f32 0.0, %v368
      %370 = vmatmul.f32.gmra.mxu0 %v304
      %v371 = vpop.f32.mrf.mxu0
      %v372 = vadd.f32 0.0, %v371
      %373 = vmatmul.f32.gmra.mxu0 %v305
      %v374 = vpop.f32.mrf.mxu0
      %v375 = vadd.f32 0.0, %v374
      %376 = vmatmul.f32.gmra.mxu0 %v306
      %v377 = vpop.f32.mrf.mxu0
      %v378 = vadd.f32 0.0, %v377
      %379 = vmatmul.f32.gmra.mxu0 %v307
      %v380 = vpop.f32.mrf.mxu0
      %v381 = vadd.f32 0.0, %v380
      %382 = vmatmul.f32.gmra.mxu0 %v308
      %v383 = vpop.f32.mrf.mxu0
      %v384 = vadd.f32 0.0, %v383
      %385 = vmatmul.f32.gmra.mxu0 %v309
      %v386 = vpop.f32.mrf.mxu0
      %v387 = vadd.f32 0.0, %v386
      %388 = vmatmul.f32.gmra.mxu0 %v310
      %v389 = vpop.f32.mrf.mxu0
      %v390 = vadd.f32 0.0, %v389
      %391 = vdwg.mxu0
      %v392 = vadd.f32 %v279, %v345
      %v393 = vadd.f32 %v280, %v348
      %v394 = vadd.f32 %v281, %v351
      %v395 = vadd.f32 %v282, %v354
      %v396 = vadd.f32 %v283, %v357
      %v397 = vadd.f32 %v284, %v360
      %v398 = vadd.f32 %v285, %v363
      %v399 = vadd.f32 %v286, %v366
      %v400 = vadd.f32 %v287, %v369
      %v401 = vadd.f32 %v288, %v372
      %v402 = vadd.f32 %v289, %v375
      %v403 = vadd.f32 %v290, %v378
      %v404 = vadd.f32 %v291, %v381
      %v405 = vadd.f32 %v292, %v384
      %v406 = vadd.f32 %v293, %v387
      %v407 = vadd.f32 %v294, %v390
      %408 = vst [vmem:[#allocation2] sm:$0xff] %v392
      %409 = vst [vmem:[#allocation2 + $0x8] sm:$0xff] %v393
      %410 = vst [vmem:[#allocation2 + $0x10] sm:$0xff] %v394
      %411 = vst [vmem:[#allocation2 + $0x18] sm:$0xff] %v395
      %412 = vst [vmem:[#allocation2 + $0x20] sm:$0xff] %v396
      %413 = vst [vmem:[#allocation2 + $0x28] sm:$0xff] %v397
      %414 = vst [vmem:[#allocation2 + $0x30] sm:$0xff] %v398
      %415 = vst [vmem:[#allocation2 + $0x38] sm:$0xff] %v399
      %416 = vst [vmem:[#allocation2 + $0x40] sm:$0xff] %v400
      %417 = vst [vmem:[#allocation2 + $0x48] sm:$0xff] %v401
      %418 = vst [vmem:[#allocation2 + $0x50] sm:$0xff] %v402
      %419 = vst [vmem:[#allocation2 + $0x58] sm:$0xff] %v403
      %420 = vst [vmem:[#allocation2 + $0x60] sm:$0xff] %v404
      %421 = vst [vmem:[#allocation2 + $0x68] sm:$0xff] %v405
      %422 = vst [vmem:[#allocation2 + $0x70] sm:$0xff] %v406
      %423 = vst [vmem:[#allocation2 + $0x78] sm:$0xff] %v407
      // Predicated region
      $region37: #{generator_forward.40} parent=31 // pred_check
        %p424 = pneg %p259
      $region38: #{generator_forward.40} parent=31 // pred_check_branch
        %426 = sbr.rel (%p424) target = $region40
      $region39: #{generator_forward.40} parent=31 // pred_region
        %v427 = vld [vmem:[#allocation2] sm:$0xff]
        %v428 = vld [vmem:[#allocation2 + $0x8] sm:$0xff]
        %v429 = vld [vmem:[#allocation2 + $0x10] sm:$0xff]
        %v430 = vld [vmem:[#allocation2 + $0x18] sm:$0xff]
        %v431 = vld [vmem:[#allocation2 + $0x20] sm:$0xff]
        %v432 = vld [vmem:[#allocation2 + $0x28] sm:$0xff]
        %v433 = vld [vmem:[#allocation2 + $0x30] sm:$0xff]
        %v434 = vld [vmem:[#allocation2 + $0x38] sm:$0xff]
        %v435 = vld [vmem:[#allocation2 + $0x40] sm:$0xff]
        %v436 = vld [vmem:[#allocation2 + $0x48] sm:$0xff]
        %v437 = vld [vmem:[#allocation2 + $0x50] sm:$0xff]
        %v438 = vld [vmem:[#allocation2 + $0x58] sm:$0xff]
        %v439 = vld [vmem:[#allocation2 + $0x60] sm:$0xff]
        %v440 = vld [vmem:[#allocation2 + $0x68] sm:$0xff]
        %v441 = vld [vmem:[#allocation2 + $0x70] sm:$0xff]
        %v442 = vld [vmem:[#allocation2 + $0x78] sm:$0xff]
        %v443 = vld [vmem:[%s249] sm:$0x1]
        %v445 = vperm.slane %v443, 0
        %v447 = vadd.f32 %v427, %v445
        %v448 = vadd.f32 %v428, %v445
        %v449 = vadd.f32 %v429, %v445
        %v450 = vadd.f32 %v430, %v445
        %v451 = vadd.f32 %v431, %v445
        %v452 = vadd.f32 %v432, %v445
        %v453 = vadd.f32 %v433, %v445
        %v454 = vadd.f32 %v434, %v445
        %v455 = vadd.f32 %v435, %v445
        %v456 = vadd.f32 %v436, %v445
        %v457 = vadd.f32 %v437, %v445
        %v458 = vadd.f32 %v438, %v445
        %v459 = vadd.f32 %v439, %v445
        %v460 = vadd.f32 %v440, %v445
        %v461 = vadd.f32 %v441, %v445
        %v462 = vadd.f32 %v442, %v445
        %vm463 = vcmp.gt.f32.partialorder %v447, 0.0
        %vm464 = vcmp.gt.f32.partialorder %v448, 0.0
        %vm465 = vcmp.gt.f32.partialorder %v449, 0.0
        %vm466 = vcmp.gt.f32.partialorder %v450, 0.0
        %vm467 = vcmp.gt.f32.partialorder %v451, 0.0
        %vm468 = vcmp.gt.f32.partialorder %v452, 0.0
        %vm469 = vcmp.gt.f32.partialorder %v453, 0.0
        %vm470 = vcmp.gt.f32.partialorder %v454, 0.0
        %vm471 = vcmp.gt.f32.partialorder %v455, 0.0
        %vm472 = vcmp.gt.f32.partialorder %v456, 0.0
        %vm473 = vcmp.gt.f32.partialorder %v457, 0.0
        %vm474 = vcmp.gt.f32.partialorder %v458, 0.0
        %vm475 = vcmp.gt.f32.partialorder %v459, 0.0
        %vm476 = vcmp.gt.f32.partialorder %v460, 0.0
        %vm477 = vcmp.gt.f32.partialorder %v461, 0.0
        %vm478 = vcmp.gt.f32.partialorder %v462, 0.0
        %v479 = vmul.f32 %v447, 0.01
        %v480 = vmul.f32 %v448, 0.01
        %v481 = vmul.f32 %v449, 0.01
        %v482 = vmul.f32 %v450, 0.01
        %v483 = vmul.f32 %v451, 0.01
        %v484 = vmul.f32 %v452, 0.01
        %v485 = vmul.f32 %v453, 0.01
        %v486 = vmul.f32 %v454, 0.01
        %v487 = vmul.f32 %v455, 0.01
        %v488 = vmul.f32 %v456, 0.01
        %v489 = vmul.f32 %v457, 0.01
        %v490 = vmul.f32 %v458, 0.01
        %v491 = vmul.f32 %v459, 0.01
        %v492 = vmul.f32 %v460, 0.01
        %v493 = vmul.f32 %v461, 0.01
        %v494 = vmul.f32 %v462, 0.01
        %v495 = vsel %vm463, %v447, %v479
        %v496 = vsel %vm464, %v448, %v480
        %v497 = vsel %vm465, %v449, %v481
        %v498 = vsel %vm466, %v450, %v482
        %v499 = vsel %vm467, %v451, %v483
        %v500 = vsel %vm468, %v452, %v484
        %v501 = vsel %vm469, %v453, %v485
        %v502 = vsel %vm470, %v454, %v486
        %v503 = vsel %vm471, %v455, %v487
        %v504 = vsel %vm472, %v456, %v488
        %v505 = vsel %vm473, %v457, %v489
        %v506 = vsel %vm474, %v458, %v490
        %v507 = vsel %vm475, %v459, %v491
        %v508 = vsel %vm476, %v460, %v492
        %v509 = vsel %vm477, %v461, %v493
        %v510 = vsel %vm478, %v462, %v494
        %511 = vst [vmem:[%s257] sm:$0xff] %v495
        %512 = vst [vmem:[%s257 + $0x8] sm:$0xff] %v496
        %513 = vst [vmem:[%s257 + $0x10] sm:$0xff] %v497
        %514 = vst [vmem:[%s257 + $0x18] sm:$0xff] %v498
        %515 = vst [vmem:[%s257 + $0x20] sm:$0xff] %v499
        %516 = vst [vmem:[%s257 + $0x28] sm:$0xff] %v500
        %517 = vst [vmem:[%s257 + $0x30] sm:$0xff] %v501
        %518 = vst [vmem:[%s257 + $0x38] sm:$0xff] %v502
        %519 = vst [vmem:[%s257 + $0x40] sm:$0xff] %v503
        %520 = vst [vmem:[%s257 + $0x48] sm:$0xff] %v504
        %521 = vst [vmem:[%s257 + $0x50] sm:$0xff] %v505
        %522 = vst [vmem:[%s257 + $0x58] sm:$0xff] %v506
        %523 = vst [vmem:[%s257 + $0x60] sm:$0xff] %v507
        %524 = vst [vmem:[%s257 + $0x68] sm:$0xff] %v508
        %525 = vst [vmem:[%s257 + $0x70] sm:$0xff] %v509
        %526 = vst [vmem:[%s257 + $0x78] sm:$0xff] %v510
      $region40: #{generator_forward.40} parent=31 // pred_fallthru
        _
      %s527 = smul.u32 16, %s19
      %p528 = scmp.lt.s32.totalorder %s527, 79
      %s529 = scalar_select %p528, %s527, 79
      %p530 = scmp.lt.s32.totalorder %s20, 0
      %s531 = scalar_select %p530, %s20, 0
      %s532 = sadd.s32 %s531, %s529
      %s533 = smul.addr %s532, 8
      %s534 = scalar_lea.vmem %s3, %s533
      // Predicated region
      $region41: #{generator_forward.40} parent=31 // pred_check
        %p535 = pneg %p135
      $region42: #{generator_forward.40} parent=31 // pred_check_branch
        %537 = sbr.rel (%p535) target = $region44
      $region43: #{generator_forward.40} parent=31 // pred_region
        %s538 = smul.u32 16, %s19
      $region44: #{generator_forward.40} parent=31 // pred_fallthru
        _
    $region32: #{generator_forward.40} parent=5 // pred_fallthru
      _
    %p539 = scmp.le.s32.totalorder 2, %s9
    // Predicated region
    $region45: #{generator_forward.40} parent=5 // pred_check
      %p540 = pneg %p539
    $region46: #{generator_forward.40} parent=5 // pred_check_branch
      %542 = sbr.rel (%p540) target = $region48
    $region47: #{generator_forward.40} parent=5 // pred_region
      %s543 = ssub.s32 %s9, 2
      // Predicated region
      $region49: #{generator_forward.40} parent=47 // pred_check
        %p544 = pneg %p141
      $region50: #{generator_forward.40} parent=47 // pred_check_branch
        %546 = sbr.rel (%p544) target = $region52
      $region51: #{generator_forward.40} parent=47 // pred_region
        %s547 = smul.u32 16, %s22
        %p548 = scmp.lt.s32.totalorder %s547, 79
        %s549 = scalar_select %p548, %s547, 79
        %p550 = scmp.lt.s32.totalorder %s23, 0
        %s551 = scalar_select %p550, %s23, 0
        %s552 = sadd.s32 %s551, %s549
        %s553 = smul.addr %s552, 8
        %s554 = scalar_lea.vmem %s3, %s553
      $region52: #{generator_forward.40} parent=47 // pred_fallthru
        _
    $region48: #{generator_forward.40} parent=5 // pred_fallthru
      _
  $region6: #{generator_forward.40} parent=0 // loop_footer
    %s13 = sadd.s32 1, %s9
  $region7: #{generator_forward.40} parent=0 // loop_footer_branch
    %8 = sbr.rel target = $region3
  $region8: #{generator_forward.40} parent=0 // loop_exit
    _

// kernel: generator_forward.41
$region0: #{generator_forward.41}
  #allocation0 [shape = 'u32[]', space=smem, size = 0x4, offset = 0x4, fixed_abs, tag = 'smem constant byte address 0x4 - core index']
  #allocation1 [shape = 'u32[72,128]{1,0:T(1,128)}', space=vmem, size = 0x9000, scoped, tag = 'internal scratch']
  %s0 = inlined_call_operand.vmem [shape: f32[2048,128], index: 0, kind: input, shape index: {}]
  %s1 = inlined_call_operand.vmem [shape: f32[1,128], index: 1, kind: output, shape index: {0}]
  %s2 = inlined_call_operand.vmem [shape: f32[1,128], index: 2, kind: output, shape index: {1}]
  %3 = xla_tuple %s1, %s2
  %s4 = sld [smem:[#allocation0]]
  $region49: #{generator_forward.41} parent=0
    _
  %s6 = ssub.s32 1, %s4
  %s7 = scalar_select 0, %s6, %s4
  loop: start=0, step=1, limit=6
  $region2: #{generator_forward.41} parent=0 // loop_pre_header
    _
  $region3: #{generator_forward.41} parent=0 // loop_header
    %s9 = sphi 0, %s13
    %p10 = scmp.ge.s32.totalorder %s9, 6
    %s16 = sphi 0, %s28
    %s17 = sphi 0, %s24
    %s18 = sphi 0, %s16
    %s19 = sphi 0, %s17
    %s20 = sphi 0, %s18
    %s21 = sphi 0, %s19
    %s33 = sphi 0, %s35
    %s36 = sphi 0, %s33
    %s37 = sphi 0, %s36
    %s53 = sphi 0, %s37
    %s59 = sphi 0, %s61
    %s62 = sphi 0, %s59
    %s63 = sphi 0, %s62
    %s79 = sphi 0, %s63
    %s85 = sphi 0, %s87
    %s88 = sphi 0, %s85
    %s89 = sphi 0, %s88
    %s105 = sphi 0, %s89
  $region4: #{generator_forward.41} parent=0 // loop_header_branch
    %12 = sbr.rel (%p10) target = $region8
  $region5: #{generator_forward.41} parent=0 // loop_body
    %s14 = ssub.s32 %s9, 1
    %s15 = ssub.s32 %s9, 2
    %s22 = sadd.s32 1, %s17
    %p23 = scmp.ge.s32.totalorder %s22, 4
    %s24 = scalar_select %p23, 0, %s22
    %s25 = sadd.s32 1, %s16
    %s26 = scalar_select %p23, %s25, %s16
    %p27 = scmp.ge.s32.totalorder %s26, 1
    %s28 = scalar_select %p27, 0, %s26
    %s29 = ssub.s32 %s17, %s24
    %s30 = ssub.s32 %s16, %s28
    %s31 = sor.u32 %s29, %s30
    %p32 = scmp.eq.s32.totalorder %s31, 0
    %s34 = sadd.s32 %s33, 1
    %s35 = scalar_select %p32, %s33, %s34
    %p38 = pneg %p32
    %p39 = scmp.eq.s32.totalorder %s9, 3
    %p40 = por %p38, %p39
    %p41 = scmp.ne.s32.totalorder %s33, %s36
    %p42 = scmp.eq.s32.totalorder %s9, 0
    %p43 = por %p41, %p42
    %p44 = scmp.ne.s32.totalorder %s33, %s36
    %p45 = scmp.eq.s32.totalorder %s14, 3
    %p46 = por %p44, %p45
    %p47 = scmp.ne.s32.totalorder %s36, %s37
    %p48 = scmp.eq.s32.totalorder %s14, 0
    %p49 = por %p47, %p48
    %p50 = scmp.ne.s32.totalorder %s36, %s37
    %p51 = scmp.eq.s32.totalorder %s15, 3
    %p52 = por %p50, %p51
    %p54 = scmp.ne.s32.totalorder %s37, %s53
    %p55 = scmp.eq.s32.totalorder %s15, 0
    %p56 = por %p54, %p55
    %s57 = ssub.s32 %s16, %s28
    %p58 = scmp.eq.s32.totalorder %s57, 0
    %s60 = sadd.s32 %s59, 1
    %s61 = scalar_select %p58, %s59, %s60
    %p64 = pneg %p58
    %p65 = scmp.eq.s32.totalorder %s9, 3
    %p66 = por %p64, %p65
    %p67 = scmp.ne.s32.totalorder %s59, %s62
    %p68 = scmp.eq.s32.totalorder %s9, 0
    %p69 = por %p67, %p68
    %p70 = scmp.ne.s32.totalorder %s59, %s62
    %p71 = scmp.eq.s32.totalorder %s14, 3
    %p72 = por %p70, %p71
    %p73 = scmp.ne.s32.totalorder %s62, %s63
    %p74 = scmp.eq.s32.totalorder %s14, 0
    %p75 = por %p73, %p74
    %p76 = scmp.ne.s32.totalorder %s62, %s63
    %p77 = scmp.eq.s32.totalorder %s15, 3
    %p78 = por %p76, %p77
    %p80 = scmp.ne.s32.totalorder %s63, %s79
    %p81 = scmp.eq.s32.totalorder %s15, 0
    %p82 = por %p80, %p81
    %s83 = ssub.s32 %s16, %s28
    %p84 = scmp.eq.s32.totalorder %s83, 0
    %s86 = sadd.s32 %s85, 1
    %s87 = scalar_select %p84, %s85, %s86
    %p90 = pneg %p84
    %p91 = scmp.eq.s32.totalorder %s9, 3
    %p92 = por %p90, %p91
    %p93 = scmp.ne.s32.totalorder %s85, %s88
    %p94 = scmp.eq.s32.totalorder %s9, 0
    %p95 = por %p93, %p94
    %p96 = scmp.ne.s32.totalorder %s85, %s88
    %p97 = scmp.eq.s32.totalorder %s14, 3
    %p98 = por %p96, %p97
    %p99 = scmp.ne.s32.totalorder %s88, %s89
    %p100 = scmp.eq.s32.totalorder %s14, 0
    %p101 = por %p99, %p100
    %p102 = scmp.ne.s32.totalorder %s88, %s89
    %p103 = scmp.eq.s32.totalorder %s15, 3
    %p104 = por %p102, %p103
    %p106 = scmp.ne.s32.totalorder %s89, %s105
    %p107 = scmp.eq.s32.totalorder %s15, 0
    %p108 = por %p106, %p107
    %p109 = scmp.le.s32.totalorder 1, %s9
    %p110 = scmp.lt.s32.totalorder %s9, 5
    %p111 = pnand %p109, %p110
    %p112 = pneg %p111
    // Predicated region
    $region9: #{generator_forward.41} parent=5 // pred_check
      _
    $region10: #{generator_forward.41} parent=5 // pred_check_branch
      %114 = sbr.rel (%p111) target = $region12
    $region11: #{generator_forward.41} parent=5 // pred_region
      %s115 = ssub.s32 %s9, 1
    $region12: #{generator_forward.41} parent=5 // pred_fallthru
      _
    %p116 = scmp.lt.s32.totalorder %s9, 4
    // Predicated region
    $region13: #{generator_forward.41} parent=5 // pred_check
      %p117 = pneg %p116
    $region14: #{generator_forward.41} parent=5 // pred_check_branch
      %119 = sbr.rel (%p117) target = $region16
    $region15: #{generator_forward.41} parent=5 // pred_region
      // Predicated region
      $region17: #{generator_forward.41} parent=15 // pred_check
        %p120 = pneg %p43
      $region18: #{generator_forward.41} parent=15 // pred_check_branch
        %122 = sbr.rel (%p120) target = $region20
      $region19: #{generator_forward.41} parent=15 // pred_region
        %s123 = smul.u32 64, %s17
        %p124 = scmp.lt.s32.totalorder %s123, 255
        %s125 = scalar_select %p124, %s123, 255
        %p126 = scmp.lt.s32.totalorder %s16, 0
        %s127 = scalar_select %p126, %s16, 0
        %s128 = sadd.s32 %s127, %s125
        %s129 = smul.addr %s128, 8
        %s130 = scalar_lea.vmem %s0, %s129
        %s131 = smul.u32 64, %s17
      $region20: #{generator_forward.41} parent=15 // pred_fallthru
        _
    $region16: #{generator_forward.41} parent=5 // pred_fallthru
      _
    %p132 = scmp.le.s32.totalorder 1, %s9
    %p133 = scmp.lt.s32.totalorder %s9, 5
    %p134 = pnand %p132, %p133
    %p135 = pneg %p134
    // Predicated region
    $region21: #{generator_forward.41} parent=5 // pred_check
      _
    $region22: #{generator_forward.41} parent=5 // pred_check_branch
      %137 = sbr.rel (%p134) target = $region24
    $region23: #{generator_forward.41} parent=5 // pred_region
      %s138 = ssub.s32 %s9, 1
      %s139 = smul.u32 64, %s19
      %p140 = scmp.lt.s32.totalorder %s139, 255
      %s141 = scalar_select %p140, %s139, 255
      %p142 = scmp.lt.s32.totalorder %s18, 0
      %s143 = scalar_select %p142, %s18, 0
      %s144 = sadd.s32 %s143, %s141
      %s145 = smul.addr %s144, 8
      %s146 = scalar_lea.vmem %s0, %s145
      %p147 = pneg %p49
      %p148 = pneg %p46
      %p149 = pneg %p75
      %p150 = pneg %p72
      %p151 = scmp.lt.s32.totalorder %s18, 0
      %s152 = scalar_select %p151, %s18, 0
      %s153 = scalar_lea.vmem %s1, %s152
      %p154 = pneg %p101
      %p155 = pneg %p98
      %p156 = scmp.lt.s32.totalorder %s18, 0
      %s157 = scalar_select %p156, %s18, 0
      %s158 = scalar_lea.vmem %s2, %s157
      %s159 = smul.u32 64, %s19
      %p160 = scmp.lt.s32.totalorder %s159, 255
      %s161 = scalar_select %p160, %s159, 255
      %p162 = scmp.lt.s32.totalorder %s18, 0
      %s163 = scalar_select %p162, %s18, 0
      %s164 = sadd.s32 %s163, %s161
      %s165 = smul.addr %s164, 8
      %s166 = scalar_lea.vmem %s0, %s165
      %s167 = smul.u32 64, %s19
      %p168 = scmp.lt.s32.totalorder %s18, 0
      %s169 = scalar_select %p168, %s18, 0
      %s170 = scalar_lea.vmem %s1, %s169
      %p171 = scmp.lt.s32.totalorder %s18, 0
      %s172 = scalar_select %p171, %s18, 0
      %s173 = scalar_lea.vmem %s2, %s172
      %p174 = scmp.eq.s32.totalorder %s19, 0
      // Predicated region
      $region25: #{generator_forward.41} parent=23 // pred_check
        %p175 = pneg %p174
      $region26: #{generator_forward.41} parent=23 // pred_check_branch
        %177 = sbr.rel (%p175) target = $region28
      $region27: #{generator_forward.41} parent=23 // pred_region
        %178 = vst [vmem:[%s170] sm:$0x1] 0.0
        %179 = vst [vmem:[%s173] sm:$0x1] 0.0
      $region28: #{generator_forward.41} parent=23 // pred_fallthru
        _
      %v180 = vld [vmem:[%s166] sm:$0xff]
      %v181 = vld [vmem:[%s166 + $0x8] sm:$0xff]
      %v182 = vld [vmem:[%s166 + $0x10] sm:$0xff]
      %v183 = vld [vmem:[%s166 + $0x18] sm:$0xff]
      %v184 = vld [vmem:[%s166 + $0x20] sm:$0xff]
      %v185 = vld [vmem:[%s166 + $0x28] sm:$0xff]
      %v186 = vld [vmem:[%s166 + $0x30] sm:$0xff]
      %v187 = vld [vmem:[%s166 + $0x38] sm:$0xff]
      %v188 = vld [vmem:[%s166 + $0x40] sm:$0xff]
      %v189 = vld [vmem:[%s166 + $0x48] sm:$0xff]
      %v190 = vld [vmem:[%s166 + $0x50] sm:$0xff]
      %v191 = vld [vmem:[%s166 + $0x58] sm:$0xff]
      %v192 = vld [vmem:[%s166 + $0x60] sm:$0xff]
      %v193 = vld [vmem:[%s166 + $0x68] sm:$0xff]
      %v194 = vld [vmem:[%s166 + $0x70] sm:$0xff]
      %v195 = vld [vmem:[%s166 + $0x78] sm:$0xff]
      %v196 = vld [vmem:[%s166 + $0x80] sm:$0xff]
      %v197 = vld [vmem:[%s166 + $0x88] sm:$0xff]
      %v198 = vld [vmem:[%s166 + $0x90] sm:$0xff]
      %v199 = vld [vmem:[%s166 + $0x98] sm:$0xff]
      %v200 = vld [vmem:[%s166 + $0xa0] sm:$0xff]
      %v201 = vld [vmem:[%s166 + $0xa8] sm:$0xff]
      %v202 = vld [vmem:[%s166 + $0xb0] sm:$0xff]
      %v203 = vld [vmem:[%s166 + $0xb8] sm:$0xff]
      %v204 = vld [vmem:[%s166 + $0xc0] sm:$0xff]
      %v205 = vld [vmem:[%s166 + $0xc8] sm:$0xff]
      %v206 = vld [vmem:[%s166 + $0xd0] sm:$0xff]
      %v207 = vld [vmem:[%s166 + $0xd8] sm:$0xff]
      %v208 = vld [vmem:[%s166 + $0xe0] sm:$0xff]
      %v209 = vld [vmem:[%s166 + $0xe8] sm:$0xff]
      %v210 = vld [vmem:[%s166 + $0xf0] sm:$0xff]
      %v211 = vld [vmem:[%s166 + $0xf8] sm:$0xff]
      %v212 = vld [vmem:[%s166 + $0x100] sm:$0xff]
      %v213 = vld [vmem:[%s166 + $0x108] sm:$0xff]
      %v214 = vld [vmem:[%s166 + $0x110] sm:$0xff]
      %v215 = vld [vmem:[%s166 + $0x118] sm:$0xff]
      %v216 = vld [vmem:[%s166 + $0x120] sm:$0xff]
      %v217 = vld [vmem:[%s166 + $0x128] sm:$0xff]
      %v218 = vld [vmem:[%s166 + $0x130] sm:$0xff]
      %v219 = vld [vmem:[%s166 + $0x138] sm:$0xff]
      %v220 = vld [vmem:[%s166 + $0x140] sm:$0xff]
      %v221 = vld [vmem:[%s166 + $0x148] sm:$0xff]
      %v222 = vld [vmem:[%s166 + $0x150] sm:$0xff]
      %v223 = vld [vmem:[%s166 + $0x158] sm:$0xff]
      %v224 = vld [vmem:[%s166 + $0x160] sm:$0xff]
      %v225 = vld [vmem:[%s166 + $0x168] sm:$0xff]
      %v226 = vld [vmem:[%s166 + $0x170] sm:$0xff]
      %v227 = vld [vmem:[%s166 + $0x178] sm:$0xff]
      %v228 = vld [vmem:[%s166 + $0x180] sm:$0xff]
      %v229 = vld [vmem:[%s166 + $0x188] sm:$0xff]
      %v230 = vld [vmem:[%s166 + $0x190] sm:$0xff]
      %v231 = vld [vmem:[%s166 + $0x198] sm:$0xff]
      %v232 = vld [vmem:[%s166 + $0x1a0] sm:$0xff]
      %v233 = vld [vmem:[%s166 + $0x1a8] sm:$0xff]
      %v234 = vld [vmem:[%s166 + $0x1b0] sm:$0xff]
      %v235 = vld [vmem:[%s166 + $0x1b8] sm:$0xff]
      %v236 = vld [vmem:[%s166 + $0x1c0] sm:$0xff]
      %v237 = vld [vmem:[%s166 + $0x1c8] sm:$0xff]
      %v238 = vld [vmem:[%s166 + $0x1d0] sm:$0xff]
      %v239 = vld [vmem:[%s166 + $0x1d8] sm:$0xff]
      %v240 = vld [vmem:[%s166 + $0x1e0] sm:$0xff]
      %v241 = vld [vmem:[%s166 + $0x1e8] sm:$0xff]
      %v242 = vld [vmem:[%s166 + $0x1f0] sm:$0xff]
      %v243 = vld [vmem:[%s166 + $0x1f8] sm:$0xff]
      %v244 = vld [vmem:[%s170] sm:$0x1]
      %v245 = vadd.f32 %v180, %v181
      %v246 = vadd.f32 %v245, %v182
      %v247 = vadd.f32 %v246, %v183
      %v248 = vadd.f32 %v247, %v184
      %v249 = vadd.f32 %v248, %v185
      %v250 = vadd.f32 %v249, %v186
      %v251 = vadd.f32 %v250, %v187
      %v252 = vadd.f32 %v251, %v188
      %v253 = vadd.f32 %v252, %v189
      %v254 = vadd.f32 %v253, %v190
      %v255 = vadd.f32 %v254, %v191
      %v256 = vadd.f32 %v255, %v192
      %v257 = vadd.f32 %v256, %v193
      %v258 = vadd.f32 %v257, %v194
      %v259 = vadd.f32 %v258, %v195
      %v260 = vadd.f32 %v259, %v196
      %v261 = vadd.f32 %v260, %v197
      %v262 = vadd.f32 %v261, %v198
      %v263 = vadd.f32 %v262, %v199
      %v264 = vadd.f32 %v263, %v200
      %v265 = vadd.f32 %v264, %v201
      %v266 = vadd.f32 %v265, %v202
      %v267 = vadd.f32 %v266, %v203
      %v268 = vadd.f32 %v267, %v204
      %v269 = vadd.f32 %v268, %v205
      %v270 = vadd.f32 %v269, %v206
      %v271 = vadd.f32 %v270, %v207
      %v272 = vadd.f32 %v271, %v208
      %v273 = vadd.f32 %v272, %v209
      %v274 = vadd.f32 %v273, %v210
      %v275 = vadd.f32 %v274, %v211
      %v276 = vadd.f32 %v275, %v212
      %v277 = vadd.f32 %v276, %v213
      %v278 = vadd.f32 %v277, %v214
      %v279 = vadd.f32 %v278, %v215
      %v280 = vadd.f32 %v279, %v216
      %v281 = vadd.f32 %v280, %v217
      %v282 = vadd.f32 %v281, %v218
      %v283 = vadd.f32 %v282, %v219
      %v284 = vadd.f32 %v283, %v220
      %v285 = vadd.f32 %v284, %v221
      %v286 = vadd.f32 %v285, %v222
      %v287 = vadd.f32 %v286, %v223
      %v288 = vadd.f32 %v287, %v224
      %v289 = vadd.f32 %v288, %v225
      %v290 = vadd.f32 %v289, %v226
      %v291 = vadd.f32 %v290, %v227
      %v292 = vadd.f32 %v291, %v228
      %v293 = vadd.f32 %v292, %v229
      %v294 = vadd.f32 %v293, %v230
      %v295 = vadd.f32 %v294, %v231
      %v296 = vadd.f32 %v295, %v232
      %v297 = vadd.f32 %v296, %v233
      %v298 = vadd.f32 %v297, %v234
      %v299 = vadd.f32 %v298, %v235
      %v300 = vadd.f32 %v299, %v236
      %v301 = vadd.f32 %v300, %v237
      %v302 = vadd.f32 %v301, %v238
      %v303 = vadd.f32 %v302, %v239
      %v304 = vadd.f32 %v303, %v240
      %v305 = vadd.f32 %v304, %v241
      %v306 = vadd.f32 %v305, %v242
      %v307 = vadd.f32 %v306, %v243
      %v308 = vrot.slane %v307, 4
      %v309 = vadd.f32 %v307, %v308
      %v310 = vrot.slane %v309, 2
      %v311 = vadd.f32 %v309, %v310
      %v312 = vrot.slane %v311, 1
      %v313 = vadd.f32 %v311, %v312
      %v314 = vadd.f32 %v244, %v313
      %315 = vst [vmem:[%s170] sm:$0x1] %v314
      %v316 = vld [vmem:[%s173] sm:$0x1]
      %v317 = vmul.f32 %v180, %v180
      %v318 = vmul.f32 %v181, %v181
      %v319 = vmul.f32 %v182, %v182
      %v320 = vmul.f32 %v183, %v183
      %v321 = vmul.f32 %v184, %v184
      %v322 = vmul.f32 %v185, %v185
      %v323 = vmul.f32 %v186, %v186
      %v324 = vmul.f32 %v187, %v187
      %v325 = vmul.f32 %v188, %v188
      %v326 = vmul.f32 %v189, %v189
      %v327 = vmul.f32 %v190, %v190
      %v328 = vmul.f32 %v191, %v191
      %v329 = vmul.f32 %v192, %v192
      %v330 = vmul.f32 %v193, %v193
      %v331 = vmul.f32 %v194, %v194
      %v332 = vmul.f32 %v195, %v195
      %v333 = vmul.f32 %v196, %v196
      %v334 = vmul.f32 %v197, %v197
      %v335 = vmul.f32 %v198, %v198
      %v336 = vmul.f32 %v199, %v199
      %v337 = vmul.f32 %v200, %v200
      %v338 = vmul.f32 %v201, %v201
      %v339 = vmul.f32 %v202, %v202
      %v340 = vmul.f32 %v203, %v203
      %v341 = vmul.f32 %v204, %v204
      %v342 = vmul.f32 %v205, %v205
      %v343 = vmul.f32 %v206, %v206
      %v344 = vmul.f32 %v207, %v207
      %v345 = vmul.f32 %v208, %v208
      %v346 = vmul.f32 %v209, %v209
      %v347 = vmul.f32 %v210, %v210
      %v348 = vmul.f32 %v211, %v211
      %v349 = vmul.f32 %v212, %v212
      %v350 = vmul.f32 %v213, %v213
      %v351 = vmul.f32 %v214, %v214
      %v352 = vmul.f32 %v215, %v215
      %v353 = vmul.f32 %v216, %v216
      %v354 = vmul.f32 %v217, %v217
      %v355 = vmul.f32 %v218, %v218
      %v356 = vmul.f32 %v219, %v219
      %v357 = vmul.f32 %v220, %v220
      %v358 = vmul.f32 %v221, %v221
      %v359 = vmul.f32 %v222, %v222
      %v360 = vmul.f32 %v223, %v223
      %v361 = vmul.f32 %v224, %v224
      %v362 = vmul.f32 %v225, %v225
      %v363 = vmul.f32 %v226, %v226
      %v364 = vmul.f32 %v227, %v227
      %v365 = vmul.f32 %v228, %v228
      %v366 = vmul.f32 %v229, %v229
      %v367 = vmul.f32 %v230, %v230
      %v368 = vmul.f32 %v231, %v231
      %v369 = vmul.f32 %v232, %v232
      %v370 = vmul.f32 %v233, %v233
      %v371 = vmul.f32 %v234, %v234
      %v372 = vmul.f32 %v235, %v235
      %v373 = vmul.f32 %v236, %v236
      %v374 = vmul.f32 %v237, %v237
      %v375 = vmul.f32 %v238, %v238
      %v376 = vmul.f32 %v239, %v239
      %v377 = vmul.f32 %v240, %v240
      %v378 = vmul.f32 %v241, %v241
      %v379 = vmul.f32 %v242, %v242
      %v380 = vmul.f32 %v243, %v243
      %v381 = vadd.f32 %v317, %v318
      %v382 = vadd.f32 %v381, %v319
      %v383 = vadd.f32 %v382, %v320
      %v384 = vadd.f32 %v383, %v321
      %v385 = vadd.f32 %v384, %v322
      %v386 = vadd.f32 %v385, %v323
      %v387 = vadd.f32 %v386, %v324
      %v388 = vadd.f32 %v387, %v325
      %v389 = vadd.f32 %v388, %v326
      %v390 = vadd.f32 %v389, %v327
      %v391 = vadd.f32 %v390, %v328
      %v392 = vadd.f32 %v391, %v329
      %v393 = vadd.f32 %v392, %v330
      %v394 = vadd.f32 %v393, %v331
      %v395 = vadd.f32 %v394, %v332
      %v396 = vadd.f32 %v395, %v333
      %v397 = vadd.f32 %v396, %v334
      %v398 = vadd.f32 %v397, %v335
      %v399 = vadd.f32 %v398, %v336
      %v400 = vadd.f32 %v399, %v337
      %v401 = vadd.f32 %v400, %v338
      %v402 = vadd.f32 %v401, %v339
      %v403 = vadd.f32 %v402, %v340
      %v404 = vadd.f32 %v403, %v341
      %v405 = vadd.f32 %v404, %v342
      %v406 = vadd.f32 %v405, %v343
      %v407 = vadd.f32 %v406, %v344
      %v408 = vadd.f32 %v407, %v345
      %v409 = vadd.f32 %v408, %v346
      %v410 = vadd.f32 %v409, %v347
      %v411 = vadd.f32 %v410, %v348
      %v412 = vadd.f32 %v411, %v349
      %v413 = vadd.f32 %v412, %v350
      %v414 = vadd.f32 %v413, %v351
      %v415 = vadd.f32 %v414, %v352
      %v416 = vadd.f32 %v415, %v353
      %v417 = vadd.f32 %v416, %v354
      %v418 = vadd.f32 %v417, %v355
      %v419 = vadd.f32 %v418, %v356
      %v420 = vadd.f32 %v419, %v357
      %v421 = vadd.f32 %v420, %v358
      %v422 = vadd.f32 %v421, %v359
      %v423 = vadd.f32 %v422, %v360
      %v424 = vadd.f32 %v423, %v361
      %v425 = vadd.f32 %v424, %v362
      %v426 = vadd.f32 %v425, %v363
      %v427 = vadd.f32 %v426, %v364
      %v428 = vadd.f32 %v427, %v365
      %v429 = vadd.f32 %v428, %v366
      %v430 = vadd.f32 %v429, %v367
      %v431 = vadd.f32 %v430, %v368
      %v432 = vadd.f32 %v431, %v369
      %v433 = vadd.f32 %v432, %v370
      %v434 = vadd.f32 %v433, %v371
      %v435 = vadd.f32 %v434, %v372
      %v436 = vadd.f32 %v435, %v373
      %v437 = vadd.f32 %v436, %v374
      %v438 = vadd.f32 %v437, %v375
      %v439 = vadd.f32 %v438, %v376
      %v440 = vadd.f32 %v439, %v377
      %v441 = vadd.f32 %v440, %v378
      %v442 = vadd.f32 %v441, %v379
      %v443 = vadd.f32 %v442, %v380
      %v444 = vrot.slane %v443, 4
      %v445 = vadd.f32 %v443, %v444
      %v446 = vrot.slane %v445, 2
      %v447 = vadd.f32 %v445, %v446
      %v448 = vrot.slane %v447, 1
      %v449 = vadd.f32 %v447, %v448
      %v450 = vadd.f32 %v316, %v449
      %451 = vst [vmem:[%s173] sm:$0x1] %v450
      %p452 = scmp.lt.s32.totalorder %s18, 0
      %s453 = scalar_select %p452, %s18, 0
      %s454 = scalar_lea.vmem %s1, %s453
      %p455 = scmp.lt.s32.totalorder %s18, 0
      %s456 = scalar_select %p455, %s18, 0
      %s457 = scalar_lea.vmem %s2, %s456
      // Predicated region
      $region29: #{generator_forward.41} parent=23 // pred_check
        %p458 = pneg %p72
      $region30: #{generator_forward.41} parent=23 // pred_check_branch
        %460 = sbr.rel (%p458) target = $region32
      $region31: #{generator_forward.41} parent=23 // pred_region
        _
      $region32: #{generator_forward.41} parent=23 // pred_fallthru
        _
      // Predicated region
      $region33: #{generator_forward.41} parent=23 // pred_check
        %p461 = pneg %p98
      $region34: #{generator_forward.41} parent=23 // pred_check_branch
        %463 = sbr.rel (%p461) target = $region36
      $region35: #{generator_forward.41} parent=23 // pred_region
        _
      $region36: #{generator_forward.41} parent=23 // pred_fallthru
        _
      // Predicated region
      $region37: #{generator_forward.41} parent=23 // pred_check
        %p464 = pneg %p72
      $region38: #{generator_forward.41} parent=23 // pred_check_branch
        %466 = sbr.rel (%p464) target = $region40
      $region39: #{generator_forward.41} parent=23 // pred_region
        %p467 = scmp.lt.s32.totalorder %s18, 0
        %s468 = scalar_select %p467, %s18, 0
        %s469 = scalar_lea.vmem %s1, %s468
      $region40: #{generator_forward.41} parent=23 // pred_fallthru
        _
      // Predicated region
      $region41: #{generator_forward.41} parent=23 // pred_check
        %p470 = pneg %p98
      $region42: #{generator_forward.41} parent=23 // pred_check_branch
        %472 = sbr.rel (%p470) target = $region44
      $region43: #{generator_forward.41} parent=23 // pred_region
        %p473 = scmp.lt.s32.totalorder %s18, 0
        %s474 = scalar_select %p473, %s18, 0
        %s475 = scalar_lea.vmem %s2, %s474
      $region44: #{generator_forward.41} parent=23 // pred_fallthru
        _
    $region24: #{generator_forward.41} parent=5 // pred_fallthru
      _
    %p476 = scmp.le.s32.totalorder 2, %s9
    // Predicated region
    $region45: #{generator_forward.41} parent=5 // pred_check
      %p477 = pneg %p476
    $region46: #{generator_forward.41} parent=5 // pred_check_branch
      %479 = sbr.rel (%p477) target = $region48
    $region47: #{generator_forward.41} parent=5 // pred_region
      %s480 = ssub.s32 %s9, 2
    $region48: #{generator_forward.41} parent=5 // pred_fallthru
      _
  $region6: #{generator_forward.41} parent=0 // loop_footer
    %s13 = sadd.s32 1, %s9
  $region7: #{generator_forward.41} parent=0 // loop_footer_branch
    %8 = sbr.rel target = $region3
  $region8: #{generator_forward.41} parent=0 // loop_exit
    _

// kernel: generator_forward.42
$region0: #{generator_forward.42}
  #allocation0 [shape = 'u32[]', space=smem, size = 0x4, offset = 0x4, fixed_abs, tag = 'smem constant byte address 0x4 - core index']
  #allocation1 [shape = 'u32[72,128]{1,0:T(1,128)}', space=vmem, size = 0x9000, scoped, tag = 'internal scratch']
  %s0 = inlined_call_operand.vmem [shape: f32[2048,128], index: 0, kind: input, shape index: {}]
  %s1 = inlined_call_operand.vmem [shape: f32[1,128], index: 1, kind: input, shape index: {}]
  %s2 = inlined_call_operand.vmem [shape: f32[1,128], index: 2, kind: input, shape index: {}]
  %s3 = inlined_call_operand.vmem [shape: f32[2048,128], index: 3, kind: output, shape index: {}]
  %s4 = sld [smem:[#allocation0]]
  $region45: #{generator_forward.42} parent=0
    _
  %s6 = ssub.s32 1, %s4
  %s7 = scalar_select 0, %s6, %s4
  loop: start=0, step=1, limit=6
  $region2: #{generator_forward.42} parent=0 // loop_pre_header
    _
  $region3: #{generator_forward.42} parent=0 // loop_header
    %s9 = sphi 0, %s13
    %p10 = scmp.ge.s32.totalorder %s9, 6
    %s16 = sphi 0, %s28
    %s17 = sphi 0, %s24
    %s18 = sphi 0, %s16
    %s19 = sphi 0, %s17
    %s20 = sphi 0, %s18
    %s21 = sphi 0, %s19
    %s33 = sphi 0, %s35
    %s36 = sphi 0, %s33
    %s37 = sphi 0, %s36
    %s53 = sphi 0, %s37
    %s59 = sphi 0, %s61
    %s62 = sphi 0, %s59
    %s63 = sphi 0, %s62
    %s79 = sphi 0, %s63
    %s85 = sphi 0, %s87
    %s88 = sphi 0, %s85
    %s89 = sphi 0, %s88
    %s105 = sphi 0, %s89
    %s113 = sphi 0, %s115
    %s116 = sphi 0, %s113
    %s117 = sphi 0, %s116
    %s133 = sphi 0, %s117
  $region4: #{generator_forward.42} parent=0 // loop_header_branch
    %12 = sbr.rel (%p10) target = $region8
  $region5: #{generator_forward.42} parent=0 // loop_body
    %s14 = ssub.s32 %s9, 1
    %s15 = ssub.s32 %s9, 2
    %s22 = sadd.s32 1, %s17
    %p23 = scmp.ge.s32.totalorder %s22, 1
    %s24 = scalar_select %p23, 0, %s22
    %s25 = sadd.s32 1, %s16
    %s26 = scalar_select %p23, %s25, %s16
    %p27 = scmp.ge.s32.totalorder %s26, 4
    %s28 = scalar_select %p27, 0, %s26
    %s29 = ssub.s32 %s16, %s28
    %s30 = ssub.s32 %s17, %s24
    %s31 = sor.u32 %s29, %s30
    %p32 = scmp.eq.s32.totalorder %s31, 0
    %s34 = sadd.s32 %s33, 1
    %s35 = scalar_select %p32, %s33, %s34
    %p38 = pneg %p32
    %p39 = scmp.eq.s32.totalorder %s9, 3
    %p40 = por %p38, %p39
    %p41 = scmp.ne.s32.totalorder %s33, %s36
    %p42 = scmp.eq.s32.totalorder %s9, 0
    %p43 = por %p41, %p42
    %p44 = scmp.ne.s32.totalorder %s33, %s36
    %p45 = scmp.eq.s32.totalorder %s14, 3
    %p46 = por %p44, %p45
    %p47 = scmp.ne.s32.totalorder %s36, %s37
    %p48 = scmp.eq.s32.totalorder %s14, 0
    %p49 = por %p47, %p48
    %p50 = scmp.ne.s32.totalorder %s36, %s37
    %p51 = scmp.eq.s32.totalorder %s15, 3
    %p52 = por %p50, %p51
    %p54 = scmp.ne.s32.totalorder %s37, %s53
    %p55 = scmp.eq.s32.totalorder %s15, 0
    %p56 = por %p54, %p55
    %s57 = ssub.s32 %s17, %s24
    %p58 = scmp.eq.s32.totalorder %s57, 0
    %s60 = sadd.s32 %s59, 1
    %s61 = scalar_select %p58, %s59, %s60
    %p64 = pneg %p58
    %p65 = scmp.eq.s32.totalorder %s9, 3
    %p66 = por %p64, %p65
    %p67 = scmp.ne.s32.totalorder %s59, %s62
    %p68 = scmp.eq.s32.totalorder %s9, 0
    %p69 = por %p67, %p68
    %p70 = scmp.ne.s32.totalorder %s59, %s62
    %p71 = scmp.eq.s32.totalorder %s14, 3
    %p72 = por %p70, %p71
    %p73 = scmp.ne.s32.totalorder %s62, %s63
    %p74 = scmp.eq.s32.totalorder %s14, 0
    %p75 = por %p73, %p74
    %p76 = scmp.ne.s32.totalorder %s62, %s63
    %p77 = scmp.eq.s32.totalorder %s15, 3
    %p78 = por %p76, %p77
    %p80 = scmp.ne.s32.totalorder %s63, %s79
    %p81 = scmp.eq.s32.totalorder %s15, 0
    %p82 = por %p80, %p81
    %s83 = ssub.s32 %s17, %s24
    %p84 = scmp.eq.s32.totalorder %s83, 0
    %s86 = sadd.s32 %s85, 1
    %s87 = scalar_select %p84, %s85, %s86
    %p90 = pneg %p84
    %p91 = scmp.eq.s32.totalorder %s9, 3
    %p92 = por %p90, %p91
    %p93 = scmp.ne.s32.totalorder %s85, %s88
    %p94 = scmp.eq.s32.totalorder %s9, 0
    %p95 = por %p93, %p94
    %p96 = scmp.ne.s32.totalorder %s85, %s88
    %p97 = scmp.eq.s32.totalorder %s14, 3
    %p98 = por %p96, %p97
    %p99 = scmp.ne.s32.totalorder %s88, %s89
    %p100 = scmp.eq.s32.totalorder %s14, 0
    %p101 = por %p99, %p100
    %p102 = scmp.ne.s32.totalorder %s88, %s89
    %p103 = scmp.eq.s32.totalorder %s15, 3
    %p104 = por %p102, %p103
    %p106 = scmp.ne.s32.totalorder %s89, %s105
    %p107 = scmp.eq.s32.totalorder %s15, 0
    %p108 = por %p106, %p107
    %s109 = ssub.s32 %s16, %s28
    %s110 = ssub.s32 %s17, %s24
    %s111 = sor.u32 %s109, %s110
    %p112 = scmp.eq.s32.totalorder %s111, 0
    %s114 = sadd.s32 %s113, 1
    %s115 = scalar_select %p112, %s113, %s114
    %p118 = pneg %p112
    %p119 = scmp.eq.s32.totalorder %s9, 3
    %p120 = por %p118, %p119
    %p121 = scmp.ne.s32.totalorder %s113, %s116
    %p122 = scmp.eq.s32.totalorder %s9, 0
    %p123 = por %p121, %p122
    %p124 = scmp.ne.s32.totalorder %s113, %s116
    %p125 = scmp.eq.s32.totalorder %s14, 3
    %p126 = por %p124, %p125
    %p127 = scmp.ne.s32.totalorder %s116, %s117
    %p128 = scmp.eq.s32.totalorder %s14, 0
    %p129 = por %p127, %p128
    %p130 = scmp.ne.s32.totalorder %s116, %s117
    %p131 = scmp.eq.s32.totalorder %s15, 3
    %p132 = por %p130, %p131
    %p134 = scmp.ne.s32.totalorder %s117, %s133
    %p135 = scmp.eq.s32.totalorder %s15, 0
    %p136 = por %p134, %p135
    %p137 = scmp.le.s32.totalorder 1, %s9
    %p138 = scmp.lt.s32.totalorder %s9, 5
    %p139 = pnand %p137, %p138
    %p140 = pneg %p139
    // Predicated region
    $region9: #{generator_forward.42} parent=5 // pred_check
      _
    $region10: #{generator_forward.42} parent=5 // pred_check_branch
      %142 = sbr.rel (%p139) target = $region12
    $region11: #{generator_forward.42} parent=5 // pred_region
      %s143 = ssub.s32 %s9, 1
      // Predicated region
      $region13: #{generator_forward.42} parent=11 // pred_check
        %p144 = pneg %p75
      $region14: #{generator_forward.42} parent=11 // pred_check_branch
        %146 = sbr.rel (%p144) target = $region16
      $region15: #{generator_forward.42} parent=11 // pred_region
        %p147 = scmp.lt.s32.totalorder %s19, 0
        %s148 = scalar_select %p147, %s19, 0
        %s149 = scalar_lea.vmem %s1, %s148
      $region16: #{generator_forward.42} parent=11 // pred_fallthru
        _
      // Predicated region
      $region17: #{generator_forward.42} parent=11 // pred_check
        %p150 = pneg %p101
      $region18: #{generator_forward.42} parent=11 // pred_check_branch
        %152 = sbr.rel (%p150) target = $region20
      $region19: #{generator_forward.42} parent=11 // pred_region
        %p153 = scmp.lt.s32.totalorder %s19, 0
        %s154 = scalar_select %p153, %s19, 0
        %s155 = scalar_lea.vmem %s2, %s154
      $region20: #{generator_forward.42} parent=11 // pred_fallthru
        _
    $region12: #{generator_forward.42} parent=5 // pred_fallthru
      _
    %p156 = scmp.lt.s32.totalorder %s9, 4
    // Predicated region
    $region21: #{generator_forward.42} parent=5 // pred_check
      %p157 = pneg %p156
    $region22: #{generator_forward.42} parent=5 // pred_check_branch
      %159 = sbr.rel (%p157) target = $region24
    $region23: #{generator_forward.42} parent=5 // pred_region
      // Predicated region
      $region25: #{generator_forward.42} parent=23 // pred_check
        %p160 = pneg %p43
      $region26: #{generator_forward.42} parent=23 // pred_check_branch
        %162 = sbr.rel (%p160) target = $region28
      $region27: #{generator_forward.42} parent=23 // pred_region
        %s163 = smul.u32 64, %s16
        %p164 = scmp.lt.s32.totalorder %s163, 255
        %s165 = scalar_select %p164, %s163, 255
        %p166 = scmp.lt.s32.totalorder %s17, 0
        %s167 = scalar_select %p166, %s17, 0
        %s168 = sadd.s32 %s167, %s165
        %s169 = smul.addr %s168, 8
        %s170 = scalar_lea.vmem %s0, %s169
        %s171 = smul.u32 64, %s16
      $region28: #{generator_forward.42} parent=23 // pred_fallthru
        _
    $region24: #{generator_forward.42} parent=5 // pred_fallthru
      _
    %p172 = scmp.le.s32.totalorder 1, %s9
    %p173 = scmp.lt.s32.totalorder %s9, 5
    %p174 = pnand %p172, %p173
    %p175 = pneg %p174
    // Predicated region
    $region29: #{generator_forward.42} parent=5 // pred_check
      _
    $region30: #{generator_forward.42} parent=5 // pred_check_branch
      %177 = sbr.rel (%p174) target = $region32
    $region31: #{generator_forward.42} parent=5 // pred_region
      %s178 = ssub.s32 %s9, 1
      %s179 = smul.u32 64, %s18
      %p180 = scmp.lt.s32.totalorder %s179, 255
      %s181 = scalar_select %p180, %s179, 255
      %p182 = scmp.lt.s32.totalorder %s19, 0
      %s183 = scalar_select %p182, %s19, 0
      %s184 = sadd.s32 %s183, %s181
      %s185 = smul.addr %s184, 8
      %s186 = scalar_lea.vmem %s0, %s185
      %p187 = pneg %p49
      %p188 = pneg %p46
      %p189 = scmp.lt.s32.totalorder %s19, 0
      %s190 = scalar_select %p189, %s19, 0
      %s191 = scalar_lea.vmem %s1, %s190
      %p192 = pneg %p75
      %p193 = pneg %p72
      %p194 = scmp.lt.s32.totalorder %s19, 0
      %s195 = scalar_select %p194, %s19, 0
      %s196 = scalar_lea.vmem %s2, %s195
      %p197 = pneg %p101
      %p198 = pneg %p98
      %p199 = pneg %p129
      %p200 = pneg %p126
      %s201 = smul.u32 64, %s18
      %p202 = scmp.lt.s32.totalorder %s201, 255
      %s203 = scalar_select %p202, %s201, 255
      %p204 = scmp.lt.s32.totalorder %s19, 0
      %s205 = scalar_select %p204, %s19, 0
      %s206 = sadd.s32 %s205, %s203
      %s207 = smul.addr %s206, 8
      %s208 = scalar_lea.vmem %s3, %s207
      %s209 = smul.u32 64, %s18
      %p210 = scmp.lt.s32.totalorder %s209, 255
      %s211 = scalar_select %p210, %s209, 255
      %p212 = scmp.lt.s32.totalorder %s19, 0
      %s213 = scalar_select %p212, %s19, 0
      %s214 = sadd.s32 %s213, %s211
      %s215 = smul.addr %s214, 8
      %s216 = scalar_lea.vmem %s0, %s215
      %s217 = smul.u32 64, %s18
      %p218 = scmp.lt.s32.totalorder %s19, 0
      %s219 = scalar_select %p218, %s19, 0
      %s220 = scalar_lea.vmem %s1, %s219
      %p221 = scmp.lt.s32.totalorder %s19, 0
      %s222 = scalar_select %p221, %s19, 0
      %s223 = scalar_lea.vmem %s2, %s222
      %s224 = smul.u32 64, %s18
      %p225 = scmp.lt.s32.totalorder %s224, 255
      %s226 = scalar_select %p225, %s224, 255
      %p227 = scmp.lt.s32.totalorder %s19, 0
      %s228 = scalar_select %p227, %s19, 0
      %s229 = sadd.s32 %s228, %s226
      %s230 = smul.addr %s229, 8
      %s231 = scalar_lea.vmem %s3, %s230
      %s232 = smul.u32 64, %s18
      %v233 = vld [vmem:[%s216] sm:$0xff]
      %v234 = vld [vmem:[%s216 + $0x8] sm:$0xff]
      %v235 = vld [vmem:[%s216 + $0x10] sm:$0xff]
      %v236 = vld [vmem:[%s216 + $0x18] sm:$0xff]
      %v237 = vld [vmem:[%s216 + $0x20] sm:$0xff]
      %v238 = vld [vmem:[%s216 + $0x28] sm:$0xff]
      %v239 = vld [vmem:[%s216 + $0x30] sm:$0xff]
      %v240 = vld [vmem:[%s216 + $0x38] sm:$0xff]
      %v241 = vld [vmem:[%s216 + $0x40] sm:$0xff]
      %v242 = vld [vmem:[%s216 + $0x48] sm:$0xff]
      %v243 = vld [vmem:[%s216 + $0x50] sm:$0xff]
      %v244 = vld [vmem:[%s216 + $0x58] sm:$0xff]
      %v245 = vld [vmem:[%s216 + $0x60] sm:$0xff]
      %v246 = vld [vmem:[%s216 + $0x68] sm:$0xff]
      %v247 = vld [vmem:[%s216 + $0x70] sm:$0xff]
      %v248 = vld [vmem:[%s216 + $0x78] sm:$0xff]
      %v249 = vld [vmem:[%s216 + $0x80] sm:$0xff]
      %v250 = vld [vmem:[%s216 + $0x88] sm:$0xff]
      %v251 = vld [vmem:[%s216 + $0x90] sm:$0xff]
      %v252 = vld [vmem:[%s216 + $0x98] sm:$0xff]
      %v253 = vld [vmem:[%s216 + $0xa0] sm:$0xff]
      %v254 = vld [vmem:[%s216 + $0xa8] sm:$0xff]
      %v255 = vld [vmem:[%s216 + $0xb0] sm:$0xff]
      %v256 = vld [vmem:[%s216 + $0xb8] sm:$0xff]
      %v257 = vld [vmem:[%s216 + $0xc0] sm:$0xff]
      %v258 = vld [vmem:[%s216 + $0xc8] sm:$0xff]
      %v259 = vld [vmem:[%s216 + $0xd0] sm:$0xff]
      %v260 = vld [vmem:[%s216 + $0xd8] sm:$0xff]
      %v261 = vld [vmem:[%s216 + $0xe0] sm:$0xff]
      %v262 = vld [vmem:[%s216 + $0xe8] sm:$0xff]
      %v263 = vld [vmem:[%s216 + $0xf0] sm:$0xff]
      %v264 = vld [vmem:[%s216 + $0xf8] sm:$0xff]
      %v265 = vld [vmem:[%s216 + $0x100] sm:$0xff]
      %v266 = vld [vmem:[%s216 + $0x108] sm:$0xff]
      %v267 = vld [vmem:[%s216 + $0x110] sm:$0xff]
      %v268 = vld [vmem:[%s216 + $0x118] sm:$0xff]
      %v269 = vld [vmem:[%s216 + $0x120] sm:$0xff]
      %v270 = vld [vmem:[%s216 + $0x128] sm:$0xff]
      %v271 = vld [vmem:[%s216 + $0x130] sm:$0xff]
      %v272 = vld [vmem:[%s216 + $0x138] sm:$0xff]
      %v273 = vld [vmem:[%s216 + $0x140] sm:$0xff]
      %v274 = vld [vmem:[%s216 + $0x148] sm:$0xff]
      %v275 = vld [vmem:[%s216 + $0x150] sm:$0xff]
      %v276 = vld [vmem:[%s216 + $0x158] sm:$0xff]
      %v277 = vld [vmem:[%s216 + $0x160] sm:$0xff]
      %v278 = vld [vmem:[%s216 + $0x168] sm:$0xff]
      %v279 = vld [vmem:[%s216 + $0x170] sm:$0xff]
      %v280 = vld [vmem:[%s216 + $0x178] sm:$0xff]
      %v281 = vld [vmem:[%s216 + $0x180] sm:$0xff]
      %v282 = vld [vmem:[%s216 + $0x188] sm:$0xff]
      %v283 = vld [vmem:[%s216 + $0x190] sm:$0xff]
      %v284 = vld [vmem:[%s216 + $0x198] sm:$0xff]
      %v285 = vld [vmem:[%s216 + $0x1a0] sm:$0xff]
      %v286 = vld [vmem:[%s216 + $0x1a8] sm:$0xff]
      %v287 = vld [vmem:[%s216 + $0x1b0] sm:$0xff]
      %v288 = vld [vmem:[%s216 + $0x1b8] sm:$0xff]
      %v289 = vld [vmem:[%s216 + $0x1c0] sm:$0xff]
      %v290 = vld [vmem:[%s216 + $0x1c8] sm:$0xff]
      %v291 = vld [vmem:[%s216 + $0x1d0] sm:$0xff]
      %v292 = vld [vmem:[%s216 + $0x1d8] sm:$0xff]
      %v293 = vld [vmem:[%s216 + $0x1e0] sm:$0xff]
      %v294 = vld [vmem:[%s216 + $0x1e8] sm:$0xff]
      %v295 = vld [vmem:[%s216 + $0x1f0] sm:$0xff]
      %v296 = vld [vmem:[%s216 + $0x1f8] sm:$0xff]
      %v297 = vld [vmem:[%s220] sm:$0x1]
      %v299 = vperm.slane %v297, 0
      %v301 = vmul.f32 %v233, %v299
      %v302 = vmul.f32 %v234, %v299
      %v303 = vmul.f32 %v235, %v299
      %v304 = vmul.f32 %v236, %v299
      %v305 = vmul.f32 %v237, %v299
      %v306 = vmul.f32 %v238, %v299
      %v307 = vmul.f32 %v239, %v299
      %v308 = vmul.f32 %v240, %v299
      %v309 = vmul.f32 %v241, %v299
      %v310 = vmul.f32 %v242, %v299
      %v311 = vmul.f32 %v243, %v299
      %v312 = vmul.f32 %v244, %v299
      %v313 = vmul.f32 %v245, %v299
      %v314 = vmul.f32 %v246, %v299
      %v315 = vmul.f32 %v247, %v299
      %v316 = vmul.f32 %v248, %v299
      %v317 = vmul.f32 %v249, %v299
      %v318 = vmul.f32 %v250, %v299
      %v319 = vmul.f32 %v251, %v299
      %v320 = vmul.f32 %v252, %v299
      %v321 = vmul.f32 %v253, %v299
      %v322 = vmul.f32 %v254, %v299
      %v323 = vmul.f32 %v255, %v299
      %v324 = vmul.f32 %v256, %v299
      %v325 = vmul.f32 %v257, %v299
      %v326 = vmul.f32 %v258, %v299
      %v327 = vmul.f32 %v259, %v299
      %v328 = vmul.f32 %v260, %v299
      %v329 = vmul.f32 %v261, %v299
      %v330 = vmul.f32 %v262, %v299
      %v331 = vmul.f32 %v263, %v299
      %v332 = vmul.f32 %v264, %v299
      %v333 = vmul.f32 %v265, %v299
      %v334 = vmul.f32 %v266, %v299
      %v335 = vmul.f32 %v267, %v299
      %v336 = vmul.f32 %v268, %v299
      %v337 = vmul.f32 %v269, %v299
      %v338 = vmul.f32 %v270, %v299
      %v339 = vmul.f32 %v271, %v299
      %v340 = vmul.f32 %v272, %v299
      %v341 = vmul.f32 %v273, %v299
      %v342 = vmul.f32 %v274, %v299
      %v343 = vmul.f32 %v275, %v299
      %v344 = vmul.f32 %v276, %v299
      %v345 = vmul.f32 %v277, %v299
      %v346 = vmul.f32 %v278, %v299
      %v347 = vmul.f32 %v279, %v299
      %v348 = vmul.f32 %v280, %v299
      %v349 = vmul.f32 %v281, %v299
      %v350 = vmul.f32 %v282, %v299
      %v351 = vmul.f32 %v283, %v299
      %v352 = vmul.f32 %v284, %v299
      %v353 = vmul.f32 %v285, %v299
      %v354 = vmul.f32 %v286, %v299
      %v355 = vmul.f32 %v287, %v299
      %v356 = vmul.f32 %v288, %v299
      %v357 = vmul.f32 %v289, %v299
      %v358 = vmul.f32 %v290, %v299
      %v359 = vmul.f32 %v291, %v299
      %v360 = vmul.f32 %v292, %v299
      %v361 = vmul.f32 %v293, %v299
      %v362 = vmul.f32 %v294, %v299
      %v363 = vmul.f32 %v295, %v299
      %v364 = vmul.f32 %v296, %v299
      %v365 = vld [vmem:[%s223] sm:$0x1]
      %v367 = vperm.slane %v365, 0
      %v369 = vadd.f32 %v301, %v367
      %v370 = vadd.f32 %v302, %v367
      %v371 = vadd.f32 %v303, %v367
      %v372 = vadd.f32 %v304, %v367
      %v373 = vadd.f32 %v305, %v367
      %v374 = vadd.f32 %v306, %v367
      %v375 = vadd.f32 %v307, %v367
      %v376 = vadd.f32 %v308, %v367
      %v377 = vadd.f32 %v309, %v367
      %v378 = vadd.f32 %v310, %v367
      %v379 = vadd.f32 %v311, %v367
      %v380 = vadd.f32 %v312, %v367
      %v381 = vadd.f32 %v313, %v367
      %v382 = vadd.f32 %v314, %v367
      %v383 = vadd.f32 %v315, %v367
      %v384 = vadd.f32 %v316, %v367
      %v385 = vadd.f32 %v317, %v367
      %v386 = vadd.f32 %v318, %v367
      %v387 = vadd.f32 %v319, %v367
      %v388 = vadd.f32 %v320, %v367
      %v389 = vadd.f32 %v321, %v367
      %v390 = vadd.f32 %v322, %v367
      %v391 = vadd.f32 %v323, %v367
      %v392 = vadd.f32 %v324, %v367
      %v393 = vadd.f32 %v325, %v367
      %v394 = vadd.f32 %v326, %v367
      %v395 = vadd.f32 %v327, %v367
      %v396 = vadd.f32 %v328, %v367
      %v397 = vadd.f32 %v329, %v367
      %v398 = vadd.f32 %v330, %v367
      %v399 = vadd.f32 %v331, %v367
      %v400 = vadd.f32 %v332, %v367
      %v401 = vadd.f32 %v333, %v367
      %v402 = vadd.f32 %v334, %v367
      %v403 = vadd.f32 %v335, %v367
      %v404 = vadd.f32 %v336, %v367
      %v405 = vadd.f32 %v337, %v367
      %v406 = vadd.f32 %v338, %v367
      %v407 = vadd.f32 %v339, %v367
      %v408 = vadd.f32 %v340, %v367
      %v409 = vadd.f32 %v341, %v367
      %v410 = vadd.f32 %v342, %v367
      %v411 = vadd.f32 %v343, %v367
      %v412 = vadd.f32 %v344, %v367
      %v413 = vadd.f32 %v345, %v367
      %v414 = vadd.f32 %v346, %v367
      %v415 = vadd.f32 %v347, %v367
      %v416 = vadd.f32 %v348, %v367
      %v417 = vadd.f32 %v349, %v367
      %v418 = vadd.f32 %v350, %v367
      %v419 = vadd.f32 %v351, %v367
      %v420 = vadd.f32 %v352, %v367
      %v421 = vadd.f32 %v353, %v367
      %v422 = vadd.f32 %v354, %v367
      %v423 = vadd.f32 %v355, %v367
      %v424 = vadd.f32 %v356, %v367
      %v425 = vadd.f32 %v357, %v367
      %v426 = vadd.f32 %v358, %v367
      %v427 = vadd.f32 %v359, %v367
      %v428 = vadd.f32 %v360, %v367
      %v429 = vadd.f32 %v361, %v367
      %v430 = vadd.f32 %v362, %v367
      %v431 = vadd.f32 %v363, %v367
      %v432 = vadd.f32 %v364, %v367
      %433 = vst [vmem:[%s231] sm:$0xff] %v369
      %434 = vst [vmem:[%s231 + $0x8] sm:$0xff] %v370
      %435 = vst [vmem:[%s231 + $0x10] sm:$0xff] %v371
      %436 = vst [vmem:[%s231 + $0x18] sm:$0xff] %v372
      %437 = vst [vmem:[%s231 + $0x20] sm:$0xff] %v373
      %438 = vst [vmem:[%s231 + $0x28] sm:$0xff] %v374
      %439 = vst [vmem:[%s231 + $0x30] sm:$0xff] %v375
      %440 = vst [vmem:[%s231 + $0x38] sm:$0xff] %v376
      %441 = vst [vmem:[%s231 + $0x40] sm:$0xff] %v377
      %442 = vst [vmem:[%s231 + $0x48] sm:$0xff] %v378
      %443 = vst [vmem:[%s231 + $0x50] sm:$0xff] %v379
      %444 = vst [vmem:[%s231 + $0x58] sm:$0xff] %v380
      %445 = vst [vmem:[%s231 + $0x60] sm:$0xff] %v381
      %446 = vst [vmem:[%s231 + $0x68] sm:$0xff] %v382
      %447 = vst [vmem:[%s231 + $0x70] sm:$0xff] %v383
      %448 = vst [vmem:[%s231 + $0x78] sm:$0xff] %v384
      %449 = vst [vmem:[%s231 + $0x80] sm:$0xff] %v385
      %450 = vst [vmem:[%s231 + $0x88] sm:$0xff] %v386
      %451 = vst [vmem:[%s231 + $0x90] sm:$0xff] %v387
      %452 = vst [vmem:[%s231 + $0x98] sm:$0xff] %v388
      %453 = vst [vmem:[%s231 + $0xa0] sm:$0xff] %v389
      %454 = vst [vmem:[%s231 + $0xa8] sm:$0xff] %v390
      %455 = vst [vmem:[%s231 + $0xb0] sm:$0xff] %v391
      %456 = vst [vmem:[%s231 + $0xb8] sm:$0xff] %v392
      %457 = vst [vmem:[%s231 + $0xc0] sm:$0xff] %v393
      %458 = vst [vmem:[%s231 + $0xc8] sm:$0xff] %v394
      %459 = vst [vmem:[%s231 + $0xd0] sm:$0xff] %v395
      %460 = vst [vmem:[%s231 + $0xd8] sm:$0xff] %v396
      %461 = vst [vmem:[%s231 + $0xe0] sm:$0xff] %v397
      %462 = vst [vmem:[%s231 + $0xe8] sm:$0xff] %v398
      %463 = vst [vmem:[%s231 + $0xf0] sm:$0xff] %v399
      %464 = vst [vmem:[%s231 + $0xf8] sm:$0xff] %v400
      %465 = vst [vmem:[%s231 + $0x100] sm:$0xff] %v401
      %466 = vst [vmem:[%s231 + $0x108] sm:$0xff] %v402
      %467 = vst [vmem:[%s231 + $0x110] sm:$0xff] %v403
      %468 = vst [vmem:[%s231 + $0x118] sm:$0xff] %v404
      %469 = vst [vmem:[%s231 + $0x120] sm:$0xff] %v405
      %470 = vst [vmem:[%s231 + $0x128] sm:$0xff] %v406
      %471 = vst [vmem:[%s231 + $0x130] sm:$0xff] %v407
      %472 = vst [vmem:[%s231 + $0x138] sm:$0xff] %v408
      %473 = vst [vmem:[%s231 + $0x140] sm:$0xff] %v409
      %474 = vst [vmem:[%s231 + $0x148] sm:$0xff] %v410
      %475 = vst [vmem:[%s231 + $0x150] sm:$0xff] %v411
      %476 = vst [vmem:[%s231 + $0x158] sm:$0xff] %v412
      %477 = vst [vmem:[%s231 + $0x160] sm:$0xff] %v413
      %478 = vst [vmem:[%s231 + $0x168] sm:$0xff] %v414
      %479 = vst [vmem:[%s231 + $0x170] sm:$0xff] %v415
      %480 = vst [vmem:[%s231 + $0x178] sm:$0xff] %v416
      %481 = vst [vmem:[%s231 + $0x180] sm:$0xff] %v417
      %482 = vst [vmem:[%s231 + $0x188] sm:$0xff] %v418
      %483 = vst [vmem:[%s231 + $0x190] sm:$0xff] %v419
      %484 = vst [vmem:[%s231 + $0x198] sm:$0xff] %v420
      %485 = vst [vmem:[%s231 + $0x1a0] sm:$0xff] %v421
      %486 = vst [vmem:[%s231 + $0x1a8] sm:$0xff] %v422
      %487 = vst [vmem:[%s231 + $0x1b0] sm:$0xff] %v423
      %488 = vst [vmem:[%s231 + $0x1b8] sm:$0xff] %v424
      %489 = vst [vmem:[%s231 + $0x1c0] sm:$0xff] %v425
      %490 = vst [vmem:[%s231 + $0x1c8] sm:$0xff] %v426
      %491 = vst [vmem:[%s231 + $0x1d0] sm:$0xff] %v427
      %492 = vst [vmem:[%s231 + $0x1d8] sm:$0xff] %v428
      %493 = vst [vmem:[%s231 + $0x1e0] sm:$0xff] %v429
      %494 = vst [vmem:[%s231 + $0x1e8] sm:$0xff] %v430
      %495 = vst [vmem:[%s231 + $0x1f0] sm:$0xff] %v431
      %496 = vst [vmem:[%s231 + $0x1f8] sm:$0xff] %v432
      %s497 = smul.u32 64, %s18
      %p498 = scmp.lt.s32.totalorder %s497, 255
      %s499 = scalar_select %p498, %s497, 255
      %p500 = scmp.lt.s32.totalorder %s19, 0
      %s501 = scalar_select %p500, %s19, 0
      %s502 = sadd.s32 %s501, %s499
      %s503 = smul.addr %s502, 8
      %s504 = scalar_lea.vmem %s3, %s503
      // Predicated region
      $region33: #{generator_forward.42} parent=31 // pred_check
        %p505 = pneg %p126
      $region34: #{generator_forward.42} parent=31 // pred_check_branch
        %507 = sbr.rel (%p505) target = $region36
      $region35: #{generator_forward.42} parent=31 // pred_region
        %s508 = smul.u32 64, %s18
      $region36: #{generator_forward.42} parent=31 // pred_fallthru
        _
    $region32: #{generator_forward.42} parent=5 // pred_fallthru
      _
    %p509 = scmp.le.s32.totalorder 2, %s9
    // Predicated region
    $region37: #{generator_forward.42} parent=5 // pred_check
      %p510 = pneg %p509
    $region38: #{generator_forward.42} parent=5 // pred_check_branch
      %512 = sbr.rel (%p510) target = $region40
    $region39: #{generator_forward.42} parent=5 // pred_region
      %s513 = ssub.s32 %s9, 2
      // Predicated region
      $region41: #{generator_forward.42} parent=39 // pred_check
        %p514 = pneg %p132
      $region42: #{generator_forward.42} parent=39 // pred_check_branch
        %516 = sbr.rel (%p514) target = $region44
      $region43: #{generator_forward.42} parent=39 // pred_region
        %s517 = smul.u32 64, %s20
        %p518 = scmp.lt.s32.totalorder %s517, 255
        %s519 = scalar_select %p518, %s517, 255
        %p520 = scmp.lt.s32.totalorder %s21, 0
        %s521 = scalar_select %p520, %s21, 0
        %s522 = sadd.s32 %s521, %s519
        %s523 = smul.addr %s522, 8
        %s524 = scalar_lea.vmem %s3, %s523
      $region44: #{generator_forward.42} parent=39 // pred_fallthru
        _
    $region40: #{generator_forward.42} parent=5 // pred_fallthru
      _
  $region6: #{generator_forward.42} parent=0 // loop_footer
    %s13 = sadd.s32 1, %s9
  $region7: #{generator_forward.42} parent=0 // loop_footer_branch
    %8 = sbr.rel target = $region3
  $region8: #{generator_forward.42} parent=0 // loop_exit
    _

// kernel: generator_forward.43
$region0: #{generator_forward.43}
  #allocation0 [shape = 'u32[]', space=smem, size = 0x4, offset = 0x4, fixed_abs, tag = 'smem constant byte address 0x4 - core index']
  #allocation1 [shape = 'u32[72,128]{1,0:T(1,128)}', space=vmem, size = 0x9000, scoped, tag = 'internal scratch']
  #allocation2 [shape = 'f32[256,128]{1,0:T(8,128)}', space=vmem, size = 0x20000, scoped, tag = 'scratch operand']
  %s0 = inlined_call_operand.vmem [shape: f32[2304,128], index: 0, kind: input, shape index: {}]
  %s1 = inlined_call_operand.vmem [shape: f32[128,128], index: 1, kind: input, shape index: {}]
  %s2 = inlined_call_operand.vmem [shape: f32[1,128], index: 2, kind: input, shape index: {}]
  %s3 = inlined_call_operand.vmem [shape: f32[2304,128], index: 3, kind: output, shape index: {}]
  %s4 = sld [smem:[#allocation0]]
  $region53: #{generator_forward.43} parent=0
    _
  %s6 = ssub.s32 1, %s4
  %s7 = scalar_select 0, %s6, %s4
  loop: start=0, step=1, limit=11
  $region2: #{generator_forward.43} parent=0 // loop_pre_header
    _
  $region3: #{generator_forward.43} parent=0 // loop_header
    %s9 = sphi 0, %s13
    %p10 = scmp.ge.s32.totalorder %s9, 11
    %s16 = sphi 0, %s35
    %s17 = sphi 0, %s31
    %s18 = sphi 0, %s27
    %s19 = sphi 0, %s16
    %s20 = sphi 0, %s17
    %s21 = sphi 0, %s18
    %s22 = sphi 0, %s19
    %s23 = sphi 0, %s20
    %s24 = sphi 0, %s21
    %s40 = sphi 0, %s42
    %s43 = sphi 0, %s40
    %s44 = sphi 0, %s43
    %s60 = sphi 0, %s44
    %s68 = sphi 0, %s70
    %s71 = sphi 0, %s68
    %s72 = sphi 0, %s71
    %s88 = sphi 0, %s72
    %s94 = sphi 0, %s96
    %s97 = sphi 0, %s94
    %s98 = sphi 0, %s97
    %s114 = sphi 0, %s98
    %s122 = sphi 0, %s124
    %s125 = sphi 0, %s122
    %s126 = sphi 0, %s125
    %s142 = sphi 0, %s126
  $region4: #{generator_forward.43} parent=0 // loop_header_branch
    %12 = sbr.rel (%p10) target = $region8
  $region5: #{generator_forward.43} parent=0 // loop_body
    %s14 = ssub.s32 %s9, 1
    %s15 = ssub.s32 %s9, 2
    %s25 = sadd.s32 1, %s18
    %p26 = scmp.ge.s32.totalorder %s25, 1
    %s27 = scalar_select %p26, 0, %s25
    %s28 = sadd.s32 1, %s17
    %s29 = scalar_select %p26, %s28, %s17
    %p30 = scmp.ge.s32.totalorder %s29, 1
    %s31 = scalar_select %p30, 0, %s29
    %s32 = sadd.s32 1, %s16
    %s33 = scalar_select %p30, %s32, %s16
    %p34 = scmp.ge.s32.totalorder %s33, 9
    %s35 = scalar_select %p34, 0, %s33
    %s36 = ssub.s32 %s16, %s35
    %s37 = ssub.s32 %s18, %s27
    %s38 = sor.u32 %s36, %s37
    %p39 = scmp.eq.s32.totalorder %s38, 0
    %s41 = sadd.s32 %s40, 1
    %s42 = scalar_select %p39, %s40, %s41
    %p45 = pneg %p39
    %p46 = scmp.eq.s32.totalorder %s9, 8
    %p47 = por %p45, %p46
    %p48 = scmp.ne.s32.totalorder %s40, %s43
    %p49 = scmp.eq.s32.totalorder %s9, 0
    %p50 = por %p48, %p49
    %p51 = scmp.ne.s32.totalorder %s40, %s43
    %p52 = scmp.eq.s32.totalorder %s14, 8
    %p53 = por %p51, %p52
    %p54 = scmp.ne.s32.totalorder %s43, %s44
    %p55 = scmp.eq.s32.totalorder %s14, 0
    %p56 = por %p54, %p55
    %p57 = scmp.ne.s32.totalorder %s43, %s44
    %p58 = scmp.eq.s32.totalorder %s15, 8
    %p59 = por %p57, %p58
    %p61 = scmp.ne.s32.totalorder %s44, %s60
    %p62 = scmp.eq.s32.totalorder %s15, 0
    %p63 = por %p61, %p62
    %s64 = ssub.s32 %s18, %s27
    %s65 = ssub.s32 %s17, %s31
    %s66 = sor.u32 %s64, %s65
    %p67 = scmp.eq.s32.totalorder %s66, 0
    %s69 = sadd.s32 %s68, 1
    %s70 = scalar_select %p67, %s68, %s69
    %p73 = pneg %p67
    %p74 = scmp.eq.s32.totalorder %s9, 8
    %p75 = por %p73, %p74
    %p76 = scmp.ne.s32.totalorder %s68, %s71
    %p77 = scmp.eq.s32.totalorder %s9, 0
    %p78 = por %p76, %p77
    %p79 = scmp.ne.s32.totalorder %s68, %s71
    %p80 = scmp.eq.s32.totalorder %s14, 8
    %p81 = por %p79, %p80
    %p82 = scmp.ne.s32.totalorder %s71, %s72
    %p83 = scmp.eq.s32.totalorder %s14, 0
    %p84 = por %p82, %p83
    %p85 = scmp.ne.s32.totalorder %s71, %s72
    %p86 = scmp.eq.s32.totalorder %s15, 8
    %p87 = por %p85, %p86
    %p89 = scmp.ne.s32.totalorder %s72, %s88
    %p90 = scmp.eq.s32.totalorder %s15, 0
    %p91 = por %p89, %p90
    %s92 = ssub.s32 %s17, %s31
    %p93 = scmp.eq.s32.totalorder %s92, 0
    %s95 = sadd.s32 %s94, 1
    %s96 = scalar_select %p93, %s94, %s95
    %p99 = pneg %p93
    %p100 = scmp.eq.s32.totalorder %s9, 8
    %p101 = por %p99, %p100
    %p102 = scmp.ne.s32.totalorder %s94, %s97
    %p103 = scmp.eq.s32.totalorder %s9, 0
    %p104 = por %p102, %p103
    %p105 = scmp.ne.s32.totalorder %s94, %s97
    %p106 = scmp.eq.s32.totalorder %s14, 8
    %p107 = por %p105, %p106
    %p108 = scmp.ne.s32.totalorder %s97, %s98
    %p109 = scmp.eq.s32.totalorder %s14, 0
    %p110 = por %p108, %p109
    %p111 = scmp.ne.s32.totalorder %s97, %s98
    %p112 = scmp.eq.s32.totalorder %s15, 8
    %p113 = por %p111, %p112
    %p115 = scmp.ne.s32.totalorder %s98, %s114
    %p116 = scmp.eq.s32.totalorder %s15, 0
    %p117 = por %p115, %p116
    %s118 = ssub.s32 %s16, %s35
    %s119 = ssub.s32 %s17, %s31
    %s120 = sor.u32 %s118, %s119
    %p121 = scmp.eq.s32.totalorder %s120, 0
    %s123 = sadd.s32 %s122, 1
    %s124 = scalar_select %p121, %s122, %s123
    %p127 = pneg %p121
    %p128 = scmp.eq.s32.totalorder %s9, 8
    %p129 = por %p127, %p128
    %p130 = scmp.ne.s32.totalorder %s122, %s125
    %p131 = scmp.eq.s32.totalorder %s9, 0
    %p132 = por %p130, %p131
    %p133 = scmp.ne.s32.totalorder %s122, %s125
    %p134 = scmp.eq.s32.totalorder %s14, 8
    %p135 = por %p133, %p134
    %p136 = scmp.ne.s32.totalorder %s125, %s126
    %p137 = scmp.eq.s32.totalorder %s14, 0
    %p138 = por %p136, %p137
    %p139 = scmp.ne.s32.totalorder %s125, %s126
    %p140 = scmp.eq.s32.totalorder %s15, 8
    %p141 = por %p139, %p140
    %p143 = scmp.ne.s32.totalorder %s126, %s142
    %p144 = scmp.eq.s32.totalorder %s15, 0
    %p145 = por %p143, %p144
    %p146 = scmp.le.s32.totalorder 1, %s9
    %p147 = scmp.lt.s32.totalorder %s9, 10
    %p148 = pnand %p146, %p147
    %p149 = pneg %p148
    // Predicated region
    $region9: #{generator_forward.43} parent=5 // pred_check
      _
    $region10: #{generator_forward.43} parent=5 // pred_check_branch
      %151 = sbr.rel (%p148) target = $region12
    $region11: #{generator_forward.43} parent=5 // pred_region
      %s152 = ssub.s32 %s9, 1
      // Predicated region
      $region13: #{generator_forward.43} parent=11 // pred_check
        %p153 = pneg %p84
      $region14: #{generator_forward.43} parent=11 // pred_check_branch
        %155 = sbr.rel (%p153) target = $region16
      $region15: #{generator_forward.43} parent=11 // pred_region
        %s156 = smul.u32 16, %s21
        %p157 = scmp.lt.s32.totalorder %s156, 15
        %s158 = scalar_select %p157, %s156, 15
        %p159 = scmp.lt.s32.totalorder %s20, 0
        %s160 = scalar_select %p159, %s20, 0
        %s161 = sadd.s32 %s160, %s158
        %s162 = smul.addr %s161, 8
        %s163 = scalar_lea.vmem %s1, %s162
        %s164 = smul.u32 16, %s21
      $region16: #{generator_forward.43} parent=11 // pred_fallthru
        _
      // Predicated region
      $region17: #{generator_forward.43} parent=11 // pred_check
        %p165 = pneg %p110
      $region18: #{generator_forward.43} parent=11 // pred_check_branch
        %167 = sbr.rel (%p165) target = $region20
      $region19: #{generator_forward.43} parent=11 // pred_region
        %p168 = scmp.lt.s32.totalorder %s20, 0
        %s169 = scalar_select %p168, %s20, 0
        %s170 = scalar_lea.vmem %s2, %s169
      $region20: #{generator_forward.43} parent=11 // pred_fallthru
        _
    $region12: #{generator_forward.43} parent=5 // pred_fallthru
      _
    %p171 = scmp.lt.s32.totalorder %s9, 9
    // Predicated region
    $region21: #{generator_forward.43} parent=5 // pred_check
      %p172 = pneg %p171
    $region22: #{generator_forward.43} parent=5 // pred_check_branch
      %174 = sbr.rel (%p172) target = $region24
    $region23: #{generator_forward.43} parent=5 // pred_region
      // Predicated region
      $region25: #{generator_forward.43} parent=23 // pred_check
        %p175 = pneg %p50
      $region26: #{generator_forward.43} parent=23 // pred_check_branch
        %177 = sbr.rel (%p175) target = $region28
      $region27: #{generator_forward.43} parent=23 // pred_region
        %s178 = smul.u32 32, %s16
        %p179 = scmp.lt.s32.totalorder %s178, 287
        %s180 = scalar_select %p179, %s178, 287
        %p181 = scmp.lt.s32.totalorder %s18, 0
        %s182 = scalar_select %p181, %s18, 0
        %s183 = sadd.s32 %s182, %s180
        %s184 = smul.addr %s183, 8
        %s185 = scalar_lea.vmem %s0, %s184
        %s186 = smul.u32 32, %s16
      $region28: #{generator_forward.43} parent=23 // pred_fallthru
        _
    $region24: #{generator_forward.43} parent=5 // pred_fallthru
      _
    %p187 = scmp.le.s32.totalorder 1, %s9
    %p188 = scmp.lt.s32.totalorder %s9, 10
    %p189 = pnand %p187, %p188
    %p190 = pneg %p189
    // Predicated region
    $region29: #{generator_forward.43} parent=5 // pred_check
      _
    $region30: #{generator_forward.43} parent=5 // pred_check_branch
      %192 = sbr.rel (%p189) target = $region32
    $region31: #{generator_forward.43} parent=5 // pred_region
      %s193 = ssub.s32 %s9, 1
      %s194 = smul.u32 32, %s19
      %p195 = scmp.lt.s32.totalorder %s194, 287
      %s196 = scalar_select %p195, %s194, 287
      %p197 = scmp.lt.s32.totalorder %s21, 0
      %s198 = scalar_select %p197, %s21, 0
      %s199 = sadd.s32 %s198, %s196
      %s200 = smul.addr %s199, 8
      %s201 = scalar_lea.vmem %s0, %s200
      %p202 = pneg %p56
      %p203 = pneg %p53
      %s204 = smul.u32 16, %s21
      %p205 = scmp.lt.s32.totalorder %s204, 15
      %s206 = scalar_select %p205, %s204, 15
      %p207 = scmp.lt.s32.totalorder %s20, 0
      %s208 = scalar_select %p207, %s20, 0
      %s209 = sadd.s32 %s208, %s206
      %s210 = smul.addr %s209, 8
      %s211 = scalar_lea.vmem %s1, %s210
      %p212 = pneg %p84
      %p213 = pneg %p81
      %p214 = scmp.lt.s32.totalorder %s20, 0
      %s215 = scalar_select %p214, %s20, 0
      %s216 = scalar_lea.vmem %s2, %s215
      %p217 = pneg %p110
      %p218 = pneg %p107
      %p219 = pneg %p138
      %p220 = pneg %p135
      %s221 = smul.u32 32, %s19
      %p222 = scmp.lt.s32.totalorder %s221, 287
      %s223 = scalar_select %p222, %s221, 287
      %p224 = scmp.lt.s32.totalorder %s20, 0
      %s225 = scalar_select %p224, %s20, 0
      %s226 = sadd.s32 %s225, %s223
      %s227 = smul.addr %s226, 8
      %s228 = scalar_lea.vmem %s3, %s227
      %s229 = smul.u32 32, %s19
      %p230 = scmp.lt.s32.totalorder %s229, 287
      %s231 = scalar_select %p230, %s229, 287
      %p232 = scmp.lt.s32.totalorder %s21, 0
      %s233 = scalar_select %p232, %s21, 0
      %s234 = sadd.s32 %s233, %s231
      %s235 = smul.addr %s234, 8
      %s236 = scalar_lea.vmem %s0, %s235
      %s237 = smul.u32 32, %s19
      %s238 = smul.u32 16, %s21
      %p239 = scmp.lt.s32.totalorder %s238, 15
      %s240 = scalar_select %p239, %s238, 15
      %p241 = scmp.lt.s32.totalorder %s20, 0
      %s242 = scalar_select %p241, %s20, 0
      %s243 = sadd.s32 %s242, %s240
      %s244 = smul.addr %s243, 8
      %s245 = scalar_lea.vmem %s1, %s244
      %s246 = smul.u32 16, %s21
      %p247 = scmp.lt.s32.totalorder %s20, 0
      %s248 = scalar_select %p247, %s20, 0
      %s249 = scalar_lea.vmem %s2, %s248
      %s250 = smul.u32 32, %s19
      %p251 = scmp.lt.s32.totalorder %s250, 287
      %s252 = scalar_select %p251, %s250, 287
      %p253 = scmp.lt.s32.totalorder %s20, 0
      %s254 = scalar_select %p253, %s20, 0
      %s255 = sadd.s32 %s254, %s252
      %s256 = smul.addr %s255, 8
      %s257 = scalar_lea.vmem %s3, %s256
      %s258 = smul.u32 32, %s19
      %p259 = scmp.eq.s32.totalorder %s21, 0
      // Predicated region
      $region33: #{generator_forward.43} parent=31 // pred_check
        %p260 = pneg %p259
      $region34: #{generator_forward.43} parent=31 // pred_check_branch
        %262 = sbr.rel (%p260) target = $region36
      $region35: #{generator_forward.43} parent=31 // pred_region
        %263 = vst [vmem:[#allocation2] sm:$0xff] 0.0
        %264 = vst [vmem:[#allocation2 + $0x8] sm:$0xff] 0.0
        %265 = vst [vmem:[#allocation2 + $0x10] sm:$0xff] 0.0
        %266 = vst [vmem:[#allocation2 + $0x18] sm:$0xff] 0.0
        %267 = vst [vmem:[#allocation2 + $0x20] sm:$0xff] 0.0
        %268 = vst [vmem:[#allocation2 + $0x28] sm:$0xff] 0.0
        %269 = vst [vmem:[#allocation2 + $0x30] sm:$0xff] 0.0
        %270 = vst [vmem:[#allocation2 + $0x38] sm:$0xff] 0.0
        %271 = vst [vmem:[#allocation2 + $0x40] sm:$0xff] 0.0
        %272 = vst [vmem:[#allocation2 + $0x48] sm:$0xff] 0.0
        %273 = vst [vmem:[#allocation2 + $0x50] sm:$0xff] 0.0
        %274 = vst [vmem:[#allocation2 + $0x58] sm:$0xff] 0.0
        %275 = vst [vmem:[#allocation2 + $0x60] sm:$0xff] 0.0
        %276 = vst [vmem:[#allocation2 + $0x68] sm:$0xff] 0.0
        %277 = vst [vmem:[#allocation2 + $0x70] sm:$0xff] 0.0
        %278 = vst [vmem:[#allocation2 + $0x78] sm:$0xff] 0.0
        %279 = vst [vmem:[#allocation2 + $0x80] sm:$0xff] 0.0
        %280 = vst [vmem:[#allocation2 + $0x88] sm:$0xff] 0.0
        %281 = vst [vmem:[#allocation2 + $0x90] sm:$0xff] 0.0
        %282 = vst [vmem:[#allocation2 + $0x98] sm:$0xff] 0.0
        %283 = vst [vmem:[#allocation2 + $0xa0] sm:$0xff] 0.0
        %284 = vst [vmem:[#allocation2 + $0xa8] sm:$0xff] 0.0
        %285 = vst [vmem:[#allocation2 + $0xb0] sm:$0xff] 0.0
        %286 = vst [vmem:[#allocation2 + $0xb8] sm:$0xff] 0.0
        %287 = vst [vmem:[#allocation2 + $0xc0] sm:$0xff] 0.0
        %288 = vst [vmem:[#allocation2 + $0xc8] sm:$0xff] 0.0
        %289 = vst [vmem:[#allocation2 + $0xd0] sm:$0xff] 0.0
        %290 = vst [vmem:[#allocation2 + $0xd8] sm:$0xff] 0.0
        %291 = vst [vmem:[#allocation2 + $0xe0] sm:$0xff] 0.0
        %292 = vst [vmem:[#allocation2 + $0xe8] sm:$0xff] 0.0
        %293 = vst [vmem:[#allocation2 + $0xf0] sm:$0xff] 0.0
        %294 = vst [vmem:[#allocation2 + $0xf8] sm:$0xff] 0.0
      $region36: #{generator_forward.43} parent=31 // pred_fallthru
        _
      %v295 = vld [vmem:[#allocation2] sm:$0xff]
      %v296 = vld [vmem:[#allocation2 + $0x8] sm:$0xff]
      %v297 = vld [vmem:[#allocation2 + $0x10] sm:$0xff]
      %v298 = vld [vmem:[#allocation2 + $0x18] sm:$0xff]
      %v299 = vld [vmem:[#allocation2 + $0x20] sm:$0xff]
      %v300 = vld [vmem:[#allocation2 + $0x28] sm:$0xff]
      %v301 = vld [vmem:[#allocation2 + $0x30] sm:$0xff]
      %v302 = vld [vmem:[#allocation2 + $0x38] sm:$0xff]
      %v303 = vld [vmem:[#allocation2 + $0x40] sm:$0xff]
      %v304 = vld [vmem:[#allocation2 + $0x48] sm:$0xff]
      %v305 = vld [vmem:[#allocation2 + $0x50] sm:$0xff]
      %v306 = vld [vmem:[#allocation2 + $0x58] sm:$0xff]
      %v307 = vld [vmem:[#allocation2 + $0x60] sm:$0xff]
      %v308 = vld [vmem:[#allocation2 + $0x68] sm:$0xff]
      %v309 = vld [vmem:[#allocation2 + $0x70] sm:$0xff]
      %v310 = vld [vmem:[#allocation2 + $0x78] sm:$0xff]
      %v311 = vld [vmem:[#allocation2 + $0x80] sm:$0xff]
      %v312 = vld [vmem:[#allocation2 + $0x88] sm:$0xff]
      %v313 = vld [vmem:[#allocation2 + $0x90] sm:$0xff]
      %v314 = vld [vmem:[#allocation2 + $0x98] sm:$0xff]
      %v315 = vld [vmem:[#allocation2 + $0xa0] sm:$0xff]
      %v316 = vld [vmem:[#allocation2 + $0xa8] sm:$0xff]
      %v317 = vld [vmem:[#allocation2 + $0xb0] sm:$0xff]
      %v318 = vld [vmem:[#allocation2 + $0xb8] sm:$0xff]
      %v319 = vld [vmem:[#allocation2 + $0xc0] sm:$0xff]
      %v320 = vld [vmem:[#allocation2 + $0xc8] sm:$0xff]
      %v321 = vld [vmem:[#allocation2 + $0xd0] sm:$0xff]
      %v322 = vld [vmem:[#allocation2 + $0xd8] sm:$0xff]
      %v323 = vld [vmem:[#allocation2 + $0xe0] sm:$0xff]
      %v324 = vld [vmem:[#allocation2 + $0xe8] sm:$0xff]
      %v325 = vld [vmem:[#allocation2 + $0xf0] sm:$0xff]
      %v326 = vld [vmem:[#allocation2 + $0xf8] sm:$0xff]
      %v327 = vld [vmem:[%s236] sm:$0xff]
      %v328 = vld [vmem:[%s236 + $0x8] sm:$0xff]
      %v329 = vld [vmem:[%s236 + $0x10] sm:$0xff]
      %v330 = vld [vmem:[%s236 + $0x18] sm:$0xff]
      %v331 = vld [vmem:[%s236 + $0x20] sm:$0xff]
      %v332 = vld [vmem:[%s236 + $0x28] sm:$0xff]
      %v333 = vld [vmem:[%s236 + $0x30] sm:$0xff]
      %v334 = vld [vmem:[%s236 + $0x38] sm:$0xff]
      %v335 = vld [vmem:[%s236 + $0x40] sm:$0xff]
      %v336 = vld [vmem:[%s236 + $0x48] sm:$0xff]
      %v337 = vld [vmem:[%s236 + $0x50] sm:$0xff]
      %v338 = vld [vmem:[%s236 + $0x58] sm:$0xff]
      %v339 = vld [vmem:[%s236 + $0x60] sm:$0xff]
      %v340 = vld [vmem:[%s236 + $0x68] sm:$0xff]
      %v341 = vld [vmem:[%s236 + $0x70] sm:$0xff]
      %v342 = vld [vmem:[%s236 + $0x78] sm:$0xff]
      %v343 = vld [vmem:[%s236 + $0x80] sm:$0xff]
      %v344 = vld [vmem:[%s236 + $0x88] sm:$0xff]
      %v345 = vld [vmem:[%s236 + $0x90] sm:$0xff]
      %v346 = vld [vmem:[%s236 + $0x98] sm:$0xff]
      %v347 = vld [vmem:[%s236 + $0xa0] sm:$0xff]
      %v348 = vld [vmem:[%s236 + $0xa8] sm:$0xff]
      %v349 = vld [vmem:[%s236 + $0xb0] sm:$0xff]
      %v350 = vld [vmem:[%s236 + $0xb8] sm:$0xff]
      %v351 = vld [vmem:[%s236 + $0xc0] sm:$0xff]
      %v352 = vld [vmem:[%s236 + $0xc8] sm:$0xff]
      %v353 = vld [vmem:[%s236 + $0xd0] sm:$0xff]
      %v354 = vld [vmem:[%s236 + $0xd8] sm:$0xff]
      %v355 = vld [vmem:[%s236 + $0xe0] sm:$0xff]
      %v356 = vld [vmem:[%s236 + $0xe8] sm:$0xff]
      %v357 = vld [vmem:[%s236 + $0xf0] sm:$0xff]
      %v358 = vld [vmem:[%s236 + $0xf8] sm:$0xff]
      %v359 = vld [vmem:[%s245] sm:$0xff]
      %v360 = vld [vmem:[%s245 + $0x8] sm:$0xff]
      %v361 = vld [vmem:[%s245 + $0x10] sm:$0xff]
      %v362 = vld [vmem:[%s245 + $0x18] sm:$0xff]
      %v363 = vld [vmem:[%s245 + $0x20] sm:$0xff]
      %v364 = vld [vmem:[%s245 + $0x28] sm:$0xff]
      %v365 = vld [vmem:[%s245 + $0x30] sm:$0xff]
      %v366 = vld [vmem:[%s245 + $0x38] sm:$0xff]
      %v367 = vld [vmem:[%s245 + $0x40] sm:$0xff]
      %v368 = vld [vmem:[%s245 + $0x48] sm:$0xff]
      %v369 = vld [vmem:[%s245 + $0x50] sm:$0xff]
      %v370 = vld [vmem:[%s245 + $0x58] sm:$0xff]
      %v371 = vld [vmem:[%s245 + $0x60] sm:$0xff]
      %v372 = vld [vmem:[%s245 + $0x68] sm:$0xff]
      %v373 = vld [vmem:[%s245 + $0x70] sm:$0xff]
      %v374 = vld [vmem:[%s245 + $0x78] sm:$0xff]
      %375 = vmatpush.msra.mxu0 %v374
      %376 = vmatpush.msra.mxu0 %v373
      %377 = vmatpush.msra.mxu0 %v372
      %378 = vmatpush.msra.mxu0 %v371
      %379 = vmatpush.msra.mxu0 %v370
      %380 = vmatpush.msra.mxu0 %v369
      %381 = vmatpush.msra.mxu0 %v368
      %382 = vmatpush.msra.mxu0 %v367
      %383 = vmatpush.msra.mxu0 %v366
      %384 = vmatpush.msra.mxu0 %v365
      %385 = vmatpush.msra.mxu0 %v364
      %386 = vmatpush.msra.mxu0 %v363
      %387 = vmatpush.msra.mxu0 %v362
      %388 = vmatpush.msra.mxu0 %v361
      %389 = vmatpush.msra.mxu0 %v360
      %390 = vmatpush.msra.mxu0 %v359
      %391 = vmatmul.f32.gmra.mxu0 %v327
      %v392 = vpop.f32.mrf.mxu0
      %v393 = vadd.f32 0.0, %v392
      %394 = vmatmul.f32.gmra.mxu0 %v328
      %v395 = vpop.f32.mrf.mxu0
      %v396 = vadd.f32 0.0, %v395
      %397 = vmatmul.f32.gmra.mxu0 %v329
      %v398 = vpop.f32.mrf.mxu0
      %v399 = vadd.f32 0.0, %v398
      %400 = vmatmul.f32.gmra.mxu0 %v330
      %v401 = vpop.f32.mrf.mxu0
      %v402 = vadd.f32 0.0, %v401
      %403 = vmatmul.f32.gmra.mxu0 %v331
      %v404 = vpop.f32.mrf.mxu0
      %v405 = vadd.f32 0.0, %v404
      %406 = vmatmul.f32.gmra.mxu0 %v332
      %v407 = vpop.f32.mrf.mxu0
      %v408 = vadd.f32 0.0, %v407
      %409 = vmatmul.f32.gmra.mxu0 %v333
      %v410 = vpop.f32.mrf.mxu0
      %v411 = vadd.f32 0.0, %v410
      %412 = vmatmul.f32.gmra.mxu0 %v334
      %v413 = vpop.f32.mrf.mxu0
      %v414 = vadd.f32 0.0, %v413
      %415 = vmatmul.f32.gmra.mxu0 %v335
      %v416 = vpop.f32.mrf.mxu0
      %v417 = vadd.f32 0.0, %v416
      %418 = vmatmul.f32.gmra.mxu0 %v336
      %v419 = vpop.f32.mrf.mxu0
      %v420 = vadd.f32 0.0, %v419
      %421 = vmatmul.f32.gmra.mxu0 %v337
      %v422 = vpop.f32.mrf.mxu0
      %v423 = vadd.f32 0.0, %v422
      %424 = vmatmul.f32.gmra.mxu0 %v338
      %v425 = vpop.f32.mrf.mxu0
      %v426 = vadd.f32 0.0, %v425
      %427 = vmatmul.f32.gmra.mxu0 %v339
      %v428 = vpop.f32.mrf.mxu0
      %v429 = vadd.f32 0.0, %v428
      %430 = vmatmul.f32.gmra.mxu0 %v340
      %v431 = vpop.f32.mrf.mxu0
      %v432 = vadd.f32 0.0, %v431
      %433 = vmatmul.f32.gmra.mxu0 %v341
      %v434 = vpop.f32.mrf.mxu0
      %v435 = vadd.f32 0.0, %v434
      %436 = vmatmul.f32.gmra.mxu0 %v342
      %v437 = vpop.f32.mrf.mxu0
      %v438 = vadd.f32 0.0, %v437
      %439 = vmatmul.f32.gmra.mxu0 %v343
      %v440 = vpop.f32.mrf.mxu0
      %v441 = vadd.f32 0.0, %v440
      %442 = vmatmul.f32.gmra.mxu0 %v344
      %v443 = vpop.f32.mrf.mxu0
      %v444 = vadd.f32 0.0, %v443
      %445 = vmatmul.f32.gmra.mxu0 %v345
      %v446 = vpop.f32.mrf.mxu0
      %v447 = vadd.f32 0.0, %v446
      %448 = vmatmul.f32.gmra.mxu0 %v346
      %v449 = vpop.f32.mrf.mxu0
      %v450 = vadd.f32 0.0, %v449
      %451 = vmatmul.f32.gmra.mxu0 %v347
      %v452 = vpop.f32.mrf.mxu0
      %v453 = vadd.f32 0.0, %v452
      %454 = vmatmul.f32.gmra.mxu0 %v348
      %v455 = vpop.f32.mrf.mxu0
      %v456 = vadd.f32 0.0, %v455
      %457 = vmatmul.f32.gmra.mxu0 %v349
      %v458 = vpop.f32.mrf.mxu0
      %v459 = vadd.f32 0.0, %v458
      %460 = vmatmul.f32.gmra.mxu0 %v350
      %v461 = vpop.f32.mrf.mxu0
      %v462 = vadd.f32 0.0, %v461
      %463 = vmatmul.f32.gmra.mxu0 %v351
      %v464 = vpop.f32.mrf.mxu0
      %v465 = vadd.f32 0.0, %v464
      %466 = vmatmul.f32.gmra.mxu0 %v352
      %v467 = vpop.f32.mrf.mxu0
      %v468 = vadd.f32 0.0, %v467
      %469 = vmatmul.f32.gmra.mxu0 %v353
      %v470 = vpop.f32.mrf.mxu0
      %v471 = vadd.f32 0.0, %v470
      %472 = vmatmul.f32.gmra.mxu0 %v354
      %v473 = vpop.f32.mrf.mxu0
      %v474 = vadd.f32 0.0, %v473
      %475 = vmatmul.f32.gmra.mxu0 %v355
      %v476 = vpop.f32.mrf.mxu0
      %v477 = vadd.f32 0.0, %v476
      %478 = vmatmul.f32.gmra.mxu0 %v356
      %v479 = vpop.f32.mrf.mxu0
      %v480 = vadd.f32 0.0, %v479
      %481 = vmatmul.f32.gmra.mxu0 %v357
      %v482 = vpop.f32.mrf.mxu0
      %v483 = vadd.f32 0.0, %v482
      %484 = vmatmul.f32.gmra.mxu0 %v358
      %v485 = vpop.f32.mrf.mxu0
      %v486 = vadd.f32 0.0, %v485
      %487 = vdwg.mxu0
      %v488 = vadd.f32 %v295, %v393
      %v489 = vadd.f32 %v296, %v396
      %v490 = vadd.f32 %v297, %v399
      %v491 = vadd.f32 %v298, %v402
      %v492 = vadd.f32 %v299, %v405
      %v493 = vadd.f32 %v300, %v408
      %v494 = vadd.f32 %v301, %v411
      %v495 = vadd.f32 %v302, %v414
      %v496 = vadd.f32 %v303, %v417
      %v497 = vadd.f32 %v304, %v420
      %v498 = vadd.f32 %v305, %v423
      %v499 = vadd.f32 %v306, %v426
      %v500 = vadd.f32 %v307, %v429
      %v501 = vadd.f32 %v308, %v432
      %v502 = vadd.f32 %v309, %v435
      %v503 = vadd.f32 %v310, %v438
      %v504 = vadd.f32 %v311, %v441
      %v505 = vadd.f32 %v312, %v444
      %v506 = vadd.f32 %v313, %v447
      %v507 = vadd.f32 %v314, %v450
      %v508 = vadd.f32 %v315, %v453
      %v509 = vadd.f32 %v316, %v456
      %v510 = vadd.f32 %v317, %v459
      %v511 = vadd.f32 %v318, %v462
      %v512 = vadd.f32 %v319, %v465
      %v513 = vadd.f32 %v320, %v468
      %v514 = vadd.f32 %v321, %v471
      %v515 = vadd.f32 %v322, %v474
      %v516 = vadd.f32 %v323, %v477
      %v517 = vadd.f32 %v324, %v480
      %v518 = vadd.f32 %v325, %v483
      %v519 = vadd.f32 %v326, %v486
      %520 = vst [vmem:[#allocation2] sm:$0xff] %v488
      %521 = vst [vmem:[#allocation2 + $0x8] sm:$0xff] %v489
      %522 = vst [vmem:[#allocation2 + $0x10] sm:$0xff] %v490
      %523 = vst [vmem:[#allocation2 + $0x18] sm:$0xff] %v491
      %524 = vst [vmem:[#allocation2 + $0x20] sm:$0xff] %v492
      %525 = vst [vmem:[#allocation2 + $0x28] sm:$0xff] %v493
      %526 = vst [vmem:[#allocation2 + $0x30] sm:$0xff] %v494
      %527 = vst [vmem:[#allocation2 + $0x38] sm:$0xff] %v495
      %528 = vst [vmem:[#allocation2 + $0x40] sm:$0xff] %v496
      %529 = vst [vmem:[#allocation2 + $0x48] sm:$0xff] %v497
      %530 = vst [vmem:[#allocation2 + $0x50] sm:$0xff] %v498
      %531 = vst [vmem:[#allocation2 + $0x58] sm:$0xff] %v499
      %532 = vst [vmem:[#allocation2 + $0x60] sm:$0xff] %v500
      %533 = vst [vmem:[#allocation2 + $0x68] sm:$0xff] %v501
      %534 = vst [vmem:[#allocation2 + $0x70] sm:$0xff] %v502
      %535 = vst [vmem:[#allocation2 + $0x78] sm:$0xff] %v503
      %536 = vst [vmem:[#allocation2 + $0x80] sm:$0xff] %v504
      %537 = vst [vmem:[#allocation2 + $0x88] sm:$0xff] %v505
      %538 = vst [vmem:[#allocation2 + $0x90] sm:$0xff] %v506
      %539 = vst [vmem:[#allocation2 + $0x98] sm:$0xff] %v507
      %540 = vst [vmem:[#allocation2 + $0xa0] sm:$0xff] %v508
      %541 = vst [vmem:[#allocation2 + $0xa8] sm:$0xff] %v509
      %542 = vst [vmem:[#allocation2 + $0xb0] sm:$0xff] %v510
      %543 = vst [vmem:[#allocation2 + $0xb8] sm:$0xff] %v511
      %544 = vst [vmem:[#allocation2 + $0xc0] sm:$0xff] %v512
      %545 = vst [vmem:[#allocation2 + $0xc8] sm:$0xff] %v513
      %546 = vst [vmem:[#allocation2 + $0xd0] sm:$0xff] %v514
      %547 = vst [vmem:[#allocation2 + $0xd8] sm:$0xff] %v515
      %548 = vst [vmem:[#allocation2 + $0xe0] sm:$0xff] %v516
      %549 = vst [vmem:[#allocation2 + $0xe8] sm:$0xff] %v517
      %550 = vst [vmem:[#allocation2 + $0xf0] sm:$0xff] %v518
      %551 = vst [vmem:[#allocation2 + $0xf8] sm:$0xff] %v519
      // Predicated region
      $region37: #{generator_forward.43} parent=31 // pred_check
        %p552 = pneg %p259
      $region38: #{generator_forward.43} parent=31 // pred_check_branch
        %554 = sbr.rel (%p552) target = $region40
      $region39: #{generator_forward.43} parent=31 // pred_region
        %v555 = vld [vmem:[#allocation2] sm:$0xff]
        %v556 = vld [vmem:[#allocation2 + $0x8] sm:$0xff]
        %v557 = vld [vmem:[#allocation2 + $0x10] sm:$0xff]
        %v558 = vld [vmem:[#allocation2 + $0x18] sm:$0xff]
        %v559 = vld [vmem:[#allocation2 + $0x20] sm:$0xff]
        %v560 = vld [vmem:[#allocation2 + $0x28] sm:$0xff]
        %v561 = vld [vmem:[#allocation2 + $0x30] sm:$0xff]
        %v562 = vld [vmem:[#allocation2 + $0x38] sm:$0xff]
        %v563 = vld [vmem:[#allocation2 + $0x40] sm:$0xff]
        %v564 = vld [vmem:[#allocation2 + $0x48] sm:$0xff]
        %v565 = vld [vmem:[#allocation2 + $0x50] sm:$0xff]
        %v566 = vld [vmem:[#allocation2 + $0x58] sm:$0xff]
        %v567 = vld [vmem:[#allocation2 + $0x60] sm:$0xff]
        %v568 = vld [vmem:[#allocation2 + $0x68] sm:$0xff]
        %v569 = vld [vmem:[#allocation2 + $0x70] sm:$0xff]
        %v570 = vld [vmem:[#allocation2 + $0x78] sm:$0xff]
        %v571 = vld [vmem:[#allocation2 + $0x80] sm:$0xff]
        %v572 = vld [vmem:[#allocation2 + $0x88] sm:$0xff]
        %v573 = vld [vmem:[#allocation2 + $0x90] sm:$0xff]
        %v574 = vld [vmem:[#allocation2 + $0x98] sm:$0xff]
        %v575 = vld [vmem:[#allocation2 + $0xa0] sm:$0xff]
        %v576 = vld [vmem:[#allocation2 + $0xa8] sm:$0xff]
        %v577 = vld [vmem:[#allocation2 + $0xb0] sm:$0xff]
        %v578 = vld [vmem:[#allocation2 + $0xb8] sm:$0xff]
        %v579 = vld [vmem:[#allocation2 + $0xc0] sm:$0xff]
        %v580 = vld [vmem:[#allocation2 + $0xc8] sm:$0xff]
        %v581 = vld [vmem:[#allocation2 + $0xd0] sm:$0xff]
        %v582 = vld [vmem:[#allocation2 + $0xd8] sm:$0xff]
        %v583 = vld [vmem:[#allocation2 + $0xe0] sm:$0xff]
        %v584 = vld [vmem:[#allocation2 + $0xe8] sm:$0xff]
        %v585 = vld [vmem:[#allocation2 + $0xf0] sm:$0xff]
        %v586 = vld [vmem:[#allocation2 + $0xf8] sm:$0xff]
        %v587 = vld [vmem:[%s249] sm:$0x1]
        %v589 = vperm.slane %v587, 0
        %v591 = vadd.f32 %v555, %v589
        %v592 = vadd.f32 %v556, %v589
        %v593 = vadd.f32 %v557, %v589
        %v594 = vadd.f32 %v558, %v589
        %v595 = vadd.f32 %v559, %v589
        %v596 = vadd.f32 %v560, %v589
        %v597 = vadd.f32 %v561, %v589
        %v598 = vadd.f32 %v562, %v589
        %v599 = vadd.f32 %v563, %v589
        %v600 = vadd.f32 %v564, %v589
        %v601 = vadd.f32 %v565, %v589
        %v602 = vadd.f32 %v566, %v589
        %v603 = vadd.f32 %v567, %v589
        %v604 = vadd.f32 %v568, %v589
        %v605 = vadd.f32 %v569, %v589
        %v606 = vadd.f32 %v570, %v589
        %v607 = vadd.f32 %v571, %v589
        %v608 = vadd.f32 %v572, %v589
        %v609 = vadd.f32 %v573, %v589
        %v610 = vadd.f32 %v574, %v589
        %v611 = vadd.f32 %v575, %v589
        %v612 = vadd.f32 %v576, %v589
        %v613 = vadd.f32 %v577, %v589
        %v614 = vadd.f32 %v578, %v589
        %v615 = vadd.f32 %v579, %v589
        %v616 = vadd.f32 %v580, %v589
        %v617 = vadd.f32 %v581, %v589
        %v618 = vadd.f32 %v582, %v589
        %v619 = vadd.f32 %v583, %v589
        %v620 = vadd.f32 %v584, %v589
        %v621 = vadd.f32 %v585, %v589
        %v622 = vadd.f32 %v586, %v589
        %v623 = vtanh.pop %v591
        %v624 = vtanh.pop %v592
        %v625 = vtanh.pop %v593
        %v626 = vtanh.pop %v594
        %v627 = vtanh.pop %v595
        %v628 = vtanh.pop %v596
        %v629 = vtanh.pop %v597
        %v630 = vtanh.pop %v598
        %v631 = vtanh.pop %v599
        %v632 = vtanh.pop %v600
        %v633 = vtanh.pop %v601
        %v634 = vtanh.pop %v602
        %v635 = vtanh.pop %v603
        %v636 = vtanh.pop %v604
        %v637 = vtanh.pop %v605
        %v638 = vtanh.pop %v606
        %v639 = vtanh.pop %v607
        %v640 = vtanh.pop %v608
        %v641 = vtanh.pop %v609
        %v642 = vtanh.pop %v610
        %v643 = vtanh.pop %v611
        %v644 = vtanh.pop %v612
        %v645 = vtanh.pop %v613
        %v646 = vtanh.pop %v614
        %v647 = vtanh.pop %v615
        %v648 = vtanh.pop %v616
        %v649 = vtanh.pop %v617
        %v650 = vtanh.pop %v618
        %v651 = vtanh.pop %v619
        %v652 = vtanh.pop %v620
        %v653 = vtanh.pop %v621
        %v654 = vtanh.pop %v622
        %655 = vst [vmem:[%s257] sm:$0xff] %v623
        %656 = vst [vmem:[%s257 + $0x8] sm:$0xff] %v624
        %657 = vst [vmem:[%s257 + $0x10] sm:$0xff] %v625
        %658 = vst [vmem:[%s257 + $0x18] sm:$0xff] %v626
        %659 = vst [vmem:[%s257 + $0x20] sm:$0xff] %v627
        %660 = vst [vmem:[%s257 + $0x28] sm:$0xff] %v628
        %661 = vst [vmem:[%s257 + $0x30] sm:$0xff] %v629
        %662 = vst [vmem:[%s257 + $0x38] sm:$0xff] %v630
        %663 = vst [vmem:[%s257 + $0x40] sm:$0xff] %v631
        %664 = vst [vmem:[%s257 + $0x48] sm:$0xff] %v632
        %665 = vst [vmem:[%s257 + $0x50] sm:$0xff] %v633
        %666 = vst [vmem:[%s257 + $0x58] sm:$0xff] %v634
        %667 = vst [vmem:[%s257 + $0x60] sm:$0xff] %v635
        %668 = vst [vmem:[%s257 + $0x68] sm:$0xff] %v636
        %669 = vst [vmem:[%s257 + $0x70] sm:$0xff] %v637
        %670 = vst [vmem:[%s257 + $0x78] sm:$0xff] %v638
        %671 = vst [vmem:[%s257 + $0x80] sm:$0xff] %v639
        %672 = vst [vmem:[%s257 + $0x88] sm:$0xff] %v640
        %673 = vst [vmem:[%s257 + $0x90] sm:$0xff] %v641
        %674 = vst [vmem:[%s257 + $0x98] sm:$0xff] %v642
        %675 = vst [vmem:[%s257 + $0xa0] sm:$0xff] %v643
        %676 = vst [vmem:[%s257 + $0xa8] sm:$0xff] %v644
        %677 = vst [vmem:[%s257 + $0xb0] sm:$0xff] %v645
        %678 = vst [vmem:[%s257 + $0xb8] sm:$0xff] %v646
        %679 = vst [vmem:[%s257 + $0xc0] sm:$0xff] %v647
        %680 = vst [vmem:[%s257 + $0xc8] sm:$0xff] %v648
        %681 = vst [vmem:[%s257 + $0xd0] sm:$0xff] %v649
        %682 = vst [vmem:[%s257 + $0xd8] sm:$0xff] %v650
        %683 = vst [vmem:[%s257 + $0xe0] sm:$0xff] %v651
        %684 = vst [vmem:[%s257 + $0xe8] sm:$0xff] %v652
        %685 = vst [vmem:[%s257 + $0xf0] sm:$0xff] %v653
        %686 = vst [vmem:[%s257 + $0xf8] sm:$0xff] %v654
      $region40: #{generator_forward.43} parent=31 // pred_fallthru
        _
      %s687 = smul.u32 32, %s19
      %p688 = scmp.lt.s32.totalorder %s687, 287
      %s689 = scalar_select %p688, %s687, 287
      %p690 = scmp.lt.s32.totalorder %s20, 0
      %s691 = scalar_select %p690, %s20, 0
      %s692 = sadd.s32 %s691, %s689
      %s693 = smul.addr %s692, 8
      %s694 = scalar_lea.vmem %s3, %s693
      // Predicated region
      $region41: #{generator_forward.43} parent=31 // pred_check
        %p695 = pneg %p135
      $region42: #{generator_forward.43} parent=31 // pred_check_branch
        %697 = sbr.rel (%p695) target = $region44
      $region43: #{generator_forward.43} parent=31 // pred_region
        %s698 = smul.u32 32, %s19
      $region44: #{generator_forward.43} parent=31 // pred_fallthru
        _
    $region32: #{generator_forward.43} parent=5 // pred_fallthru
      _
    %p699 = scmp.le.s32.totalorder 2, %s9
    // Predicated region
    $region45: #{generator_forward.43} parent=5 // pred_check
      %p700 = pneg %p699
    $region46: #{generator_forward.43} parent=5 // pred_check_branch
      %702 = sbr.rel (%p700) target = $region48
    $region47: #{generator_forward.43} parent=5 // pred_region
      %s703 = ssub.s32 %s9, 2
      // Predicated region
      $region49: #{generator_forward.43} parent=47 // pred_check
        %p704 = pneg %p141
      $region50: #{generator_forward.43} parent=47 // pred_check_branch
        %706 = sbr.rel (%p704) target = $region52
      $region51: #{generator_forward.43} parent=47 // pred_region
        %s707 = smul.u32 32, %s22
        %p708 = scmp.lt.s32.totalorder %s707, 287
        %s709 = scalar_select %p708, %s707, 287
        %p710 = scmp.lt.s32.totalorder %s23, 0
        %s711 = scalar_select %p710, %s23, 0
        %s712 = sadd.s32 %s711, %s709
        %s713 = smul.addr %s712, 8
        %s714 = scalar_lea.vmem %s3, %s713
      $region52: #{generator_forward.43} parent=47 // pred_fallthru
        _
    $region48: #{generator_forward.43} parent=5 // pred_fallthru
      _
  $region6: #{generator_forward.43} parent=0 // loop_footer
    %s13 = sadd.s32 1, %s9
  $region7: #{generator_forward.43} parent=0 // loop_footer_branch
    %8 = sbr.rel target = $region3
  $region8: #{generator_forward.43} parent=0 // loop_exit
    _

</llo_original>
